<compile_context>
chip_gen: v5e
topology: v5e:2x2
jax: 0.10.0
libtpu: 0.0.40
codegen_flags: <defaults>
</compile_context>

<pallas_src>
import numpy as np
import jax
import jax.numpy as jnp
from jax.experimental import pallas as pl
from jax.experimental.pallas import tpu as pltpu


# Fixed geometry of BinaryCNN1 (fc1.in_features = 64*5*5 = 1600 forces a 26x26 input):
# 26 -conv3-> 24 -pool2-> 12 -conv3-> 10 -pool2-> 5
H_IN = W_IN = 26
HO1, HP1, WP1, C1 = 24, 12, 12, 32
HO2, HP2, WP2, C2 = 10, 5, 5, 64
N1 = WP1 * C1          # 384 = 3*128  (conv1 output columns: (wp1, c1))
N2 = WP2 * C2          # 320         (conv2 output columns: (wp2, c2))
FC1_OUT = 64
NCLS = 2


# -----------------------------------------------------------------------------
# The fused Pallas kernel (one grid step == one batch tile of `bt` samples)
# -----------------------------------------------------------------------------
def _binary_cnn1_kernel(x_ref, w1_ref, b1_ref, s1_ref, w2_ref, b2_ref, s2_ref,
                        wf1_ref, bf1_ref, wf2_ref, bf2_ref, o_ref):
    f32, bf16 = jnp.float32, jnp.bfloat16
    bt = o_ref.shape[0]                         # samples per grid step (8)

    def band_conv(act, w_ref_, rows_out):
        """3x3 valid conv as 3 accumulated matmuls per W-parity.
        act: [(h, b), w*Cin] f32; returns (even, odd) pre-bias conv outputs,
        each [(ho, b), wp*Cout] f32 (W-direction pool taps)."""
        outs = []
        for p in range(2):
            acc = None
            for di in range(3):
                a = act[di * bt:(di + rows_out) * bt, :].astype(bf16)
                d = jnp.dot(a, w_ref_[p, di], preferred_element_type=f32)
                acc = d if acc is None else acc + d
            outs.append(acc)
        return outs

    def pool_rows(z_even, z_odd, s_ref):
        """2x2 max-pool: W direction = max of the even/odd band outputs,
        H direction = two 0/1 row-selection matmuls + max (rows are (h, b))."""
        zm = jnp.maximum(z_even, z_odd)
        return jnp.maximum(
            jnp.dot(s_ref[0], zm, preferred_element_type=f32),
            jnp.dot(s_ref[1], zm, preferred_element_type=f32))

    # conv1 + bias + ReLU + 2x2 max-pool  ->  h1: [(hp1, b), (wp1, c1)] = [12*bt, 384]
    x = x_ref[...].reshape(H_IN * bt, W_IN)                 # f32, rows ordered (h, b)
    ze, zo = band_conv(x, w1_ref, HO1)                      # [24*bt, 384] each
    h1 = jnp.maximum(pool_rows(ze, zo, s1_ref) + b1_ref[...], 0.0)

    # conv2 + bias + ReLU + 2x2 max-pool  ->  h2: [(hp2, b), (wp2, c2)] = [5*bt, 320]
    ze, zo = band_conv(h1, w2_ref, HO2)                     # [10*bt, 320] each
    h2 = jnp.maximum(pool_rows(ze, zo, s2_ref) + b2_ref[...], 0.0)

    # fc1 (+ReLU) + fc2, consuming h2 row-blocks directly (flatten folded into wf1)
    acc = None
    for hp in range(HP2):
        d = jnp.dot(h2[hp * bt:(hp + 1) * bt, :].astype(bf16), wf1_ref[hp],
                    preferred_element_type=f32)
        acc = d if acc is None else acc + d
    f1 = jnp.maximum(acc + bf1_ref[...], 0.0)               # [bt, 64] f32
    o_ref[...] = jnp.dot(f1, wf2_ref[...], preferred_element_type=f32) + bf2_ref[...]


# -----------------------------------------------------------------------------
# Forward wrapper (one pallas_call; only XLA glue is a tiny input transpose)
# -----------------------------------------------------------------------------
def binary_cnn1_forward(params, x_nchw):
    """x_nchw: [B, 1, 26, 26] float32 (PyTorch layout). Returns logits [B, 2] f32."""
    B = x_nchw.shape[0]
    bt = params["s2"].shape[1] // HP2                        # samples per grid step
    assert B % bt == 0, f"batch {B} must be a multiple of the batch tile {bt}"
    grid_n = B // bt

    # Rows in (h, batch) order -> every in-kernel conv tap is a contiguous,
    # sublane-aligned row slice.  (Tiny array; single transpose of the input.)
    xhb = jnp.transpose(x_nchw.reshape(B, H_IN, W_IN), (1, 0, 2))   # [26, B, 26] f32

    macs = grid_n * (
        6 * (HO1 * bt) * W_IN * N1            # conv1 band matmuls
        + 2 * (HP1 * bt) * (HO1 * bt) * N1    # conv1 H-pool selection matmuls
        + 6 * (HO2 * bt) * N1 * N2            # conv2 band matmuls
        + 2 * (HP2 * bt) * (HO2 * bt) * N2    # conv2 H-pool selection matmuls
        + HP2 * bt * N2 * FC1_OUT + bt * FC1_OUT * NCLS)
    w_bytes = sum(int(np.prod(params[k].shape)) * params[k].dtype.itemsize
                  for k in params)
    cost = pl.CostEstimate(flops=2 * macs, transcendentals=0,
                           bytes_accessed=xhb.size * 4 + w_bytes + B * NCLS * 4)

    return pl.pallas_call(
        _binary_cnn1_kernel,
        out_shape=jax.ShapeDtypeStruct((B, NCLS), jnp.float32),
        grid=(grid_n,),
        in_specs=[
            pl.BlockSpec((H_IN, bt, W_IN), lambda i: (0, i, 0)),        # input tile
            pl.BlockSpec((2, 3, W_IN, N1), lambda i: (0, 0, 0, 0)),     # conv1 bands
            pl.BlockSpec((1, N1), lambda i: (0, 0)),                    # conv1 bias
            pl.BlockSpec((2, HP1 * bt, HO1 * bt), lambda i: (0, 0, 0)),  # pool1 select
            pl.BlockSpec((2, 3, N1, N2), lambda i: (0, 0, 0, 0)),       # conv2 bands
            pl.BlockSpec((1, N2), lambda i: (0, 0)),                    # conv2 bias
            pl.BlockSpec((2, HP2 * bt, HO2 * bt), lambda i: (0, 0, 0)),  # pool2 select
            pl.BlockSpec((HP2, N2, FC1_OUT), lambda i: (0, 0, 0)),      # fc1 weights
            pl.BlockSpec((1, FC1_OUT), lambda i: (0, 0)),               # fc1 bias
            pl.BlockSpec((FC1_OUT, NCLS), lambda i: (0, 0)),            # fc2 weights
            pl.BlockSpec((1, NCLS), lambda i: (0, 0)),                  # fc2 bias
        ],
        out_specs=pl.BlockSpec((bt, NCLS), lambda i: (i, 0)),
        compiler_params=pltpu.CompilerParams(
            dimension_semantics=("parallel",),
            vmem_limit_bytes=32 * 1024 * 1024,
        ),
        cost_estimate=cost,
    )(xhb, params["w1b"], params["b1"], params["s1"],
      params["w2b"], params["b2"], params["s2"],
      params["wf1"], params["bf1"], params["wf2"], params["bf2"])


# -----------------------------------------------------------------------------
# Parameters (PyTorch layout) and one-time conversion to kernel layout
# -----------------------------------------------------------------------------
def init_torch_style_params(key):
    ks = jax.random.split(key, 8)
    s = 0.05
    return {
        "conv1_w": s * jax.random.normal(ks[0], (C1, 1, 3, 3), jnp.float32),
        "conv1_b": s * jax.random.normal(ks[1], (C1,), jnp.float32),
        "conv2_w": s * jax.random.normal(ks[2], (C2, C1, 3, 3), jnp.float32),
        "conv2_b": s * jax.random.normal(ks[3], (C2,), jnp.float32),
        "fc1_w": s * jax.random.normal(ks[4], (FC1_OUT, 1600), jnp.float32),  # [out, in]
        "fc1_b": s * jax.random.normal(ks[5], (FC1_OUT,), jnp.float32),
        "fc2_w": s * jax.random.normal(ks[6], (NCLS, FC1_OUT), jnp.float32),  # [out, in]
        "fc2_b": s * jax.random.normal(ks[7], (NCLS,), jnp.float32),
    }


def _banded_conv_weights(w_oihw, w_in, wp_out):
    """Conv weight [Cout, Cin, 3, 3] -> banded matrices [2, 3, w_in*Cin, wp_out*Cout]
    so that conv (at the even/odd W-pool tap) is 3 accumulated matmuls per parity:
      band[p, di, w*Cin + ci, wp*Cout + co] = w[co, ci, di, w - (2*wp + p)]."""
    co_n, ci_n, kh, kw = w_oihw.shape
    out = np.zeros((2, kh, w_in * ci_n, wp_out * co_n), np.float32)
    for p in range(2):
        for di in range(kh):
            for wp in range(wp_out):
                for dj in range(kw):
                    w = 2 * wp + p + dj
                    out[p, di, w * ci_n:(w + 1) * ci_n,
                        wp * co_n:(wp + 1) * co_n] = w_oihw[:, :, di, dj].T
    return out


def _pool_row_select(hp_n, bt):
    """0/1 matrices [2, hp_n*bt, 2*hp_n*bt] selecting the even / odd source row of
    each H-pool pair (rows ordered (h, batch))."""
    s = np.zeros((2, hp_n * bt, 2 * hp_n * bt), np.float32)
    for p in range(2):
        for hp in range(hp_n):
            for b in range(bt):
                s[p, hp * bt + b, (2 * hp + p) * bt + b] = 1.0
    return s


def prepare_params(p, bt=8):
    """One-time conversion of PyTorch-layout params into the kernel layout."""
    w1 = np.asarray(p["conv1_w"], np.float32)
    w2 = np.asarray(p["conv2_w"], np.float32)
    fc1 = np.asarray(p["fc1_w"], np.float32)
    # PyTorch flattens conv2 output [B, C2, 5, 5] as (c2, hp, wp); the kernel's h2
    # tile for a fixed hp has columns (wp, c2) -> split fc1 weights per hp block.
    wf1 = fc1.reshape(FC1_OUT, C2, HP2, WP2).transpose(2, 3, 1, 0).reshape(HP2, N2, FC1_OUT)
    return {
        "w1b": jnp.asarray(_banded_conv_weights(w1, W_IN, WP1), jnp.bfloat16),
        "b1": jnp.asarray(np.tile(np.asarray(p["conv1_b"], np.float32), WP1)[None, :]),
        "s1": jnp.asarray(_pool_row_select(HP1, bt)),
        "w2b": jnp.asarray(_banded_conv_weights(w2, WP1, WP2), jnp.bfloat16),
        "b2": jnp.asarray(np.tile(np.asarray(p["conv2_b"], np.float32), WP2)[None, :]),
        "s2": jnp.asarray(_pool_row_select(HP2, bt)),
        "wf1": jnp.asarray(wf1, jnp.bfloat16),
        "bf1": jnp.asarray(np.asarray(p["fc1_b"], np.float32)[None, :]),
        "wf2": jnp.asarray(np.asarray(p["fc2_w"], np.float32).T),
        "bf2": jnp.asarray(np.asarray(p["fc2_b"], np.float32)[None, :]),
    }


# -----------------------------------------------------------------------------
# Pure-JAX reference (same bf16 rounding points) for a correctness self-check
# -----------------------------------------------------------------------------
def reference_forward(p, x_nchw):
    f32, bf16 = jnp.float32, jnp.bfloat16
    r = lambda v: v.astype(bf16).astype(f32)
    dn = ("NCHW", "OIHW", "NCHW")
    z = jax.lax.conv_general_dilated(r(x_nchw), r(p["conv1_w"]), (1, 1), "VALID",
                                     dimension_numbers=dn)
    z = jnp.maximum(z + p["conv1_b"][None, :, None, None], 0.0)
    b, c, h, w = z.shape
    z = z.reshape(b, c, h // 2, 2, w // 2, 2).max(axis=(3, 5))
    z = jax.lax.conv_general_dilated(r(z), r(p["conv2_w"]), (1, 1), "VALID",
                                     dimension_numbers=dn)
    z = jnp.maximum(z + p["conv2_b"][None, :, None, None], 0.0)
    b, c, h, w = z.shape
    z = z.reshape(b, c, h // 2, 2, w // 2, 2).max(axis=(3, 5))
    z = r(z).reshape(b, -1)                                  # PyTorch flatten (c, h, w)
    hid = jnp.maximum(z @ r(p["fc1_w"]).T + p["fc1_b"], 0.0)
    return hid @ p["fc2_w"].T + p["fc2_b"]


if __name__ == "__main__":
    key = jax.random.PRNGKey(0)
    pkey, xkey = jax.random.split(key)
    torch_params = init_torch_style_params(pkey)
    params = prepare_params(torch_params, bt=8)

    # Batch 16 -> grid of 2 batch tiles (keeps both v7x TensorCores busy).
    x = jax.random.normal(xkey, (16, 1, H_IN, W_IN), jnp.float32)

    fwd = jax.jit(binary_cnn1_forward)
    logits = jax.block_until_ready(fwd(params, x))

    assert logits.shape == (16, NCLS), logits.shape
    assert bool(jnp.all(jnp.isfinite(logits)))

    ref = jax.block_until_ready(jax.jit(reference_forward)(torch_params, x))
    np.testing.assert_allclose(np.asarray(logits), np.asarray(ref),
                               rtol=3e-2, atol=3e-3)
    print("KERNEL_OK")
</pallas_src>

<mosaic_0001>
module attributes {stable_mosaic.version = 11 : i64} {
  func.func @_binary_cnn1_kernel(%arg0: i32, %arg1: memref<26x8x26xf32, #tpu.memory_space<vmem>>, %arg2: memref<2x3x26x384xbf16, #tpu.memory_space<vmem>>, %arg3: memref<1x384xf32, #tpu.memory_space<vmem>>, %arg4: memref<2x96x192xf32, #tpu.memory_space<vmem>>, %arg5: memref<2x3x384x320xbf16, #tpu.memory_space<vmem>>, %arg6: memref<1x320xf32, #tpu.memory_space<vmem>>, %arg7: memref<2x40x80xf32, #tpu.memory_space<vmem>>, %arg8: memref<5x320x64xbf16, #tpu.memory_space<vmem>>, %arg9: memref<1x64xf32, #tpu.memory_space<vmem>>, %arg10: memref<64x2xf32, #tpu.memory_space<vmem>>, %arg11: memref<1x2xf32, #tpu.memory_space<vmem>>, %arg12: memref<8x2xf32, #tpu.memory_space<vmem>>) attributes {dimension_semantics = [#tpu.dimension_semantics<parallel>], iteration_bounds = array<i64: 2>, scalar_prefetch = 0 : i64, scratch_operands = 0 : i64, tpu.core_type = #tpu.core_type<tc>, window_params = [{transform_indices = @transform_0, window_bounds = array<i64: 26, 8, 26>}, {pipeline_mode = #tpu.pipeline_mode<synchronous>, transform_indices = @transform_1, window_bounds = array<i64: 2, 3, 26, 384>}, {pipeline_mode = #tpu.pipeline_mode<synchronous>, transform_indices = @transform_2, window_bounds = array<i64: 1, 384>}, {pipeline_mode = #tpu.pipeline_mode<synchronous>, transform_indices = @transform_3, window_bounds = array<i64: 2, 96, 192>}, {pipeline_mode = #tpu.pipeline_mode<synchronous>, transform_indices = @transform_4, window_bounds = array<i64: 2, 3, 384, 320>}, {pipeline_mode = #tpu.pipeline_mode<synchronous>, transform_indices = @transform_5, window_bounds = array<i64: 1, 320>}, {pipeline_mode = #tpu.pipeline_mode<synchronous>, transform_indices = @transform_6, window_bounds = array<i64: 2, 40, 80>}, {pipeline_mode = #tpu.pipeline_mode<synchronous>, transform_indices = @transform_7, window_bounds = array<i64: 5, 320, 64>}, {pipeline_mode = #tpu.pipeline_mode<synchronous>, transform_indices = @transform_8, window_bounds = array<i64: 1, 64>}, {pipeline_mode = #tpu.pipeline_mode<synchronous>, transform_indices = @transform_9, window_bounds = array<i64: 64, 2>}, {pipeline_mode = #tpu.pipeline_mode<synchronous>, transform_indices = @transform_10, window_bounds = array<i64: 1, 2>}, {transform_indices = @transform_11, window_bounds = array<i64: 8, 2>}]} {
    %c0 = arith.constant 0 : index
    %c0_0 = arith.constant 0 : index
    %c0_1 = arith.constant 0 : index
    %0 = vector.load %arg1[%c0, %c0_0, %c0_1] : memref<26x8x26xf32, #tpu.memory_space<vmem>>, vector<26x8x26xf32>
    %1 = vector.shape_cast %0 : vector<26x8x26xf32> to vector<208x26xf32>
    %2 = vector.extract_strided_slice %1 {offsets = [0, 0], sizes = [192, 26], strides = [1, 1]} : vector<208x26xf32> to vector<192x26xf32>
    %3 = arith.truncf %2 : vector<192x26xf32> to vector<192x26xbf16>
    %c0_2 = arith.constant 0 : index
    %c0_3 = arith.constant 0 : index
    %c0_4 = arith.constant 0 : index
    %c0_5 = arith.constant 0 : index
    %4 = vector.load %arg2[%c0_2, %c0_3, %c0_4, %c0_5] : memref<2x3x26x384xbf16, #tpu.memory_space<vmem>>, vector<1x1x26x384xbf16>
    %5 = vector.shape_cast %4 : vector<1x1x26x384xbf16> to vector<26x384xbf16>
    %cst = arith.constant dense<0.000000e+00> : vector<192x384xf32>
    %6 = tpu.matmul %3, %5, %cst {dimension_numbers = #tpu.dot_dimension_numbers<[1], [0], [0], [1], [0, 0, 1, 1], [], []>} : vector<192x26xbf16>, vector<26x384xbf16>, vector<192x384xf32> -> vector<192x384xf32>
    %7 = vector.extract_strided_slice %1 {offsets = [8, 0], sizes = [192, 26], strides = [1, 1]} : vector<208x26xf32> to vector<192x26xf32>
    %8 = arith.truncf %7 : vector<192x26xf32> to vector<192x26xbf16>
    %c0_6 = arith.constant 0 : index
    %c1 = arith.constant 1 : index
    %c0_7 = arith.constant 0 : index
    %c0_8 = arith.constant 0 : index
    %9 = vector.load %arg2[%c0_6, %c1, %c0_7, %c0_8] : memref<2x3x26x384xbf16, #tpu.memory_space<vmem>>, vector<1x1x26x384xbf16>
    %10 = vector.shape_cast %9 : vector<1x1x26x384xbf16> to vector<26x384xbf16>
    %cst_9 = arith.constant dense<0.000000e+00> : vector<192x384xf32>
    %11 = tpu.matmul %8, %10, %cst_9 {dimension_numbers = #tpu.dot_dimension_numbers<[1], [0], [0], [1], [0, 0, 1, 1], [], []>} : vector<192x26xbf16>, vector<26x384xbf16>, vector<192x384xf32> -> vector<192x384xf32>
    %12 = arith.addf %6, %11 : vector<192x384xf32>
    %13 = vector.extract_strided_slice %1 {offsets = [16, 0], sizes = [192, 26], strides = [1, 1]} : vector<208x26xf32> to vector<192x26xf32>
    %14 = arith.truncf %13 : vector<192x26xf32> to vector<192x26xbf16>
    %c0_10 = arith.constant 0 : index
    %c2 = arith.constant 2 : index
    %c0_11 = arith.constant 0 : index
    %c0_12 = arith.constant 0 : index
    %15 = vector.load %arg2[%c0_10, %c2, %c0_11, %c0_12] : memref<2x3x26x384xbf16, #tpu.memory_space<vmem>>, vector<1x1x26x384xbf16>
    %16 = vector.shape_cast %15 : vector<1x1x26x384xbf16> to vector<26x384xbf16>
    %cst_13 = arith.constant dense<0.000000e+00> : vector<192x384xf32>
    %17 = tpu.matmul %14, %16, %cst_13 {dimension_numbers = #tpu.dot_dimension_numbers<[1], [0], [0], [1], [0, 0, 1, 1], [], []>} : vector<192x26xbf16>, vector<26x384xbf16>, vector<192x384xf32> -> vector<192x384xf32>
    %18 = arith.addf %12, %17 : vector<192x384xf32>
    %19 = vector.extract_strided_slice %1 {offsets = [0, 0], sizes = [192, 26], strides = [1, 1]} : vector<208x26xf32> to vector<192x26xf32>
    %20 = arith.truncf %19 : vector<192x26xf32> to vector<192x26xbf16>
    %c1_14 = arith.constant 1 : index
    %c0_15 = arith.constant 0 : index
    %c0_16 = arith.constant 0 : index
    %c0_17 = arith.constant 0 : index
    %21 = vector.load %arg2[%c1_14, %c0_15, %c0_16, %c0_17] : memref<2x3x26x384xbf16, #tpu.memory_space<vmem>>, vector<1x1x26x384xbf16>
    %22 = vector.shape_cast %21 : vector<1x1x26x384xbf16> to vector<26x384xbf16>
    %cst_18 = arith.constant dense<0.000000e+00> : vector<192x384xf32>
    %23 = tpu.matmul %20, %22, %cst_18 {dimension_numbers = #tpu.dot_dimension_numbers<[1], [0], [0], [1], [0, 0, 1, 1], [], []>} : vector<192x26xbf16>, vector<26x384xbf16>, vector<192x384xf32> -> vector<192x384xf32>
    %24 = vector.extract_strided_slice %1 {offsets = [8, 0], sizes = [192, 26], strides = [1, 1]} : vector<208x26xf32> to vector<192x26xf32>
    %25 = arith.truncf %24 : vector<192x26xf32> to vector<192x26xbf16>
    %c1_19 = arith.constant 1 : index
    %c1_20 = arith.constant 1 : index
    %c0_21 = arith.constant 0 : index
    %c0_22 = arith.constant 0 : index
    %26 = vector.load %arg2[%c1_19, %c1_20, %c0_21, %c0_22] : memref<2x3x26x384xbf16, #tpu.memory_space<vmem>>, vector<1x1x26x384xbf16>
    %27 = vector.shape_cast %26 : vector<1x1x26x384xbf16> to vector<26x384xbf16>
    %cst_23 = arith.constant dense<0.000000e+00> : vector<192x384xf32>
    %28 = tpu.matmul %25, %27, %cst_23 {dimension_numbers = #tpu.dot_dimension_numbers<[1], [0], [0], [1], [0, 0, 1, 1], [], []>} : vector<192x26xbf16>, vector<26x384xbf16>, vector<192x384xf32> -> vector<192x384xf32>
    %29 = arith.addf %23, %28 : vector<192x384xf32>
    %30 = vector.extract_strided_slice %1 {offsets = [16, 0], sizes = [192, 26], strides = [1, 1]} : vector<208x26xf32> to vector<192x26xf32>
    %31 = arith.truncf %30 : vector<192x26xf32> to vector<192x26xbf16>
    %c1_24 = arith.constant 1 : index
    %c2_25 = arith.constant 2 : index
    %c0_26 = arith.constant 0 : index
    %c0_27 = arith.constant 0 : index
    %32 = vector.load %arg2[%c1_24, %c2_25, %c0_26, %c0_27] : memref<2x3x26x384xbf16, #tpu.memory_space<vmem>>, vector<1x1x26x384xbf16>
    %33 = vector.shape_cast %32 : vector<1x1x26x384xbf16> to vector<26x384xbf16>
    %cst_28 = arith.constant dense<0.000000e+00> : vector<192x384xf32>
    %34 = tpu.matmul %31, %33, %cst_28 {dimension_numbers = #tpu.dot_dimension_numbers<[1], [0], [0], [1], [0, 0, 1, 1], [], []>} : vector<192x26xbf16>, vector<26x384xbf16>, vector<192x384xf32> -> vector<192x384xf32>
    %35 = arith.addf %29, %34 : vector<192x384xf32>
    %36 = arith.maximumf %18, %35 : vector<192x384xf32>
    %c0_29 = arith.constant 0 : index
    %c0_30 = arith.constant 0 : index
    %c0_31 = arith.constant 0 : index
    %37 = vector.load %arg4[%c0_29, %c0_30, %c0_31] : memref<2x96x192xf32, #tpu.memory_space<vmem>>, vector<1x96x192xf32>
    %38 = vector.shape_cast %37 : vector<1x96x192xf32> to vector<96x192xf32>
    %cst_32 = arith.constant dense<0.000000e+00> : vector<96x384xf32>
    %39 = tpu.matmul %38, %36, %cst_32 {dimension_numbers = #tpu.dot_dimension_numbers<[1], [0], [0], [1], [0, 0, 1, 1], [], []>} : vector<96x192xf32>, vector<192x384xf32>, vector<96x384xf32> -> vector<96x384xf32>
    %c1_33 = arith.constant 1 : index
    %c0_34 = arith.constant 0 : index
    %c0_35 = arith.constant 0 : index
    %40 = vector.load %arg4[%c1_33, %c0_34, %c0_35] : memref<2x96x192xf32, #tpu.memory_space<vmem>>, vector<1x96x192xf32>
    %41 = vector.shape_cast %40 : vector<1x96x192xf32> to vector<96x192xf32>
    %cst_36 = arith.constant dense<0.000000e+00> : vector<96x384xf32>
    %42 = tpu.matmul %41, %36, %cst_36 {dimension_numbers = #tpu.dot_dimension_numbers<[1], [0], [0], [1], [0, 0, 1, 1], [], []>} : vector<96x192xf32>, vector<192x384xf32>, vector<96x384xf32> -> vector<96x384xf32>
    %43 = arith.maximumf %39, %42 : vector<96x384xf32>
    %c0_37 = arith.constant 0 : index
    %c0_38 = arith.constant 0 : index
    %44 = vector.load %arg3[%c0_37, %c0_38] : memref<1x384xf32, #tpu.memory_space<vmem>>, vector<1x384xf32>
    %45 = vector.broadcast %44 : vector<1x384xf32> to vector<96x384xf32>
    %46 = arith.addf %43, %45 : vector<96x384xf32>
    %cst_39 = arith.constant 0.000000e+00 : f32
    %47 = vector.broadcast %cst_39 : f32 to vector<96x384xf32>
    %48 = arith.maximumf %46, %47 : vector<96x384xf32>
    %49 = vector.extract_strided_slice %48 {offsets = [0, 0], sizes = [80, 384], strides = [1, 1]} : vector<96x384xf32> to vector<80x384xf32>
    %50 = arith.truncf %49 : vector<80x384xf32> to vector<80x384xbf16>
    %c0_40 = arith.constant 0 : index
    %c0_41 = arith.constant 0 : index
    %c0_42 = arith.constant 0 : index
    %c0_43 = arith.constant 0 : index
    %51 = vector.load %arg5[%c0_40, %c0_41, %c0_42, %c0_43] : memref<2x3x384x320xbf16, #tpu.memory_space<vmem>>, vector<1x1x384x320xbf16>
    %52 = vector.shape_cast %51 : vector<1x1x384x320xbf16> to vector<384x320xbf16>
    %cst_44 = arith.constant dense<0.000000e+00> : vector<80x320xf32>
    %53 = tpu.matmul %50, %52, %cst_44 {dimension_numbers = #tpu.dot_dimension_numbers<[1], [0], [0], [1], [0, 0, 1, 1], [], []>} : vector<80x384xbf16>, vector<384x320xbf16>, vector<80x320xf32> -> vector<80x320xf32>
    %54 = vector.extract_strided_slice %48 {offsets = [8, 0], sizes = [80, 384], strides = [1, 1]} : vector<96x384xf32> to vector<80x384xf32>
    %55 = arith.truncf %54 : vector<80x384xf32> to vector<80x384xbf16>
    %c0_45 = arith.constant 0 : index
    %c1_46 = arith.constant 1 : index
    %c0_47 = arith.constant 0 : index
    %c0_48 = arith.constant 0 : index
    %56 = vector.load %arg5[%c0_45, %c1_46, %c0_47, %c0_48] : memref<2x3x384x320xbf16, #tpu.memory_space<vmem>>, vector<1x1x384x320xbf16>
    %57 = vector.shape_cast %56 : vector<1x1x384x320xbf16> to vector<384x320xbf16>
    %cst_49 = arith.constant dense<0.000000e+00> : vector<80x320xf32>
    %58 = tpu.matmul %55, %57, %cst_49 {dimension_numbers = #tpu.dot_dimension_numbers<[1], [0], [0], [1], [0, 0, 1, 1], [], []>} : vector<80x384xbf16>, vector<384x320xbf16>, vector<80x320xf32> -> vector<80x320xf32>
    %59 = arith.addf %53, %58 : vector<80x320xf32>
    %60 = vector.extract_strided_slice %48 {offsets = [16, 0], sizes = [80, 384], strides = [1, 1]} : vector<96x384xf32> to vector<80x384xf32>
    %61 = arith.truncf %60 : vector<80x384xf32> to vector<80x384xbf16>
    %c0_50 = arith.constant 0 : index
    %c2_51 = arith.constant 2 : index
    %c0_52 = arith.constant 0 : index
    %c0_53 = arith.constant 0 : index
    %62 = vector.load %arg5[%c0_50, %c2_51, %c0_52, %c0_53] : memref<2x3x384x320xbf16, #tpu.memory_space<vmem>>, vector<1x1x384x320xbf16>
    %63 = vector.shape_cast %62 : vector<1x1x384x320xbf16> to vector<384x320xbf16>
    %cst_54 = arith.constant dense<0.000000e+00> : vector<80x320xf32>
    %64 = tpu.matmul %61, %63, %cst_54 {dimension_numbers = #tpu.dot_dimension_numbers<[1], [0], [0], [1], [0, 0, 1, 1], [], []>} : vector<80x384xbf16>, vector<384x320xbf16>, vector<80x320xf32> -> vector<80x320xf32>
    %65 = arith.addf %59, %64 : vector<80x320xf32>
    %66 = vector.extract_strided_slice %48 {offsets = [0, 0], sizes = [80, 384], strides = [1, 1]} : vector<96x384xf32> to vector<80x384xf32>
    %67 = arith.truncf %66 : vector<80x384xf32> to vector<80x384xbf16>
    %c1_55 = arith.constant 1 : index
    %c0_56 = arith.constant 0 : index
    %c0_57 = arith.constant 0 : index
    %c0_58 = arith.constant 0 : index
    %68 = vector.load %arg5[%c1_55, %c0_56, %c0_57, %c0_58] : memref<2x3x384x320xbf16, #tpu.memory_space<vmem>>, vector<1x1x384x320xbf16>
    %69 = vector.shape_cast %68 : vector<1x1x384x320xbf16> to vector<384x320xbf16>
    %cst_59 = arith.constant dense<0.000000e+00> : vector<80x320xf32>
    %70 = tpu.matmul %67, %69, %cst_59 {dimension_numbers = #tpu.dot_dimension_numbers<[1], [0], [0], [1], [0, 0, 1, 1], [], []>} : vector<80x384xbf16>, vector<384x320xbf16>, vector<80x320xf32> -> vector<80x320xf32>
    %71 = vector.extract_strided_slice %48 {offsets = [8, 0], sizes = [80, 384], strides = [1, 1]} : vector<96x384xf32> to vector<80x384xf32>
    %72 = arith.truncf %71 : vector<80x384xf32> to vector<80x384xbf16>
    %c1_60 = arith.constant 1 : index
    %c1_61 = arith.constant 1 : index
    %c0_62 = arith.constant 0 : index
    %c0_63 = arith.constant 0 : index
    %73 = vector.load %arg5[%c1_60, %c1_61, %c0_62, %c0_63] : memref<2x3x384x320xbf16, #tpu.memory_space<vmem>>, vector<1x1x384x320xbf16>
    %74 = vector.shape_cast %73 : vector<1x1x384x320xbf16> to vector<384x320xbf16>
    %cst_64 = arith.constant dense<0.000000e+00> : vector<80x320xf32>
    %75 = tpu.matmul %72, %74, %cst_64 {dimension_numbers = #tpu.dot_dimension_numbers<[1], [0], [0], [1], [0, 0, 1, 1], [], []>} : vector<80x384xbf16>, vector<384x320xbf16>, vector<80x320xf32> -> vector<80x320xf32>
    %76 = arith.addf %70, %75 : vector<80x320xf32>
    %77 = vector.extract_strided_slice %48 {offsets = [16, 0], sizes = [80, 384], strides = [1, 1]} : vector<96x384xf32> to vector<80x384xf32>
    %78 = arith.truncf %77 : vector<80x384xf32> to vector<80x384xbf16>
    %c1_65 = arith.constant 1 : index
    %c2_66 = arith.constant 2 : index
    %c0_67 = arith.constant 0 : index
    %c0_68 = arith.constant 0 : index
    %79 = vector.load %arg5[%c1_65, %c2_66, %c0_67, %c0_68] : memref<2x3x384x320xbf16, #tpu.memory_space<vmem>>, vector<1x1x384x320xbf16>
    %80 = vector.shape_cast %79 : vector<1x1x384x320xbf16> to vector<384x320xbf16>
    %cst_69 = arith.constant dense<0.000000e+00> : vector<80x320xf32>
    %81 = tpu.matmul %78, %80, %cst_69 {dimension_numbers = #tpu.dot_dimension_numbers<[1], [0], [0], [1], [0, 0, 1, 1], [], []>} : vector<80x384xbf16>, vector<384x320xbf16>, vector<80x320xf32> -> vector<80x320xf32>
    %82 = arith.addf %76, %81 : vector<80x320xf32>
    %83 = arith.maximumf %65, %82 : vector<80x320xf32>
    %c0_70 = arith.constant 0 : index
    %c0_71 = arith.constant 0 : index
    %c0_72 = arith.constant 0 : index
    %84 = vector.load %arg7[%c0_70, %c0_71, %c0_72] : memref<2x40x80xf32, #tpu.memory_space<vmem>>, vector<1x40x80xf32>
    %85 = vector.shape_cast %84 : vector<1x40x80xf32> to vector<40x80xf32>
    %cst_73 = arith.constant dense<0.000000e+00> : vector<40x320xf32>
    %86 = tpu.matmul %85, %83, %cst_73 {dimension_numbers = #tpu.dot_dimension_numbers<[1], [0], [0], [1], [0, 0, 1, 1], [], []>} : vector<40x80xf32>, vector<80x320xf32>, vector<40x320xf32> -> vector<40x320xf32>
    %c1_74 = arith.constant 1 : index
    %c0_75 = arith.constant 0 : index
    %c0_76 = arith.constant 0 : index
    %87 = vector.load %arg7[%c1_74, %c0_75, %c0_76] : memref<2x40x80xf32, #tpu.memory_space<vmem>>, vector<1x40x80xf32>
    %88 = vector.shape_cast %87 : vector<1x40x80xf32> to vector<40x80xf32>
    %cst_77 = arith.constant dense<0.000000e+00> : vector<40x320xf32>
    %89 = tpu.matmul %88, %83, %cst_77 {dimension_numbers = #tpu.dot_dimension_numbers<[1], [0], [0], [1], [0, 0, 1, 1], [], []>} : vector<40x80xf32>, vector<80x320xf32>, vector<40x320xf32> -> vector<40x320xf32>
    %90 = arith.maximumf %86, %89 : vector<40x320xf32>
    %c0_78 = arith.constant 0 : index
    %c0_79 = arith.constant 0 : index
    %91 = vector.load %arg6[%c0_78, %c0_79] : memref<1x320xf32, #tpu.memory_space<vmem>>, vector<1x320xf32>
    %92 = vector.broadcast %91 : vector<1x320xf32> to vector<40x320xf32>
    %93 = arith.addf %90, %92 : vector<40x320xf32>
    %cst_80 = arith.constant 0.000000e+00 : f32
    %94 = vector.broadcast %cst_80 : f32 to vector<40x320xf32>
    %95 = arith.maximumf %93, %94 : vector<40x320xf32>
    %96 = vector.extract_strided_slice %95 {offsets = [0, 0], sizes = [8, 320], strides = [1, 1]} : vector<40x320xf32> to vector<8x320xf32>
    %97 = arith.truncf %96 : vector<8x320xf32> to vector<8x320xbf16>
    %c0_81 = arith.constant 0 : index
    %c0_82 = arith.constant 0 : index
    %c0_83 = arith.constant 0 : index
    %98 = vector.load %arg8[%c0_81, %c0_82, %c0_83] : memref<5x320x64xbf16, #tpu.memory_space<vmem>>, vector<1x320x64xbf16>
    %99 = vector.shape_cast %98 : vector<1x320x64xbf16> to vector<320x64xbf16>
    %cst_84 = arith.constant dense<0.000000e+00> : vector<8x64xf32>
    %100 = tpu.matmul %97, %99, %cst_84 {dimension_numbers = #tpu.dot_dimension_numbers<[1], [0], [0], [1], [0, 0, 1, 1], [], []>} : vector<8x320xbf16>, vector<320x64xbf16>, vector<8x64xf32> -> vector<8x64xf32>
    %101 = vector.extract_strided_slice %95 {offsets = [8, 0], sizes = [8, 320], strides = [1, 1]} : vector<40x320xf32> to vector<8x320xf32>
    %102 = arith.truncf %101 : vector<8x320xf32> to vector<8x320xbf16>
    %c1_85 = arith.constant 1 : index
    %c0_86 = arith.constant 0 : index
    %c0_87 = arith.constant 0 : index
    %103 = vector.load %arg8[%c1_85, %c0_86, %c0_87] : memref<5x320x64xbf16, #tpu.memory_space<vmem>>, vector<1x320x64xbf16>
    %104 = vector.shape_cast %103 : vector<1x320x64xbf16> to vector<320x64xbf16>
    %cst_88 = arith.constant dense<0.000000e+00> : vector<8x64xf32>
    %105 = tpu.matmul %102, %104, %cst_88 {dimension_numbers = #tpu.dot_dimension_numbers<[1], [0], [0], [1], [0, 0, 1, 1], [], []>} : vector<8x320xbf16>, vector<320x64xbf16>, vector<8x64xf32> -> vector<8x64xf32>
    %106 = arith.addf %100, %105 : vector<8x64xf32>
    %107 = vector.extract_strided_slice %95 {offsets = [16, 0], sizes = [8, 320], strides = [1, 1]} : vector<40x320xf32> to vector<8x320xf32>
    %108 = arith.truncf %107 : vector<8x320xf32> to vector<8x320xbf16>
    %c2_89 = arith.constant 2 : index
    %c0_90 = arith.constant 0 : index
    %c0_91 = arith.constant 0 : index
    %109 = vector.load %arg8[%c2_89, %c0_90, %c0_91] : memref<5x320x64xbf16, #tpu.memory_space<vmem>>, vector<1x320x64xbf16>
    %110 = vector.shape_cast %109 : vector<1x320x64xbf16> to vector<320x64xbf16>
    %cst_92 = arith.constant dense<0.000000e+00> : vector<8x64xf32>
    %111 = tpu.matmul %108, %110, %cst_92 {dimension_numbers = #tpu.dot_dimension_numbers<[1], [0], [0], [1], [0, 0, 1, 1], [], []>} : vector<8x320xbf16>, vector<320x64xbf16>, vector<8x64xf32> -> vector<8x64xf32>
    %112 = arith.addf %106, %111 : vector<8x64xf32>
    %113 = vector.extract_strided_slice %95 {offsets = [24, 0], sizes = [8, 320], strides = [1, 1]} : vector<40x320xf32> to vector<8x320xf32>
    %114 = arith.truncf %113 : vector<8x320xf32> to vector<8x320xbf16>
    %c3 = arith.constant 3 : index
    %c0_93 = arith.constant 0 : index
    %c0_94 = arith.constant 0 : index
    %115 = vector.load %arg8[%c3, %c0_93, %c0_94] : memref<5x320x64xbf16, #tpu.memory_space<vmem>>, vector<1x320x64xbf16>
    %116 = vector.shape_cast %115 : vector<1x320x64xbf16> to vector<320x64xbf16>
    %cst_95 = arith.constant dense<0.000000e+00> : vector<8x64xf32>
    %117 = tpu.matmul %114, %116, %cst_95 {dimension_numbers = #tpu.dot_dimension_numbers<[1], [0], [0], [1], [0, 0, 1, 1], [], []>} : vector<8x320xbf16>, vector<320x64xbf16>, vector<8x64xf32> -> vector<8x64xf32>
    %118 = arith.addf %112, %117 : vector<8x64xf32>
    %119 = vector.extract_strided_slice %95 {offsets = [32, 0], sizes = [8, 320], strides = [1, 1]} : vector<40x320xf32> to vector<8x320xf32>
    %120 = arith.truncf %119 : vector<8x320xf32> to vector<8x320xbf16>
    %c4 = arith.constant 4 : index
    %c0_96 = arith.constant 0 : index
    %c0_97 = arith.constant 0 : index
    %121 = vector.load %arg8[%c4, %c0_96, %c0_97] : memref<5x320x64xbf16, #tpu.memory_space<vmem>>, vector<1x320x64xbf16>
    %122 = vector.shape_cast %121 : vector<1x320x64xbf16> to vector<320x64xbf16>
    %cst_98 = arith.constant dense<0.000000e+00> : vector<8x64xf32>
    %123 = tpu.matmul %120, %122, %cst_98 {dimension_numbers = #tpu.dot_dimension_numbers<[1], [0], [0], [1], [0, 0, 1, 1], [], []>} : vector<8x320xbf16>, vector<320x64xbf16>, vector<8x64xf32> -> vector<8x64xf32>
    %124 = arith.addf %118, %123 : vector<8x64xf32>
    %c0_99 = arith.constant 0 : index
    %c0_100 = arith.constant 0 : index
    %125 = vector.load %arg9[%c0_99, %c0_100] : memref<1x64xf32, #tpu.memory_space<vmem>>, vector<1x64xf32>
    %126 = vector.broadcast %125 : vector<1x64xf32> to vector<8x64xf32>
    %127 = arith.addf %124, %126 : vector<8x64xf32>
    %cst_101 = arith.constant 0.000000e+00 : f32
    %128 = vector.broadcast %cst_101 : f32 to vector<8x64xf32>
    %129 = arith.maximumf %127, %128 : vector<8x64xf32>
    %c0_102 = arith.constant 0 : index
    %c0_103 = arith.constant 0 : index
    %130 = vector.load %arg10[%c0_102, %c0_103] : memref<64x2xf32, #tpu.memory_space<vmem>>, vector<64x2xf32>
    %cst_104 = arith.constant dense<0.000000e+00> : vector<8x2xf32>
    %131 = tpu.matmul %129, %130, %cst_104 {dimension_numbers = #tpu.dot_dimension_numbers<[1], [0], [0], [1], [0, 0, 1, 1], [], []>} : vector<8x64xf32>, vector<64x2xf32>, vector<8x2xf32> -> vector<8x2xf32>
    %c0_105 = arith.constant 0 : index
    %c0_106 = arith.constant 0 : index
    %132 = vector.load %arg11[%c0_105, %c0_106] : memref<1x2xf32, #tpu.memory_space<vmem>>, vector<1x2xf32>
    %133 = vector.broadcast %132 : vector<1x2xf32> to vector<8x2xf32>
    %134 = arith.addf %131, %133 : vector<8x2xf32>
    %c0_107 = arith.constant 0 : index
    %c0_108 = arith.constant 0 : index
    %135 = vector.load %arg12[%c0_107, %c0_108] : memref<8x2xf32, #tpu.memory_space<vmem>>, vector<8x2xf32>
    tpu.vector_store %arg12[%c0_107, %c0_108], %134 {strides = array<i32>} : memref<8x2xf32, #tpu.memory_space<vmem>>, vector<8x2xf32>,
    return
  }
  func.func @transform_0(%arg0: i32) -> (i32, i32, i32) {
    %c0_i32 = arith.constant 0 : i32
    %c0_i32_0 = arith.constant 0 : i32
    %c0_i32_1 = arith.constant 0 : i32
    return %c0_i32, %arg0, %c0_i32_0 : i32, i32, i32
  }
  func.func @transform_1(%arg0: i32) -> (i32, i32, i32, i32) {
    %c0_i32 = arith.constant 0 : i32
    %c0_i32_0 = arith.constant 0 : i32
    %c0_i32_1 = arith.constant 0 : i32
    %c0_i32_2 = arith.constant 0 : i32
    %c0_i32_3 = arith.constant 0 : i32
    return %c0_i32, %c0_i32_0, %c0_i32_1, %c0_i32_2 : i32, i32, i32, i32
  }
  func.func @transform_2(%arg0: i32) -> (i32, i32) {
    %c0_i32 = arith.constant 0 : i32
    %c0_i32_0 = arith.constant 0 : i32
    %c0_i32_1 = arith.constant 0 : i32
    return %c0_i32, %c0_i32_0 : i32, i32
  }
  func.func @transform_3(%arg0: i32) -> (i32, i32, i32) {
    %c0_i32 = arith.constant 0 : i32
    %c0_i32_0 = arith.constant 0 : i32
    %c0_i32_1 = arith.constant 0 : i32
    %c0_i32_2 = arith.constant 0 : i32
    return %c0_i32, %c0_i32_0, %c0_i32_1 : i32, i32, i32
  }
  func.func @transform_4(%arg0: i32) -> (i32, i32, i32, i32) {
    %c0_i32 = arith.constant 0 : i32
    %c0_i32_0 = arith.constant 0 : i32
    %c0_i32_1 = arith.constant 0 : i32
    %c0_i32_2 = arith.constant 0 : i32
    %c0_i32_3 = arith.constant 0 : i32
    return %c0_i32, %c0_i32_0, %c0_i32_1, %c0_i32_2 : i32, i32, i32, i32
  }
  func.func @transform_5(%arg0: i32) -> (i32, i32) {
    %c0_i32 = arith.constant 0 : i32
    %c0_i32_0 = arith.constant 0 : i32
    %c0_i32_1 = arith.constant 0 : i32
    return %c0_i32, %c0_i32_0 : i32, i32
  }
  func.func @transform_6(%arg0: i32) -> (i32, i32, i32) {
    %c0_i32 = arith.constant 0 : i32
    %c0_i32_0 = arith.constant 0 : i32
    %c0_i32_1 = arith.constant 0 : i32
    %c0_i32_2 = arith.constant 0 : i32
    return %c0_i32, %c0_i32_0, %c0_i32_1 : i32, i32, i32
  }
  func.func @transform_7(%arg0: i32) -> (i32, i32, i32) {
    %c0_i32 = arith.constant 0 : i32
    %c0_i32_0 = arith.constant 0 : i32
    %c0_i32_1 = arith.constant 0 : i32
    %c0_i32_2 = arith.constant 0 : i32
    return %c0_i32, %c0_i32_0, %c0_i32_1 : i32, i32, i32
  }
  func.func @transform_8(%arg0: i32) -> (i32, i32) {
    %c0_i32 = arith.constant 0 : i32
    %c0_i32_0 = arith.constant 0 : i32
    %c0_i32_1 = arith.constant 0 : i32
    return %c0_i32, %c0_i32_0 : i32, i32
  }
  func.func @transform_9(%arg0: i32) -> (i32, i32) {
    %c0_i32 = arith.constant 0 : i32
    %c0_i32_0 = arith.constant 0 : i32
    %c0_i32_1 = arith.constant 0 : i32
    return %c0_i32, %c0_i32_0 : i32, i32
  }
  func.func @transform_10(%arg0: i32) -> (i32, i32) {
    %c0_i32 = arith.constant 0 : i32
    %c0_i32_0 = arith.constant 0 : i32
    %c0_i32_1 = arith.constant 0 : i32
    return %c0_i32, %c0_i32_0 : i32, i32
  }
  func.func @transform_11(%arg0: i32) -> (i32, i32) {
    %c0_i32 = arith.constant 0 : i32
    %c0_i32_0 = arith.constant 0 : i32
    return %arg0, %c0_i32 : i32, i32
  }
}

</mosaic_0001>

<llo_original>
// kernel: binary_cnn1_forward.1
$region0: #{binary_cnn1_forward.1}
  #allocation0 [shape = 'u32[]', space=smem, size = 0x4, offset = 0x4, fixed_abs, tag = 'smem constant byte address 0x4 - core index']
  #allocation1 [shape = 'u32[72,128]{1,0:T(1,128)}', space=vmem, size = 0x9000, scoped, tag = 'internal scratch']
  %s0 = inlined_call_operand.vmem [shape: f32[26,16,26], index: 0, kind: input, shape index: {}]
  %s1 = inlined_call_operand.vmem [shape: bf16[2,3,26,384], index: 1, kind: input, shape index: {}]
  %s2 = inlined_call_operand.vmem [shape: f32[1,384], index: 2, kind: input, shape index: {}]
  %s3 = inlined_call_operand.vmem [shape: f32[2,96,192], index: 3, kind: input, shape index: {}]
  %s4 = inlined_call_operand.vmem [shape: bf16[2,3,384,320], index: 4, kind: input, shape index: {}]
  %s5 = inlined_call_operand.vmem [shape: f32[1,320], index: 5, kind: input, shape index: {}]
  %s6 = inlined_call_operand.vmem [shape: f32[2,40,80], index: 6, kind: input, shape index: {}]
  %s7 = inlined_call_operand.vmem [shape: bf16[5,320,64], index: 7, kind: input, shape index: {}]
  %s8 = inlined_call_operand.vmem [shape: f32[1,64], index: 8, kind: input, shape index: {}]
  %s9 = inlined_call_operand.vmem [shape: f32[64,2], index: 9, kind: input, shape index: {}]
  %s10 = inlined_call_operand.vmem [shape: f32[1,2], index: 10, kind: input, shape index: {}]
  %s11 = inlined_call_operand.vmem [shape: f32[16,2], index: 11, kind: output, shape index: {}]
  %s12 = sld [smem:[#allocation0]]
  $region115: #{binary_cnn1_forward.1} parent=0
    _
  %s14 = ssub.s32 1, %s12
  %s15 = scalar_select 0, %s14, %s12
  $region1: #{binary_cnn1_forward.1} parent=0
    #allocation2 [shape = 'u8[212992]{0}', space=vmem, size = 0x34000, scoped, tag = 'input window, operand 0']
    loop: start=0, step=1, limit=4
    $region2: #{binary_cnn1_forward.1} parent=1 // loop_pre_header
      _
    $region3: #{binary_cnn1_forward.1} parent=1 // loop_header
      %s17 = sphi 0, %s21
      %p18 = scmp.ge.s32.totalorder %s17, 4
      %s27 = sphi 0, %s29
      %s30 = sphi 0, %s27
      %s31 = sphi 0, %s30
      %s47 = sphi 0, %s31
      %s51 = sphi 0, %s51
      %s53 = sphi 0, %s51
      %s54 = sphi 0, %s53
      %s68 = sphi 0, %s54
      %s72 = sphi 0, %s72
      %s74 = sphi 0, %s72
      %s75 = sphi 0, %s74
      %s89 = sphi 0, %s75
      %s93 = sphi 0, %s93
      %s95 = sphi 0, %s93
      %s96 = sphi 0, %s95
      %s110 = sphi 0, %s96
      %s114 = sphi 0, %s114
      %s116 = sphi 0, %s114
      %s117 = sphi 0, %s116
      %s131 = sphi 0, %s117
      %s135 = sphi 0, %s135
      %s137 = sphi 0, %s135
      %s138 = sphi 0, %s137
      %s152 = sphi 0, %s138
      %s156 = sphi 0, %s156
      %s158 = sphi 0, %s156
      %s159 = sphi 0, %s158
      %s173 = sphi 0, %s159
      %s177 = sphi 0, %s177
      %s179 = sphi 0, %s177
      %s180 = sphi 0, %s179
      %s194 = sphi 0, %s180
      %s198 = sphi 0, %s198
      %s200 = sphi 0, %s198
      %s201 = sphi 0, %s200
      %s215 = sphi 0, %s201
      %s219 = sphi 0, %s219
      %s221 = sphi 0, %s219
      %s222 = sphi 0, %s221
      %s236 = sphi 0, %s222
      %s240 = sphi 0, %s240
      %s242 = sphi 0, %s240
      %s243 = sphi 0, %s242
      %s257 = sphi 0, %s243
      %s263 = sphi 0, %s265
      %s266 = sphi 0, %s263
      %s267 = sphi 0, %s266
      %s283 = sphi 0, %s267
    $region4: #{binary_cnn1_forward.1} parent=1 // loop_header_branch
      %20 = sbr.rel (%p18) target = $region8
    $region5: #{binary_cnn1_forward.1} parent=1 // loop_body
      %s22 = ssub.s32 %s17, 1
      %s23 = ssub.s32 %s17, 2
      %s24 = sadd.s32 %s17, 1
      %s25 = ssub.s32 %s17, %s24
      %p26 = scmp.eq.s32.totalorder %s25, 0
      %s28 = sadd.s32 %s27, 1
      %s29 = scalar_select %p26, %s27, %s28
      %p32 = pneg %p26
      %p33 = scmp.eq.s32.totalorder %s17, 1
      %p34 = por %p32, %p33
      %p35 = scmp.ne.s32.totalorder %s27, %s30
      %p36 = scmp.eq.s32.totalorder %s17, 0
      %p37 = por %p35, %p36
      %p38 = scmp.ne.s32.totalorder %s27, %s30
      %p39 = scmp.eq.s32.totalorder %s22, 1
      %p40 = por %p38, %p39
      %p41 = scmp.ne.s32.totalorder %s30, %s31
      %p42 = scmp.eq.s32.totalorder %s22, 0
      %p43 = por %p41, %p42
      %p44 = scmp.ne.s32.totalorder %s30, %s31
      %p45 = scmp.eq.s32.totalorder %s23, 1
      %p46 = por %p44, %p45
      %p48 = scmp.ne.s32.totalorder %s31, %s47
      %p49 = scmp.eq.s32.totalorder %s23, 0
      %p50 = por %p48, %p49
      %s52 = sadd.s32 %s51, 1
      %p55 = scmp.eq.s32.totalorder %s17, 1
      %p56 = scmp.ne.s32.totalorder %s51, %s53
      %p57 = scmp.eq.s32.totalorder %s17, 0
      %p58 = por %p56, %p57
      %p59 = scmp.ne.s32.totalorder %s51, %s53
      %p60 = scmp.eq.s32.totalorder %s22, 1
      %p61 = por %p59, %p60
      %p62 = scmp.ne.s32.totalorder %s53, %s54
      %p63 = scmp.eq.s32.totalorder %s22, 0
      %p64 = por %p62, %p63
      %p65 = scmp.ne.s32.totalorder %s53, %s54
      %p66 = scmp.eq.s32.totalorder %s23, 1
      %p67 = por %p65, %p66
      %p69 = scmp.ne.s32.totalorder %s54, %s68
      %p70 = scmp.eq.s32.totalorder %s23, 0
      %p71 = por %p69, %p70
      %s73 = sadd.s32 %s72, 1
      %p76 = scmp.eq.s32.totalorder %s17, 1
      %p77 = scmp.ne.s32.totalorder %s72, %s74
      %p78 = scmp.eq.s32.totalorder %s17, 0
      %p79 = por %p77, %p78
      %p80 = scmp.ne.s32.totalorder %s72, %s74
      %p81 = scmp.eq.s32.totalorder %s22, 1
      %p82 = por %p80, %p81
      %p83 = scmp.ne.s32.totalorder %s74, %s75
      %p84 = scmp.eq.s32.totalorder %s22, 0
      %p85 = por %p83, %p84
      %p86 = scmp.ne.s32.totalorder %s74, %s75
      %p87 = scmp.eq.s32.totalorder %s23, 1
      %p88 = por %p86, %p87
      %p90 = scmp.ne.s32.totalorder %s75, %s89
      %p91 = scmp.eq.s32.totalorder %s23, 0
      %p92 = por %p90, %p91
      %s94 = sadd.s32 %s93, 1
      %p97 = scmp.eq.s32.totalorder %s17, 1
      %p98 = scmp.ne.s32.totalorder %s93, %s95
      %p99 = scmp.eq.s32.totalorder %s17, 0
      %p100 = por %p98, %p99
      %p101 = scmp.ne.s32.totalorder %s93, %s95
      %p102 = scmp.eq.s32.totalorder %s22, 1
      %p103 = por %p101, %p102
      %p104 = scmp.ne.s32.totalorder %s95, %s96
      %p105 = scmp.eq.s32.totalorder %s22, 0
      %p106 = por %p104, %p105
      %p107 = scmp.ne.s32.totalorder %s95, %s96
      %p108 = scmp.eq.s32.totalorder %s23, 1
      %p109 = por %p107, %p108
      %p111 = scmp.ne.s32.totalorder %s96, %s110
      %p112 = scmp.eq.s32.totalorder %s23, 0
      %p113 = por %p111, %p112
      %s115 = sadd.s32 %s114, 1
      %p118 = scmp.eq.s32.totalorder %s17, 1
      %p119 = scmp.ne.s32.totalorder %s114, %s116
      %p120 = scmp.eq.s32.totalorder %s17, 0
      %p121 = por %p119, %p120
      %p122 = scmp.ne.s32.totalorder %s114, %s116
      %p123 = scmp.eq.s32.totalorder %s22, 1
      %p124 = por %p122, %p123
      %p125 = scmp.ne.s32.totalorder %s116, %s117
      %p126 = scmp.eq.s32.totalorder %s22, 0
      %p127 = por %p125, %p126
      %p128 = scmp.ne.s32.totalorder %s116, %s117
      %p129 = scmp.eq.s32.totalorder %s23, 1
      %p130 = por %p128, %p129
      %p132 = scmp.ne.s32.totalorder %s117, %s131
      %p133 = scmp.eq.s32.totalorder %s23, 0
      %p134 = por %p132, %p133
      %s136 = sadd.s32 %s135, 1
      %p139 = scmp.eq.s32.totalorder %s17, 1
      %p140 = scmp.ne.s32.totalorder %s135, %s137
      %p141 = scmp.eq.s32.totalorder %s17, 0
      %p142 = por %p140, %p141
      %p143 = scmp.ne.s32.totalorder %s135, %s137
      %p144 = scmp.eq.s32.totalorder %s22, 1
      %p145 = por %p143, %p144
      %p146 = scmp.ne.s32.totalorder %s137, %s138
      %p147 = scmp.eq.s32.totalorder %s22, 0
      %p148 = por %p146, %p147
      %p149 = scmp.ne.s32.totalorder %s137, %s138
      %p150 = scmp.eq.s32.totalorder %s23, 1
      %p151 = por %p149, %p150
      %p153 = scmp.ne.s32.totalorder %s138, %s152
      %p154 = scmp.eq.s32.totalorder %s23, 0
      %p155 = por %p153, %p154
      %s157 = sadd.s32 %s156, 1
      %p160 = scmp.eq.s32.totalorder %s17, 1
      %p161 = scmp.ne.s32.totalorder %s156, %s158
      %p162 = scmp.eq.s32.totalorder %s17, 0
      %p163 = por %p161, %p162
      %p164 = scmp.ne.s32.totalorder %s156, %s158
      %p165 = scmp.eq.s32.totalorder %s22, 1
      %p166 = por %p164, %p165
      %p167 = scmp.ne.s32.totalorder %s158, %s159
      %p168 = scmp.eq.s32.totalorder %s22, 0
      %p169 = por %p167, %p168
      %p170 = scmp.ne.s32.totalorder %s158, %s159
      %p171 = scmp.eq.s32.totalorder %s23, 1
      %p172 = por %p170, %p171
      %p174 = scmp.ne.s32.totalorder %s159, %s173
      %p175 = scmp.eq.s32.totalorder %s23, 0
      %p176 = por %p174, %p175
      %s178 = sadd.s32 %s177, 1
      %p181 = scmp.eq.s32.totalorder %s17, 1
      %p182 = scmp.ne.s32.totalorder %s177, %s179
      %p183 = scmp.eq.s32.totalorder %s17, 0
      %p184 = por %p182, %p183
      %p185 = scmp.ne.s32.totalorder %s177, %s179
      %p186 = scmp.eq.s32.totalorder %s22, 1
      %p187 = por %p185, %p186
      %p188 = scmp.ne.s32.totalorder %s179, %s180
      %p189 = scmp.eq.s32.totalorder %s22, 0
      %p190 = por %p188, %p189
      %p191 = scmp.ne.s32.totalorder %s179, %s180
      %p192 = scmp.eq.s32.totalorder %s23, 1
      %p193 = por %p191, %p192
      %p195 = scmp.ne.s32.totalorder %s180, %s194
      %p196 = scmp.eq.s32.totalorder %s23, 0
      %p197 = por %p195, %p196
      %s199 = sadd.s32 %s198, 1
      %p202 = scmp.eq.s32.totalorder %s17, 1
      %p203 = scmp.ne.s32.totalorder %s198, %s200
      %p204 = scmp.eq.s32.totalorder %s17, 0
      %p205 = por %p203, %p204
      %p206 = scmp.ne.s32.totalorder %s198, %s200
      %p207 = scmp.eq.s32.totalorder %s22, 1
      %p208 = por %p206, %p207
      %p209 = scmp.ne.s32.totalorder %s200, %s201
      %p210 = scmp.eq.s32.totalorder %s22, 0
      %p211 = por %p209, %p210
      %p212 = scmp.ne.s32.totalorder %s200, %s201
      %p213 = scmp.eq.s32.totalorder %s23, 1
      %p214 = por %p212, %p213
      %p216 = scmp.ne.s32.totalorder %s201, %s215
      %p217 = scmp.eq.s32.totalorder %s23, 0
      %p218 = por %p216, %p217
      %s220 = sadd.s32 %s219, 1
      %p223 = scmp.eq.s32.totalorder %s17, 1
      %p224 = scmp.ne.s32.totalorder %s219, %s221
      %p225 = scmp.eq.s32.totalorder %s17, 0
      %p226 = por %p224, %p225
      %p227 = scmp.ne.s32.totalorder %s219, %s221
      %p228 = scmp.eq.s32.totalorder %s22, 1
      %p229 = por %p227, %p228
      %p230 = scmp.ne.s32.totalorder %s221, %s222
      %p231 = scmp.eq.s32.totalorder %s22, 0
      %p232 = por %p230, %p231
      %p233 = scmp.ne.s32.totalorder %s221, %s222
      %p234 = scmp.eq.s32.totalorder %s23, 1
      %p235 = por %p233, %p234
      %p237 = scmp.ne.s32.totalorder %s222, %s236
      %p238 = scmp.eq.s32.totalorder %s23, 0
      %p239 = por %p237, %p238
      %s241 = sadd.s32 %s240, 1
      %p244 = scmp.eq.s32.totalorder %s17, 1
      %p245 = scmp.ne.s32.totalorder %s240, %s242
      %p246 = scmp.eq.s32.totalorder %s17, 0
      %p247 = por %p245, %p246
      %p248 = scmp.ne.s32.totalorder %s240, %s242
      %p249 = scmp.eq.s32.totalorder %s22, 1
      %p250 = por %p248, %p249
      %p251 = scmp.ne.s32.totalorder %s242, %s243
      %p252 = scmp.eq.s32.totalorder %s22, 0
      %p253 = por %p251, %p252
      %p254 = scmp.ne.s32.totalorder %s242, %s243
      %p255 = scmp.eq.s32.totalorder %s23, 1
      %p256 = por %p254, %p255
      %p258 = scmp.ne.s32.totalorder %s243, %s257
      %p259 = scmp.eq.s32.totalorder %s23, 0
      %p260 = por %p258, %p259
      %s261 = ssub.s32 %s17, %s24
      %p262 = scmp.eq.s32.totalorder %s261, 0
      %s264 = sadd.s32 %s263, 1
      %s265 = scalar_select %p262, %s263, %s264
      %p268 = pneg %p262
      %p269 = scmp.eq.s32.totalorder %s17, 1
      %p270 = por %p268, %p269
      %p271 = scmp.ne.s32.totalorder %s263, %s266
      %p272 = scmp.eq.s32.totalorder %s17, 0
      %p273 = por %p271, %p272
      %p274 = scmp.ne.s32.totalorder %s263, %s266
      %p275 = scmp.eq.s32.totalorder %s22, 1
      %p276 = por %p274, %p275
      %p277 = scmp.ne.s32.totalorder %s266, %s267
      %p278 = scmp.eq.s32.totalorder %s22, 0
      %p279 = por %p277, %p278
      %p280 = scmp.ne.s32.totalorder %s266, %s267
      %p281 = scmp.eq.s32.totalorder %s23, 1
      %p282 = por %p280, %p281
      %p284 = scmp.ne.s32.totalorder %s267, %s283
      %p285 = scmp.eq.s32.totalorder %s23, 0
      %p286 = por %p284, %p285
      %p287 = scmp.le.s32.totalorder 1, %s17
      %p288 = scmp.lt.s32.totalorder %s17, 3
      %p289 = pnand %p287, %p288
      %p290 = pneg %p289
      // Predicated region
      $region9: #{binary_cnn1_forward.1} parent=5 // pred_check
        _
      $region10: #{binary_cnn1_forward.1} parent=5 // pred_check_branch
        %292 = sbr.rel (%p289) target = $region12
      $region11: #{binary_cnn1_forward.1} parent=5 // pred_region
        %s293 = ssub.s32 %s17, 1
        // Predicated region
        $region13: #{binary_cnn1_forward.1} parent=11 // pred_check
          %p294 = pneg %p64
        $region14: #{binary_cnn1_forward.1} parent=11 // pred_check_branch
          %296 = sbr.rel (%p294) target = $region16
        $region15: #{binary_cnn1_forward.1} parent=11 // pred_region
          _
        $region16: #{binary_cnn1_forward.1} parent=11 // pred_fallthru
          _
        // Predicated region
        $region17: #{binary_cnn1_forward.1} parent=11 // pred_check
          %p297 = pneg %p85
        $region18: #{binary_cnn1_forward.1} parent=11 // pred_check_branch
          %299 = sbr.rel (%p297) target = $region20
        $region19: #{binary_cnn1_forward.1} parent=11 // pred_region
          _
        $region20: #{binary_cnn1_forward.1} parent=11 // pred_fallthru
          _
        // Predicated region
        $region21: #{binary_cnn1_forward.1} parent=11 // pred_check
          %p300 = pneg %p106
        $region22: #{binary_cnn1_forward.1} parent=11 // pred_check_branch
          %302 = sbr.rel (%p300) target = $region24
        $region23: #{binary_cnn1_forward.1} parent=11 // pred_region
          _
        $region24: #{binary_cnn1_forward.1} parent=11 // pred_fallthru
          _
        // Predicated region
        $region25: #{binary_cnn1_forward.1} parent=11 // pred_check
          %p303 = pneg %p127
        $region26: #{binary_cnn1_forward.1} parent=11 // pred_check_branch
          %305 = sbr.rel (%p303) target = $region28
        $region27: #{binary_cnn1_forward.1} parent=11 // pred_region
          _
        $region28: #{binary_cnn1_forward.1} parent=11 // pred_fallthru
          _
        // Predicated region
        $region29: #{binary_cnn1_forward.1} parent=11 // pred_check
          %p306 = pneg %p148
        $region30: #{binary_cnn1_forward.1} parent=11 // pred_check_branch
          %308 = sbr.rel (%p306) target = $region32
        $region31: #{binary_cnn1_forward.1} parent=11 // pred_region
          _
        $region32: #{binary_cnn1_forward.1} parent=11 // pred_fallthru
          _
        // Predicated region
        $region33: #{binary_cnn1_forward.1} parent=11 // pred_check
          %p309 = pneg %p169
        $region34: #{binary_cnn1_forward.1} parent=11 // pred_check_branch
          %311 = sbr.rel (%p309) target = $region36
        $region35: #{binary_cnn1_forward.1} parent=11 // pred_region
          _
        $region36: #{binary_cnn1_forward.1} parent=11 // pred_fallthru
          _
        // Predicated region
        $region37: #{binary_cnn1_forward.1} parent=11 // pred_check
          %p312 = pneg %p190
        $region38: #{binary_cnn1_forward.1} parent=11 // pred_check_branch
          %314 = sbr.rel (%p312) target = $region40
        $region39: #{binary_cnn1_forward.1} parent=11 // pred_region
          _
        $region40: #{binary_cnn1_forward.1} parent=11 // pred_fallthru
          _
        // Predicated region
        $region41: #{binary_cnn1_forward.1} parent=11 // pred_check
          %p315 = pneg %p211
        $region42: #{binary_cnn1_forward.1} parent=11 // pred_check_branch
          %317 = sbr.rel (%p315) target = $region44
        $region43: #{binary_cnn1_forward.1} parent=11 // pred_region
          _
        $region44: #{binary_cnn1_forward.1} parent=11 // pred_fallthru
          _
        // Predicated region
        $region45: #{binary_cnn1_forward.1} parent=11 // pred_check
          %p318 = pneg %p232
        $region46: #{binary_cnn1_forward.1} parent=11 // pred_check_branch
          %320 = sbr.rel (%p318) target = $region48
        $region47: #{binary_cnn1_forward.1} parent=11 // pred_region
          _
        $region48: #{binary_cnn1_forward.1} parent=11 // pred_fallthru
          _
        // Predicated region
        $region49: #{binary_cnn1_forward.1} parent=11 // pred_check
          %p321 = pneg %p253
        $region50: #{binary_cnn1_forward.1} parent=11 // pred_check_branch
          %323 = sbr.rel (%p321) target = $region52
        $region51: #{binary_cnn1_forward.1} parent=11 // pred_region
          _
        $region52: #{binary_cnn1_forward.1} parent=11 // pred_fallthru
          _
      $region12: #{binary_cnn1_forward.1} parent=5 // pred_fallthru
        _
      %p324 = scmp.lt.s32.totalorder %s17, 2
      // Predicated region
      $region53: #{binary_cnn1_forward.1} parent=5 // pred_check
        %p325 = pneg %p324
      $region54: #{binary_cnn1_forward.1} parent=5 // pred_check_branch
        %327 = sbr.rel (%p325) target = $region56
      $region55: #{binary_cnn1_forward.1} parent=5 // pred_region
        // Predicated region
        $region57: #{binary_cnn1_forward.1} parent=55 // pred_check
          %p328 = pneg %p37
        $region58: #{binary_cnn1_forward.1} parent=55 // pred_check_branch
          %330 = sbr.rel (%p328) target = $region60
        $region59: #{binary_cnn1_forward.1} parent=55 // pred_region
          %s331 = sand.u32 %s27, 1
          %s332 = sand.u32 %s27, 1
          %s333 = smul.addr %s332, 208
          %s334 = scalar_lea.vmem [#allocation2], %s333
          %s335 = smul.addr %s17, 8
          %s336 = scalar_lea.vmem %s0, %s335
          // Predicated region
          $region61: #{binary_cnn1_forward.1} parent=59 // pred_check
            _
          $region62: #{binary_cnn1_forward.1} parent=59 // pred_check_branch
            %338 = sbr.rel (0) target = $region64
          $region63: #{binary_cnn1_forward.1} parent=59 // pred_region
            // Predicated region
            $region65: #{binary_cnn1_forward.1} parent=63 // pred_check
              _
            $region66: #{binary_cnn1_forward.1} parent=63 // pred_check_branch
              %340 = sbr.rel (0) target = $region68
            $region67: #{binary_cnn1_forward.1} parent=63 // pred_region
              // Predicated region
              $region80: #{binary_cnn1_forward.1} parent=67 // pred_check
                _
              $region81: #{binary_cnn1_forward.1} parent=67 // pred_check_branch
                %406 = sbr.rel (0) target = $region83
              $region82: #{binary_cnn1_forward.1} parent=67 // pred_region
                loop: start=0, step=1, limit=1
                $region84: #{binary_cnn1_forward.1} parent=82 // loop_pre_header
                  _
                $region85: #{binary_cnn1_forward.1} parent=82 // loop_header
                  %s408 = sphi 0, %s412
                  %p409 = scmp.ge.s32.totalorder %s408, 1
                  %s413 = sphi %s336, %s336
                  %s414 = sphi %s334, %s334
                $region86: #{binary_cnn1_forward.1} parent=82 // loop_header_branch
                  %411 = sbr.rel (%p409) target = $region90
                $region87: #{binary_cnn1_forward.1} parent=82 // loop_body
                  %v415 = vld [vmem:[%s413] sm:$0xff]
                  %416 = vst [vmem:[%s414] sm:$0xff] %v415
                  %v417 = vld [vmem:[%s413 + $0x10] sm:$0xff]
                  %418 = vst [vmem:[%s414 + $0x8] sm:$0xff] %v417
                  %v419 = vld [vmem:[%s413 + $0x20] sm:$0xff]
                  %420 = vst [vmem:[%s414 + $0x10] sm:$0xff] %v419
                  %v421 = vld [vmem:[%s413 + $0x30] sm:$0xff]
                  %422 = vst [vmem:[%s414 + $0x18] sm:$0xff] %v421
                  %v423 = vld [vmem:[%s413 + $0x40] sm:$0xff]
                  %424 = vst [vmem:[%s414 + $0x20] sm:$0xff] %v423
                  %v425 = vld [vmem:[%s413 + $0x50] sm:$0xff]
                  %426 = vst [vmem:[%s414 + $0x28] sm:$0xff] %v425
                  %v427 = vld [vmem:[%s413 + $0x60] sm:$0xff]
                  %428 = vst [vmem:[%s414 + $0x30] sm:$0xff] %v427
                  %v429 = vld [vmem:[%s413 + $0x70] sm:$0xff]
                  %430 = vst [vmem:[%s414 + $0x38] sm:$0xff] %v429
                  %v431 = vld [vmem:[%s413 + $0x80] sm:$0xff]
                  %432 = vst [vmem:[%s414 + $0x40] sm:$0xff] %v431
                  %v433 = vld [vmem:[%s413 + $0x90] sm:$0xff]
                  %434 = vst [vmem:[%s414 + $0x48] sm:$0xff] %v433
                  %v435 = vld [vmem:[%s413 + $0xa0] sm:$0xff]
                  %436 = vst [vmem:[%s414 + $0x50] sm:$0xff] %v435
                  %v437 = vld [vmem:[%s413 + $0xb0] sm:$0xff]
                  %438 = vst [vmem:[%s414 + $0x58] sm:$0xff] %v437
                  %v439 = vld [vmem:[%s413 + $0xc0] sm:$0xff]
                  %440 = vst [vmem:[%s414 + $0x60] sm:$0xff] %v439
                  %v441 = vld [vmem:[%s413 + $0xd0] sm:$0xff]
                  %442 = vst [vmem:[%s414 + $0x68] sm:$0xff] %v441
                  %v443 = vld [vmem:[%s413 + $0xe0] sm:$0xff]
                  %444 = vst [vmem:[%s414 + $0x70] sm:$0xff] %v443
                  %v445 = vld [vmem:[%s413 + $0xf0] sm:$0xff]
                  %446 = vst [vmem:[%s414 + $0x78] sm:$0xff] %v445
                  %v447 = vld [vmem:[%s413 + $0x100] sm:$0xff]
                  %448 = vst [vmem:[%s414 + $0x80] sm:$0xff] %v447
                  %v449 = vld [vmem:[%s413 + $0x110] sm:$0xff]
                  %450 = vst [vmem:[%s414 + $0x88] sm:$0xff] %v449
                  %v451 = vld [vmem:[%s413 + $0x120] sm:$0xff]
                  %452 = vst [vmem:[%s414 + $0x90] sm:$0xff] %v451
                  %v453 = vld [vmem:[%s413 + $0x130] sm:$0xff]
                  %454 = vst [vmem:[%s414 + $0x98] sm:$0xff] %v453
                  %v455 = vld [vmem:[%s413 + $0x140] sm:$0xff]
                  %456 = vst [vmem:[%s414 + $0xa0] sm:$0xff] %v455
                  %v457 = vld [vmem:[%s413 + $0x150] sm:$0xff]
                  %458 = vst [vmem:[%s414 + $0xa8] sm:$0xff] %v457
                  %v459 = vld [vmem:[%s413 + $0x160] sm:$0xff]
                  %460 = vst [vmem:[%s414 + $0xb0] sm:$0xff] %v459
                  %v461 = vld [vmem:[%s413 + $0x170] sm:$0xff]
                  %462 = vst [vmem:[%s414 + $0xb8] sm:$0xff] %v461
                  %v463 = vld [vmem:[%s413 + $0x180] sm:$0xff]
                  %464 = vst [vmem:[%s414 + $0xc0] sm:$0xff] %v463
                  %v465 = vld [vmem:[%s413 + $0x190] sm:$0xff]
                  %466 = vst [vmem:[%s414 + $0xc8] sm:$0xff] %v465
                $region88: #{binary_cnn1_forward.1} parent=82 // loop_footer
                  %s412 = sadd.s32 1, %s408
                $region89: #{binary_cnn1_forward.1} parent=82 // loop_footer_branch
                  %407 = sbr.rel target = $region85
                $region90: #{binary_cnn1_forward.1} parent=82 // loop_exit
                  _
              $region83: #{binary_cnn1_forward.1} parent=67 // pred_fallthru
                _
              // Predicated region
              $region91: #{binary_cnn1_forward.1} parent=67 // pred_check
                _
              $region92: #{binary_cnn1_forward.1} parent=67 // pred_check_branch
                %468 = sbr.rel target = $region94
              $region93: #{binary_cnn1_forward.1} parent=67 // pred_region
                _
              $region94: #{binary_cnn1_forward.1} parent=67 // pred_fallthru
                _
            $region68: #{binary_cnn1_forward.1} parent=63 // pred_fallthru
              _
            // Predicated region
            $region69: #{binary_cnn1_forward.1} parent=63 // pred_check
              _
            $region70: #{binary_cnn1_forward.1} parent=63 // pred_check_branch
              %342 = sbr.rel target = $region72
            $region71: #{binary_cnn1_forward.1} parent=63 // pred_region
              %s344 = ssub.s32 256, 1
              loop: start=0, step=1, limit=1
              $region73: #{binary_cnn1_forward.1} parent=71 // loop_pre_header
                _
              $region74: #{binary_cnn1_forward.1} parent=71 // loop_header
                %s346 = sphi 0, %s350
                %p347 = scmp.ge.s32.totalorder %s346, 1
                %s351 = sphi %s336, %s336
                %s352 = sphi %s334, %s334
              $region75: #{binary_cnn1_forward.1} parent=71 // loop_header_branch
                %349 = sbr.rel (%p347) target = $region79
              $region76: #{binary_cnn1_forward.1} parent=71 // loop_body
                %v353 = vld [vmem:[%s351] sm:%s344]
                %354 = vst [vmem:[%s352] sm:%s344] %v353
                %v355 = vld [vmem:[%s351 + $0x10] sm:%s344]
                %356 = vst [vmem:[%s352 + $0x8] sm:%s344] %v355
                %v357 = vld [vmem:[%s351 + $0x20] sm:%s344]
                %358 = vst [vmem:[%s352 + $0x10] sm:%s344] %v357
                %v359 = vld [vmem:[%s351 + $0x30] sm:%s344]
                %360 = vst [vmem:[%s352 + $0x18] sm:%s344] %v359
                %v361 = vld [vmem:[%s351 + $0x40] sm:%s344]
                %362 = vst [vmem:[%s352 + $0x20] sm:%s344] %v361
                %v363 = vld [vmem:[%s351 + $0x50] sm:%s344]
                %364 = vst [vmem:[%s352 + $0x28] sm:%s344] %v363
                %v365 = vld [vmem:[%s351 + $0x60] sm:%s344]
                %366 = vst [vmem:[%s352 + $0x30] sm:%s344] %v365
                %v367 = vld [vmem:[%s351 + $0x70] sm:%s344]
                %368 = vst [vmem:[%s352 + $0x38] sm:%s344] %v367
                %v369 = vld [vmem:[%s351 + $0x80] sm:%s344]
                %370 = vst [vmem:[%s352 + $0x40] sm:%s344] %v369
                %v371 = vld [vmem:[%s351 + $0x90] sm:%s344]
                %372 = vst [vmem:[%s352 + $0x48] sm:%s344] %v371
                %v373 = vld [vmem:[%s351 + $0xa0] sm:%s344]
                %374 = vst [vmem:[%s352 + $0x50] sm:%s344] %v373
                %v375 = vld [vmem:[%s351 + $0xb0] sm:%s344]
                %376 = vst [vmem:[%s352 + $0x58] sm:%s344] %v375
                %v377 = vld [vmem:[%s351 + $0xc0] sm:%s344]
                %378 = vst [vmem:[%s352 + $0x60] sm:%s344] %v377
                %v379 = vld [vmem:[%s351 + $0xd0] sm:%s344]
                %380 = vst [vmem:[%s352 + $0x68] sm:%s344] %v379
                %v381 = vld [vmem:[%s351 + $0xe0] sm:%s344]
                %382 = vst [vmem:[%s352 + $0x70] sm:%s344] %v381
                %v383 = vld [vmem:[%s351 + $0xf0] sm:%s344]
                %384 = vst [vmem:[%s352 + $0x78] sm:%s344] %v383
                %v385 = vld [vmem:[%s351 + $0x100] sm:%s344]
                %386 = vst [vmem:[%s352 + $0x80] sm:%s344] %v385
                %v387 = vld [vmem:[%s351 + $0x110] sm:%s344]
                %388 = vst [vmem:[%s352 + $0x88] sm:%s344] %v387
                %v389 = vld [vmem:[%s351 + $0x120] sm:%s344]
                %390 = vst [vmem:[%s352 + $0x90] sm:%s344] %v389
                %v391 = vld [vmem:[%s351 + $0x130] sm:%s344]
                %392 = vst [vmem:[%s352 + $0x98] sm:%s344] %v391
                %v393 = vld [vmem:[%s351 + $0x140] sm:%s344]
                %394 = vst [vmem:[%s352 + $0xa0] sm:%s344] %v393
                %v395 = vld [vmem:[%s351 + $0x150] sm:%s344]
                %396 = vst [vmem:[%s352 + $0xa8] sm:%s344] %v395
                %v397 = vld [vmem:[%s351 + $0x160] sm:%s344]
                %398 = vst [vmem:[%s352 + $0xb0] sm:%s344] %v397
                %v399 = vld [vmem:[%s351 + $0x170] sm:%s344]
                %400 = vst [vmem:[%s352 + $0xb8] sm:%s344] %v399
                %v401 = vld [vmem:[%s351 + $0x180] sm:%s344]
                %402 = vst [vmem:[%s352 + $0xc0] sm:%s344] %v401
                %v403 = vld [vmem:[%s351 + $0x190] sm:%s344]
                %404 = vst [vmem:[%s352 + $0xc8] sm:%s344] %v403
              $region77: #{binary_cnn1_forward.1} parent=71 // loop_footer
                %s350 = sadd.s32 1, %s346
              $region78: #{binary_cnn1_forward.1} parent=71 // loop_footer_branch
                %345 = sbr.rel target = $region74
              $region79: #{binary_cnn1_forward.1} parent=71 // loop_exit
                _
            $region72: #{binary_cnn1_forward.1} parent=63 // pred_fallthru
              _
          $region64: #{binary_cnn1_forward.1} parent=59 // pred_fallthru
            _
          %469 = vnop
        $region60: #{binary_cnn1_forward.1} parent=55 // pred_fallthru
          _
      $region56: #{binary_cnn1_forward.1} parent=5 // pred_fallthru
        _
      %p470 = scmp.le.s32.totalorder 1, %s17
      %p471 = scmp.lt.s32.totalorder %s17, 3
      %p472 = pnand %p470, %p471
      %p473 = pneg %p472
      // Predicated region
      $region95: #{binary_cnn1_forward.1} parent=5 // pred_check
        _
      $region96: #{binary_cnn1_forward.1} parent=5 // pred_check_branch
        %475 = sbr.rel (%p472) target = $region98
      $region97: #{binary_cnn1_forward.1} parent=5 // pred_region
        %s476 = ssub.s32 %s17, 1
        %s477 = sand.u32 %s30, 1
        %s478 = sand.u32 %s30, 1
        %s479 = smul.addr %s478, 208
        %s480 = scalar_lea.vmem [#allocation2], %s479
        // Predicated region
        $region99: #{binary_cnn1_forward.1} parent=97 // pred_check
          %p481 = pneg %p43
        $region100: #{binary_cnn1_forward.1} parent=97 // pred_check_branch
          %483 = sbr.rel (%p481) target = $region102
        $region101: #{binary_cnn1_forward.1} parent=97 // pred_region
          _
        $region102: #{binary_cnn1_forward.1} parent=97 // pred_fallthru
          _
        %s484 = sand.u32 %s30, 1
        %s485 = sand.u32 %s30, 1
        %s486 = smul.addr %s485, 208
        %s487 = scalar_lea.vmem [#allocation2], %s486
        %p488 = pneg %p43
        %p489 = pneg %p40
        %p490 = pneg %p64
        %p491 = pneg %p61
        %p492 = pneg %p85
        %p493 = pneg %p82
        %p494 = pneg %p106
        %p495 = pneg %p103
        %p496 = pneg %p127
        %p497 = pneg %p124
        %p498 = pneg %p148
        %p499 = pneg %p145
        %p500 = pneg %p169
        %p501 = pneg %p166
        %p502 = pneg %p190
        %p503 = pneg %p187
        %p504 = pneg %p211
        %p505 = pneg %p208
        %p506 = pneg %p232
        %p507 = pneg %p229
        %p508 = pneg %p253
        %p509 = pneg %p250
        %p510 = pneg %p279
        %p511 = pneg %p276
        %p512 = scmp.lt.s32.totalorder %s22, 1
        %s513 = scalar_select %p512, %s22, 1
        %s514 = smul.addr %s513, 8
        %s515 = scalar_lea.vmem %s11, %s514
        %p516 = scmp.lt.s32.totalorder %s22, 1
        %s517 = scalar_select %p516, %s22, 1
        %s518 = smul.addr %s517, 8
        %s519 = scalar_lea.vmem %s11, %s518
        %v521 = vld [vmem:[%s480] sm:$0xff]
        %v522 = vld [vmem:[%s480 + $0x8] sm:$0xff]
        %v523 = vld [vmem:[%s480 + $0x10] sm:$0xff]
        %v524 = vld [vmem:[%s480 + $0x18] sm:$0xff]
        %v525 = vld [vmem:[%s480 + $0x20] sm:$0xff]
        %v526 = vld [vmem:[%s480 + $0x28] sm:$0xff]
        %v527 = vld [vmem:[%s480 + $0x30] sm:$0xff]
        %v528 = vld [vmem:[%s480 + $0x38] sm:$0xff]
        %v529 = vld [vmem:[%s480 + $0x40] sm:$0xff]
        %v530 = vld [vmem:[%s480 + $0x48] sm:$0xff]
        %v531 = vld [vmem:[%s480 + $0x50] sm:$0xff]
        %v532 = vld [vmem:[%s480 + $0x58] sm:$0xff]
        %v533 = vld [vmem:[%s480 + $0x60] sm:$0xff]
        %v534 = vld [vmem:[%s480 + $0x68] sm:$0xff]
        %v535 = vld [vmem:[%s480 + $0x70] sm:$0xff]
        %v536 = vld [vmem:[%s480 + $0x78] sm:$0xff]
        %v537 = vld [vmem:[%s480 + $0x80] sm:$0xff]
        %v538 = vld [vmem:[%s480 + $0x88] sm:$0xff]
        %v539 = vld [vmem:[%s480 + $0x90] sm:$0xff]
        %v540 = vld [vmem:[%s480 + $0x98] sm:$0xff]
        %v541 = vld [vmem:[%s480 + $0xa0] sm:$0xff]
        %v542 = vld [vmem:[%s480 + $0xa8] sm:$0xff]
        %v543 = vld [vmem:[%s480 + $0xb0] sm:$0xff]
        %v544 = vld [vmem:[%s480 + $0xb8] sm:$0xff]
        %v545 = vld [vmem:[%s480 + $0xc0] sm:$0xff]
        %v546 = vld [vmem:[%s480 + $0xc8] sm:$0xff]
        %v547 = vpack.c.bf16 %v522, %v521
        %v548 = vpack.c.bf16 %v524, %v523
        %v549 = vpack.c.bf16 %v526, %v525
        %v550 = vpack.c.bf16 %v528, %v527
        %v551 = vpack.c.bf16 %v530, %v529
        %v552 = vpack.c.bf16 %v532, %v531
        %v553 = vpack.c.bf16 %v534, %v533
        %v554 = vpack.c.bf16 %v536, %v535
        %v555 = vpack.c.bf16 %v538, %v537
        %v556 = vpack.c.bf16 %v540, %v539
        %v557 = vpack.c.bf16 %v542, %v541
        %v558 = vpack.c.bf16 %v544, %v543
        %v559 = vld [vmem:[%s1] sm:$0xff]
        %v560 = vld [vmem:[%s1 + $0x8] sm:$0xf]
        %v561 = vld [vmem:[%s1 + $0xc] sm:$0xff]
        %v562 = vld [vmem:[%s1 + $0x14] sm:$0xf]
        %v563 = vld [vmem:[%s1 + $0x18] sm:$0xff]
        %v564 = vld [vmem:[%s1 + $0x20] sm:$0xf]
        %v565 = vld [vmem:[%s1 + $0x24] sm:$0x11]
        %v566 = vld [vmem:[%s1 + $0x2c] sm:$0x1]
        %v567 = vpack.c.bf16 %v523, %v522
        %v568 = vpack.c.bf16 %v525, %v524
        %v569 = vpack.c.bf16 %v527, %v526
        %v570 = vpack.c.bf16 %v529, %v528
        %v571 = vpack.c.bf16 %v531, %v530
        %v572 = vpack.c.bf16 %v533, %v532
        %v573 = vpack.c.bf16 %v535, %v534
        %v574 = vpack.c.bf16 %v537, %v536
        %v575 = vpack.c.bf16 %v539, %v538
        %v576 = vpack.c.bf16 %v541, %v540
        %v577 = vpack.c.bf16 %v543, %v542
        %v578 = vpack.c.bf16 %v545, %v544
        %s579 = scalar_lea.vmem %s1, 48
        %v580 = vld [vmem:[%s579] sm:$0xff]
        %v581 = vld [vmem:[%s579 + $0x8] sm:$0xf]
        %v582 = vld [vmem:[%s579 + $0xc] sm:$0xff]
        %v583 = vld [vmem:[%s579 + $0x14] sm:$0xf]
        %v584 = vld [vmem:[%s579 + $0x18] sm:$0xff]
        %v585 = vld [vmem:[%s579 + $0x20] sm:$0xf]
        %v586 = vld [vmem:[%s579 + $0x24] sm:$0x11]
        %v587 = vld [vmem:[%s579 + $0x2c] sm:$0x1]
        %v596 = vunpack.c.l.b16 %v580
        %v597 = vunpack.c.h.b16 %v580
        %v598 = vunpack.c.l.b16 %v581
        %v599 = vunpack.c.l.b16 %v582
        %v600 = vunpack.c.h.b16 %v582
        %v601 = vunpack.c.l.b16 %v583
        %v602 = vunpack.c.l.b16 %v584
        %v603 = vunpack.c.h.b16 %v584
        %v604 = vunpack.c.l.b16 %v585
        %v605 = vunpack.c.l.b16 %v586
        %v606 = vunpack.c.h.b16 %v586
        %v607 = vunpack.c.l.b16 %v587
        %v608 = vpack.c.b16 %v599, %v596
        %v609 = vpack.c.b16 %v600, %v597
        %v610 = vpack.c.b16 %v601, %v598
        %v611 = vpack.c.b16 %v605, %v602
        %v612 = vpack.c.b16 %v606, %v603
        %v613 = vpack.c.b16 %v607, %v604
        %vm617 = vcmask 211968
        %v619 = vsel %vm617, %v567, 0
        %v622 = vsel %vm617, %v568, 0
        %v625 = vsel %vm617, %v569, 0
        %v628 = vsel %vm617, %v570, 0
        %v631 = vsel %vm617, %v571, 0
        %v634 = vsel %vm617, %v572, 0
        %v637 = vsel %vm617, %v573, 0
        %v640 = vsel %vm617, %v574, 0
        %v643 = vsel %vm617, %v575, 0
        %v646 = vsel %vm617, %v576, 0
        %v649 = vsel %vm617, %v577, 0
        %v652 = vsel %vm617, %v578, 0
        %vm654 = vcmask 1044480
        %v656 = vsel %vm654, %v611, 0
        %v659 = vsel %vm654, %v612, 0
        %v662 = vsel %vm654, %v613, 0
        %664 = vmatpush.bf16.msra.mxu0 0
        %665 = vmatpush.bf16.msra.mxu0 0
        %666 = vmatpush.bf16.msra.mxu0 0
        %667 = vmatpush.bf16.msra.mxu0 0
        %668 = vmatpush.bf16.msra.mxu0 0
        %669 = vmatpush.bf16.msra.mxu0 0
        %670 = vmatpush.bf16.msra.mxu0 %v656
        %671 = vmatpush.bf16.msra.mxu0 %v608
        %672 = vmatmul.bf16.gmra.mxu0 %v619
        %v673 = vpop.f32.mrf.mxu0
        %v674 = vadd.f32 0.0, %v673
        %v675 = vpop.f32.mrf.mxu0
        %v676 = vadd.f32 0.0, %v675
        %677 = vmatmul.bf16.gmra.mxu0 %v622
        %v678 = vpop.f32.mrf.mxu0
        %v679 = vadd.f32 0.0, %v678
        %v680 = vpop.f32.mrf.mxu0
        %v681 = vadd.f32 0.0, %v680
        %682 = vmatmul.bf16.gmra.mxu0 %v625
        %v683 = vpop.f32.mrf.mxu0
        %v684 = vadd.f32 0.0, %v683
        %v685 = vpop.f32.mrf.mxu0
        %v686 = vadd.f32 0.0, %v685
        %687 = vmatmul.bf16.gmra.mxu0 %v628
        %v688 = vpop.f32.mrf.mxu0
        %v689 = vadd.f32 0.0, %v688
        %v690 = vpop.f32.mrf.mxu0
        %v691 = vadd.f32 0.0, %v690
        %692 = vmatmul.bf16.gmra.mxu0 %v631
        %v693 = vpop.f32.mrf.mxu0
        %v694 = vadd.f32 0.0, %v693
        %v695 = vpop.f32.mrf.mxu0
        %v696 = vadd.f32 0.0, %v695
        %697 = vmatmul.bf16.gmra.mxu0 %v634
        %v698 = vpop.f32.mrf.mxu0
        %v699 = vadd.f32 0.0, %v698
        %v700 = vpop.f32.mrf.mxu0
        %v701 = vadd.f32 0.0, %v700
        %702 = vmatmul.bf16.gmra.mxu0 %v637
        %v703 = vpop.f32.mrf.mxu0
        %v704 = vadd.f32 0.0, %v703
        %v705 = vpop.f32.mrf.mxu0
        %v706 = vadd.f32 0.0, %v705
        %707 = vmatmul.bf16.gmra.mxu0 %v640
        %v708 = vpop.f32.mrf.mxu0
        %v709 = vadd.f32 0.0, %v708
        %v710 = vpop.f32.mrf.mxu0
        %v711 = vadd.f32 0.0, %v710
        %712 = vmatmul.bf16.gmra.mxu0 %v643
        %v713 = vpop.f32.mrf.mxu0
        %v714 = vadd.f32 0.0, %v713
        %v715 = vpop.f32.mrf.mxu0
        %v716 = vadd.f32 0.0, %v715
        %717 = vmatmul.bf16.gmra.mxu0 %v646
        %v718 = vpop.f32.mrf.mxu0
        %v719 = vadd.f32 0.0, %v718
        %v720 = vpop.f32.mrf.mxu0
        %v721 = vadd.f32 0.0, %v720
        %722 = vmatmul.bf16.gmra.mxu0 %v649
        %v723 = vpop.f32.mrf.mxu0
        %v724 = vadd.f32 0.0, %v723
        %v725 = vpop.f32.mrf.mxu0
        %v726 = vadd.f32 0.0, %v725
        %727 = vmatmul.bf16.gmra.mxu0 %v652
        %v728 = vpop.f32.mrf.mxu0
        %v729 = vadd.f32 0.0, %v728
        %v730 = vpop.f32.mrf.mxu0
        %v731 = vadd.f32 0.0, %v730
        %732 = vdwg.mxu0
        %733 = vmatpush.bf16.msra.mxu0 0
        %734 = vmatpush.bf16.msra.mxu0 0
        %735 = vmatpush.bf16.msra.mxu0 0
        %736 = vmatpush.bf16.msra.mxu0 0
        %737 = vmatpush.bf16.msra.mxu0 0
        %738 = vmatpush.bf16.msra.mxu0 0
        %739 = vmatpush.bf16.msra.mxu0 %v659
        %740 = vmatpush.bf16.msra.mxu0 %v609
        %741 = vmatmul.bf16.gmra.mxu0 %v619
        %v742 = vpop.f32.mrf.mxu0
        %v743 = vadd.f32 0.0, %v742
        %v744 = vpop.f32.mrf.mxu0
        %v745 = vadd.f32 0.0, %v744
        %746 = vmatmul.bf16.gmra.mxu0 %v622
        %v747 = vpop.f32.mrf.mxu0
        %v748 = vadd.f32 0.0, %v747
        %v749 = vpop.f32.mrf.mxu0
        %v750 = vadd.f32 0.0, %v749
        %751 = vmatmul.bf16.gmra.mxu0 %v625
        %v752 = vpop.f32.mrf.mxu0
        %v753 = vadd.f32 0.0, %v752
        %v754 = vpop.f32.mrf.mxu0
        %v755 = vadd.f32 0.0, %v754
        %756 = vmatmul.bf16.gmra.mxu0 %v628
        %v757 = vpop.f32.mrf.mxu0
        %v758 = vadd.f32 0.0, %v757
        %v759 = vpop.f32.mrf.mxu0
        %v760 = vadd.f32 0.0, %v759
        %761 = vmatmul.bf16.gmra.mxu0 %v631
        %v762 = vpop.f32.mrf.mxu0
        %v763 = vadd.f32 0.0, %v762
        %v764 = vpop.f32.mrf.mxu0
        %v765 = vadd.f32 0.0, %v764
        %766 = vmatmul.bf16.gmra.mxu0 %v634
        %v767 = vpop.f32.mrf.mxu0
        %v768 = vadd.f32 0.0, %v767
        %v769 = vpop.f32.mrf.mxu0
        %v770 = vadd.f32 0.0, %v769
        %771 = vmatmul.bf16.gmra.mxu0 %v637
        %v772 = vpop.f32.mrf.mxu0
        %v773 = vadd.f32 0.0, %v772
        %v774 = vpop.f32.mrf.mxu0
        %v775 = vadd.f32 0.0, %v774
        %776 = vmatmul.bf16.gmra.mxu0 %v640
        %v777 = vpop.f32.mrf.mxu0
        %v778 = vadd.f32 0.0, %v777
        %v779 = vpop.f32.mrf.mxu0
        %v780 = vadd.f32 0.0, %v779
        %781 = vmatmul.bf16.gmra.mxu0 %v643
        %v782 = vpop.f32.mrf.mxu0
        %v783 = vadd.f32 0.0, %v782
        %v784 = vpop.f32.mrf.mxu0
        %v785 = vadd.f32 0.0, %v784
        %786 = vmatmul.bf16.gmra.mxu0 %v646
        %v787 = vpop.f32.mrf.mxu0
        %v788 = vadd.f32 0.0, %v787
        %v789 = vpop.f32.mrf.mxu0
        %v790 = vadd.f32 0.0, %v789
        %791 = vmatmul.bf16.gmra.mxu0 %v649
        %v792 = vpop.f32.mrf.mxu0
        %v793 = vadd.f32 0.0, %v792
        %v794 = vpop.f32.mrf.mxu0
        %v795 = vadd.f32 0.0, %v794
        %796 = vmatmul.bf16.gmra.mxu0 %v652
        %v797 = vpop.f32.mrf.mxu0
        %v798 = vadd.f32 0.0, %v797
        %v799 = vpop.f32.mrf.mxu0
        %v800 = vadd.f32 0.0, %v799
        %801 = vdwg.mxu0
        %802 = vmatpush.bf16.msra.mxu0 0
        %803 = vmatpush.bf16.msra.mxu0 0
        %804 = vmatpush.bf16.msra.mxu0 0
        %805 = vmatpush.bf16.msra.mxu0 0
        %806 = vmatpush.bf16.msra.mxu0 0
        %807 = vmatpush.bf16.msra.mxu0 0
        %808 = vmatpush.bf16.msra.mxu0 %v662
        %809 = vmatpush.bf16.msra.mxu0 %v610
        %810 = vmatmul.bf16.gmra.mxu0 %v619
        %v811 = vpop.f32.mrf.mxu0
        %v812 = vadd.f32 0.0, %v811
        %v813 = vpop.f32.mrf.mxu0
        %v814 = vadd.f32 0.0, %v813
        %815 = vmatmul.bf16.gmra.mxu0 %v622
        %v816 = vpop.f32.mrf.mxu0
        %v817 = vadd.f32 0.0, %v816
        %v818 = vpop.f32.mrf.mxu0
        %v819 = vadd.f32 0.0, %v818
        %820 = vmatmul.bf16.gmra.mxu0 %v625
        %v821 = vpop.f32.mrf.mxu0
        %v822 = vadd.f32 0.0, %v821
        %v823 = vpop.f32.mrf.mxu0
        %v824 = vadd.f32 0.0, %v823
        %825 = vmatmul.bf16.gmra.mxu0 %v628
        %v826 = vpop.f32.mrf.mxu0
        %v827 = vadd.f32 0.0, %v826
        %v828 = vpop.f32.mrf.mxu0
        %v829 = vadd.f32 0.0, %v828
        %830 = vmatmul.bf16.gmra.mxu0 %v631
        %v831 = vpop.f32.mrf.mxu0
        %v832 = vadd.f32 0.0, %v831
        %v833 = vpop.f32.mrf.mxu0
        %v834 = vadd.f32 0.0, %v833
        %835 = vmatmul.bf16.gmra.mxu0 %v634
        %v836 = vpop.f32.mrf.mxu0
        %v837 = vadd.f32 0.0, %v836
        %v838 = vpop.f32.mrf.mxu0
        %v839 = vadd.f32 0.0, %v838
        %840 = vmatmul.bf16.gmra.mxu0 %v637
        %v841 = vpop.f32.mrf.mxu0
        %v842 = vadd.f32 0.0, %v841
        %v843 = vpop.f32.mrf.mxu0
        %v844 = vadd.f32 0.0, %v843
        %845 = vmatmul.bf16.gmra.mxu0 %v640
        %v846 = vpop.f32.mrf.mxu0
        %v847 = vadd.f32 0.0, %v846
        %v848 = vpop.f32.mrf.mxu0
        %v849 = vadd.f32 0.0, %v848
        %850 = vmatmul.bf16.gmra.mxu0 %v643
        %v851 = vpop.f32.mrf.mxu0
        %v852 = vadd.f32 0.0, %v851
        %v853 = vpop.f32.mrf.mxu0
        %v854 = vadd.f32 0.0, %v853
        %855 = vmatmul.bf16.gmra.mxu0 %v646
        %v856 = vpop.f32.mrf.mxu0
        %v857 = vadd.f32 0.0, %v856
        %v858 = vpop.f32.mrf.mxu0
        %v859 = vadd.f32 0.0, %v858
        %860 = vmatmul.bf16.gmra.mxu0 %v649
        %v861 = vpop.f32.mrf.mxu0
        %v862 = vadd.f32 0.0, %v861
        %v863 = vpop.f32.mrf.mxu0
        %v864 = vadd.f32 0.0, %v863
        %865 = vmatmul.bf16.gmra.mxu0 %v652
        %v866 = vpop.f32.mrf.mxu0
        %v867 = vadd.f32 0.0, %v866
        %v868 = vpop.f32.mrf.mxu0
        %v869 = vadd.f32 0.0, %v868
        %870 = vdwg.mxu0
        %v879 = vunpack.c.l.b16 %v559
        %v880 = vunpack.c.h.b16 %v559
        %v881 = vunpack.c.l.b16 %v560
        %v882 = vunpack.c.l.b16 %v561
        %v883 = vunpack.c.h.b16 %v561
        %v884 = vunpack.c.l.b16 %v562
        %v885 = vunpack.c.l.b16 %v563
        %v886 = vunpack.c.h.b16 %v563
        %v887 = vunpack.c.l.b16 %v564
        %v888 = vunpack.c.l.b16 %v565
        %v889 = vunpack.c.h.b16 %v565
        %v890 = vunpack.c.l.b16 %v566
        %v891 = vpack.c.b16 %v882, %v879
        %v892 = vpack.c.b16 %v883, %v880
        %v893 = vpack.c.b16 %v884, %v881
        %v894 = vpack.c.b16 %v888, %v885
        %v895 = vpack.c.b16 %v889, %v886
        %v896 = vpack.c.b16 %v890, %v887
        %v901 = vsel %vm617, %v547, 0
        %v904 = vsel %vm617, %v548, 0
        %v907 = vsel %vm617, %v549, 0
        %v910 = vsel %vm617, %v550, 0
        %v913 = vsel %vm617, %v551, 0
        %v916 = vsel %vm617, %v552, 0
        %v919 = vsel %vm617, %v553, 0
        %v922 = vsel %vm617, %v554, 0
        %v925 = vsel %vm617, %v555, 0
        %v928 = vsel %vm617, %v556, 0
        %v931 = vsel %vm617, %v557, 0
        %v934 = vsel %vm617, %v558, 0
        %v937 = vsel %vm654, %v894, 0
        %v940 = vsel %vm654, %v895, 0
        %v943 = vsel %vm654, %v896, 0
        %945 = vmatpush.bf16.msra.mxu0 0
        %946 = vmatpush.bf16.msra.mxu0 0
        %947 = vmatpush.bf16.msra.mxu0 0
        %948 = vmatpush.bf16.msra.mxu0 0
        %949 = vmatpush.bf16.msra.mxu0 0
        %950 = vmatpush.bf16.msra.mxu0 0
        %951 = vmatpush.bf16.msra.mxu0 %v937
        %952 = vmatpush.bf16.msra.mxu0 %v891
        %953 = vmatmul.bf16.gmra.mxu0 %v901
        %v954 = vpop.f32.mrf.mxu0
        %v955 = vadd.f32 %v674, %v954
        %v956 = vpop.f32.mrf.mxu0
        %v957 = vadd.f32 %v676, %v956
        %958 = vmatmul.bf16.gmra.mxu0 %v904
        %v959 = vpop.f32.mrf.mxu0
        %v960 = vadd.f32 %v679, %v959
        %v961 = vpop.f32.mrf.mxu0
        %v962 = vadd.f32 %v681, %v961
        %963 = vmatmul.bf16.gmra.mxu0 %v907
        %v964 = vpop.f32.mrf.mxu0
        %v965 = vadd.f32 %v684, %v964
        %v966 = vpop.f32.mrf.mxu0
        %v967 = vadd.f32 %v686, %v966
        %968 = vmatmul.bf16.gmra.mxu0 %v910
        %v969 = vpop.f32.mrf.mxu0
        %v970 = vadd.f32 %v689, %v969
        %v971 = vpop.f32.mrf.mxu0
        %v972 = vadd.f32 %v691, %v971
        %973 = vmatmul.bf16.gmra.mxu0 %v913
        %v974 = vpop.f32.mrf.mxu0
        %v975 = vadd.f32 %v694, %v974
        %v976 = vpop.f32.mrf.mxu0
        %v977 = vadd.f32 %v696, %v976
        %978 = vmatmul.bf16.gmra.mxu0 %v916
        %v979 = vpop.f32.mrf.mxu0
        %v980 = vadd.f32 %v699, %v979
        %v981 = vpop.f32.mrf.mxu0
        %v982 = vadd.f32 %v701, %v981
        %983 = vmatmul.bf16.gmra.mxu0 %v919
        %v984 = vpop.f32.mrf.mxu0
        %v985 = vadd.f32 %v704, %v984
        %v986 = vpop.f32.mrf.mxu0
        %v987 = vadd.f32 %v706, %v986
        %988 = vmatmul.bf16.gmra.mxu0 %v922
        %v989 = vpop.f32.mrf.mxu0
        %v990 = vadd.f32 %v709, %v989
        %v991 = vpop.f32.mrf.mxu0
        %v992 = vadd.f32 %v711, %v991
        %993 = vmatmul.bf16.gmra.mxu0 %v925
        %v994 = vpop.f32.mrf.mxu0
        %v995 = vadd.f32 %v714, %v994
        %v996 = vpop.f32.mrf.mxu0
        %v997 = vadd.f32 %v716, %v996
        %998 = vmatmul.bf16.gmra.mxu0 %v928
        %v999 = vpop.f32.mrf.mxu0
        %v1000 = vadd.f32 %v719, %v999
        %v1001 = vpop.f32.mrf.mxu0
        %v1002 = vadd.f32 %v721, %v1001
        %1003 = vmatmul.bf16.gmra.mxu0 %v931
        %v1004 = vpop.f32.mrf.mxu0
        %v1005 = vadd.f32 %v724, %v1004
        %v1006 = vpop.f32.mrf.mxu0
        %v1007 = vadd.f32 %v726, %v1006
        %1008 = vmatmul.bf16.gmra.mxu0 %v934
        %v1009 = vpop.f32.mrf.mxu0
        %v1010 = vadd.f32 %v729, %v1009
        %v1011 = vpop.f32.mrf.mxu0
        %v1012 = vadd.f32 %v731, %v1011
        %1013 = vdwg.mxu0
        %1014 = vmatpush.bf16.msra.mxu0 0
        %1015 = vmatpush.bf16.msra.mxu0 0
        %1016 = vmatpush.bf16.msra.mxu0 0
        %1017 = vmatpush.bf16.msra.mxu0 0
        %1018 = vmatpush.bf16.msra.mxu0 0
        %1019 = vmatpush.bf16.msra.mxu0 0
        %1020 = vmatpush.bf16.msra.mxu0 %v940
        %1021 = vmatpush.bf16.msra.mxu0 %v892
        %1022 = vmatmul.bf16.gmra.mxu0 %v901
        %v1023 = vpop.f32.mrf.mxu0
        %v1024 = vadd.f32 %v743, %v1023
        %v1025 = vpop.f32.mrf.mxu0
        %v1026 = vadd.f32 %v745, %v1025
        %1027 = vmatmul.bf16.gmra.mxu0 %v904
        %v1028 = vpop.f32.mrf.mxu0
        %v1029 = vadd.f32 %v748, %v1028
        %v1030 = vpop.f32.mrf.mxu0
        %v1031 = vadd.f32 %v750, %v1030
        %1032 = vmatmul.bf16.gmra.mxu0 %v907
        %v1033 = vpop.f32.mrf.mxu0
        %v1034 = vadd.f32 %v753, %v1033
        %v1035 = vpop.f32.mrf.mxu0
        %v1036 = vadd.f32 %v755, %v1035
        %1037 = vmatmul.bf16.gmra.mxu0 %v910
        %v1038 = vpop.f32.mrf.mxu0
        %v1039 = vadd.f32 %v758, %v1038
        %v1040 = vpop.f32.mrf.mxu0
        %v1041 = vadd.f32 %v760, %v1040
        %1042 = vmatmul.bf16.gmra.mxu0 %v913
        %v1043 = vpop.f32.mrf.mxu0
        %v1044 = vadd.f32 %v763, %v1043
        %v1045 = vpop.f32.mrf.mxu0
        %v1046 = vadd.f32 %v765, %v1045
        %1047 = vmatmul.bf16.gmra.mxu0 %v916
        %v1048 = vpop.f32.mrf.mxu0
        %v1049 = vadd.f32 %v768, %v1048
        %v1050 = vpop.f32.mrf.mxu0
        %v1051 = vadd.f32 %v770, %v1050
        %1052 = vmatmul.bf16.gmra.mxu0 %v919
        %v1053 = vpop.f32.mrf.mxu0
        %v1054 = vadd.f32 %v773, %v1053
        %v1055 = vpop.f32.mrf.mxu0
        %v1056 = vadd.f32 %v775, %v1055
        %1057 = vmatmul.bf16.gmra.mxu0 %v922
        %v1058 = vpop.f32.mrf.mxu0
        %v1059 = vadd.f32 %v778, %v1058
        %v1060 = vpop.f32.mrf.mxu0
        %v1061 = vadd.f32 %v780, %v1060
        %1062 = vmatmul.bf16.gmra.mxu0 %v925
        %v1063 = vpop.f32.mrf.mxu0
        %v1064 = vadd.f32 %v783, %v1063
        %v1065 = vpop.f32.mrf.mxu0
        %v1066 = vadd.f32 %v785, %v1065
        %1067 = vmatmul.bf16.gmra.mxu0 %v928
        %v1068 = vpop.f32.mrf.mxu0
        %v1069 = vadd.f32 %v788, %v1068
        %v1070 = vpop.f32.mrf.mxu0
        %v1071 = vadd.f32 %v790, %v1070
        %1072 = vmatmul.bf16.gmra.mxu0 %v931
        %v1073 = vpop.f32.mrf.mxu0
        %v1074 = vadd.f32 %v793, %v1073
        %v1075 = vpop.f32.mrf.mxu0
        %v1076 = vadd.f32 %v795, %v1075
        %1077 = vmatmul.bf16.gmra.mxu0 %v934
        %v1078 = vpop.f32.mrf.mxu0
        %v1079 = vadd.f32 %v798, %v1078
        %v1080 = vpop.f32.mrf.mxu0
        %v1081 = vadd.f32 %v800, %v1080
        %1082 = vdwg.mxu0
        %1083 = vmatpush.bf16.msra.mxu0 0
        %1084 = vmatpush.bf16.msra.mxu0 0
        %1085 = vmatpush.bf16.msra.mxu0 0
        %1086 = vmatpush.bf16.msra.mxu0 0
        %1087 = vmatpush.bf16.msra.mxu0 0
        %1088 = vmatpush.bf16.msra.mxu0 0
        %1089 = vmatpush.bf16.msra.mxu0 %v943
        %1090 = vmatpush.bf16.msra.mxu0 %v893
        %1091 = vmatmul.bf16.gmra.mxu0 %v901
        %v1092 = vpop.f32.mrf.mxu0
        %v1093 = vadd.f32 %v812, %v1092
        %v1094 = vpop.f32.mrf.mxu0
        %v1095 = vadd.f32 %v814, %v1094
        %1096 = vmatmul.bf16.gmra.mxu0 %v904
        %v1097 = vpop.f32.mrf.mxu0
        %v1098 = vadd.f32 %v817, %v1097
        %v1099 = vpop.f32.mrf.mxu0
        %v1100 = vadd.f32 %v819, %v1099
        %1101 = vmatmul.bf16.gmra.mxu0 %v907
        %v1102 = vpop.f32.mrf.mxu0
        %v1103 = vadd.f32 %v822, %v1102
        %v1104 = vpop.f32.mrf.mxu0
        %v1105 = vadd.f32 %v824, %v1104
        %1106 = vmatmul.bf16.gmra.mxu0 %v910
        %v1107 = vpop.f32.mrf.mxu0
        %v1108 = vadd.f32 %v827, %v1107
        %v1109 = vpop.f32.mrf.mxu0
        %v1110 = vadd.f32 %v829, %v1109
        %1111 = vmatmul.bf16.gmra.mxu0 %v913
        %v1112 = vpop.f32.mrf.mxu0
        %v1113 = vadd.f32 %v832, %v1112
        %v1114 = vpop.f32.mrf.mxu0
        %v1115 = vadd.f32 %v834, %v1114
        %1116 = vmatmul.bf16.gmra.mxu0 %v916
        %v1117 = vpop.f32.mrf.mxu0
        %v1118 = vadd.f32 %v837, %v1117
        %v1119 = vpop.f32.mrf.mxu0
        %v1120 = vadd.f32 %v839, %v1119
        %1121 = vmatmul.bf16.gmra.mxu0 %v919
        %v1122 = vpop.f32.mrf.mxu0
        %v1123 = vadd.f32 %v842, %v1122
        %v1124 = vpop.f32.mrf.mxu0
        %v1125 = vadd.f32 %v844, %v1124
        %1126 = vmatmul.bf16.gmra.mxu0 %v922
        %v1127 = vpop.f32.mrf.mxu0
        %v1128 = vadd.f32 %v847, %v1127
        %v1129 = vpop.f32.mrf.mxu0
        %v1130 = vadd.f32 %v849, %v1129
        %1131 = vmatmul.bf16.gmra.mxu0 %v925
        %v1132 = vpop.f32.mrf.mxu0
        %v1133 = vadd.f32 %v852, %v1132
        %v1134 = vpop.f32.mrf.mxu0
        %v1135 = vadd.f32 %v854, %v1134
        %1136 = vmatmul.bf16.gmra.mxu0 %v928
        %v1137 = vpop.f32.mrf.mxu0
        %v1138 = vadd.f32 %v857, %v1137
        %v1139 = vpop.f32.mrf.mxu0
        %v1140 = vadd.f32 %v859, %v1139
        %1141 = vmatmul.bf16.gmra.mxu0 %v931
        %v1142 = vpop.f32.mrf.mxu0
        %v1143 = vadd.f32 %v862, %v1142
        %v1144 = vpop.f32.mrf.mxu0
        %v1145 = vadd.f32 %v864, %v1144
        %1146 = vmatmul.bf16.gmra.mxu0 %v934
        %v1147 = vpop.f32.mrf.mxu0
        %v1148 = vadd.f32 %v867, %v1147
        %v1149 = vpop.f32.mrf.mxu0
        %v1150 = vadd.f32 %v869, %v1149
        %1151 = vdwg.mxu0
        %v1152 = vpack.c.bf16 %v546, %v545
        %s1153 = scalar_lea.vmem %s1, 96
        %v1154 = vld [vmem:[%s1153] sm:$0xff]
        %v1155 = vld [vmem:[%s1153 + $0x8] sm:$0xf]
        %v1156 = vld [vmem:[%s1153 + $0xc] sm:$0xff]
        %v1157 = vld [vmem:[%s1153 + $0x14] sm:$0xf]
        %v1158 = vld [vmem:[%s1153 + $0x18] sm:$0xff]
        %v1159 = vld [vmem:[%s1153 + $0x20] sm:$0xf]
        %v1160 = vld [vmem:[%s1153 + $0x24] sm:$0x11]
        %v1161 = vld [vmem:[%s1153 + $0x2c] sm:$0x1]
        %v1170 = vunpack.c.l.b16 %v1154
        %v1171 = vunpack.c.h.b16 %v1154
        %v1172 = vunpack.c.l.b16 %v1155
        %v1173 = vunpack.c.l.b16 %v1156
        %v1174 = vunpack.c.h.b16 %v1156
        %v1175 = vunpack.c.l.b16 %v1157
        %v1176 = vunpack.c.l.b16 %v1158
        %v1177 = vunpack.c.h.b16 %v1158
        %v1178 = vunpack.c.l.b16 %v1159
        %v1179 = vunpack.c.l.b16 %v1160
        %v1180 = vunpack.c.h.b16 %v1160
        %v1181 = vunpack.c.l.b16 %v1161
        %v1182 = vpack.c.b16 %v1173, %v1170
        %v1183 = vpack.c.b16 %v1174, %v1171
        %v1184 = vpack.c.b16 %v1175, %v1172
        %v1185 = vpack.c.b16 %v1179, %v1176
        %v1186 = vpack.c.b16 %v1180, %v1177
        %v1187 = vpack.c.b16 %v1181, %v1178
        %v1192 = vsel %vm617, %v1152, 0
        %v1195 = vsel %vm654, %v1185, 0
        %v1198 = vsel %vm654, %v1186, 0
        %v1201 = vsel %vm654, %v1187, 0
        %1203 = vmatpush.bf16.msra.mxu0 0
        %1204 = vmatpush.bf16.msra.mxu0 0
        %1205 = vmatpush.bf16.msra.mxu0 0
        %1206 = vmatpush.bf16.msra.mxu0 0
        %1207 = vmatpush.bf16.msra.mxu0 0
        %1208 = vmatpush.bf16.msra.mxu0 0
        %1209 = vmatpush.bf16.msra.mxu0 %v1195
        %1210 = vmatpush.bf16.msra.mxu0 %v1182
        %1211 = vmatmul.bf16.gmra.mxu0 %v904
        %v1212 = vpop.f32.mrf.mxu0
        %v1213 = vadd.f32 0.0, %v1212
        %v1214 = vpop.f32.mrf.mxu0
        %v1215 = vadd.f32 0.0, %v1214
        %1216 = vmatmul.bf16.gmra.mxu0 %v907
        %v1217 = vpop.f32.mrf.mxu0
        %v1218 = vadd.f32 0.0, %v1217
        %v1219 = vpop.f32.mrf.mxu0
        %v1220 = vadd.f32 0.0, %v1219
        %1221 = vmatmul.bf16.gmra.mxu0 %v910
        %v1222 = vpop.f32.mrf.mxu0
        %v1223 = vadd.f32 0.0, %v1222
        %v1224 = vpop.f32.mrf.mxu0
        %v1225 = vadd.f32 0.0, %v1224
        %1226 = vmatmul.bf16.gmra.mxu0 %v913
        %v1227 = vpop.f32.mrf.mxu0
        %v1228 = vadd.f32 0.0, %v1227
        %v1229 = vpop.f32.mrf.mxu0
        %v1230 = vadd.f32 0.0, %v1229
        %1231 = vmatmul.bf16.gmra.mxu0 %v916
        %v1232 = vpop.f32.mrf.mxu0
        %v1233 = vadd.f32 0.0, %v1232
        %v1234 = vpop.f32.mrf.mxu0
        %v1235 = vadd.f32 0.0, %v1234
        %1236 = vmatmul.bf16.gmra.mxu0 %v919
        %v1237 = vpop.f32.mrf.mxu0
        %v1238 = vadd.f32 0.0, %v1237
        %v1239 = vpop.f32.mrf.mxu0
        %v1240 = vadd.f32 0.0, %v1239
        %1241 = vmatmul.bf16.gmra.mxu0 %v922
        %v1242 = vpop.f32.mrf.mxu0
        %v1243 = vadd.f32 0.0, %v1242
        %v1244 = vpop.f32.mrf.mxu0
        %v1245 = vadd.f32 0.0, %v1244
        %1246 = vmatmul.bf16.gmra.mxu0 %v925
        %v1247 = vpop.f32.mrf.mxu0
        %v1248 = vadd.f32 0.0, %v1247
        %v1249 = vpop.f32.mrf.mxu0
        %v1250 = vadd.f32 0.0, %v1249
        %1251 = vmatmul.bf16.gmra.mxu0 %v928
        %v1252 = vpop.f32.mrf.mxu0
        %v1253 = vadd.f32 0.0, %v1252
        %v1254 = vpop.f32.mrf.mxu0
        %v1255 = vadd.f32 0.0, %v1254
        %1256 = vmatmul.bf16.gmra.mxu0 %v931
        %v1257 = vpop.f32.mrf.mxu0
        %v1258 = vadd.f32 0.0, %v1257
        %v1259 = vpop.f32.mrf.mxu0
        %v1260 = vadd.f32 0.0, %v1259
        %1261 = vmatmul.bf16.gmra.mxu0 %v934
        %v1262 = vpop.f32.mrf.mxu0
        %v1263 = vadd.f32 0.0, %v1262
        %v1264 = vpop.f32.mrf.mxu0
        %v1265 = vadd.f32 0.0, %v1264
        %1266 = vmatmul.bf16.gmra.mxu0 %v1192
        %v1267 = vpop.f32.mrf.mxu0
        %v1268 = vadd.f32 0.0, %v1267
        %v1269 = vpop.f32.mrf.mxu0
        %v1270 = vadd.f32 0.0, %v1269
        %1271 = vdwg.mxu0
        %1272 = vmatpush.bf16.msra.mxu0 0
        %1273 = vmatpush.bf16.msra.mxu0 0
        %1274 = vmatpush.bf16.msra.mxu0 0
        %1275 = vmatpush.bf16.msra.mxu0 0
        %1276 = vmatpush.bf16.msra.mxu0 0
        %1277 = vmatpush.bf16.msra.mxu0 0
        %1278 = vmatpush.bf16.msra.mxu0 %v1198
        %1279 = vmatpush.bf16.msra.mxu0 %v1183
        %1280 = vmatmul.bf16.gmra.mxu0 %v904
        %v1281 = vpop.f32.mrf.mxu0
        %v1282 = vadd.f32 0.0, %v1281
        %v1283 = vpop.f32.mrf.mxu0
        %v1284 = vadd.f32 0.0, %v1283
        %1285 = vmatmul.bf16.gmra.mxu0 %v907
        %v1286 = vpop.f32.mrf.mxu0
        %v1287 = vadd.f32 0.0, %v1286
        %v1288 = vpop.f32.mrf.mxu0
        %v1289 = vadd.f32 0.0, %v1288
        %1290 = vmatmul.bf16.gmra.mxu0 %v910
        %v1291 = vpop.f32.mrf.mxu0
        %v1292 = vadd.f32 0.0, %v1291
        %v1293 = vpop.f32.mrf.mxu0
        %v1294 = vadd.f32 0.0, %v1293
        %1295 = vmatmul.bf16.gmra.mxu0 %v913
        %v1296 = vpop.f32.mrf.mxu0
        %v1297 = vadd.f32 0.0, %v1296
        %v1298 = vpop.f32.mrf.mxu0
        %v1299 = vadd.f32 0.0, %v1298
        %1300 = vmatmul.bf16.gmra.mxu0 %v916
        %v1301 = vpop.f32.mrf.mxu0
        %v1302 = vadd.f32 0.0, %v1301
        %v1303 = vpop.f32.mrf.mxu0
        %v1304 = vadd.f32 0.0, %v1303
        %1305 = vmatmul.bf16.gmra.mxu0 %v919
        %v1306 = vpop.f32.mrf.mxu0
        %v1307 = vadd.f32 0.0, %v1306
        %v1308 = vpop.f32.mrf.mxu0
        %v1309 = vadd.f32 0.0, %v1308
        %1310 = vmatmul.bf16.gmra.mxu0 %v922
        %v1311 = vpop.f32.mrf.mxu0
        %v1312 = vadd.f32 0.0, %v1311
        %v1313 = vpop.f32.mrf.mxu0
        %v1314 = vadd.f32 0.0, %v1313
        %1315 = vmatmul.bf16.gmra.mxu0 %v925
        %v1316 = vpop.f32.mrf.mxu0
        %v1317 = vadd.f32 0.0, %v1316
        %v1318 = vpop.f32.mrf.mxu0
        %v1319 = vadd.f32 0.0, %v1318
        %1320 = vmatmul.bf16.gmra.mxu0 %v928
        %v1321 = vpop.f32.mrf.mxu0
        %v1322 = vadd.f32 0.0, %v1321
        %v1323 = vpop.f32.mrf.mxu0
        %v1324 = vadd.f32 0.0, %v1323
        %1325 = vmatmul.bf16.gmra.mxu0 %v931
        %v1326 = vpop.f32.mrf.mxu0
        %v1327 = vadd.f32 0.0, %v1326
        %v1328 = vpop.f32.mrf.mxu0
        %v1329 = vadd.f32 0.0, %v1328
        %1330 = vmatmul.bf16.gmra.mxu0 %v934
        %v1331 = vpop.f32.mrf.mxu0
        %v1332 = vadd.f32 0.0, %v1331
        %v1333 = vpop.f32.mrf.mxu0
        %v1334 = vadd.f32 0.0, %v1333
        %1335 = vmatmul.bf16.gmra.mxu0 %v1192
        %v1336 = vpop.f32.mrf.mxu0
        %v1337 = vadd.f32 0.0, %v1336
        %v1338 = vpop.f32.mrf.mxu0
        %v1339 = vadd.f32 0.0, %v1338
        %1340 = vdwg.mxu0
        %1341 = vmatpush.bf16.msra.mxu0 0
        %1342 = vmatpush.bf16.msra.mxu0 0
        %1343 = vmatpush.bf16.msra.mxu0 0
        %1344 = vmatpush.bf16.msra.mxu0 0
        %1345 = vmatpush.bf16.msra.mxu0 0
        %1346 = vmatpush.bf16.msra.mxu0 0
        %1347 = vmatpush.bf16.msra.mxu0 %v1201
        %1348 = vmatpush.bf16.msra.mxu0 %v1184
        %1349 = vmatmul.bf16.gmra.mxu0 %v904
        %v1350 = vpop.f32.mrf.mxu0
        %v1351 = vadd.f32 0.0, %v1350
        %v1352 = vpop.f32.mrf.mxu0
        %v1353 = vadd.f32 0.0, %v1352
        %1354 = vmatmul.bf16.gmra.mxu0 %v907
        %v1355 = vpop.f32.mrf.mxu0
        %v1356 = vadd.f32 0.0, %v1355
        %v1357 = vpop.f32.mrf.mxu0
        %v1358 = vadd.f32 0.0, %v1357
        %1359 = vmatmul.bf16.gmra.mxu0 %v910
        %v1360 = vpop.f32.mrf.mxu0
        %v1361 = vadd.f32 0.0, %v1360
        %v1362 = vpop.f32.mrf.mxu0
        %v1363 = vadd.f32 0.0, %v1362
        %1364 = vmatmul.bf16.gmra.mxu0 %v913
        %v1365 = vpop.f32.mrf.mxu0
        %v1366 = vadd.f32 0.0, %v1365
        %v1367 = vpop.f32.mrf.mxu0
        %v1368 = vadd.f32 0.0, %v1367
        %1369 = vmatmul.bf16.gmra.mxu0 %v916
        %v1370 = vpop.f32.mrf.mxu0
        %v1371 = vadd.f32 0.0, %v1370
        %v1372 = vpop.f32.mrf.mxu0
        %v1373 = vadd.f32 0.0, %v1372
        %1374 = vmatmul.bf16.gmra.mxu0 %v919
        %v1375 = vpop.f32.mrf.mxu0
        %v1376 = vadd.f32 0.0, %v1375
        %v1377 = vpop.f32.mrf.mxu0
        %v1378 = vadd.f32 0.0, %v1377
        %1379 = vmatmul.bf16.gmra.mxu0 %v922
        %v1380 = vpop.f32.mrf.mxu0
        %v1381 = vadd.f32 0.0, %v1380
        %v1382 = vpop.f32.mrf.mxu0
        %v1383 = vadd.f32 0.0, %v1382
        %1384 = vmatmul.bf16.gmra.mxu0 %v925
        %v1385 = vpop.f32.mrf.mxu0
        %v1386 = vadd.f32 0.0, %v1385
        %v1387 = vpop.f32.mrf.mxu0
        %v1388 = vadd.f32 0.0, %v1387
        %1389 = vmatmul.bf16.gmra.mxu0 %v928
        %v1390 = vpop.f32.mrf.mxu0
        %v1391 = vadd.f32 0.0, %v1390
        %v1392 = vpop.f32.mrf.mxu0
        %v1393 = vadd.f32 0.0, %v1392
        %1394 = vmatmul.bf16.gmra.mxu0 %v931
        %v1395 = vpop.f32.mrf.mxu0
        %v1396 = vadd.f32 0.0, %v1395
        %v1397 = vpop.f32.mrf.mxu0
        %v1398 = vadd.f32 0.0, %v1397
        %1399 = vmatmul.bf16.gmra.mxu0 %v934
        %v1400 = vpop.f32.mrf.mxu0
        %v1401 = vadd.f32 0.0, %v1400
        %v1402 = vpop.f32.mrf.mxu0
        %v1403 = vadd.f32 0.0, %v1402
        %1404 = vmatmul.bf16.gmra.mxu0 %v1192
        %v1405 = vpop.f32.mrf.mxu0
        %v1406 = vadd.f32 0.0, %v1405
        %v1407 = vpop.f32.mrf.mxu0
        %v1408 = vadd.f32 0.0, %v1407
        %1409 = vdwg.mxu0
        %v1410 = vadd.f32 %v955, %v1213
        %v1411 = vadd.f32 %v1024, %v1282
        %v1412 = vadd.f32 %v1093, %v1351
        %v1413 = vadd.f32 %v957, %v1215
        %v1414 = vadd.f32 %v1026, %v1284
        %v1415 = vadd.f32 %v1095, %v1353
        %v1416 = vadd.f32 %v960, %v1218
        %v1417 = vadd.f32 %v1029, %v1287
        %v1418 = vadd.f32 %v1098, %v1356
        %v1419 = vadd.f32 %v962, %v1220
        %v1420 = vadd.f32 %v1031, %v1289
        %v1421 = vadd.f32 %v1100, %v1358
        %v1422 = vadd.f32 %v965, %v1223
        %v1423 = vadd.f32 %v1034, %v1292
        %v1424 = vadd.f32 %v1103, %v1361
        %v1425 = vadd.f32 %v967, %v1225
        %v1426 = vadd.f32 %v1036, %v1294
        %v1427 = vadd.f32 %v1105, %v1363
        %v1428 = vadd.f32 %v970, %v1228
        %v1429 = vadd.f32 %v1039, %v1297
        %v1430 = vadd.f32 %v1108, %v1366
        %v1431 = vadd.f32 %v972, %v1230
        %v1432 = vadd.f32 %v1041, %v1299
        %v1433 = vadd.f32 %v1110, %v1368
        %v1434 = vadd.f32 %v975, %v1233
        %v1435 = vadd.f32 %v1044, %v1302
        %v1436 = vadd.f32 %v1113, %v1371
        %v1437 = vadd.f32 %v977, %v1235
        %v1438 = vadd.f32 %v1046, %v1304
        %v1439 = vadd.f32 %v1115, %v1373
        %v1440 = vadd.f32 %v980, %v1238
        %v1441 = vadd.f32 %v1049, %v1307
        %v1442 = vadd.f32 %v1118, %v1376
        %v1443 = vadd.f32 %v982, %v1240
        %v1444 = vadd.f32 %v1051, %v1309
        %v1445 = vadd.f32 %v1120, %v1378
        %v1446 = vadd.f32 %v985, %v1243
        %v1447 = vadd.f32 %v1054, %v1312
        %v1448 = vadd.f32 %v1123, %v1381
        %v1449 = vadd.f32 %v987, %v1245
        %v1450 = vadd.f32 %v1056, %v1314
        %v1451 = vadd.f32 %v1125, %v1383
        %v1452 = vadd.f32 %v990, %v1248
        %v1453 = vadd.f32 %v1059, %v1317
        %v1454 = vadd.f32 %v1128, %v1386
        %v1455 = vadd.f32 %v992, %v1250
        %v1456 = vadd.f32 %v1061, %v1319
        %v1457 = vadd.f32 %v1130, %v1388
        %v1458 = vadd.f32 %v995, %v1253
        %v1459 = vadd.f32 %v1064, %v1322
        %v1460 = vadd.f32 %v1133, %v1391
        %v1461 = vadd.f32 %v997, %v1255
        %v1462 = vadd.f32 %v1066, %v1324
        %v1463 = vadd.f32 %v1135, %v1393
        %v1464 = vadd.f32 %v1000, %v1258
        %v1465 = vadd.f32 %v1069, %v1327
        %v1466 = vadd.f32 %v1138, %v1396
        %v1467 = vadd.f32 %v1002, %v1260
        %v1468 = vadd.f32 %v1071, %v1329
        %v1469 = vadd.f32 %v1140, %v1398
        %v1470 = vadd.f32 %v1005, %v1263
        %v1471 = vadd.f32 %v1074, %v1332
        %v1472 = vadd.f32 %v1143, %v1401
        %v1473 = vadd.f32 %v1007, %v1265
        %v1474 = vadd.f32 %v1076, %v1334
        %v1475 = vadd.f32 %v1145, %v1403
        %v1476 = vadd.f32 %v1010, %v1268
        %v1477 = vadd.f32 %v1079, %v1337
        %v1478 = vadd.f32 %v1148, %v1406
        %v1479 = vadd.f32 %v1012, %v1270
        %v1480 = vadd.f32 %v1081, %v1339
        %v1481 = vadd.f32 %v1150, %v1408
        %s1482 = scalar_lea.vmem %s1, 144
        %v1483 = vld [vmem:[%s1482] sm:$0xff]
        %v1484 = vld [vmem:[%s1482 + $0x8] sm:$0xf]
        %v1485 = vld [vmem:[%s1482 + $0xc] sm:$0xff]
        %v1486 = vld [vmem:[%s1482 + $0x14] sm:$0xf]
        %v1487 = vld [vmem:[%s1482 + $0x18] sm:$0xff]
        %v1488 = vld [vmem:[%s1482 + $0x20] sm:$0xf]
        %v1489 = vld [vmem:[%s1482 + $0x24] sm:$0x11]
        %v1490 = vld [vmem:[%s1482 + $0x2c] sm:$0x1]
        %s1491 = scalar_lea.vmem %s1, 192
        %v1492 = vld [vmem:[%s1491] sm:$0xff]
        %v1493 = vld [vmem:[%s1491 + $0x8] sm:$0xf]
        %v1494 = vld [vmem:[%s1491 + $0xc] sm:$0xff]
        %v1495 = vld [vmem:[%s1491 + $0x14] sm:$0xf]
        %v1496 = vld [vmem:[%s1491 + $0x18] sm:$0xff]
        %v1497 = vld [vmem:[%s1491 + $0x20] sm:$0xf]
        %v1498 = vld [vmem:[%s1491 + $0x24] sm:$0x11]
        %v1499 = vld [vmem:[%s1491 + $0x2c] sm:$0x1]
        %v1508 = vunpack.c.l.b16 %v1492
        %v1509 = vunpack.c.h.b16 %v1492
        %v1510 = vunpack.c.l.b16 %v1493
        %v1511 = vunpack.c.l.b16 %v1494
        %v1512 = vunpack.c.h.b16 %v1494
        %v1513 = vunpack.c.l.b16 %v1495
        %v1514 = vunpack.c.l.b16 %v1496
        %v1515 = vunpack.c.h.b16 %v1496
        %v1516 = vunpack.c.l.b16 %v1497
        %v1517 = vunpack.c.l.b16 %v1498
        %v1518 = vunpack.c.h.b16 %v1498
        %v1519 = vunpack.c.l.b16 %v1499
        %v1520 = vpack.c.b16 %v1511, %v1508
        %v1521 = vpack.c.b16 %v1512, %v1509
        %v1522 = vpack.c.b16 %v1513, %v1510
        %v1523 = vpack.c.b16 %v1517, %v1514
        %v1524 = vpack.c.b16 %v1518, %v1515
        %v1525 = vpack.c.b16 %v1519, %v1516
        %v1530 = vsel %vm654, %v1523, 0
        %v1533 = vsel %vm654, %v1524, 0
        %v1536 = vsel %vm654, %v1525, 0
        %1538 = vmatpush.bf16.msra.mxu0 0
        %1539 = vmatpush.bf16.msra.mxu0 0
        %1540 = vmatpush.bf16.msra.mxu0 0
        %1541 = vmatpush.bf16.msra.mxu0 0
        %1542 = vmatpush.bf16.msra.mxu0 0
        %1543 = vmatpush.bf16.msra.mxu0 0
        %1544 = vmatpush.bf16.msra.mxu0 %v1530
        %1545 = vmatpush.bf16.msra.mxu0 %v1520
        %1546 = vmatmul.bf16.gmra.mxu0 %v619
        %v1547 = vpop.f32.mrf.mxu0
        %v1548 = vadd.f32 0.0, %v1547
        %v1549 = vpop.f32.mrf.mxu0
        %v1550 = vadd.f32 0.0, %v1549
        %1551 = vmatmul.bf16.gmra.mxu0 %v622
        %v1552 = vpop.f32.mrf.mxu0
        %v1553 = vadd.f32 0.0, %v1552
        %v1554 = vpop.f32.mrf.mxu0
        %v1555 = vadd.f32 0.0, %v1554
        %1556 = vmatmul.bf16.gmra.mxu0 %v625
        %v1557 = vpop.f32.mrf.mxu0
        %v1558 = vadd.f32 0.0, %v1557
        %v1559 = vpop.f32.mrf.mxu0
        %v1560 = vadd.f32 0.0, %v1559
        %1561 = vmatmul.bf16.gmra.mxu0 %v628
        %v1562 = vpop.f32.mrf.mxu0
        %v1563 = vadd.f32 0.0, %v1562
        %v1564 = vpop.f32.mrf.mxu0
        %v1565 = vadd.f32 0.0, %v1564
        %1566 = vmatmul.bf16.gmra.mxu0 %v631
        %v1567 = vpop.f32.mrf.mxu0
        %v1568 = vadd.f32 0.0, %v1567
        %v1569 = vpop.f32.mrf.mxu0
        %v1570 = vadd.f32 0.0, %v1569
        %1571 = vmatmul.bf16.gmra.mxu0 %v634
        %v1572 = vpop.f32.mrf.mxu0
        %v1573 = vadd.f32 0.0, %v1572
        %v1574 = vpop.f32.mrf.mxu0
        %v1575 = vadd.f32 0.0, %v1574
        %1576 = vmatmul.bf16.gmra.mxu0 %v637
        %v1577 = vpop.f32.mrf.mxu0
        %v1578 = vadd.f32 0.0, %v1577
        %v1579 = vpop.f32.mrf.mxu0
        %v1580 = vadd.f32 0.0, %v1579
        %1581 = vmatmul.bf16.gmra.mxu0 %v640
        %v1582 = vpop.f32.mrf.mxu0
        %v1583 = vadd.f32 0.0, %v1582
        %v1584 = vpop.f32.mrf.mxu0
        %v1585 = vadd.f32 0.0, %v1584
        %1586 = vmatmul.bf16.gmra.mxu0 %v643
        %v1587 = vpop.f32.mrf.mxu0
        %v1588 = vadd.f32 0.0, %v1587
        %v1589 = vpop.f32.mrf.mxu0
        %v1590 = vadd.f32 0.0, %v1589
        %1591 = vmatmul.bf16.gmra.mxu0 %v646
        %v1592 = vpop.f32.mrf.mxu0
        %v1593 = vadd.f32 0.0, %v1592
        %v1594 = vpop.f32.mrf.mxu0
        %v1595 = vadd.f32 0.0, %v1594
        %1596 = vmatmul.bf16.gmra.mxu0 %v649
        %v1597 = vpop.f32.mrf.mxu0
        %v1598 = vadd.f32 0.0, %v1597
        %v1599 = vpop.f32.mrf.mxu0
        %v1600 = vadd.f32 0.0, %v1599
        %1601 = vmatmul.bf16.gmra.mxu0 %v652
        %v1602 = vpop.f32.mrf.mxu0
        %v1603 = vadd.f32 0.0, %v1602
        %v1604 = vpop.f32.mrf.mxu0
        %v1605 = vadd.f32 0.0, %v1604
        %1606 = vdwg.mxu0
        %1607 = vmatpush.bf16.msra.mxu0 0
        %1608 = vmatpush.bf16.msra.mxu0 0
        %1609 = vmatpush.bf16.msra.mxu0 0
        %1610 = vmatpush.bf16.msra.mxu0 0
        %1611 = vmatpush.bf16.msra.mxu0 0
        %1612 = vmatpush.bf16.msra.mxu0 0
        %1613 = vmatpush.bf16.msra.mxu0 %v1533
        %1614 = vmatpush.bf16.msra.mxu0 %v1521
        %1615 = vmatmul.bf16.gmra.mxu0 %v619
        %v1616 = vpop.f32.mrf.mxu0
        %v1617 = vadd.f32 0.0, %v1616
        %v1618 = vpop.f32.mrf.mxu0
        %v1619 = vadd.f32 0.0, %v1618
        %1620 = vmatmul.bf16.gmra.mxu0 %v622
        %v1621 = vpop.f32.mrf.mxu0
        %v1622 = vadd.f32 0.0, %v1621
        %v1623 = vpop.f32.mrf.mxu0
        %v1624 = vadd.f32 0.0, %v1623
        %1625 = vmatmul.bf16.gmra.mxu0 %v625
        %v1626 = vpop.f32.mrf.mxu0
        %v1627 = vadd.f32 0.0, %v1626
        %v1628 = vpop.f32.mrf.mxu0
        %v1629 = vadd.f32 0.0, %v1628
        %1630 = vmatmul.bf16.gmra.mxu0 %v628
        %v1631 = vpop.f32.mrf.mxu0
        %v1632 = vadd.f32 0.0, %v1631
        %v1633 = vpop.f32.mrf.mxu0
        %v1634 = vadd.f32 0.0, %v1633
        %1635 = vmatmul.bf16.gmra.mxu0 %v631
        %v1636 = vpop.f32.mrf.mxu0
        %v1637 = vadd.f32 0.0, %v1636
        %v1638 = vpop.f32.mrf.mxu0
        %v1639 = vadd.f32 0.0, %v1638
        %1640 = vmatmul.bf16.gmra.mxu0 %v634
        %v1641 = vpop.f32.mrf.mxu0
        %v1642 = vadd.f32 0.0, %v1641
        %v1643 = vpop.f32.mrf.mxu0
        %v1644 = vadd.f32 0.0, %v1643
        %1645 = vmatmul.bf16.gmra.mxu0 %v637
        %v1646 = vpop.f32.mrf.mxu0
        %v1647 = vadd.f32 0.0, %v1646
        %v1648 = vpop.f32.mrf.mxu0
        %v1649 = vadd.f32 0.0, %v1648
        %1650 = vmatmul.bf16.gmra.mxu0 %v640
        %v1651 = vpop.f32.mrf.mxu0
        %v1652 = vadd.f32 0.0, %v1651
        %v1653 = vpop.f32.mrf.mxu0
        %v1654 = vadd.f32 0.0, %v1653
        %1655 = vmatmul.bf16.gmra.mxu0 %v643
        %v1656 = vpop.f32.mrf.mxu0
        %v1657 = vadd.f32 0.0, %v1656
        %v1658 = vpop.f32.mrf.mxu0
        %v1659 = vadd.f32 0.0, %v1658
        %1660 = vmatmul.bf16.gmra.mxu0 %v646
        %v1661 = vpop.f32.mrf.mxu0
        %v1662 = vadd.f32 0.0, %v1661
        %v1663 = vpop.f32.mrf.mxu0
        %v1664 = vadd.f32 0.0, %v1663
        %1665 = vmatmul.bf16.gmra.mxu0 %v649
        %v1666 = vpop.f32.mrf.mxu0
        %v1667 = vadd.f32 0.0, %v1666
        %v1668 = vpop.f32.mrf.mxu0
        %v1669 = vadd.f32 0.0, %v1668
        %1670 = vmatmul.bf16.gmra.mxu0 %v652
        %v1671 = vpop.f32.mrf.mxu0
        %v1672 = vadd.f32 0.0, %v1671
        %v1673 = vpop.f32.mrf.mxu0
        %v1674 = vadd.f32 0.0, %v1673
        %1675 = vdwg.mxu0
        %1676 = vmatpush.bf16.msra.mxu0 0
        %1677 = vmatpush.bf16.msra.mxu0 0
        %1678 = vmatpush.bf16.msra.mxu0 0
        %1679 = vmatpush.bf16.msra.mxu0 0
        %1680 = vmatpush.bf16.msra.mxu0 0
        %1681 = vmatpush.bf16.msra.mxu0 0
        %1682 = vmatpush.bf16.msra.mxu0 %v1536
        %1683 = vmatpush.bf16.msra.mxu0 %v1522
        %1684 = vmatmul.bf16.gmra.mxu0 %v619
        %v1685 = vpop.f32.mrf.mxu0
        %v1686 = vadd.f32 0.0, %v1685
        %v1687 = vpop.f32.mrf.mxu0
        %v1688 = vadd.f32 0.0, %v1687
        %1689 = vmatmul.bf16.gmra.mxu0 %v622
        %v1690 = vpop.f32.mrf.mxu0
        %v1691 = vadd.f32 0.0, %v1690
        %v1692 = vpop.f32.mrf.mxu0
        %v1693 = vadd.f32 0.0, %v1692
        %1694 = vmatmul.bf16.gmra.mxu0 %v625
        %v1695 = vpop.f32.mrf.mxu0
        %v1696 = vadd.f32 0.0, %v1695
        %v1697 = vpop.f32.mrf.mxu0
        %v1698 = vadd.f32 0.0, %v1697
        %1699 = vmatmul.bf16.gmra.mxu0 %v628
        %v1700 = vpop.f32.mrf.mxu0
        %v1701 = vadd.f32 0.0, %v1700
        %v1702 = vpop.f32.mrf.mxu0
        %v1703 = vadd.f32 0.0, %v1702
        %1704 = vmatmul.bf16.gmra.mxu0 %v631
        %v1705 = vpop.f32.mrf.mxu0
        %v1706 = vadd.f32 0.0, %v1705
        %v1707 = vpop.f32.mrf.mxu0
        %v1708 = vadd.f32 0.0, %v1707
        %1709 = vmatmul.bf16.gmra.mxu0 %v634
        %v1710 = vpop.f32.mrf.mxu0
        %v1711 = vadd.f32 0.0, %v1710
        %v1712 = vpop.f32.mrf.mxu0
        %v1713 = vadd.f32 0.0, %v1712
        %1714 = vmatmul.bf16.gmra.mxu0 %v637
        %v1715 = vpop.f32.mrf.mxu0
        %v1716 = vadd.f32 0.0, %v1715
        %v1717 = vpop.f32.mrf.mxu0
        %v1718 = vadd.f32 0.0, %v1717
        %1719 = vmatmul.bf16.gmra.mxu0 %v640
        %v1720 = vpop.f32.mrf.mxu0
        %v1721 = vadd.f32 0.0, %v1720
        %v1722 = vpop.f32.mrf.mxu0
        %v1723 = vadd.f32 0.0, %v1722
        %1724 = vmatmul.bf16.gmra.mxu0 %v643
        %v1725 = vpop.f32.mrf.mxu0
        %v1726 = vadd.f32 0.0, %v1725
        %v1727 = vpop.f32.mrf.mxu0
        %v1728 = vadd.f32 0.0, %v1727
        %1729 = vmatmul.bf16.gmra.mxu0 %v646
        %v1730 = vpop.f32.mrf.mxu0
        %v1731 = vadd.f32 0.0, %v1730
        %v1732 = vpop.f32.mrf.mxu0
        %v1733 = vadd.f32 0.0, %v1732
        %1734 = vmatmul.bf16.gmra.mxu0 %v649
        %v1735 = vpop.f32.mrf.mxu0
        %v1736 = vadd.f32 0.0, %v1735
        %v1737 = vpop.f32.mrf.mxu0
        %v1738 = vadd.f32 0.0, %v1737
        %1739 = vmatmul.bf16.gmra.mxu0 %v652
        %v1740 = vpop.f32.mrf.mxu0
        %v1741 = vadd.f32 0.0, %v1740
        %v1742 = vpop.f32.mrf.mxu0
        %v1743 = vadd.f32 0.0, %v1742
        %1744 = vdwg.mxu0
        %v1753 = vunpack.c.l.b16 %v1483
        %v1754 = vunpack.c.h.b16 %v1483
        %v1755 = vunpack.c.l.b16 %v1484
        %v1756 = vunpack.c.l.b16 %v1485
        %v1757 = vunpack.c.h.b16 %v1485
        %v1758 = vunpack.c.l.b16 %v1486
        %v1759 = vunpack.c.l.b16 %v1487
        %v1760 = vunpack.c.h.b16 %v1487
        %v1761 = vunpack.c.l.b16 %v1488
        %v1762 = vunpack.c.l.b16 %v1489
        %v1763 = vunpack.c.h.b16 %v1489
        %v1764 = vunpack.c.l.b16 %v1490
        %v1765 = vpack.c.b16 %v1756, %v1753
        %v1766 = vpack.c.b16 %v1757, %v1754
        %v1767 = vpack.c.b16 %v1758, %v1755
        %v1768 = vpack.c.b16 %v1762, %v1759
        %v1769 = vpack.c.b16 %v1763, %v1760
        %v1770 = vpack.c.b16 %v1764, %v1761
        %v1775 = vsel %vm654, %v1768, 0
        %v1778 = vsel %vm654, %v1769, 0
        %v1781 = vsel %vm654, %v1770, 0
        %1783 = vmatpush.bf16.msra.mxu0 0
        %1784 = vmatpush.bf16.msra.mxu0 0
        %1785 = vmatpush.bf16.msra.mxu0 0
        %1786 = vmatpush.bf16.msra.mxu0 0
        %1787 = vmatpush.bf16.msra.mxu0 0
        %1788 = vmatpush.bf16.msra.mxu0 0
        %1789 = vmatpush.bf16.msra.mxu0 %v1775
        %1790 = vmatpush.bf16.msra.mxu0 %v1765
        %1791 = vmatmul.bf16.gmra.mxu0 %v901
        %v1792 = vpop.f32.mrf.mxu0
        %v1793 = vadd.f32 %v1548, %v1792
        %v1794 = vpop.f32.mrf.mxu0
        %v1795 = vadd.f32 %v1550, %v1794
        %1796 = vmatmul.bf16.gmra.mxu0 %v904
        %v1797 = vpop.f32.mrf.mxu0
        %v1798 = vadd.f32 %v1553, %v1797
        %v1799 = vpop.f32.mrf.mxu0
        %v1800 = vadd.f32 %v1555, %v1799
        %1801 = vmatmul.bf16.gmra.mxu0 %v907
        %v1802 = vpop.f32.mrf.mxu0
        %v1803 = vadd.f32 %v1558, %v1802
        %v1804 = vpop.f32.mrf.mxu0
        %v1805 = vadd.f32 %v1560, %v1804
        %1806 = vmatmul.bf16.gmra.mxu0 %v910
        %v1807 = vpop.f32.mrf.mxu0
        %v1808 = vadd.f32 %v1563, %v1807
        %v1809 = vpop.f32.mrf.mxu0
        %v1810 = vadd.f32 %v1565, %v1809
        %1811 = vmatmul.bf16.gmra.mxu0 %v913
        %v1812 = vpop.f32.mrf.mxu0
        %v1813 = vadd.f32 %v1568, %v1812
        %v1814 = vpop.f32.mrf.mxu0
        %v1815 = vadd.f32 %v1570, %v1814
        %1816 = vmatmul.bf16.gmra.mxu0 %v916
        %v1817 = vpop.f32.mrf.mxu0
        %v1818 = vadd.f32 %v1573, %v1817
        %v1819 = vpop.f32.mrf.mxu0
        %v1820 = vadd.f32 %v1575, %v1819
        %1821 = vmatmul.bf16.gmra.mxu0 %v919
        %v1822 = vpop.f32.mrf.mxu0
        %v1823 = vadd.f32 %v1578, %v1822
        %v1824 = vpop.f32.mrf.mxu0
        %v1825 = vadd.f32 %v1580, %v1824
        %1826 = vmatmul.bf16.gmra.mxu0 %v922
        %v1827 = vpop.f32.mrf.mxu0
        %v1828 = vadd.f32 %v1583, %v1827
        %v1829 = vpop.f32.mrf.mxu0
        %v1830 = vadd.f32 %v1585, %v1829
        %1831 = vmatmul.bf16.gmra.mxu0 %v925
        %v1832 = vpop.f32.mrf.mxu0
        %v1833 = vadd.f32 %v1588, %v1832
        %v1834 = vpop.f32.mrf.mxu0
        %v1835 = vadd.f32 %v1590, %v1834
        %1836 = vmatmul.bf16.gmra.mxu0 %v928
        %v1837 = vpop.f32.mrf.mxu0
        %v1838 = vadd.f32 %v1593, %v1837
        %v1839 = vpop.f32.mrf.mxu0
        %v1840 = vadd.f32 %v1595, %v1839
        %1841 = vmatmul.bf16.gmra.mxu0 %v931
        %v1842 = vpop.f32.mrf.mxu0
        %v1843 = vadd.f32 %v1598, %v1842
        %v1844 = vpop.f32.mrf.mxu0
        %v1845 = vadd.f32 %v1600, %v1844
        %1846 = vmatmul.bf16.gmra.mxu0 %v934
        %v1847 = vpop.f32.mrf.mxu0
        %v1848 = vadd.f32 %v1603, %v1847
        %v1849 = vpop.f32.mrf.mxu0
        %v1850 = vadd.f32 %v1605, %v1849
        %1851 = vdwg.mxu0
        %1852 = vmatpush.bf16.msra.mxu0 0
        %1853 = vmatpush.bf16.msra.mxu0 0
        %1854 = vmatpush.bf16.msra.mxu0 0
        %1855 = vmatpush.bf16.msra.mxu0 0
        %1856 = vmatpush.bf16.msra.mxu0 0
        %1857 = vmatpush.bf16.msra.mxu0 0
        %1858 = vmatpush.bf16.msra.mxu0 %v1778
        %1859 = vmatpush.bf16.msra.mxu0 %v1766
        %1860 = vmatmul.bf16.gmra.mxu0 %v901
        %v1861 = vpop.f32.mrf.mxu0
        %v1862 = vadd.f32 %v1617, %v1861
        %v1863 = vpop.f32.mrf.mxu0
        %v1864 = vadd.f32 %v1619, %v1863
        %1865 = vmatmul.bf16.gmra.mxu0 %v904
        %v1866 = vpop.f32.mrf.mxu0
        %v1867 = vadd.f32 %v1622, %v1866
        %v1868 = vpop.f32.mrf.mxu0
        %v1869 = vadd.f32 %v1624, %v1868
        %1870 = vmatmul.bf16.gmra.mxu0 %v907
        %v1871 = vpop.f32.mrf.mxu0
        %v1872 = vadd.f32 %v1627, %v1871
        %v1873 = vpop.f32.mrf.mxu0
        %v1874 = vadd.f32 %v1629, %v1873
        %1875 = vmatmul.bf16.gmra.mxu0 %v910
        %v1876 = vpop.f32.mrf.mxu0
        %v1877 = vadd.f32 %v1632, %v1876
        %v1878 = vpop.f32.mrf.mxu0
        %v1879 = vadd.f32 %v1634, %v1878
        %1880 = vmatmul.bf16.gmra.mxu0 %v913
        %v1881 = vpop.f32.mrf.mxu0
        %v1882 = vadd.f32 %v1637, %v1881
        %v1883 = vpop.f32.mrf.mxu0
        %v1884 = vadd.f32 %v1639, %v1883
        %1885 = vmatmul.bf16.gmra.mxu0 %v916
        %v1886 = vpop.f32.mrf.mxu0
        %v1887 = vadd.f32 %v1642, %v1886
        %v1888 = vpop.f32.mrf.mxu0
        %v1889 = vadd.f32 %v1644, %v1888
        %1890 = vmatmul.bf16.gmra.mxu0 %v919
        %v1891 = vpop.f32.mrf.mxu0
        %v1892 = vadd.f32 %v1647, %v1891
        %v1893 = vpop.f32.mrf.mxu0
        %v1894 = vadd.f32 %v1649, %v1893
        %1895 = vmatmul.bf16.gmra.mxu0 %v922
        %v1896 = vpop.f32.mrf.mxu0
        %v1897 = vadd.f32 %v1652, %v1896
        %v1898 = vpop.f32.mrf.mxu0
        %v1899 = vadd.f32 %v1654, %v1898
        %1900 = vmatmul.bf16.gmra.mxu0 %v925
        %v1901 = vpop.f32.mrf.mxu0
        %v1902 = vadd.f32 %v1657, %v1901
        %v1903 = vpop.f32.mrf.mxu0
        %v1904 = vadd.f32 %v1659, %v1903
        %1905 = vmatmul.bf16.gmra.mxu0 %v928
        %v1906 = vpop.f32.mrf.mxu0
        %v1907 = vadd.f32 %v1662, %v1906
        %v1908 = vpop.f32.mrf.mxu0
        %v1909 = vadd.f32 %v1664, %v1908
        %1910 = vmatmul.bf16.gmra.mxu0 %v931
        %v1911 = vpop.f32.mrf.mxu0
        %v1912 = vadd.f32 %v1667, %v1911
        %v1913 = vpop.f32.mrf.mxu0
        %v1914 = vadd.f32 %v1669, %v1913
        %1915 = vmatmul.bf16.gmra.mxu0 %v934
        %v1916 = vpop.f32.mrf.mxu0
        %v1917 = vadd.f32 %v1672, %v1916
        %v1918 = vpop.f32.mrf.mxu0
        %v1919 = vadd.f32 %v1674, %v1918
        %1920 = vdwg.mxu0
        %1921 = vmatpush.bf16.msra.mxu0 0
        %1922 = vmatpush.bf16.msra.mxu0 0
        %1923 = vmatpush.bf16.msra.mxu0 0
        %1924 = vmatpush.bf16.msra.mxu0 0
        %1925 = vmatpush.bf16.msra.mxu0 0
        %1926 = vmatpush.bf16.msra.mxu0 0
        %1927 = vmatpush.bf16.msra.mxu0 %v1781
        %1928 = vmatpush.bf16.msra.mxu0 %v1767
        %1929 = vmatmul.bf16.gmra.mxu0 %v901
        %v1930 = vpop.f32.mrf.mxu0
        %v1931 = vadd.f32 %v1686, %v1930
        %v1932 = vpop.f32.mrf.mxu0
        %v1933 = vadd.f32 %v1688, %v1932
        %1934 = vmatmul.bf16.gmra.mxu0 %v904
        %v1935 = vpop.f32.mrf.mxu0
        %v1936 = vadd.f32 %v1691, %v1935
        %v1937 = vpop.f32.mrf.mxu0
        %v1938 = vadd.f32 %v1693, %v1937
        %1939 = vmatmul.bf16.gmra.mxu0 %v907
        %v1940 = vpop.f32.mrf.mxu0
        %v1941 = vadd.f32 %v1696, %v1940
        %v1942 = vpop.f32.mrf.mxu0
        %v1943 = vadd.f32 %v1698, %v1942
        %1944 = vmatmul.bf16.gmra.mxu0 %v910
        %v1945 = vpop.f32.mrf.mxu0
        %v1946 = vadd.f32 %v1701, %v1945
        %v1947 = vpop.f32.mrf.mxu0
        %v1948 = vadd.f32 %v1703, %v1947
        %1949 = vmatmul.bf16.gmra.mxu0 %v913
        %v1950 = vpop.f32.mrf.mxu0
        %v1951 = vadd.f32 %v1706, %v1950
        %v1952 = vpop.f32.mrf.mxu0
        %v1953 = vadd.f32 %v1708, %v1952
        %1954 = vmatmul.bf16.gmra.mxu0 %v916
        %v1955 = vpop.f32.mrf.mxu0
        %v1956 = vadd.f32 %v1711, %v1955
        %v1957 = vpop.f32.mrf.mxu0
        %v1958 = vadd.f32 %v1713, %v1957
        %1959 = vmatmul.bf16.gmra.mxu0 %v919
        %v1960 = vpop.f32.mrf.mxu0
        %v1961 = vadd.f32 %v1716, %v1960
        %v1962 = vpop.f32.mrf.mxu0
        %v1963 = vadd.f32 %v1718, %v1962
        %1964 = vmatmul.bf16.gmra.mxu0 %v922
        %v1965 = vpop.f32.mrf.mxu0
        %v1966 = vadd.f32 %v1721, %v1965
        %v1967 = vpop.f32.mrf.mxu0
        %v1968 = vadd.f32 %v1723, %v1967
        %1969 = vmatmul.bf16.gmra.mxu0 %v925
        %v1970 = vpop.f32.mrf.mxu0
        %v1971 = vadd.f32 %v1726, %v1970
        %v1972 = vpop.f32.mrf.mxu0
        %v1973 = vadd.f32 %v1728, %v1972
        %1974 = vmatmul.bf16.gmra.mxu0 %v928
        %v1975 = vpop.f32.mrf.mxu0
        %v1976 = vadd.f32 %v1731, %v1975
        %v1977 = vpop.f32.mrf.mxu0
        %v1978 = vadd.f32 %v1733, %v1977
        %1979 = vmatmul.bf16.gmra.mxu0 %v931
        %v1980 = vpop.f32.mrf.mxu0
        %v1981 = vadd.f32 %v1736, %v1980
        %v1982 = vpop.f32.mrf.mxu0
        %v1983 = vadd.f32 %v1738, %v1982
        %1984 = vmatmul.bf16.gmra.mxu0 %v934
        %v1985 = vpop.f32.mrf.mxu0
        %v1986 = vadd.f32 %v1741, %v1985
        %v1987 = vpop.f32.mrf.mxu0
        %v1988 = vadd.f32 %v1743, %v1987
        %1989 = vdwg.mxu0
        %s1990 = scalar_lea.vmem %s1, 240
        %v1991 = vld [vmem:[%s1990] sm:$0xff]
        %v1992 = vld [vmem:[%s1990 + $0x8] sm:$0xf]
        %v1993 = vld [vmem:[%s1990 + $0xc] sm:$0xff]
        %v1994 = vld [vmem:[%s1990 + $0x14] sm:$0xf]
        %v1995 = vld [vmem:[%s1990 + $0x18] sm:$0xff]
        %v1996 = vld [vmem:[%s1990 + $0x20] sm:$0xf]
        %v1997 = vld [vmem:[%s1990 + $0x24] sm:$0x11]
        %v1998 = vld [vmem:[%s1990 + $0x2c] sm:$0x1]
        %v2007 = vunpack.c.l.b16 %v1991
        %v2008 = vunpack.c.h.b16 %v1991
        %v2009 = vunpack.c.l.b16 %v1992
        %v2010 = vunpack.c.l.b16 %v1993
        %v2011 = vunpack.c.h.b16 %v1993
        %v2012 = vunpack.c.l.b16 %v1994
        %v2013 = vunpack.c.l.b16 %v1995
        %v2014 = vunpack.c.h.b16 %v1995
        %v2015 = vunpack.c.l.b16 %v1996
        %v2016 = vunpack.c.l.b16 %v1997
        %v2017 = vunpack.c.h.b16 %v1997
        %v2018 = vunpack.c.l.b16 %v1998
        %v2019 = vpack.c.b16 %v2010, %v2007
        %v2020 = vpack.c.b16 %v2011, %v2008
        %v2021 = vpack.c.b16 %v2012, %v2009
        %v2022 = vpack.c.b16 %v2016, %v2013
        %v2023 = vpack.c.b16 %v2017, %v2014
        %v2024 = vpack.c.b16 %v2018, %v2015
        %v2029 = vsel %vm654, %v2022, 0
        %v2032 = vsel %vm654, %v2023, 0
        %v2035 = vsel %vm654, %v2024, 0
        %2037 = vmatpush.bf16.msra.mxu0 0
        %2038 = vmatpush.bf16.msra.mxu0 0
        %2039 = vmatpush.bf16.msra.mxu0 0
        %2040 = vmatpush.bf16.msra.mxu0 0
        %2041 = vmatpush.bf16.msra.mxu0 0
        %2042 = vmatpush.bf16.msra.mxu0 0
        %2043 = vmatpush.bf16.msra.mxu0 %v2029
        %2044 = vmatpush.bf16.msra.mxu0 %v2019
        %2045 = vmatmul.bf16.gmra.mxu0 %v904
        %v2046 = vpop.f32.mrf.mxu0
        %v2047 = vadd.f32 0.0, %v2046
        %v2048 = vpop.f32.mrf.mxu0
        %v2049 = vadd.f32 0.0, %v2048
        %2050 = vmatmul.bf16.gmra.mxu0 %v907
        %v2051 = vpop.f32.mrf.mxu0
        %v2052 = vadd.f32 0.0, %v2051
        %v2053 = vpop.f32.mrf.mxu0
        %v2054 = vadd.f32 0.0, %v2053
        %2055 = vmatmul.bf16.gmra.mxu0 %v910
        %v2056 = vpop.f32.mrf.mxu0
        %v2057 = vadd.f32 0.0, %v2056
        %v2058 = vpop.f32.mrf.mxu0
        %v2059 = vadd.f32 0.0, %v2058
        %2060 = vmatmul.bf16.gmra.mxu0 %v913
        %v2061 = vpop.f32.mrf.mxu0
        %v2062 = vadd.f32 0.0, %v2061
        %v2063 = vpop.f32.mrf.mxu0
        %v2064 = vadd.f32 0.0, %v2063
        %2065 = vmatmul.bf16.gmra.mxu0 %v916
        %v2066 = vpop.f32.mrf.mxu0
        %v2067 = vadd.f32 0.0, %v2066
        %v2068 = vpop.f32.mrf.mxu0
        %v2069 = vadd.f32 0.0, %v2068
        %2070 = vmatmul.bf16.gmra.mxu0 %v919
        %v2071 = vpop.f32.mrf.mxu0
        %v2072 = vadd.f32 0.0, %v2071
        %v2073 = vpop.f32.mrf.mxu0
        %v2074 = vadd.f32 0.0, %v2073
        %2075 = vmatmul.bf16.gmra.mxu0 %v922
        %v2076 = vpop.f32.mrf.mxu0
        %v2077 = vadd.f32 0.0, %v2076
        %v2078 = vpop.f32.mrf.mxu0
        %v2079 = vadd.f32 0.0, %v2078
        %2080 = vmatmul.bf16.gmra.mxu0 %v925
        %v2081 = vpop.f32.mrf.mxu0
        %v2082 = vadd.f32 0.0, %v2081
        %v2083 = vpop.f32.mrf.mxu0
        %v2084 = vadd.f32 0.0, %v2083
        %2085 = vmatmul.bf16.gmra.mxu0 %v928
        %v2086 = vpop.f32.mrf.mxu0
        %v2087 = vadd.f32 0.0, %v2086
        %v2088 = vpop.f32.mrf.mxu0
        %v2089 = vadd.f32 0.0, %v2088
        %2090 = vmatmul.bf16.gmra.mxu0 %v931
        %v2091 = vpop.f32.mrf.mxu0
        %v2092 = vadd.f32 0.0, %v2091
        %v2093 = vpop.f32.mrf.mxu0
        %v2094 = vadd.f32 0.0, %v2093
        %2095 = vmatmul.bf16.gmra.mxu0 %v934
        %v2096 = vpop.f32.mrf.mxu0
        %v2097 = vadd.f32 0.0, %v2096
        %v2098 = vpop.f32.mrf.mxu0
        %v2099 = vadd.f32 0.0, %v2098
        %2100 = vmatmul.bf16.gmra.mxu0 %v1192
        %v2101 = vpop.f32.mrf.mxu0
        %v2102 = vadd.f32 0.0, %v2101
        %v2103 = vpop.f32.mrf.mxu0
        %v2104 = vadd.f32 0.0, %v2103
        %2105 = vdwg.mxu0
        %2106 = vmatpush.bf16.msra.mxu0 0
        %2107 = vmatpush.bf16.msra.mxu0 0
        %2108 = vmatpush.bf16.msra.mxu0 0
        %2109 = vmatpush.bf16.msra.mxu0 0
        %2110 = vmatpush.bf16.msra.mxu0 0
        %2111 = vmatpush.bf16.msra.mxu0 0
        %2112 = vmatpush.bf16.msra.mxu0 %v2032
        %2113 = vmatpush.bf16.msra.mxu0 %v2020
        %2114 = vmatmul.bf16.gmra.mxu0 %v904
        %v2115 = vpop.f32.mrf.mxu0
        %v2116 = vadd.f32 0.0, %v2115
        %v2117 = vpop.f32.mrf.mxu0
        %v2118 = vadd.f32 0.0, %v2117
        %2119 = vmatmul.bf16.gmra.mxu0 %v907
        %v2120 = vpop.f32.mrf.mxu0
        %v2121 = vadd.f32 0.0, %v2120
        %v2122 = vpop.f32.mrf.mxu0
        %v2123 = vadd.f32 0.0, %v2122
        %2124 = vmatmul.bf16.gmra.mxu0 %v910
        %v2125 = vpop.f32.mrf.mxu0
        %v2126 = vadd.f32 0.0, %v2125
        %v2127 = vpop.f32.mrf.mxu0
        %v2128 = vadd.f32 0.0, %v2127
        %2129 = vmatmul.bf16.gmra.mxu0 %v913
        %v2130 = vpop.f32.mrf.mxu0
        %v2131 = vadd.f32 0.0, %v2130
        %v2132 = vpop.f32.mrf.mxu0
        %v2133 = vadd.f32 0.0, %v2132
        %2134 = vmatmul.bf16.gmra.mxu0 %v916
        %v2135 = vpop.f32.mrf.mxu0
        %v2136 = vadd.f32 0.0, %v2135
        %v2137 = vpop.f32.mrf.mxu0
        %v2138 = vadd.f32 0.0, %v2137
        %2139 = vmatmul.bf16.gmra.mxu0 %v919
        %v2140 = vpop.f32.mrf.mxu0
        %v2141 = vadd.f32 0.0, %v2140
        %v2142 = vpop.f32.mrf.mxu0
        %v2143 = vadd.f32 0.0, %v2142
        %2144 = vmatmul.bf16.gmra.mxu0 %v922
        %v2145 = vpop.f32.mrf.mxu0
        %v2146 = vadd.f32 0.0, %v2145
        %v2147 = vpop.f32.mrf.mxu0
        %v2148 = vadd.f32 0.0, %v2147
        %2149 = vmatmul.bf16.gmra.mxu0 %v925
        %v2150 = vpop.f32.mrf.mxu0
        %v2151 = vadd.f32 0.0, %v2150
        %v2152 = vpop.f32.mrf.mxu0
        %v2153 = vadd.f32 0.0, %v2152
        %2154 = vmatmul.bf16.gmra.mxu0 %v928
        %v2155 = vpop.f32.mrf.mxu0
        %v2156 = vadd.f32 0.0, %v2155
        %v2157 = vpop.f32.mrf.mxu0
        %v2158 = vadd.f32 0.0, %v2157
        %2159 = vmatmul.bf16.gmra.mxu0 %v931
        %v2160 = vpop.f32.mrf.mxu0
        %v2161 = vadd.f32 0.0, %v2160
        %v2162 = vpop.f32.mrf.mxu0
        %v2163 = vadd.f32 0.0, %v2162
        %2164 = vmatmul.bf16.gmra.mxu0 %v934
        %v2165 = vpop.f32.mrf.mxu0
        %v2166 = vadd.f32 0.0, %v2165
        %v2167 = vpop.f32.mrf.mxu0
        %v2168 = vadd.f32 0.0, %v2167
        %2169 = vmatmul.bf16.gmra.mxu0 %v1192
        %v2170 = vpop.f32.mrf.mxu0
        %v2171 = vadd.f32 0.0, %v2170
        %v2172 = vpop.f32.mrf.mxu0
        %v2173 = vadd.f32 0.0, %v2172
        %2174 = vdwg.mxu0
        %2175 = vmatpush.bf16.msra.mxu0 0
        %2176 = vmatpush.bf16.msra.mxu0 0
        %2177 = vmatpush.bf16.msra.mxu0 0
        %2178 = vmatpush.bf16.msra.mxu0 0
        %2179 = vmatpush.bf16.msra.mxu0 0
        %2180 = vmatpush.bf16.msra.mxu0 0
        %2181 = vmatpush.bf16.msra.mxu0 %v2035
        %2182 = vmatpush.bf16.msra.mxu0 %v2021
        %2183 = vmatmul.bf16.gmra.mxu0 %v904
        %v2184 = vpop.f32.mrf.mxu0
        %v2185 = vadd.f32 0.0, %v2184
        %v2186 = vpop.f32.mrf.mxu0
        %v2187 = vadd.f32 0.0, %v2186
        %2188 = vmatmul.bf16.gmra.mxu0 %v907
        %v2189 = vpop.f32.mrf.mxu0
        %v2190 = vadd.f32 0.0, %v2189
        %v2191 = vpop.f32.mrf.mxu0
        %v2192 = vadd.f32 0.0, %v2191
        %2193 = vmatmul.bf16.gmra.mxu0 %v910
        %v2194 = vpop.f32.mrf.mxu0
        %v2195 = vadd.f32 0.0, %v2194
        %v2196 = vpop.f32.mrf.mxu0
        %v2197 = vadd.f32 0.0, %v2196
        %2198 = vmatmul.bf16.gmra.mxu0 %v913
        %v2199 = vpop.f32.mrf.mxu0
        %v2200 = vadd.f32 0.0, %v2199
        %v2201 = vpop.f32.mrf.mxu0
        %v2202 = vadd.f32 0.0, %v2201
        %2203 = vmatmul.bf16.gmra.mxu0 %v916
        %v2204 = vpop.f32.mrf.mxu0
        %v2205 = vadd.f32 0.0, %v2204
        %v2206 = vpop.f32.mrf.mxu0
        %v2207 = vadd.f32 0.0, %v2206
        %2208 = vmatmul.bf16.gmra.mxu0 %v919
        %v2209 = vpop.f32.mrf.mxu0
        %v2210 = vadd.f32 0.0, %v2209
        %v2211 = vpop.f32.mrf.mxu0
        %v2212 = vadd.f32 0.0, %v2211
        %2213 = vmatmul.bf16.gmra.mxu0 %v922
        %v2214 = vpop.f32.mrf.mxu0
        %v2215 = vadd.f32 0.0, %v2214
        %v2216 = vpop.f32.mrf.mxu0
        %v2217 = vadd.f32 0.0, %v2216
        %2218 = vmatmul.bf16.gmra.mxu0 %v925
        %v2219 = vpop.f32.mrf.mxu0
        %v2220 = vadd.f32 0.0, %v2219
        %v2221 = vpop.f32.mrf.mxu0
        %v2222 = vadd.f32 0.0, %v2221
        %2223 = vmatmul.bf16.gmra.mxu0 %v928
        %v2224 = vpop.f32.mrf.mxu0
        %v2225 = vadd.f32 0.0, %v2224
        %v2226 = vpop.f32.mrf.mxu0
        %v2227 = vadd.f32 0.0, %v2226
        %2228 = vmatmul.bf16.gmra.mxu0 %v931
        %v2229 = vpop.f32.mrf.mxu0
        %v2230 = vadd.f32 0.0, %v2229
        %v2231 = vpop.f32.mrf.mxu0
        %v2232 = vadd.f32 0.0, %v2231
        %2233 = vmatmul.bf16.gmra.mxu0 %v934
        %v2234 = vpop.f32.mrf.mxu0
        %v2235 = vadd.f32 0.0, %v2234
        %v2236 = vpop.f32.mrf.mxu0
        %v2237 = vadd.f32 0.0, %v2236
        %2238 = vmatmul.bf16.gmra.mxu0 %v1192
        %v2239 = vpop.f32.mrf.mxu0
        %v2240 = vadd.f32 0.0, %v2239
        %v2241 = vpop.f32.mrf.mxu0
        %v2242 = vadd.f32 0.0, %v2241
        %2243 = vdwg.mxu0
        %v2244 = vadd.f32 %v1793, %v2047
        %v2245 = vadd.f32 %v1862, %v2116
        %v2246 = vadd.f32 %v1931, %v2185
        %v2247 = vadd.f32 %v1795, %v2049
        %v2248 = vadd.f32 %v1864, %v2118
        %v2249 = vadd.f32 %v1933, %v2187
        %v2250 = vadd.f32 %v1798, %v2052
        %v2251 = vadd.f32 %v1867, %v2121
        %v2252 = vadd.f32 %v1936, %v2190
        %v2253 = vadd.f32 %v1800, %v2054
        %v2254 = vadd.f32 %v1869, %v2123
        %v2255 = vadd.f32 %v1938, %v2192
        %v2256 = vadd.f32 %v1803, %v2057
        %v2257 = vadd.f32 %v1872, %v2126
        %v2258 = vadd.f32 %v1941, %v2195
        %v2259 = vadd.f32 %v1805, %v2059
        %v2260 = vadd.f32 %v1874, %v2128
        %v2261 = vadd.f32 %v1943, %v2197
        %v2262 = vadd.f32 %v1808, %v2062
        %v2263 = vadd.f32 %v1877, %v2131
        %v2264 = vadd.f32 %v1946, %v2200
        %v2265 = vadd.f32 %v1810, %v2064
        %v2266 = vadd.f32 %v1879, %v2133
        %v2267 = vadd.f32 %v1948, %v2202
        %v2268 = vadd.f32 %v1813, %v2067
        %v2269 = vadd.f32 %v1882, %v2136
        %v2270 = vadd.f32 %v1951, %v2205
        %v2271 = vadd.f32 %v1815, %v2069
        %v2272 = vadd.f32 %v1884, %v2138
        %v2273 = vadd.f32 %v1953, %v2207
        %v2274 = vadd.f32 %v1818, %v2072
        %v2275 = vadd.f32 %v1887, %v2141
        %v2276 = vadd.f32 %v1956, %v2210
        %v2277 = vadd.f32 %v1820, %v2074
        %v2278 = vadd.f32 %v1889, %v2143
        %v2279 = vadd.f32 %v1958, %v2212
        %v2280 = vadd.f32 %v1823, %v2077
        %v2281 = vadd.f32 %v1892, %v2146
        %v2282 = vadd.f32 %v1961, %v2215
        %v2283 = vadd.f32 %v1825, %v2079
        %v2284 = vadd.f32 %v1894, %v2148
        %v2285 = vadd.f32 %v1963, %v2217
        %v2286 = vadd.f32 %v1828, %v2082
        %v2287 = vadd.f32 %v1897, %v2151
        %v2288 = vadd.f32 %v1966, %v2220
        %v2289 = vadd.f32 %v1830, %v2084
        %v2290 = vadd.f32 %v1899, %v2153
        %v2291 = vadd.f32 %v1968, %v2222
        %v2292 = vadd.f32 %v1833, %v2087
        %v2293 = vadd.f32 %v1902, %v2156
        %v2294 = vadd.f32 %v1971, %v2225
        %v2295 = vadd.f32 %v1835, %v2089
        %v2296 = vadd.f32 %v1904, %v2158
        %v2297 = vadd.f32 %v1973, %v2227
        %v2298 = vadd.f32 %v1838, %v2092
        %v2299 = vadd.f32 %v1907, %v2161
        %v2300 = vadd.f32 %v1976, %v2230
        %v2301 = vadd.f32 %v1840, %v2094
        %v2302 = vadd.f32 %v1909, %v2163
        %v2303 = vadd.f32 %v1978, %v2232
        %v2304 = vadd.f32 %v1843, %v2097
        %v2305 = vadd.f32 %v1912, %v2166
        %v2306 = vadd.f32 %v1981, %v2235
        %v2307 = vadd.f32 %v1845, %v2099
        %v2308 = vadd.f32 %v1914, %v2168
        %v2309 = vadd.f32 %v1983, %v2237
        %v2310 = vadd.f32 %v1848, %v2102
        %v2311 = vadd.f32 %v1917, %v2171
        %v2312 = vadd.f32 %v1986, %v2240
        %v2313 = vadd.f32 %v1850, %v2104
        %v2314 = vadd.f32 %v1919, %v2173
        %v2315 = vadd.f32 %v1988, %v2242
        %v2316 = vmax.f32 %v1410, %v2244
        %v2317 = vmax.f32 %v1411, %v2245
        %v2318 = vmax.f32 %v1412, %v2246
        %v2319 = vmax.f32 %v1413, %v2247
        %v2320 = vmax.f32 %v1414, %v2248
        %v2321 = vmax.f32 %v1415, %v2249
        %v2322 = vmax.f32 %v1416, %v2250
        %v2323 = vmax.f32 %v1417, %v2251
        %v2324 = vmax.f32 %v1418, %v2252
        %v2325 = vmax.f32 %v1419, %v2253
        %v2326 = vmax.f32 %v1420, %v2254
        %v2327 = vmax.f32 %v1421, %v2255
        %v2328 = vmax.f32 %v1422, %v2256
        %v2329 = vmax.f32 %v1423, %v2257
        %v2330 = vmax.f32 %v1424, %v2258
        %v2331 = vmax.f32 %v1425, %v2259
        %v2332 = vmax.f32 %v1426, %v2260
        %v2333 = vmax.f32 %v1427, %v2261
        %v2334 = vmax.f32 %v1428, %v2262
        %v2335 = vmax.f32 %v1429, %v2263
        %v2336 = vmax.f32 %v1430, %v2264
        %v2337 = vmax.f32 %v1431, %v2265
        %v2338 = vmax.f32 %v1432, %v2266
        %v2339 = vmax.f32 %v1433, %v2267
        %v2340 = vmax.f32 %v1434, %v2268
        %v2341 = vmax.f32 %v1435, %v2269
        %v2342 = vmax.f32 %v1436, %v2270
        %v2343 = vmax.f32 %v1437, %v2271
        %v2344 = vmax.f32 %v1438, %v2272
        %v2345 = vmax.f32 %v1439, %v2273
        %v2346 = vmax.f32 %v1440, %v2274
        %v2347 = vmax.f32 %v1441, %v2275
        %v2348 = vmax.f32 %v1442, %v2276
        %v2349 = vmax.f32 %v1443, %v2277
        %v2350 = vmax.f32 %v1444, %v2278
        %v2351 = vmax.f32 %v1445, %v2279
        %v2352 = vmax.f32 %v1446, %v2280
        %v2353 = vmax.f32 %v1447, %v2281
        %v2354 = vmax.f32 %v1448, %v2282
        %v2355 = vmax.f32 %v1449, %v2283
        %v2356 = vmax.f32 %v1450, %v2284
        %v2357 = vmax.f32 %v1451, %v2285
        %v2358 = vmax.f32 %v1452, %v2286
        %v2359 = vmax.f32 %v1453, %v2287
        %v2360 = vmax.f32 %v1454, %v2288
        %v2361 = vmax.f32 %v1455, %v2289
        %v2362 = vmax.f32 %v1456, %v2290
        %v2363 = vmax.f32 %v1457, %v2291
        %v2364 = vmax.f32 %v1458, %v2292
        %v2365 = vmax.f32 %v1459, %v2293
        %v2366 = vmax.f32 %v1460, %v2294
        %v2367 = vmax.f32 %v1461, %v2295
        %v2368 = vmax.f32 %v1462, %v2296
        %v2369 = vmax.f32 %v1463, %v2297
        %v2370 = vmax.f32 %v1464, %v2298
        %v2371 = vmax.f32 %v1465, %v2299
        %v2372 = vmax.f32 %v1466, %v2300
        %v2373 = vmax.f32 %v1467, %v2301
        %v2374 = vmax.f32 %v1468, %v2302
        %v2375 = vmax.f32 %v1469, %v2303
        %v2376 = vmax.f32 %v1470, %v2304
        %v2377 = vmax.f32 %v1471, %v2305
        %v2378 = vmax.f32 %v1472, %v2306
        %v2379 = vmax.f32 %v1473, %v2307
        %v2380 = vmax.f32 %v1474, %v2308
        %v2381 = vmax.f32 %v1475, %v2309
        %v2382 = vmax.f32 %v1476, %v2310
        %v2383 = vmax.f32 %v1477, %v2311
        %v2384 = vmax.f32 %v1478, %v2312
        %v2385 = vmax.f32 %v1479, %v2313
        %v2386 = vmax.f32 %v1480, %v2314
        %v2387 = vmax.f32 %v1481, %v2315
        %v2388 = vld [vmem:[%s3] sm:$0xff]
        %v2389 = vld [vmem:[%s3 + $0x8] sm:$0xff]
        %v2390 = vld [vmem:[%s3 + $0x10] sm:$0xff]
        %v2391 = vld [vmem:[%s3 + $0x18] sm:$0xff]
        %v2392 = vld [vmem:[%s3 + $0x20] sm:$0xff]
        %v2393 = vld [vmem:[%s3 + $0x28] sm:$0xff]
        %v2394 = vld [vmem:[%s3 + $0x30] sm:$0xff]
        %v2395 = vld [vmem:[%s3 + $0x38] sm:$0xff]
        %v2396 = vld [vmem:[%s3 + $0x40] sm:$0xff]
        %v2397 = vld [vmem:[%s3 + $0x48] sm:$0xff]
        %v2398 = vld [vmem:[%s3 + $0x50] sm:$0xff]
        %v2399 = vld [vmem:[%s3 + $0x58] sm:$0xff]
        %v2400 = vld [vmem:[%s3 + $0x60] sm:$0xff]
        %v2401 = vld [vmem:[%s3 + $0x68] sm:$0xff]
        %v2402 = vld [vmem:[%s3 + $0x70] sm:$0xff]
        %v2403 = vld [vmem:[%s3 + $0x78] sm:$0xff]
        %v2404 = vld [vmem:[%s3 + $0x80] sm:$0xff]
        %v2405 = vld [vmem:[%s3 + $0x88] sm:$0xff]
        %v2406 = vld [vmem:[%s3 + $0x90] sm:$0xff]
        %v2407 = vld [vmem:[%s3 + $0x98] sm:$0xff]
        %v2408 = vld [vmem:[%s3 + $0xa0] sm:$0xff]
        %v2409 = vld [vmem:[%s3 + $0xa8] sm:$0xff]
        %v2410 = vld [vmem:[%s3 + $0xb0] sm:$0xff]
        %v2411 = vld [vmem:[%s3 + $0xb8] sm:$0xff]
        %vm2412 = vcmask 523264
        %v2414 = vsel %vm2412, %v2389, 0
        %v2417 = vsel %vm2412, %v2391, 0
        %v2420 = vsel %vm2412, %v2393, 0
        %v2423 = vsel %vm2412, %v2395, 0
        %v2426 = vsel %vm2412, %v2397, 0
        %v2429 = vsel %vm2412, %v2399, 0
        %v2432 = vsel %vm2412, %v2401, 0
        %v2435 = vsel %vm2412, %v2403, 0
        %v2438 = vsel %vm2412, %v2405, 0
        %v2441 = vsel %vm2412, %v2407, 0
        %v2444 = vsel %vm2412, %v2409, 0
        %v2447 = vsel %vm2412, %v2411, 0
        %2449 = vmatpush.msra.mxu0 %v2361
        %2450 = vmatpush.msra.mxu0 %v2358
        %2451 = vmatpush.msra.mxu0 %v2355
        %2452 = vmatpush.msra.mxu0 %v2352
        %2453 = vmatpush.msra.mxu0 %v2349
        %2454 = vmatpush.msra.mxu0 %v2346
        %2455 = vmatpush.msra.mxu0 %v2343
        %2456 = vmatpush.msra.mxu0 %v2340
        %2457 = vmatpush.msra.mxu0 %v2337
        %2458 = vmatpush.msra.mxu0 %v2334
        %2459 = vmatpush.msra.mxu0 %v2331
        %2460 = vmatpush.msra.mxu0 %v2328
        %2461 = vmatpush.msra.mxu0 %v2325
        %2462 = vmatpush.msra.mxu0 %v2322
        %2463 = vmatpush.msra.mxu0 %v2319
        %2464 = vmatpush.msra.mxu0 %v2316
        %2465 = vmatmul.f32.gmra.mxu0 %v2388
        %v2466 = vpop.f32.mrf.mxu0
        %v2467 = vadd.f32 0.0, %v2466
        %2468 = vmatmul.f32.gmra.mxu0 %v2390
        %v2469 = vpop.f32.mrf.mxu0
        %v2470 = vadd.f32 0.0, %v2469
        %2471 = vmatmul.f32.gmra.mxu0 %v2392
        %v2472 = vpop.f32.mrf.mxu0
        %v2473 = vadd.f32 0.0, %v2472
        %2474 = vmatmul.f32.gmra.mxu0 %v2394
        %v2475 = vpop.f32.mrf.mxu0
        %v2476 = vadd.f32 0.0, %v2475
        %2477 = vmatmul.f32.gmra.mxu0 %v2396
        %v2478 = vpop.f32.mrf.mxu0
        %v2479 = vadd.f32 0.0, %v2478
        %2480 = vmatmul.f32.gmra.mxu0 %v2398
        %v2481 = vpop.f32.mrf.mxu0
        %v2482 = vadd.f32 0.0, %v2481
        %2483 = vmatmul.f32.gmra.mxu0 %v2400
        %v2484 = vpop.f32.mrf.mxu0
        %v2485 = vadd.f32 0.0, %v2484
        %2486 = vmatmul.f32.gmra.mxu0 %v2402
        %v2487 = vpop.f32.mrf.mxu0
        %v2488 = vadd.f32 0.0, %v2487
        %2489 = vmatmul.f32.gmra.mxu0 %v2404
        %v2490 = vpop.f32.mrf.mxu0
        %v2491 = vadd.f32 0.0, %v2490
        %2492 = vmatmul.f32.gmra.mxu0 %v2406
        %v2493 = vpop.f32.mrf.mxu0
        %v2494 = vadd.f32 0.0, %v2493
        %2495 = vmatmul.f32.gmra.mxu0 %v2408
        %v2496 = vpop.f32.mrf.mxu0
        %v2497 = vadd.f32 0.0, %v2496
        %2498 = vmatmul.f32.gmra.mxu0 %v2410
        %v2499 = vpop.f32.mrf.mxu0
        %v2500 = vadd.f32 0.0, %v2499
        %2501 = vdwg.mxu0
        %2502 = vmatpush.msra.mxu0 0.0
        %2503 = vmatpush.msra.mxu0 0.0
        %2504 = vmatpush.msra.mxu0 0.0
        %2505 = vmatpush.msra.mxu0 0.0
        %2506 = vmatpush.msra.mxu0 0.0
        %2507 = vmatpush.msra.mxu0 0.0
        %2508 = vmatpush.msra.mxu0 0.0
        %2509 = vmatpush.msra.mxu0 0.0
        %2510 = vmatpush.msra.mxu0 %v2385
        %2511 = vmatpush.msra.mxu0 %v2382
        %2512 = vmatpush.msra.mxu0 %v2379
        %2513 = vmatpush.msra.mxu0 %v2376
        %2514 = vmatpush.msra.mxu0 %v2373
        %2515 = vmatpush.msra.mxu0 %v2370
        %2516 = vmatpush.msra.mxu0 %v2367
        %2517 = vmatpush.msra.mxu0 %v2364
        %2518 = vmatmul.f32.gmra.mxu0 %v2414
        %v2519 = vpop.f32.mrf.mxu0
        %v2520 = vadd.f32 %v2467, %v2519
        %2521 = vmatmul.f32.gmra.mxu0 %v2417
        %v2522 = vpop.f32.mrf.mxu0
        %v2523 = vadd.f32 %v2470, %v2522
        %2524 = vmatmul.f32.gmra.mxu0 %v2420
        %v2525 = vpop.f32.mrf.mxu0
        %v2526 = vadd.f32 %v2473, %v2525
        %2527 = vmatmul.f32.gmra.mxu0 %v2423
        %v2528 = vpop.f32.mrf.mxu0
        %v2529 = vadd.f32 %v2476, %v2528
        %2530 = vmatmul.f32.gmra.mxu0 %v2426
        %v2531 = vpop.f32.mrf.mxu0
        %v2532 = vadd.f32 %v2479, %v2531
        %2533 = vmatmul.f32.gmra.mxu0 %v2429
        %v2534 = vpop.f32.mrf.mxu0
        %v2535 = vadd.f32 %v2482, %v2534
        %2536 = vmatmul.f32.gmra.mxu0 %v2432
        %v2537 = vpop.f32.mrf.mxu0
        %v2538 = vadd.f32 %v2485, %v2537
        %2539 = vmatmul.f32.gmra.mxu0 %v2435
        %v2540 = vpop.f32.mrf.mxu0
        %v2541 = vadd.f32 %v2488, %v2540
        %2542 = vmatmul.f32.gmra.mxu0 %v2438
        %v2543 = vpop.f32.mrf.mxu0
        %v2544 = vadd.f32 %v2491, %v2543
        %2545 = vmatmul.f32.gmra.mxu0 %v2441
        %v2546 = vpop.f32.mrf.mxu0
        %v2547 = vadd.f32 %v2494, %v2546
        %2548 = vmatmul.f32.gmra.mxu0 %v2444
        %v2549 = vpop.f32.mrf.mxu0
        %v2550 = vadd.f32 %v2497, %v2549
        %2551 = vmatmul.f32.gmra.mxu0 %v2447
        %v2552 = vpop.f32.mrf.mxu0
        %v2553 = vadd.f32 %v2500, %v2552
        %2554 = vdwg.mxu0
        %2555 = vmatpush.msra.mxu0 %v2362
        %2556 = vmatpush.msra.mxu0 %v2359
        %2557 = vmatpush.msra.mxu0 %v2356
        %2558 = vmatpush.msra.mxu0 %v2353
        %2559 = vmatpush.msra.mxu0 %v2350
        %2560 = vmatpush.msra.mxu0 %v2347
        %2561 = vmatpush.msra.mxu0 %v2344
        %2562 = vmatpush.msra.mxu0 %v2341
        %2563 = vmatpush.msra.mxu0 %v2338
        %2564 = vmatpush.msra.mxu0 %v2335
        %2565 = vmatpush.msra.mxu0 %v2332
        %2566 = vmatpush.msra.mxu0 %v2329
        %2567 = vmatpush.msra.mxu0 %v2326
        %2568 = vmatpush.msra.mxu0 %v2323
        %2569 = vmatpush.msra.mxu0 %v2320
        %2570 = vmatpush.msra.mxu0 %v2317
        %2571 = vmatmul.f32.gmra.mxu0 %v2388
        %v2572 = vpop.f32.mrf.mxu0
        %v2573 = vadd.f32 0.0, %v2572
        %2574 = vmatmul.f32.gmra.mxu0 %v2390
        %v2575 = vpop.f32.mrf.mxu0
        %v2576 = vadd.f32 0.0, %v2575
        %2577 = vmatmul.f32.gmra.mxu0 %v2392
        %v2578 = vpop.f32.mrf.mxu0
        %v2579 = vadd.f32 0.0, %v2578
        %2580 = vmatmul.f32.gmra.mxu0 %v2394
        %v2581 = vpop.f32.mrf.mxu0
        %v2582 = vadd.f32 0.0, %v2581
        %2583 = vmatmul.f32.gmra.mxu0 %v2396
        %v2584 = vpop.f32.mrf.mxu0
        %v2585 = vadd.f32 0.0, %v2584
        %2586 = vmatmul.f32.gmra.mxu0 %v2398
        %v2587 = vpop.f32.mrf.mxu0
        %v2588 = vadd.f32 0.0, %v2587
        %2589 = vmatmul.f32.gmra.mxu0 %v2400
        %v2590 = vpop.f32.mrf.mxu0
        %v2591 = vadd.f32 0.0, %v2590
        %2592 = vmatmul.f32.gmra.mxu0 %v2402
        %v2593 = vpop.f32.mrf.mxu0
        %v2594 = vadd.f32 0.0, %v2593
        %2595 = vmatmul.f32.gmra.mxu0 %v2404
        %v2596 = vpop.f32.mrf.mxu0
        %v2597 = vadd.f32 0.0, %v2596
        %2598 = vmatmul.f32.gmra.mxu0 %v2406
        %v2599 = vpop.f32.mrf.mxu0
        %v2600 = vadd.f32 0.0, %v2599
        %2601 = vmatmul.f32.gmra.mxu0 %v2408
        %v2602 = vpop.f32.mrf.mxu0
        %v2603 = vadd.f32 0.0, %v2602
        %2604 = vmatmul.f32.gmra.mxu0 %v2410
        %v2605 = vpop.f32.mrf.mxu0
        %v2606 = vadd.f32 0.0, %v2605
        %2607 = vdwg.mxu0
        %2608 = vmatpush.msra.mxu0 0.0
        %2609 = vmatpush.msra.mxu0 0.0
        %2610 = vmatpush.msra.mxu0 0.0
        %2611 = vmatpush.msra.mxu0 0.0
        %2612 = vmatpush.msra.mxu0 0.0
        %2613 = vmatpush.msra.mxu0 0.0
        %2614 = vmatpush.msra.mxu0 0.0
        %2615 = vmatpush.msra.mxu0 0.0
        %2616 = vmatpush.msra.mxu0 %v2386
        %2617 = vmatpush.msra.mxu0 %v2383
        %2618 = vmatpush.msra.mxu0 %v2380
        %2619 = vmatpush.msra.mxu0 %v2377
        %2620 = vmatpush.msra.mxu0 %v2374
        %2621 = vmatpush.msra.mxu0 %v2371
        %2622 = vmatpush.msra.mxu0 %v2368
        %2623 = vmatpush.msra.mxu0 %v2365
        %2624 = vmatmul.f32.gmra.mxu0 %v2414
        %v2625 = vpop.f32.mrf.mxu0
        %v2626 = vadd.f32 %v2573, %v2625
        %2627 = vmatmul.f32.gmra.mxu0 %v2417
        %v2628 = vpop.f32.mrf.mxu0
        %v2629 = vadd.f32 %v2576, %v2628
        %2630 = vmatmul.f32.gmra.mxu0 %v2420
        %v2631 = vpop.f32.mrf.mxu0
        %v2632 = vadd.f32 %v2579, %v2631
        %2633 = vmatmul.f32.gmra.mxu0 %v2423
        %v2634 = vpop.f32.mrf.mxu0
        %v2635 = vadd.f32 %v2582, %v2634
        %2636 = vmatmul.f32.gmra.mxu0 %v2426
        %v2637 = vpop.f32.mrf.mxu0
        %v2638 = vadd.f32 %v2585, %v2637
        %2639 = vmatmul.f32.gmra.mxu0 %v2429
        %v2640 = vpop.f32.mrf.mxu0
        %v2641 = vadd.f32 %v2588, %v2640
        %2642 = vmatmul.f32.gmra.mxu0 %v2432
        %v2643 = vpop.f32.mrf.mxu0
        %v2644 = vadd.f32 %v2591, %v2643
        %2645 = vmatmul.f32.gmra.mxu0 %v2435
        %v2646 = vpop.f32.mrf.mxu0
        %v2647 = vadd.f32 %v2594, %v2646
        %2648 = vmatmul.f32.gmra.mxu0 %v2438
        %v2649 = vpop.f32.mrf.mxu0
        %v2650 = vadd.f32 %v2597, %v2649
        %2651 = vmatmul.f32.gmra.mxu0 %v2441
        %v2652 = vpop.f32.mrf.mxu0
        %v2653 = vadd.f32 %v2600, %v2652
        %2654 = vmatmul.f32.gmra.mxu0 %v2444
        %v2655 = vpop.f32.mrf.mxu0
        %v2656 = vadd.f32 %v2603, %v2655
        %2657 = vmatmul.f32.gmra.mxu0 %v2447
        %v2658 = vpop.f32.mrf.mxu0
        %v2659 = vadd.f32 %v2606, %v2658
        %2660 = vdwg.mxu0
        %2661 = vmatpush.msra.mxu0 %v2363
        %2662 = vmatpush.msra.mxu0 %v2360
        %2663 = vmatpush.msra.mxu0 %v2357
        %2664 = vmatpush.msra.mxu0 %v2354
        %2665 = vmatpush.msra.mxu0 %v2351
        %2666 = vmatpush.msra.mxu0 %v2348
        %2667 = vmatpush.msra.mxu0 %v2345
        %2668 = vmatpush.msra.mxu0 %v2342
        %2669 = vmatpush.msra.mxu0 %v2339
        %2670 = vmatpush.msra.mxu0 %v2336
        %2671 = vmatpush.msra.mxu0 %v2333
        %2672 = vmatpush.msra.mxu0 %v2330
        %2673 = vmatpush.msra.mxu0 %v2327
        %2674 = vmatpush.msra.mxu0 %v2324
        %2675 = vmatpush.msra.mxu0 %v2321
        %2676 = vmatpush.msra.mxu0 %v2318
        %2677 = vmatmul.f32.gmra.mxu0 %v2388
        %v2678 = vpop.f32.mrf.mxu0
        %v2679 = vadd.f32 0.0, %v2678
        %2680 = vmatmul.f32.gmra.mxu0 %v2390
        %v2681 = vpop.f32.mrf.mxu0
        %v2682 = vadd.f32 0.0, %v2681
        %2683 = vmatmul.f32.gmra.mxu0 %v2392
        %v2684 = vpop.f32.mrf.mxu0
        %v2685 = vadd.f32 0.0, %v2684
        %2686 = vmatmul.f32.gmra.mxu0 %v2394
        %v2687 = vpop.f32.mrf.mxu0
        %v2688 = vadd.f32 0.0, %v2687
        %2689 = vmatmul.f32.gmra.mxu0 %v2396
        %v2690 = vpop.f32.mrf.mxu0
        %v2691 = vadd.f32 0.0, %v2690
        %2692 = vmatmul.f32.gmra.mxu0 %v2398
        %v2693 = vpop.f32.mrf.mxu0
        %v2694 = vadd.f32 0.0, %v2693
        %2695 = vmatmul.f32.gmra.mxu0 %v2400
        %v2696 = vpop.f32.mrf.mxu0
        %v2697 = vadd.f32 0.0, %v2696
        %2698 = vmatmul.f32.gmra.mxu0 %v2402
        %v2699 = vpop.f32.mrf.mxu0
        %v2700 = vadd.f32 0.0, %v2699
        %2701 = vmatmul.f32.gmra.mxu0 %v2404
        %v2702 = vpop.f32.mrf.mxu0
        %v2703 = vadd.f32 0.0, %v2702
        %2704 = vmatmul.f32.gmra.mxu0 %v2406
        %v2705 = vpop.f32.mrf.mxu0
        %v2706 = vadd.f32 0.0, %v2705
        %2707 = vmatmul.f32.gmra.mxu0 %v2408
        %v2708 = vpop.f32.mrf.mxu0
        %v2709 = vadd.f32 0.0, %v2708
        %2710 = vmatmul.f32.gmra.mxu0 %v2410
        %v2711 = vpop.f32.mrf.mxu0
        %v2712 = vadd.f32 0.0, %v2711
        %2713 = vdwg.mxu0
        %2714 = vmatpush.msra.mxu0 0.0
        %2715 = vmatpush.msra.mxu0 0.0
        %2716 = vmatpush.msra.mxu0 0.0
        %2717 = vmatpush.msra.mxu0 0.0
        %2718 = vmatpush.msra.mxu0 0.0
        %2719 = vmatpush.msra.mxu0 0.0
        %2720 = vmatpush.msra.mxu0 0.0
        %2721 = vmatpush.msra.mxu0 0.0
        %2722 = vmatpush.msra.mxu0 %v2387
        %2723 = vmatpush.msra.mxu0 %v2384
        %2724 = vmatpush.msra.mxu0 %v2381
        %2725 = vmatpush.msra.mxu0 %v2378
        %2726 = vmatpush.msra.mxu0 %v2375
        %2727 = vmatpush.msra.mxu0 %v2372
        %2728 = vmatpush.msra.mxu0 %v2369
        %2729 = vmatpush.msra.mxu0 %v2366
        %2730 = vmatmul.f32.gmra.mxu0 %v2414
        %v2731 = vpop.f32.mrf.mxu0
        %v2732 = vadd.f32 %v2679, %v2731
        %2733 = vmatmul.f32.gmra.mxu0 %v2417
        %v2734 = vpop.f32.mrf.mxu0
        %v2735 = vadd.f32 %v2682, %v2734
        %2736 = vmatmul.f32.gmra.mxu0 %v2420
        %v2737 = vpop.f32.mrf.mxu0
        %v2738 = vadd.f32 %v2685, %v2737
        %2739 = vmatmul.f32.gmra.mxu0 %v2423
        %v2740 = vpop.f32.mrf.mxu0
        %v2741 = vadd.f32 %v2688, %v2740
        %2742 = vmatmul.f32.gmra.mxu0 %v2426
        %v2743 = vpop.f32.mrf.mxu0
        %v2744 = vadd.f32 %v2691, %v2743
        %2745 = vmatmul.f32.gmra.mxu0 %v2429
        %v2746 = vpop.f32.mrf.mxu0
        %v2747 = vadd.f32 %v2694, %v2746
        %2748 = vmatmul.f32.gmra.mxu0 %v2432
        %v2749 = vpop.f32.mrf.mxu0
        %v2750 = vadd.f32 %v2697, %v2749
        %2751 = vmatmul.f32.gmra.mxu0 %v2435
        %v2752 = vpop.f32.mrf.mxu0
        %v2753 = vadd.f32 %v2700, %v2752
        %2754 = vmatmul.f32.gmra.mxu0 %v2438
        %v2755 = vpop.f32.mrf.mxu0
        %v2756 = vadd.f32 %v2703, %v2755
        %2757 = vmatmul.f32.gmra.mxu0 %v2441
        %v2758 = vpop.f32.mrf.mxu0
        %v2759 = vadd.f32 %v2706, %v2758
        %2760 = vmatmul.f32.gmra.mxu0 %v2444
        %v2761 = vpop.f32.mrf.mxu0
        %v2762 = vadd.f32 %v2709, %v2761
        %2763 = vmatmul.f32.gmra.mxu0 %v2447
        %v2764 = vpop.f32.mrf.mxu0
        %v2765 = vadd.f32 %v2712, %v2764
        %2766 = vdwg.mxu0
        %s2767 = scalar_lea.vmem %s3, 192
        %v2768 = vld [vmem:[%s2767] sm:$0xff]
        %v2769 = vld [vmem:[%s2767 + $0x8] sm:$0xff]
        %v2770 = vld [vmem:[%s2767 + $0x10] sm:$0xff]
        %v2771 = vld [vmem:[%s2767 + $0x18] sm:$0xff]
        %v2772 = vld [vmem:[%s2767 + $0x20] sm:$0xff]
        %v2773 = vld [vmem:[%s2767 + $0x28] sm:$0xff]
        %v2774 = vld [vmem:[%s2767 + $0x30] sm:$0xff]
        %v2775 = vld [vmem:[%s2767 + $0x38] sm:$0xff]
        %v2776 = vld [vmem:[%s2767 + $0x40] sm:$0xff]
        %v2777 = vld [vmem:[%s2767 + $0x48] sm:$0xff]
        %v2778 = vld [vmem:[%s2767 + $0x50] sm:$0xff]
        %v2779 = vld [vmem:[%s2767 + $0x58] sm:$0xff]
        %v2780 = vld [vmem:[%s2767 + $0x60] sm:$0xff]
        %v2781 = vld [vmem:[%s2767 + $0x68] sm:$0xff]
        %v2782 = vld [vmem:[%s2767 + $0x70] sm:$0xff]
        %v2783 = vld [vmem:[%s2767 + $0x78] sm:$0xff]
        %v2784 = vld [vmem:[%s2767 + $0x80] sm:$0xff]
        %v2785 = vld [vmem:[%s2767 + $0x88] sm:$0xff]
        %v2786 = vld [vmem:[%s2767 + $0x90] sm:$0xff]
        %v2787 = vld [vmem:[%s2767 + $0x98] sm:$0xff]
        %v2788 = vld [vmem:[%s2767 + $0xa0] sm:$0xff]
        %v2789 = vld [vmem:[%s2767 + $0xa8] sm:$0xff]
        %v2790 = vld [vmem:[%s2767 + $0xb0] sm:$0xff]
        %v2791 = vld [vmem:[%s2767 + $0xb8] sm:$0xff]
        %v2793 = vsel %vm2412, %v2769, 0
        %v2796 = vsel %vm2412, %v2771, 0
        %v2799 = vsel %vm2412, %v2773, 0
        %v2802 = vsel %vm2412, %v2775, 0
        %v2805 = vsel %vm2412, %v2777, 0
        %v2808 = vsel %vm2412, %v2779, 0
        %v2811 = vsel %vm2412, %v2781, 0
        %v2814 = vsel %vm2412, %v2783, 0
        %v2817 = vsel %vm2412, %v2785, 0
        %v2820 = vsel %vm2412, %v2787, 0
        %v2823 = vsel %vm2412, %v2789, 0
        %v2826 = vsel %vm2412, %v2791, 0
        %2828 = vmatpush.msra.mxu0 %v2361
        %2829 = vmatpush.msra.mxu0 %v2358
        %2830 = vmatpush.msra.mxu0 %v2355
        %2831 = vmatpush.msra.mxu0 %v2352
        %2832 = vmatpush.msra.mxu0 %v2349
        %2833 = vmatpush.msra.mxu0 %v2346
        %2834 = vmatpush.msra.mxu0 %v2343
        %2835 = vmatpush.msra.mxu0 %v2340
        %2836 = vmatpush.msra.mxu0 %v2337
        %2837 = vmatpush.msra.mxu0 %v2334
        %2838 = vmatpush.msra.mxu0 %v2331
        %2839 = vmatpush.msra.mxu0 %v2328
        %2840 = vmatpush.msra.mxu0 %v2325
        %2841 = vmatpush.msra.mxu0 %v2322
        %2842 = vmatpush.msra.mxu0 %v2319
        %2843 = vmatpush.msra.mxu0 %v2316
        %2844 = vmatmul.f32.gmra.mxu0 %v2768
        %v2845 = vpop.f32.mrf.mxu0
        %v2846 = vadd.f32 0.0, %v2845
        %2847 = vmatmul.f32.gmra.mxu0 %v2770
        %v2848 = vpop.f32.mrf.mxu0
        %v2849 = vadd.f32 0.0, %v2848
        %2850 = vmatmul.f32.gmra.mxu0 %v2772
        %v2851 = vpop.f32.mrf.mxu0
        %v2852 = vadd.f32 0.0, %v2851
        %2853 = vmatmul.f32.gmra.mxu0 %v2774
        %v2854 = vpop.f32.mrf.mxu0
        %v2855 = vadd.f32 0.0, %v2854
        %2856 = vmatmul.f32.gmra.mxu0 %v2776
        %v2857 = vpop.f32.mrf.mxu0
        %v2858 = vadd.f32 0.0, %v2857
        %2859 = vmatmul.f32.gmra.mxu0 %v2778
        %v2860 = vpop.f32.mrf.mxu0
        %v2861 = vadd.f32 0.0, %v2860
        %2862 = vmatmul.f32.gmra.mxu0 %v2780
        %v2863 = vpop.f32.mrf.mxu0
        %v2864 = vadd.f32 0.0, %v2863
        %2865 = vmatmul.f32.gmra.mxu0 %v2782
        %v2866 = vpop.f32.mrf.mxu0
        %v2867 = vadd.f32 0.0, %v2866
        %2868 = vmatmul.f32.gmra.mxu0 %v2784
        %v2869 = vpop.f32.mrf.mxu0
        %v2870 = vadd.f32 0.0, %v2869
        %2871 = vmatmul.f32.gmra.mxu0 %v2786
        %v2872 = vpop.f32.mrf.mxu0
        %v2873 = vadd.f32 0.0, %v2872
        %2874 = vmatmul.f32.gmra.mxu0 %v2788
        %v2875 = vpop.f32.mrf.mxu0
        %v2876 = vadd.f32 0.0, %v2875
        %2877 = vmatmul.f32.gmra.mxu0 %v2790
        %v2878 = vpop.f32.mrf.mxu0
        %v2879 = vadd.f32 0.0, %v2878
        %2880 = vdwg.mxu0
        %2881 = vmatpush.msra.mxu0 0.0
        %2882 = vmatpush.msra.mxu0 0.0
        %2883 = vmatpush.msra.mxu0 0.0
        %2884 = vmatpush.msra.mxu0 0.0
        %2885 = vmatpush.msra.mxu0 0.0
        %2886 = vmatpush.msra.mxu0 0.0
        %2887 = vmatpush.msra.mxu0 0.0
        %2888 = vmatpush.msra.mxu0 0.0
        %2889 = vmatpush.msra.mxu0 %v2385
        %2890 = vmatpush.msra.mxu0 %v2382
        %2891 = vmatpush.msra.mxu0 %v2379
        %2892 = vmatpush.msra.mxu0 %v2376
        %2893 = vmatpush.msra.mxu0 %v2373
        %2894 = vmatpush.msra.mxu0 %v2370
        %2895 = vmatpush.msra.mxu0 %v2367
        %2896 = vmatpush.msra.mxu0 %v2364
        %2897 = vmatmul.f32.gmra.mxu0 %v2793
        %v2898 = vpop.f32.mrf.mxu0
        %v2899 = vadd.f32 %v2846, %v2898
        %2900 = vmatmul.f32.gmra.mxu0 %v2796
        %v2901 = vpop.f32.mrf.mxu0
        %v2902 = vadd.f32 %v2849, %v2901
        %2903 = vmatmul.f32.gmra.mxu0 %v2799
        %v2904 = vpop.f32.mrf.mxu0
        %v2905 = vadd.f32 %v2852, %v2904
        %2906 = vmatmul.f32.gmra.mxu0 %v2802
        %v2907 = vpop.f32.mrf.mxu0
        %v2908 = vadd.f32 %v2855, %v2907
        %2909 = vmatmul.f32.gmra.mxu0 %v2805
        %v2910 = vpop.f32.mrf.mxu0
        %v2911 = vadd.f32 %v2858, %v2910
        %2912 = vmatmul.f32.gmra.mxu0 %v2808
        %v2913 = vpop.f32.mrf.mxu0
        %v2914 = vadd.f32 %v2861, %v2913
        %2915 = vmatmul.f32.gmra.mxu0 %v2811
        %v2916 = vpop.f32.mrf.mxu0
        %v2917 = vadd.f32 %v2864, %v2916
        %2918 = vmatmul.f32.gmra.mxu0 %v2814
        %v2919 = vpop.f32.mrf.mxu0
        %v2920 = vadd.f32 %v2867, %v2919
        %2921 = vmatmul.f32.gmra.mxu0 %v2817
        %v2922 = vpop.f32.mrf.mxu0
        %v2923 = vadd.f32 %v2870, %v2922
        %2924 = vmatmul.f32.gmra.mxu0 %v2820
        %v2925 = vpop.f32.mrf.mxu0
        %v2926 = vadd.f32 %v2873, %v2925
        %2927 = vmatmul.f32.gmra.mxu0 %v2823
        %v2928 = vpop.f32.mrf.mxu0
        %v2929 = vadd.f32 %v2876, %v2928
        %2930 = vmatmul.f32.gmra.mxu0 %v2826
        %v2931 = vpop.f32.mrf.mxu0
        %v2932 = vadd.f32 %v2879, %v2931
        %2933 = vdwg.mxu0
        %2934 = vmatpush.msra.mxu0 %v2362
        %2935 = vmatpush.msra.mxu0 %v2359
        %2936 = vmatpush.msra.mxu0 %v2356
        %2937 = vmatpush.msra.mxu0 %v2353
        %2938 = vmatpush.msra.mxu0 %v2350
        %2939 = vmatpush.msra.mxu0 %v2347
        %2940 = vmatpush.msra.mxu0 %v2344
        %2941 = vmatpush.msra.mxu0 %v2341
        %2942 = vmatpush.msra.mxu0 %v2338
        %2943 = vmatpush.msra.mxu0 %v2335
        %2944 = vmatpush.msra.mxu0 %v2332
        %2945 = vmatpush.msra.mxu0 %v2329
        %2946 = vmatpush.msra.mxu0 %v2326
        %2947 = vmatpush.msra.mxu0 %v2323
        %2948 = vmatpush.msra.mxu0 %v2320
        %2949 = vmatpush.msra.mxu0 %v2317
        %2950 = vmatmul.f32.gmra.mxu0 %v2768
        %v2951 = vpop.f32.mrf.mxu0
        %v2952 = vadd.f32 0.0, %v2951
        %2953 = vmatmul.f32.gmra.mxu0 %v2770
        %v2954 = vpop.f32.mrf.mxu0
        %v2955 = vadd.f32 0.0, %v2954
        %2956 = vmatmul.f32.gmra.mxu0 %v2772
        %v2957 = vpop.f32.mrf.mxu0
        %v2958 = vadd.f32 0.0, %v2957
        %2959 = vmatmul.f32.gmra.mxu0 %v2774
        %v2960 = vpop.f32.mrf.mxu0
        %v2961 = vadd.f32 0.0, %v2960
        %2962 = vmatmul.f32.gmra.mxu0 %v2776
        %v2963 = vpop.f32.mrf.mxu0
        %v2964 = vadd.f32 0.0, %v2963
        %2965 = vmatmul.f32.gmra.mxu0 %v2778
        %v2966 = vpop.f32.mrf.mxu0
        %v2967 = vadd.f32 0.0, %v2966
        %2968 = vmatmul.f32.gmra.mxu0 %v2780
        %v2969 = vpop.f32.mrf.mxu0
        %v2970 = vadd.f32 0.0, %v2969
        %2971 = vmatmul.f32.gmra.mxu0 %v2782
        %v2972 = vpop.f32.mrf.mxu0
        %v2973 = vadd.f32 0.0, %v2972
        %2974 = vmatmul.f32.gmra.mxu0 %v2784
        %v2975 = vpop.f32.mrf.mxu0
        %v2976 = vadd.f32 0.0, %v2975
        %2977 = vmatmul.f32.gmra.mxu0 %v2786
        %v2978 = vpop.f32.mrf.mxu0
        %v2979 = vadd.f32 0.0, %v2978
        %2980 = vmatmul.f32.gmra.mxu0 %v2788
        %v2981 = vpop.f32.mrf.mxu0
        %v2982 = vadd.f32 0.0, %v2981
        %2983 = vmatmul.f32.gmra.mxu0 %v2790
        %v2984 = vpop.f32.mrf.mxu0
        %v2985 = vadd.f32 0.0, %v2984
        %2986 = vdwg.mxu0
        %2987 = vmatpush.msra.mxu0 0.0
        %2988 = vmatpush.msra.mxu0 0.0
        %2989 = vmatpush.msra.mxu0 0.0
        %2990 = vmatpush.msra.mxu0 0.0
        %2991 = vmatpush.msra.mxu0 0.0
        %2992 = vmatpush.msra.mxu0 0.0
        %2993 = vmatpush.msra.mxu0 0.0
        %2994 = vmatpush.msra.mxu0 0.0
        %2995 = vmatpush.msra.mxu0 %v2386
        %2996 = vmatpush.msra.mxu0 %v2383
        %2997 = vmatpush.msra.mxu0 %v2380
        %2998 = vmatpush.msra.mxu0 %v2377
        %2999 = vmatpush.msra.mxu0 %v2374
        %3000 = vmatpush.msra.mxu0 %v2371
        %3001 = vmatpush.msra.mxu0 %v2368
        %3002 = vmatpush.msra.mxu0 %v2365
        %3003 = vmatmul.f32.gmra.mxu0 %v2793
        %v3004 = vpop.f32.mrf.mxu0
        %v3005 = vadd.f32 %v2952, %v3004
        %3006 = vmatmul.f32.gmra.mxu0 %v2796
        %v3007 = vpop.f32.mrf.mxu0
        %v3008 = vadd.f32 %v2955, %v3007
        %3009 = vmatmul.f32.gmra.mxu0 %v2799
        %v3010 = vpop.f32.mrf.mxu0
        %v3011 = vadd.f32 %v2958, %v3010
        %3012 = vmatmul.f32.gmra.mxu0 %v2802
        %v3013 = vpop.f32.mrf.mxu0
        %v3014 = vadd.f32 %v2961, %v3013
        %3015 = vmatmul.f32.gmra.mxu0 %v2805
        %v3016 = vpop.f32.mrf.mxu0
        %v3017 = vadd.f32 %v2964, %v3016
        %3018 = vmatmul.f32.gmra.mxu0 %v2808
        %v3019 = vpop.f32.mrf.mxu0
        %v3020 = vadd.f32 %v2967, %v3019
        %3021 = vmatmul.f32.gmra.mxu0 %v2811
        %v3022 = vpop.f32.mrf.mxu0
        %v3023 = vadd.f32 %v2970, %v3022
        %3024 = vmatmul.f32.gmra.mxu0 %v2814
        %v3025 = vpop.f32.mrf.mxu0
        %v3026 = vadd.f32 %v2973, %v3025
        %3027 = vmatmul.f32.gmra.mxu0 %v2817
        %v3028 = vpop.f32.mrf.mxu0
        %v3029 = vadd.f32 %v2976, %v3028
        %3030 = vmatmul.f32.gmra.mxu0 %v2820
        %v3031 = vpop.f32.mrf.mxu0
        %v3032 = vadd.f32 %v2979, %v3031
        %3033 = vmatmul.f32.gmra.mxu0 %v2823
        %v3034 = vpop.f32.mrf.mxu0
        %v3035 = vadd.f32 %v2982, %v3034
        %3036 = vmatmul.f32.gmra.mxu0 %v2826
        %v3037 = vpop.f32.mrf.mxu0
        %v3038 = vadd.f32 %v2985, %v3037
        %3039 = vdwg.mxu0
        %3040 = vmatpush.msra.mxu0 %v2363
        %3041 = vmatpush.msra.mxu0 %v2360
        %3042 = vmatpush.msra.mxu0 %v2357
        %3043 = vmatpush.msra.mxu0 %v2354
        %3044 = vmatpush.msra.mxu0 %v2351
        %3045 = vmatpush.msra.mxu0 %v2348
        %3046 = vmatpush.msra.mxu0 %v2345
        %3047 = vmatpush.msra.mxu0 %v2342
        %3048 = vmatpush.msra.mxu0 %v2339
        %3049 = vmatpush.msra.mxu0 %v2336
        %3050 = vmatpush.msra.mxu0 %v2333
        %3051 = vmatpush.msra.mxu0 %v2330
        %3052 = vmatpush.msra.mxu0 %v2327
        %3053 = vmatpush.msra.mxu0 %v2324
        %3054 = vmatpush.msra.mxu0 %v2321
        %3055 = vmatpush.msra.mxu0 %v2318
        %3056 = vmatmul.f32.gmra.mxu0 %v2768
        %v3057 = vpop.f32.mrf.mxu0
        %v3058 = vadd.f32 0.0, %v3057
        %3059 = vmatmul.f32.gmra.mxu0 %v2770
        %v3060 = vpop.f32.mrf.mxu0
        %v3061 = vadd.f32 0.0, %v3060
        %3062 = vmatmul.f32.gmra.mxu0 %v2772
        %v3063 = vpop.f32.mrf.mxu0
        %v3064 = vadd.f32 0.0, %v3063
        %3065 = vmatmul.f32.gmra.mxu0 %v2774
        %v3066 = vpop.f32.mrf.mxu0
        %v3067 = vadd.f32 0.0, %v3066
        %3068 = vmatmul.f32.gmra.mxu0 %v2776
        %v3069 = vpop.f32.mrf.mxu0
        %v3070 = vadd.f32 0.0, %v3069
        %3071 = vmatmul.f32.gmra.mxu0 %v2778
        %v3072 = vpop.f32.mrf.mxu0
        %v3073 = vadd.f32 0.0, %v3072
        %3074 = vmatmul.f32.gmra.mxu0 %v2780
        %v3075 = vpop.f32.mrf.mxu0
        %v3076 = vadd.f32 0.0, %v3075
        %3077 = vmatmul.f32.gmra.mxu0 %v2782
        %v3078 = vpop.f32.mrf.mxu0
        %v3079 = vadd.f32 0.0, %v3078
        %3080 = vmatmul.f32.gmra.mxu0 %v2784
        %v3081 = vpop.f32.mrf.mxu0
        %v3082 = vadd.f32 0.0, %v3081
        %3083 = vmatmul.f32.gmra.mxu0 %v2786
        %v3084 = vpop.f32.mrf.mxu0
        %v3085 = vadd.f32 0.0, %v3084
        %3086 = vmatmul.f32.gmra.mxu0 %v2788
        %v3087 = vpop.f32.mrf.mxu0
        %v3088 = vadd.f32 0.0, %v3087
        %3089 = vmatmul.f32.gmra.mxu0 %v2790
        %v3090 = vpop.f32.mrf.mxu0
        %v3091 = vadd.f32 0.0, %v3090
        %3092 = vdwg.mxu0
        %3093 = vmatpush.msra.mxu0 0.0
        %3094 = vmatpush.msra.mxu0 0.0
        %3095 = vmatpush.msra.mxu0 0.0
        %3096 = vmatpush.msra.mxu0 0.0
        %3097 = vmatpush.msra.mxu0 0.0
        %3098 = vmatpush.msra.mxu0 0.0
        %3099 = vmatpush.msra.mxu0 0.0
        %3100 = vmatpush.msra.mxu0 0.0
        %3101 = vmatpush.msra.mxu0 %v2387
        %3102 = vmatpush.msra.mxu0 %v2384
        %3103 = vmatpush.msra.mxu0 %v2381
        %3104 = vmatpush.msra.mxu0 %v2378
        %3105 = vmatpush.msra.mxu0 %v2375
        %3106 = vmatpush.msra.mxu0 %v2372
        %3107 = vmatpush.msra.mxu0 %v2369
        %3108 = vmatpush.msra.mxu0 %v2366
        %3109 = vmatmul.f32.gmra.mxu0 %v2793
        %v3110 = vpop.f32.mrf.mxu0
        %v3111 = vadd.f32 %v3058, %v3110
        %3112 = vmatmul.f32.gmra.mxu0 %v2796
        %v3113 = vpop.f32.mrf.mxu0
        %v3114 = vadd.f32 %v3061, %v3113
        %3115 = vmatmul.f32.gmra.mxu0 %v2799
        %v3116 = vpop.f32.mrf.mxu0
        %v3117 = vadd.f32 %v3064, %v3116
        %3118 = vmatmul.f32.gmra.mxu0 %v2802
        %v3119 = vpop.f32.mrf.mxu0
        %v3120 = vadd.f32 %v3067, %v3119
        %3121 = vmatmul.f32.gmra.mxu0 %v2805
        %v3122 = vpop.f32.mrf.mxu0
        %v3123 = vadd.f32 %v3070, %v3122
        %3124 = vmatmul.f32.gmra.mxu0 %v2808
        %v3125 = vpop.f32.mrf.mxu0
        %v3126 = vadd.f32 %v3073, %v3125
        %3127 = vmatmul.f32.gmra.mxu0 %v2811
        %v3128 = vpop.f32.mrf.mxu0
        %v3129 = vadd.f32 %v3076, %v3128
        %3130 = vmatmul.f32.gmra.mxu0 %v2814
        %v3131 = vpop.f32.mrf.mxu0
        %v3132 = vadd.f32 %v3079, %v3131
        %3133 = vmatmul.f32.gmra.mxu0 %v2817
        %v3134 = vpop.f32.mrf.mxu0
        %v3135 = vadd.f32 %v3082, %v3134
        %3136 = vmatmul.f32.gmra.mxu0 %v2820
        %v3137 = vpop.f32.mrf.mxu0
        %v3138 = vadd.f32 %v3085, %v3137
        %3139 = vmatmul.f32.gmra.mxu0 %v2823
        %v3140 = vpop.f32.mrf.mxu0
        %v3141 = vadd.f32 %v3088, %v3140
        %3142 = vmatmul.f32.gmra.mxu0 %v2826
        %v3143 = vpop.f32.mrf.mxu0
        %v3144 = vadd.f32 %v3091, %v3143
        %3145 = vdwg.mxu0
        %v3146 = vmax.f32 %v2520, %v2899
        %v3147 = vmax.f32 %v2626, %v3005
        %v3148 = vmax.f32 %v2732, %v3111
        %v3149 = vmax.f32 %v2523, %v2902
        %v3150 = vmax.f32 %v2629, %v3008
        %v3151 = vmax.f32 %v2735, %v3114
        %v3152 = vmax.f32 %v2526, %v2905
        %v3153 = vmax.f32 %v2632, %v3011
        %v3154 = vmax.f32 %v2738, %v3117
        %v3155 = vmax.f32 %v2529, %v2908
        %v3156 = vmax.f32 %v2635, %v3014
        %v3157 = vmax.f32 %v2741, %v3120
        %v3158 = vmax.f32 %v2532, %v2911
        %v3159 = vmax.f32 %v2638, %v3017
        %v3160 = vmax.f32 %v2744, %v3123
        %v3161 = vmax.f32 %v2535, %v2914
        %v3162 = vmax.f32 %v2641, %v3020
        %v3163 = vmax.f32 %v2747, %v3126
        %v3164 = vmax.f32 %v2538, %v2917
        %v3165 = vmax.f32 %v2644, %v3023
        %v3166 = vmax.f32 %v2750, %v3129
        %v3167 = vmax.f32 %v2541, %v2920
        %v3168 = vmax.f32 %v2647, %v3026
        %v3169 = vmax.f32 %v2753, %v3132
        %v3170 = vmax.f32 %v2544, %v2923
        %v3171 = vmax.f32 %v2650, %v3029
        %v3172 = vmax.f32 %v2756, %v3135
        %v3173 = vmax.f32 %v2547, %v2926
        %v3174 = vmax.f32 %v2653, %v3032
        %v3175 = vmax.f32 %v2759, %v3138
        %v3176 = vmax.f32 %v2550, %v2929
        %v3177 = vmax.f32 %v2656, %v3035
        %v3178 = vmax.f32 %v2762, %v3141
        %v3179 = vmax.f32 %v2553, %v2932
        %v3180 = vmax.f32 %v2659, %v3038
        %v3181 = vmax.f32 %v2765, %v3144
        %v3182 = vld [vmem:[%s2] sm:$0x7]
        %v3184 = vperm.slane %v3182, 0
        %v3185 = vperm.slane %v3182, 1
        %v3186 = vperm.slane %v3182, 2
        %v3190 = vadd.f32 %v3146, %v3184
        %v3191 = vadd.f32 %v3147, %v3185
        %v3192 = vadd.f32 %v3148, %v3186
        %v3193 = vadd.f32 %v3149, %v3184
        %v3194 = vadd.f32 %v3150, %v3185
        %v3195 = vadd.f32 %v3151, %v3186
        %v3196 = vadd.f32 %v3152, %v3184
        %v3197 = vadd.f32 %v3153, %v3185
        %v3198 = vadd.f32 %v3154, %v3186
        %v3199 = vadd.f32 %v3155, %v3184
        %v3200 = vadd.f32 %v3156, %v3185
        %v3201 = vadd.f32 %v3157, %v3186
        %v3202 = vadd.f32 %v3158, %v3184
        %v3203 = vadd.f32 %v3159, %v3185
        %v3204 = vadd.f32 %v3160, %v3186
        %v3205 = vadd.f32 %v3161, %v3184
        %v3206 = vadd.f32 %v3162, %v3185
        %v3207 = vadd.f32 %v3163, %v3186
        %v3208 = vadd.f32 %v3164, %v3184
        %v3209 = vadd.f32 %v3165, %v3185
        %v3210 = vadd.f32 %v3166, %v3186
        %v3211 = vadd.f32 %v3167, %v3184
        %v3212 = vadd.f32 %v3168, %v3185
        %v3213 = vadd.f32 %v3169, %v3186
        %v3214 = vadd.f32 %v3170, %v3184
        %v3215 = vadd.f32 %v3171, %v3185
        %v3216 = vadd.f32 %v3172, %v3186
        %v3217 = vadd.f32 %v3173, %v3184
        %v3218 = vadd.f32 %v3174, %v3185
        %v3219 = vadd.f32 %v3175, %v3186
        %v3220 = vadd.f32 %v3176, %v3184
        %v3221 = vadd.f32 %v3177, %v3185
        %v3222 = vadd.f32 %v3178, %v3186
        %v3223 = vadd.f32 %v3179, %v3184
        %v3224 = vadd.f32 %v3180, %v3185
        %v3225 = vadd.f32 %v3181, %v3186
        %v3226 = vmax.f32 %v3190, 0.0
        %v3227 = vmax.f32 %v3191, 0.0
        %v3228 = vmax.f32 %v3192, 0.0
        %v3229 = vmax.f32 %v3193, 0.0
        %v3230 = vmax.f32 %v3194, 0.0
        %v3231 = vmax.f32 %v3195, 0.0
        %v3232 = vmax.f32 %v3196, 0.0
        %v3233 = vmax.f32 %v3197, 0.0
        %v3234 = vmax.f32 %v3198, 0.0
        %v3235 = vmax.f32 %v3199, 0.0
        %v3236 = vmax.f32 %v3200, 0.0
        %v3237 = vmax.f32 %v3201, 0.0
        %v3238 = vmax.f32 %v3202, 0.0
        %v3239 = vmax.f32 %v3203, 0.0
        %v3240 = vmax.f32 %v3204, 0.0
        %v3241 = vmax.f32 %v3205, 0.0
        %v3242 = vmax.f32 %v3206, 0.0
        %v3243 = vmax.f32 %v3207, 0.0
        %v3244 = vmax.f32 %v3208, 0.0
        %v3245 = vmax.f32 %v3209, 0.0
        %v3246 = vmax.f32 %v3210, 0.0
        %v3247 = vmax.f32 %v3211, 0.0
        %v3248 = vmax.f32 %v3212, 0.0
        %v3249 = vmax.f32 %v3213, 0.0
        %v3250 = vmax.f32 %v3214, 0.0
        %v3251 = vmax.f32 %v3215, 0.0
        %v3252 = vmax.f32 %v3216, 0.0
        %v3253 = vmax.f32 %v3217, 0.0
        %v3254 = vmax.f32 %v3218, 0.0
        %v3255 = vmax.f32 %v3219, 0.0
        %v3256 = vmax.f32 %v3220, 0.0
        %v3257 = vmax.f32 %v3221, 0.0
        %v3258 = vmax.f32 %v3222, 0.0
        %v3259 = vmax.f32 %v3223, 0.0
        %v3260 = vmax.f32 %v3224, 0.0
        %v3261 = vmax.f32 %v3225, 0.0
        %v3262 = vpack.c.bf16 %v3229, %v3226
        %v3263 = vpack.c.bf16 %v3230, %v3227
        %v3264 = vpack.c.bf16 %v3231, %v3228
        %v3265 = vpack.c.bf16 %v3235, %v3232
        %v3266 = vpack.c.bf16 %v3236, %v3233
        %v3267 = vpack.c.bf16 %v3237, %v3234
        %v3268 = vpack.c.bf16 %v3241, %v3238
        %v3269 = vpack.c.bf16 %v3242, %v3239
        %v3270 = vpack.c.bf16 %v3243, %v3240
        %v3271 = vpack.c.bf16 %v3247, %v3244
        %v3272 = vpack.c.bf16 %v3248, %v3245
        %v3273 = vpack.c.bf16 %v3249, %v3246
        %v3274 = vpack.c.bf16 %v3253, %v3250
        %v3275 = vpack.c.bf16 %v3254, %v3251
        %v3276 = vpack.c.bf16 %v3255, %v3252
        %v3277 = vld [vmem:[%s4] sm:$0xff]
        %v3278 = vld [vmem:[%s4 + $0x8] sm:$0xf]
        %v3279 = vld [vmem:[%s4 + $0xc] sm:$0xff]
        %v3280 = vld [vmem:[%s4 + $0x14] sm:$0xf]
        %v3281 = vld [vmem:[%s4 + $0x18] sm:$0xff]
        %v3282 = vld [vmem:[%s4 + $0x20] sm:$0xf]
        %v3283 = vld [vmem:[%s4 + $0x24] sm:$0xff]
        %v3284 = vld [vmem:[%s4 + $0x2c] sm:$0xf]
        %v3285 = vld [vmem:[%s4 + $0x30] sm:$0xff]
        %v3286 = vld [vmem:[%s4 + $0x38] sm:$0xf]
        %v3287 = vld [vmem:[%s4 + $0x3c] sm:$0xff]
        %v3288 = vld [vmem:[%s4 + $0x44] sm:$0xf]
        %v3289 = vld [vmem:[%s4 + $0x48] sm:$0xff]
        %v3290 = vld [vmem:[%s4 + $0x50] sm:$0xf]
        %v3291 = vld [vmem:[%s4 + $0x54] sm:$0xff]
        %v3292 = vld [vmem:[%s4 + $0x5c] sm:$0xf]
        %v3293 = vld [vmem:[%s4 + $0x60] sm:$0xff]
        %v3294 = vld [vmem:[%s4 + $0x68] sm:$0xf]
        %v3295 = vld [vmem:[%s4 + $0x6c] sm:$0xff]
        %v3296 = vld [vmem:[%s4 + $0x74] sm:$0xf]
        %v3297 = vld [vmem:[%s4 + $0x78] sm:$0xff]
        %v3298 = vld [vmem:[%s4 + $0x80] sm:$0xf]
        %v3299 = vld [vmem:[%s4 + $0x84] sm:$0xff]
        %v3300 = vld [vmem:[%s4 + $0x8c] sm:$0xf]
        %v3301 = vld [vmem:[%s4 + $0x90] sm:$0xff]
        %v3302 = vld [vmem:[%s4 + $0x98] sm:$0xf]
        %v3303 = vld [vmem:[%s4 + $0x9c] sm:$0xff]
        %v3304 = vld [vmem:[%s4 + $0xa4] sm:$0xf]
        %v3305 = vld [vmem:[%s4 + $0xa8] sm:$0xff]
        %v3306 = vld [vmem:[%s4 + $0xb0] sm:$0xf]
        %v3307 = vld [vmem:[%s4 + $0xb4] sm:$0xff]
        %v3308 = vld [vmem:[%s4 + $0xbc] sm:$0xf]
        %v3309 = vld [vmem:[%s4 + $0xc0] sm:$0xff]
        %v3310 = vld [vmem:[%s4 + $0xc8] sm:$0xf]
        %v3311 = vld [vmem:[%s4 + $0xcc] sm:$0xff]
        %v3312 = vld [vmem:[%s4 + $0xd4] sm:$0xf]
        %v3313 = vld [vmem:[%s4 + $0xd8] sm:$0xff]
        %v3314 = vld [vmem:[%s4 + $0xe0] sm:$0xf]
        %v3315 = vld [vmem:[%s4 + $0xe4] sm:$0xff]
        %v3316 = vld [vmem:[%s4 + $0xec] sm:$0xf]
        %v3317 = vld [vmem:[%s4 + $0xf0] sm:$0xff]
        %v3318 = vld [vmem:[%s4 + $0xf8] sm:$0xf]
        %v3319 = vld [vmem:[%s4 + $0xfc] sm:$0xff]
        %v3320 = vld [vmem:[%s4 + $0x104] sm:$0xf]
        %v3321 = vld [vmem:[%s4 + $0x108] sm:$0xff]
        %v3322 = vld [vmem:[%s4 + $0x110] sm:$0xf]
        %v3323 = vld [vmem:[%s4 + $0x114] sm:$0xff]
        %v3324 = vld [vmem:[%s4 + $0x11c] sm:$0xf]
        %v3325 = vld [vmem:[%s4 + $0x120] sm:$0xff]
        %v3326 = vld [vmem:[%s4 + $0x128] sm:$0xf]
        %v3327 = vld [vmem:[%s4 + $0x12c] sm:$0xff]
        %v3328 = vld [vmem:[%s4 + $0x134] sm:$0xf]
        %v3329 = vld [vmem:[%s4 + $0x138] sm:$0xff]
        %v3330 = vld [vmem:[%s4 + $0x140] sm:$0xf]
        %v3331 = vld [vmem:[%s4 + $0x144] sm:$0xff]
        %v3332 = vld [vmem:[%s4 + $0x14c] sm:$0xf]
        %v3333 = vld [vmem:[%s4 + $0x150] sm:$0xff]
        %v3334 = vld [vmem:[%s4 + $0x158] sm:$0xf]
        %v3335 = vld [vmem:[%s4 + $0x15c] sm:$0xff]
        %v3336 = vld [vmem:[%s4 + $0x164] sm:$0xf]
        %v3337 = vld [vmem:[%s4 + $0x168] sm:$0xff]
        %v3338 = vld [vmem:[%s4 + $0x170] sm:$0xf]
        %v3339 = vld [vmem:[%s4 + $0x174] sm:$0xff]
        %v3340 = vld [vmem:[%s4 + $0x17c] sm:$0xf]
        %v3341 = vld [vmem:[%s4 + $0x180] sm:$0xff]
        %v3342 = vld [vmem:[%s4 + $0x188] sm:$0xf]
        %v3343 = vld [vmem:[%s4 + $0x18c] sm:$0xff]
        %v3344 = vld [vmem:[%s4 + $0x194] sm:$0xf]
        %v3345 = vld [vmem:[%s4 + $0x198] sm:$0xff]
        %v3346 = vld [vmem:[%s4 + $0x1a0] sm:$0xf]
        %v3347 = vld [vmem:[%s4 + $0x1a4] sm:$0xff]
        %v3348 = vld [vmem:[%s4 + $0x1ac] sm:$0xf]
        %v3349 = vld [vmem:[%s4 + $0x1b0] sm:$0xff]
        %v3350 = vld [vmem:[%s4 + $0x1b8] sm:$0xf]
        %v3351 = vld [vmem:[%s4 + $0x1bc] sm:$0xff]
        %v3352 = vld [vmem:[%s4 + $0x1c4] sm:$0xf]
        %v3353 = vld [vmem:[%s4 + $0x1c8] sm:$0xff]
        %v3354 = vld [vmem:[%s4 + $0x1d0] sm:$0xf]
        %v3355 = vld [vmem:[%s4 + $0x1d4] sm:$0xff]
        %v3356 = vld [vmem:[%s4 + $0x1dc] sm:$0xf]
        %v3357 = vld [vmem:[%s4 + $0x1e0] sm:$0xff]
        %v3358 = vld [vmem:[%s4 + $0x1e8] sm:$0xf]
        %v3359 = vld [vmem:[%s4 + $0x1ec] sm:$0xff]
        %v3360 = vld [vmem:[%s4 + $0x1f4] sm:$0xf]
        %v3361 = vld [vmem:[%s4 + $0x1f8] sm:$0xff]
        %v3362 = vld [vmem:[%s4 + $0x200] sm:$0xf]
        %v3363 = vld [vmem:[%s4 + $0x204] sm:$0xff]
        %v3364 = vld [vmem:[%s4 + $0x20c] sm:$0xf]
        %v3365 = vld [vmem:[%s4 + $0x210] sm:$0xff]
        %v3366 = vld [vmem:[%s4 + $0x218] sm:$0xf]
        %v3367 = vld [vmem:[%s4 + $0x21c] sm:$0xff]
        %v3368 = vld [vmem:[%s4 + $0x224] sm:$0xf]
        %v3369 = vld [vmem:[%s4 + $0x228] sm:$0xff]
        %v3370 = vld [vmem:[%s4 + $0x230] sm:$0xf]
        %v3371 = vld [vmem:[%s4 + $0x234] sm:$0xff]
        %v3372 = vld [vmem:[%s4 + $0x23c] sm:$0xf]
        %v3373 = vpack.c.bf16 %v3232, %v3229
        %v3374 = vpack.c.bf16 %v3233, %v3230
        %v3375 = vpack.c.bf16 %v3234, %v3231
        %v3376 = vpack.c.bf16 %v3238, %v3235
        %v3377 = vpack.c.bf16 %v3239, %v3236
        %v3378 = vpack.c.bf16 %v3240, %v3237
        %v3379 = vpack.c.bf16 %v3244, %v3241
        %v3380 = vpack.c.bf16 %v3245, %v3242
        %v3381 = vpack.c.bf16 %v3246, %v3243
        %v3382 = vpack.c.bf16 %v3250, %v3247
        %v3383 = vpack.c.bf16 %v3251, %v3248
        %v3384 = vpack.c.bf16 %v3252, %v3249
        %v3385 = vpack.c.bf16 %v3256, %v3253
        %v3386 = vpack.c.bf16 %v3257, %v3254
        %v3387 = vpack.c.bf16 %v3258, %v3255
        %s3388 = scalar_lea.vmem %s4, 576
        %v3389 = vld [vmem:[%s3388] sm:$0xff]
        %v3390 = vld [vmem:[%s3388 + $0x8] sm:$0xf]
        %v3391 = vld [vmem:[%s3388 + $0xc] sm:$0xff]
        %v3392 = vld [vmem:[%s3388 + $0x14] sm:$0xf]
        %v3393 = vld [vmem:[%s3388 + $0x18] sm:$0xff]
        %v3394 = vld [vmem:[%s3388 + $0x20] sm:$0xf]
        %v3395 = vld [vmem:[%s3388 + $0x24] sm:$0xff]
        %v3396 = vld [vmem:[%s3388 + $0x2c] sm:$0xf]
        %v3397 = vld [vmem:[%s3388 + $0x30] sm:$0xff]
        %v3398 = vld [vmem:[%s3388 + $0x38] sm:$0xf]
        %v3399 = vld [vmem:[%s3388 + $0x3c] sm:$0xff]
        %v3400 = vld [vmem:[%s3388 + $0x44] sm:$0xf]
        %v3401 = vld [vmem:[%s3388 + $0x48] sm:$0xff]
        %v3402 = vld [vmem:[%s3388 + $0x50] sm:$0xf]
        %v3403 = vld [vmem:[%s3388 + $0x54] sm:$0xff]
        %v3404 = vld [vmem:[%s3388 + $0x5c] sm:$0xf]
        %v3405 = vld [vmem:[%s3388 + $0x60] sm:$0xff]
        %v3406 = vld [vmem:[%s3388 + $0x68] sm:$0xf]
        %v3407 = vld [vmem:[%s3388 + $0x6c] sm:$0xff]
        %v3408 = vld [vmem:[%s3388 + $0x74] sm:$0xf]
        %v3409 = vld [vmem:[%s3388 + $0x78] sm:$0xff]
        %v3410 = vld [vmem:[%s3388 + $0x80] sm:$0xf]
        %v3411 = vld [vmem:[%s3388 + $0x84] sm:$0xff]
        %v3412 = vld [vmem:[%s3388 + $0x8c] sm:$0xf]
        %v3413 = vld [vmem:[%s3388 + $0x90] sm:$0xff]
        %v3414 = vld [vmem:[%s3388 + $0x98] sm:$0xf]
        %v3415 = vld [vmem:[%s3388 + $0x9c] sm:$0xff]
        %v3416 = vld [vmem:[%s3388 + $0xa4] sm:$0xf]
        %v3417 = vld [vmem:[%s3388 + $0xa8] sm:$0xff]
        %v3418 = vld [vmem:[%s3388 + $0xb0] sm:$0xf]
        %v3419 = vld [vmem:[%s3388 + $0xb4] sm:$0xff]
        %v3420 = vld [vmem:[%s3388 + $0xbc] sm:$0xf]
        %v3421 = vld [vmem:[%s3388 + $0xc0] sm:$0xff]
        %v3422 = vld [vmem:[%s3388 + $0xc8] sm:$0xf]
        %v3423 = vld [vmem:[%s3388 + $0xcc] sm:$0xff]
        %v3424 = vld [vmem:[%s3388 + $0xd4] sm:$0xf]
        %v3425 = vld [vmem:[%s3388 + $0xd8] sm:$0xff]
        %v3426 = vld [vmem:[%s3388 + $0xe0] sm:$0xf]
        %v3427 = vld [vmem:[%s3388 + $0xe4] sm:$0xff]
        %v3428 = vld [vmem:[%s3388 + $0xec] sm:$0xf]
        %v3429 = vld [vmem:[%s3388 + $0xf0] sm:$0xff]
        %v3430 = vld [vmem:[%s3388 + $0xf8] sm:$0xf]
        %v3431 = vld [vmem:[%s3388 + $0xfc] sm:$0xff]
        %v3432 = vld [vmem:[%s3388 + $0x104] sm:$0xf]
        %v3433 = vld [vmem:[%s3388 + $0x108] sm:$0xff]
        %v3434 = vld [vmem:[%s3388 + $0x110] sm:$0xf]
        %v3435 = vld [vmem:[%s3388 + $0x114] sm:$0xff]
        %v3436 = vld [vmem:[%s3388 + $0x11c] sm:$0xf]
        %v3437 = vld [vmem:[%s3388 + $0x120] sm:$0xff]
        %v3438 = vld [vmem:[%s3388 + $0x128] sm:$0xf]
        %v3439 = vld [vmem:[%s3388 + $0x12c] sm:$0xff]
        %v3440 = vld [vmem:[%s3388 + $0x134] sm:$0xf]
        %v3441 = vld [vmem:[%s3388 + $0x138] sm:$0xff]
        %v3442 = vld [vmem:[%s3388 + $0x140] sm:$0xf]
        %v3443 = vld [vmem:[%s3388 + $0x144] sm:$0xff]
        %v3444 = vld [vmem:[%s3388 + $0x14c] sm:$0xf]
        %v3445 = vld [vmem:[%s3388 + $0x150] sm:$0xff]
        %v3446 = vld [vmem:[%s3388 + $0x158] sm:$0xf]
        %v3447 = vld [vmem:[%s3388 + $0x15c] sm:$0xff]
        %v3448 = vld [vmem:[%s3388 + $0x164] sm:$0xf]
        %v3449 = vld [vmem:[%s3388 + $0x168] sm:$0xff]
        %v3450 = vld [vmem:[%s3388 + $0x170] sm:$0xf]
        %v3451 = vld [vmem:[%s3388 + $0x174] sm:$0xff]
        %v3452 = vld [vmem:[%s3388 + $0x17c] sm:$0xf]
        %v3453 = vld [vmem:[%s3388 + $0x180] sm:$0xff]
        %v3454 = vld [vmem:[%s3388 + $0x188] sm:$0xf]
        %v3455 = vld [vmem:[%s3388 + $0x18c] sm:$0xff]
        %v3456 = vld [vmem:[%s3388 + $0x194] sm:$0xf]
        %v3457 = vld [vmem:[%s3388 + $0x198] sm:$0xff]
        %v3458 = vld [vmem:[%s3388 + $0x1a0] sm:$0xf]
        %v3459 = vld [vmem:[%s3388 + $0x1a4] sm:$0xff]
        %v3460 = vld [vmem:[%s3388 + $0x1ac] sm:$0xf]
        %v3461 = vld [vmem:[%s3388 + $0x1b0] sm:$0xff]
        %v3462 = vld [vmem:[%s3388 + $0x1b8] sm:$0xf]
        %v3463 = vld [vmem:[%s3388 + $0x1bc] sm:$0xff]
        %v3464 = vld [vmem:[%s3388 + $0x1c4] sm:$0xf]
        %v3465 = vld [vmem:[%s3388 + $0x1c8] sm:$0xff]
        %v3466 = vld [vmem:[%s3388 + $0x1d0] sm:$0xf]
        %v3467 = vld [vmem:[%s3388 + $0x1d4] sm:$0xff]
        %v3468 = vld [vmem:[%s3388 + $0x1dc] sm:$0xf]
        %v3469 = vld [vmem:[%s3388 + $0x1e0] sm:$0xff]
        %v3470 = vld [vmem:[%s3388 + $0x1e8] sm:$0xf]
        %v3471 = vld [vmem:[%s3388 + $0x1ec] sm:$0xff]
        %v3472 = vld [vmem:[%s3388 + $0x1f4] sm:$0xf]
        %v3473 = vld [vmem:[%s3388 + $0x1f8] sm:$0xff]
        %v3474 = vld [vmem:[%s3388 + $0x200] sm:$0xf]
        %v3475 = vld [vmem:[%s3388 + $0x204] sm:$0xff]
        %v3476 = vld [vmem:[%s3388 + $0x20c] sm:$0xf]
        %v3477 = vld [vmem:[%s3388 + $0x210] sm:$0xff]
        %v3478 = vld [vmem:[%s3388 + $0x218] sm:$0xf]
        %v3479 = vld [vmem:[%s3388 + $0x21c] sm:$0xff]
        %v3480 = vld [vmem:[%s3388 + $0x224] sm:$0xf]
        %v3481 = vld [vmem:[%s3388 + $0x228] sm:$0xff]
        %v3482 = vld [vmem:[%s3388 + $0x230] sm:$0xf]
        %v3483 = vld [vmem:[%s3388 + $0x234] sm:$0xff]
        %v3484 = vld [vmem:[%s3388 + $0x23c] sm:$0xf]
        %v3581 = vunpack.c.l.b16 %v3389
        %v3582 = vunpack.c.h.b16 %v3389
        %v3583 = vunpack.c.l.b16 %v3390
        %v3584 = vunpack.c.l.b16 %v3391
        %v3585 = vunpack.c.h.b16 %v3391
        %v3586 = vunpack.c.l.b16 %v3392
        %v3587 = vunpack.c.l.b16 %v3393
        %v3588 = vunpack.c.h.b16 %v3393
        %v3589 = vunpack.c.l.b16 %v3394
        %v3590 = vunpack.c.l.b16 %v3395
        %v3591 = vunpack.c.h.b16 %v3395
        %v3592 = vunpack.c.l.b16 %v3396
        %v3593 = vunpack.c.l.b16 %v3397
        %v3594 = vunpack.c.h.b16 %v3397
        %v3595 = vunpack.c.l.b16 %v3398
        %v3596 = vunpack.c.l.b16 %v3399
        %v3597 = vunpack.c.h.b16 %v3399
        %v3598 = vunpack.c.l.b16 %v3400
        %v3599 = vunpack.c.l.b16 %v3401
        %v3600 = vunpack.c.h.b16 %v3401
        %v3601 = vunpack.c.l.b16 %v3402
        %v3602 = vunpack.c.l.b16 %v3403
        %v3603 = vunpack.c.h.b16 %v3403
        %v3604 = vunpack.c.l.b16 %v3404
        %v3605 = vunpack.c.l.b16 %v3405
        %v3606 = vunpack.c.h.b16 %v3405
        %v3607 = vunpack.c.l.b16 %v3406
        %v3608 = vunpack.c.l.b16 %v3407
        %v3609 = vunpack.c.h.b16 %v3407
        %v3610 = vunpack.c.l.b16 %v3408
        %v3611 = vunpack.c.l.b16 %v3409
        %v3612 = vunpack.c.h.b16 %v3409
        %v3613 = vunpack.c.l.b16 %v3410
        %v3614 = vunpack.c.l.b16 %v3411
        %v3615 = vunpack.c.h.b16 %v3411
        %v3616 = vunpack.c.l.b16 %v3412
        %v3617 = vunpack.c.l.b16 %v3413
        %v3618 = vunpack.c.h.b16 %v3413
        %v3619 = vunpack.c.l.b16 %v3414
        %v3620 = vunpack.c.l.b16 %v3415
        %v3621 = vunpack.c.h.b16 %v3415
        %v3622 = vunpack.c.l.b16 %v3416
        %v3623 = vunpack.c.l.b16 %v3417
        %v3624 = vunpack.c.h.b16 %v3417
        %v3625 = vunpack.c.l.b16 %v3418
        %v3626 = vunpack.c.l.b16 %v3419
        %v3627 = vunpack.c.h.b16 %v3419
        %v3628 = vunpack.c.l.b16 %v3420
        %v3629 = vunpack.c.l.b16 %v3421
        %v3630 = vunpack.c.h.b16 %v3421
        %v3631 = vunpack.c.l.b16 %v3422
        %v3632 = vunpack.c.l.b16 %v3423
        %v3633 = vunpack.c.h.b16 %v3423
        %v3634 = vunpack.c.l.b16 %v3424
        %v3635 = vunpack.c.l.b16 %v3425
        %v3636 = vunpack.c.h.b16 %v3425
        %v3637 = vunpack.c.l.b16 %v3426
        %v3638 = vunpack.c.l.b16 %v3427
        %v3639 = vunpack.c.h.b16 %v3427
        %v3640 = vunpack.c.l.b16 %v3428
        %v3641 = vunpack.c.l.b16 %v3429
        %v3642 = vunpack.c.h.b16 %v3429
        %v3643 = vunpack.c.l.b16 %v3430
        %v3644 = vunpack.c.l.b16 %v3431
        %v3645 = vunpack.c.h.b16 %v3431
        %v3646 = vunpack.c.l.b16 %v3432
        %v3647 = vunpack.c.l.b16 %v3433
        %v3648 = vunpack.c.h.b16 %v3433
        %v3649 = vunpack.c.l.b16 %v3434
        %v3650 = vunpack.c.l.b16 %v3435
        %v3651 = vunpack.c.h.b16 %v3435
        %v3652 = vunpack.c.l.b16 %v3436
        %v3653 = vunpack.c.l.b16 %v3437
        %v3654 = vunpack.c.h.b16 %v3437
        %v3655 = vunpack.c.l.b16 %v3438
        %v3656 = vunpack.c.l.b16 %v3439
        %v3657 = vunpack.c.h.b16 %v3439
        %v3658 = vunpack.c.l.b16 %v3440
        %v3659 = vunpack.c.l.b16 %v3441
        %v3660 = vunpack.c.h.b16 %v3441
        %v3661 = vunpack.c.l.b16 %v3442
        %v3662 = vunpack.c.l.b16 %v3443
        %v3663 = vunpack.c.h.b16 %v3443
        %v3664 = vunpack.c.l.b16 %v3444
        %v3665 = vunpack.c.l.b16 %v3445
        %v3666 = vunpack.c.h.b16 %v3445
        %v3667 = vunpack.c.l.b16 %v3446
        %v3668 = vunpack.c.l.b16 %v3447
        %v3669 = vunpack.c.h.b16 %v3447
        %v3670 = vunpack.c.l.b16 %v3448
        %v3671 = vunpack.c.l.b16 %v3449
        %v3672 = vunpack.c.h.b16 %v3449
        %v3673 = vunpack.c.l.b16 %v3450
        %v3674 = vunpack.c.l.b16 %v3451
        %v3675 = vunpack.c.h.b16 %v3451
        %v3676 = vunpack.c.l.b16 %v3452
        %v3677 = vunpack.c.l.b16 %v3453
        %v3678 = vunpack.c.h.b16 %v3453
        %v3679 = vunpack.c.l.b16 %v3454
        %v3680 = vunpack.c.l.b16 %v3455
        %v3681 = vunpack.c.h.b16 %v3455
        %v3682 = vunpack.c.l.b16 %v3456
        %v3683 = vunpack.c.l.b16 %v3457
        %v3684 = vunpack.c.h.b16 %v3457
        %v3685 = vunpack.c.l.b16 %v3458
        %v3686 = vunpack.c.l.b16 %v3459
        %v3687 = vunpack.c.h.b16 %v3459
        %v3688 = vunpack.c.l.b16 %v3460
        %v3689 = vunpack.c.l.b16 %v3461
        %v3690 = vunpack.c.h.b16 %v3461
        %v3691 = vunpack.c.l.b16 %v3462
        %v3692 = vunpack.c.l.b16 %v3463
        %v3693 = vunpack.c.h.b16 %v3463
        %v3694 = vunpack.c.l.b16 %v3464
        %v3695 = vunpack.c.l.b16 %v3465
        %v3696 = vunpack.c.h.b16 %v3465
        %v3697 = vunpack.c.l.b16 %v3466
        %v3698 = vunpack.c.l.b16 %v3467
        %v3699 = vunpack.c.h.b16 %v3467
        %v3700 = vunpack.c.l.b16 %v3468
        %v3701 = vunpack.c.l.b16 %v3469
        %v3702 = vunpack.c.h.b16 %v3469
        %v3703 = vunpack.c.l.b16 %v3470
        %v3704 = vunpack.c.l.b16 %v3471
        %v3705 = vunpack.c.h.b16 %v3471
        %v3706 = vunpack.c.l.b16 %v3472
        %v3707 = vunpack.c.l.b16 %v3473
        %v3708 = vunpack.c.h.b16 %v3473
        %v3709 = vunpack.c.l.b16 %v3474
        %v3710 = vunpack.c.l.b16 %v3475
        %v3711 = vunpack.c.h.b16 %v3475
        %v3712 = vunpack.c.l.b16 %v3476
        %v3713 = vunpack.c.l.b16 %v3477
        %v3714 = vunpack.c.h.b16 %v3477
        %v3715 = vunpack.c.l.b16 %v3478
        %v3716 = vunpack.c.l.b16 %v3479
        %v3717 = vunpack.c.h.b16 %v3479
        %v3718 = vunpack.c.l.b16 %v3480
        %v3719 = vunpack.c.l.b16 %v3481
        %v3720 = vunpack.c.h.b16 %v3481
        %v3721 = vunpack.c.l.b16 %v3482
        %v3722 = vunpack.c.l.b16 %v3483
        %v3723 = vunpack.c.h.b16 %v3483
        %v3724 = vunpack.c.l.b16 %v3484
        %v3725 = vpack.c.b16 %v3584, %v3581
        %v3726 = vpack.c.b16 %v3585, %v3582
        %v3727 = vpack.c.b16 %v3586, %v3583
        %v3728 = vpack.c.b16 %v3590, %v3587
        %v3729 = vpack.c.b16 %v3591, %v3588
        %v3730 = vpack.c.b16 %v3592, %v3589
        %v3731 = vpack.c.b16 %v3596, %v3593
        %v3732 = vpack.c.b16 %v3597, %v3594
        %v3733 = vpack.c.b16 %v3598, %v3595
        %v3734 = vpack.c.b16 %v3602, %v3599
        %v3735 = vpack.c.b16 %v3603, %v3600
        %v3736 = vpack.c.b16 %v3604, %v3601
        %v3737 = vpack.c.b16 %v3608, %v3605
        %v3738 = vpack.c.b16 %v3609, %v3606
        %v3739 = vpack.c.b16 %v3610, %v3607
        %v3740 = vpack.c.b16 %v3614, %v3611
        %v3741 = vpack.c.b16 %v3615, %v3612
        %v3742 = vpack.c.b16 %v3616, %v3613
        %v3743 = vpack.c.b16 %v3620, %v3617
        %v3744 = vpack.c.b16 %v3621, %v3618
        %v3745 = vpack.c.b16 %v3622, %v3619
        %v3746 = vpack.c.b16 %v3626, %v3623
        %v3747 = vpack.c.b16 %v3627, %v3624
        %v3748 = vpack.c.b16 %v3628, %v3625
        %v3749 = vpack.c.b16 %v3632, %v3629
        %v3750 = vpack.c.b16 %v3633, %v3630
        %v3751 = vpack.c.b16 %v3634, %v3631
        %v3752 = vpack.c.b16 %v3638, %v3635
        %v3753 = vpack.c.b16 %v3639, %v3636
        %v3754 = vpack.c.b16 %v3640, %v3637
        %v3755 = vpack.c.b16 %v3644, %v3641
        %v3756 = vpack.c.b16 %v3645, %v3642
        %v3757 = vpack.c.b16 %v3646, %v3643
        %v3758 = vpack.c.b16 %v3650, %v3647
        %v3759 = vpack.c.b16 %v3651, %v3648
        %v3760 = vpack.c.b16 %v3652, %v3649
        %v3761 = vpack.c.b16 %v3656, %v3653
        %v3762 = vpack.c.b16 %v3657, %v3654
        %v3763 = vpack.c.b16 %v3658, %v3655
        %v3764 = vpack.c.b16 %v3662, %v3659
        %v3765 = vpack.c.b16 %v3663, %v3660
        %v3766 = vpack.c.b16 %v3664, %v3661
        %v3767 = vpack.c.b16 %v3668, %v3665
        %v3768 = vpack.c.b16 %v3669, %v3666
        %v3769 = vpack.c.b16 %v3670, %v3667
        %v3770 = vpack.c.b16 %v3674, %v3671
        %v3771 = vpack.c.b16 %v3675, %v3672
        %v3772 = vpack.c.b16 %v3676, %v3673
        %v3773 = vpack.c.b16 %v3680, %v3677
        %v3774 = vpack.c.b16 %v3681, %v3678
        %v3775 = vpack.c.b16 %v3682, %v3679
        %v3776 = vpack.c.b16 %v3686, %v3683
        %v3777 = vpack.c.b16 %v3687, %v3684
        %v3778 = vpack.c.b16 %v3688, %v3685
        %v3779 = vpack.c.b16 %v3692, %v3689
        %v3780 = vpack.c.b16 %v3693, %v3690
        %v3781 = vpack.c.b16 %v3694, %v3691
        %v3782 = vpack.c.b16 %v3698, %v3695
        %v3783 = vpack.c.b16 %v3699, %v3696
        %v3784 = vpack.c.b16 %v3700, %v3697
        %v3785 = vpack.c.b16 %v3704, %v3701
        %v3786 = vpack.c.b16 %v3705, %v3702
        %v3787 = vpack.c.b16 %v3706, %v3703
        %v3788 = vpack.c.b16 %v3710, %v3707
        %v3789 = vpack.c.b16 %v3711, %v3708
        %v3790 = vpack.c.b16 %v3712, %v3709
        %v3791 = vpack.c.b16 %v3716, %v3713
        %v3792 = vpack.c.b16 %v3717, %v3714
        %v3793 = vpack.c.b16 %v3718, %v3715
        %v3794 = vpack.c.b16 %v3722, %v3719
        %v3795 = vpack.c.b16 %v3723, %v3720
        %v3796 = vpack.c.b16 %v3724, %v3721
        %3869 = vmatpush.bf16.msra.mxu0 %v3746
        %3870 = vmatpush.bf16.msra.mxu0 %v3743
        %3871 = vmatpush.bf16.msra.mxu0 %v3740
        %3872 = vmatpush.bf16.msra.mxu0 %v3737
        %3873 = vmatpush.bf16.msra.mxu0 %v3734
        %3874 = vmatpush.bf16.msra.mxu0 %v3731
        %3875 = vmatpush.bf16.msra.mxu0 %v3728
        %3876 = vmatpush.bf16.msra.mxu0 %v3725
        %3877 = vmatmul.bf16.gmra.mxu0 %v3373
        %v3878 = vpop.f32.mrf.mxu0
        %v3879 = vadd.f32 0.0, %v3878
        %v3880 = vpop.f32.mrf.mxu0
        %v3881 = vadd.f32 0.0, %v3880
        %3882 = vmatmul.bf16.gmra.mxu0 %v3376
        %v3883 = vpop.f32.mrf.mxu0
        %v3884 = vadd.f32 0.0, %v3883
        %v3885 = vpop.f32.mrf.mxu0
        %v3886 = vadd.f32 0.0, %v3885
        %3887 = vmatmul.bf16.gmra.mxu0 %v3379
        %v3888 = vpop.f32.mrf.mxu0
        %v3889 = vadd.f32 0.0, %v3888
        %v3890 = vpop.f32.mrf.mxu0
        %v3891 = vadd.f32 0.0, %v3890
        %3892 = vmatmul.bf16.gmra.mxu0 %v3382
        %v3893 = vpop.f32.mrf.mxu0
        %v3894 = vadd.f32 0.0, %v3893
        %v3895 = vpop.f32.mrf.mxu0
        %v3896 = vadd.f32 0.0, %v3895
        %3897 = vmatmul.bf16.gmra.mxu0 %v3385
        %v3898 = vpop.f32.mrf.mxu0
        %v3899 = vadd.f32 0.0, %v3898
        %v3900 = vpop.f32.mrf.mxu0
        %v3901 = vadd.f32 0.0, %v3900
        %3902 = vdwg.mxu0
        %3903 = vmatpush.bf16.msra.mxu0 %v3770
        %3904 = vmatpush.bf16.msra.mxu0 %v3767
        %3905 = vmatpush.bf16.msra.mxu0 %v3764
        %3906 = vmatpush.bf16.msra.mxu0 %v3761
        %3907 = vmatpush.bf16.msra.mxu0 %v3758
        %3908 = vmatpush.bf16.msra.mxu0 %v3755
        %3909 = vmatpush.bf16.msra.mxu0 %v3752
        %3910 = vmatpush.bf16.msra.mxu0 %v3749
        %3911 = vmatmul.bf16.gmra.mxu0 %v3374
        %v3912 = vpop.f32.mrf.mxu0
        %v3913 = vadd.f32 %v3879, %v3912
        %v3914 = vpop.f32.mrf.mxu0
        %v3915 = vadd.f32 %v3881, %v3914
        %3916 = vmatmul.bf16.gmra.mxu0 %v3377
        %v3917 = vpop.f32.mrf.mxu0
        %v3918 = vadd.f32 %v3884, %v3917
        %v3919 = vpop.f32.mrf.mxu0
        %v3920 = vadd.f32 %v3886, %v3919
        %3921 = vmatmul.bf16.gmra.mxu0 %v3380
        %v3922 = vpop.f32.mrf.mxu0
        %v3923 = vadd.f32 %v3889, %v3922
        %v3924 = vpop.f32.mrf.mxu0
        %v3925 = vadd.f32 %v3891, %v3924
        %3926 = vmatmul.bf16.gmra.mxu0 %v3383
        %v3927 = vpop.f32.mrf.mxu0
        %v3928 = vadd.f32 %v3894, %v3927
        %v3929 = vpop.f32.mrf.mxu0
        %v3930 = vadd.f32 %v3896, %v3929
        %3931 = vmatmul.bf16.gmra.mxu0 %v3386
        %v3932 = vpop.f32.mrf.mxu0
        %v3933 = vadd.f32 %v3899, %v3932
        %v3934 = vpop.f32.mrf.mxu0
        %v3935 = vadd.f32 %v3901, %v3934
        %3936 = vdwg.mxu0
        %3937 = vmatpush.bf16.msra.mxu0 %v3794
        %3938 = vmatpush.bf16.msra.mxu0 %v3791
        %3939 = vmatpush.bf16.msra.mxu0 %v3788
        %3940 = vmatpush.bf16.msra.mxu0 %v3785
        %3941 = vmatpush.bf16.msra.mxu0 %v3782
        %3942 = vmatpush.bf16.msra.mxu0 %v3779
        %3943 = vmatpush.bf16.msra.mxu0 %v3776
        %3944 = vmatpush.bf16.msra.mxu0 %v3773
        %3945 = vmatmul.bf16.gmra.mxu0 %v3375
        %v3946 = vpop.f32.mrf.mxu0
        %v3947 = vadd.f32 %v3913, %v3946
        %v3948 = vpop.f32.mrf.mxu0
        %v3949 = vadd.f32 %v3915, %v3948
        %3950 = vmatmul.bf16.gmra.mxu0 %v3378
        %v3951 = vpop.f32.mrf.mxu0
        %v3952 = vadd.f32 %v3918, %v3951
        %v3953 = vpop.f32.mrf.mxu0
        %v3954 = vadd.f32 %v3920, %v3953
        %3955 = vmatmul.bf16.gmra.mxu0 %v3381
        %v3956 = vpop.f32.mrf.mxu0
        %v3957 = vadd.f32 %v3923, %v3956
        %v3958 = vpop.f32.mrf.mxu0
        %v3959 = vadd.f32 %v3925, %v3958
        %3960 = vmatmul.bf16.gmra.mxu0 %v3384
        %v3961 = vpop.f32.mrf.mxu0
        %v3962 = vadd.f32 %v3928, %v3961
        %v3963 = vpop.f32.mrf.mxu0
        %v3964 = vadd.f32 %v3930, %v3963
        %3965 = vmatmul.bf16.gmra.mxu0 %v3387
        %v3966 = vpop.f32.mrf.mxu0
        %v3967 = vadd.f32 %v3933, %v3966
        %v3968 = vpop.f32.mrf.mxu0
        %v3969 = vadd.f32 %v3935, %v3968
        %3970 = vdwg.mxu0
        %3971 = vmatpush.bf16.msra.mxu0 %v3747
        %3972 = vmatpush.bf16.msra.mxu0 %v3744
        %3973 = vmatpush.bf16.msra.mxu0 %v3741
        %3974 = vmatpush.bf16.msra.mxu0 %v3738
        %3975 = vmatpush.bf16.msra.mxu0 %v3735
        %3976 = vmatpush.bf16.msra.mxu0 %v3732
        %3977 = vmatpush.bf16.msra.mxu0 %v3729
        %3978 = vmatpush.bf16.msra.mxu0 %v3726
        %3979 = vmatmul.bf16.gmra.mxu0 %v3373
        %v3980 = vpop.f32.mrf.mxu0
        %v3981 = vadd.f32 0.0, %v3980
        %v3982 = vpop.f32.mrf.mxu0
        %v3983 = vadd.f32 0.0, %v3982
        %3984 = vmatmul.bf16.gmra.mxu0 %v3376
        %v3985 = vpop.f32.mrf.mxu0
        %v3986 = vadd.f32 0.0, %v3985
        %v3987 = vpop.f32.mrf.mxu0
        %v3988 = vadd.f32 0.0, %v3987
        %3989 = vmatmul.bf16.gmra.mxu0 %v3379
        %v3990 = vpop.f32.mrf.mxu0
        %v3991 = vadd.f32 0.0, %v3990
        %v3992 = vpop.f32.mrf.mxu0
        %v3993 = vadd.f32 0.0, %v3992
        %3994 = vmatmul.bf16.gmra.mxu0 %v3382
        %v3995 = vpop.f32.mrf.mxu0
        %v3996 = vadd.f32 0.0, %v3995
        %v3997 = vpop.f32.mrf.mxu0
        %v3998 = vadd.f32 0.0, %v3997
        %3999 = vmatmul.bf16.gmra.mxu0 %v3385
        %v4000 = vpop.f32.mrf.mxu0
        %v4001 = vadd.f32 0.0, %v4000
        %v4002 = vpop.f32.mrf.mxu0
        %v4003 = vadd.f32 0.0, %v4002
        %4004 = vdwg.mxu0
        %4005 = vmatpush.bf16.msra.mxu0 %v3771
        %4006 = vmatpush.bf16.msra.mxu0 %v3768
        %4007 = vmatpush.bf16.msra.mxu0 %v3765
        %4008 = vmatpush.bf16.msra.mxu0 %v3762
        %4009 = vmatpush.bf16.msra.mxu0 %v3759
        %4010 = vmatpush.bf16.msra.mxu0 %v3756
        %4011 = vmatpush.bf16.msra.mxu0 %v3753
        %4012 = vmatpush.bf16.msra.mxu0 %v3750
        %4013 = vmatmul.bf16.gmra.mxu0 %v3374
        %v4014 = vpop.f32.mrf.mxu0
        %v4015 = vadd.f32 %v3981, %v4014
        %v4016 = vpop.f32.mrf.mxu0
        %v4017 = vadd.f32 %v3983, %v4016
        %4018 = vmatmul.bf16.gmra.mxu0 %v3377
        %v4019 = vpop.f32.mrf.mxu0
        %v4020 = vadd.f32 %v3986, %v4019
        %v4021 = vpop.f32.mrf.mxu0
        %v4022 = vadd.f32 %v3988, %v4021
        %4023 = vmatmul.bf16.gmra.mxu0 %v3380
        %v4024 = vpop.f32.mrf.mxu0
        %v4025 = vadd.f32 %v3991, %v4024
        %v4026 = vpop.f32.mrf.mxu0
        %v4027 = vadd.f32 %v3993, %v4026
        %4028 = vmatmul.bf16.gmra.mxu0 %v3383
        %v4029 = vpop.f32.mrf.mxu0
        %v4030 = vadd.f32 %v3996, %v4029
        %v4031 = vpop.f32.mrf.mxu0
        %v4032 = vadd.f32 %v3998, %v4031
        %4033 = vmatmul.bf16.gmra.mxu0 %v3386
        %v4034 = vpop.f32.mrf.mxu0
        %v4035 = vadd.f32 %v4001, %v4034
        %v4036 = vpop.f32.mrf.mxu0
        %v4037 = vadd.f32 %v4003, %v4036
        %4038 = vdwg.mxu0
        %4039 = vmatpush.bf16.msra.mxu0 %v3795
        %4040 = vmatpush.bf16.msra.mxu0 %v3792
        %4041 = vmatpush.bf16.msra.mxu0 %v3789
        %4042 = vmatpush.bf16.msra.mxu0 %v3786
        %4043 = vmatpush.bf16.msra.mxu0 %v3783
        %4044 = vmatpush.bf16.msra.mxu0 %v3780
        %4045 = vmatpush.bf16.msra.mxu0 %v3777
        %4046 = vmatpush.bf16.msra.mxu0 %v3774
        %4047 = vmatmul.bf16.gmra.mxu0 %v3375
        %v4048 = vpop.f32.mrf.mxu0
        %v4049 = vadd.f32 %v4015, %v4048
        %v4050 = vpop.f32.mrf.mxu0
        %v4051 = vadd.f32 %v4017, %v4050
        %4052 = vmatmul.bf16.gmra.mxu0 %v3378
        %v4053 = vpop.f32.mrf.mxu0
        %v4054 = vadd.f32 %v4020, %v4053
        %v4055 = vpop.f32.mrf.mxu0
        %v4056 = vadd.f32 %v4022, %v4055
        %4057 = vmatmul.bf16.gmra.mxu0 %v3381
        %v4058 = vpop.f32.mrf.mxu0
        %v4059 = vadd.f32 %v4025, %v4058
        %v4060 = vpop.f32.mrf.mxu0
        %v4061 = vadd.f32 %v4027, %v4060
        %4062 = vmatmul.bf16.gmra.mxu0 %v3384
        %v4063 = vpop.f32.mrf.mxu0
        %v4064 = vadd.f32 %v4030, %v4063
        %v4065 = vpop.f32.mrf.mxu0
        %v4066 = vadd.f32 %v4032, %v4065
        %4067 = vmatmul.bf16.gmra.mxu0 %v3387
        %v4068 = vpop.f32.mrf.mxu0
        %v4069 = vadd.f32 %v4035, %v4068
        %v4070 = vpop.f32.mrf.mxu0
        %v4071 = vadd.f32 %v4037, %v4070
        %4072 = vdwg.mxu0
        %4073 = vmatpush.bf16.msra.mxu0 %v3748
        %4074 = vmatpush.bf16.msra.mxu0 %v3745
        %4075 = vmatpush.bf16.msra.mxu0 %v3742
        %4076 = vmatpush.bf16.msra.mxu0 %v3739
        %4077 = vmatpush.bf16.msra.mxu0 %v3736
        %4078 = vmatpush.bf16.msra.mxu0 %v3733
        %4079 = vmatpush.bf16.msra.mxu0 %v3730
        %4080 = vmatpush.bf16.msra.mxu0 %v3727
        %4081 = vmatmul.bf16.gmra.mxu0 %v3373
        %v4082 = vpop.f32.mrf.mxu0
        %v4083 = vadd.f32 0.0, %v4082
        %v4084 = vpop.f32.mrf.mxu0
        %v4085 = vadd.f32 0.0, %v4084
        %4086 = vmatmul.bf16.gmra.mxu0 %v3376
        %v4087 = vpop.f32.mrf.mxu0
        %v4088 = vadd.f32 0.0, %v4087
        %v4089 = vpop.f32.mrf.mxu0
        %v4090 = vadd.f32 0.0, %v4089
        %4091 = vmatmul.bf16.gmra.mxu0 %v3379
        %v4092 = vpop.f32.mrf.mxu0
        %v4093 = vadd.f32 0.0, %v4092
        %v4094 = vpop.f32.mrf.mxu0
        %v4095 = vadd.f32 0.0, %v4094
        %4096 = vmatmul.bf16.gmra.mxu0 %v3382
        %v4097 = vpop.f32.mrf.mxu0
        %v4098 = vadd.f32 0.0, %v4097
        %v4099 = vpop.f32.mrf.mxu0
        %v4100 = vadd.f32 0.0, %v4099
        %4101 = vmatmul.bf16.gmra.mxu0 %v3385
        %v4102 = vpop.f32.mrf.mxu0
        %v4103 = vadd.f32 0.0, %v4102
        %v4104 = vpop.f32.mrf.mxu0
        %v4105 = vadd.f32 0.0, %v4104
        %4106 = vdwg.mxu0
        %4107 = vmatpush.bf16.msra.mxu0 %v3772
        %4108 = vmatpush.bf16.msra.mxu0 %v3769
        %4109 = vmatpush.bf16.msra.mxu0 %v3766
        %4110 = vmatpush.bf16.msra.mxu0 %v3763
        %4111 = vmatpush.bf16.msra.mxu0 %v3760
        %4112 = vmatpush.bf16.msra.mxu0 %v3757
        %4113 = vmatpush.bf16.msra.mxu0 %v3754
        %4114 = vmatpush.bf16.msra.mxu0 %v3751
        %4115 = vmatmul.bf16.gmra.mxu0 %v3374
        %v4116 = vpop.f32.mrf.mxu0
        %v4117 = vadd.f32 %v4083, %v4116
        %v4118 = vpop.f32.mrf.mxu0
        %v4119 = vadd.f32 %v4085, %v4118
        %4120 = vmatmul.bf16.gmra.mxu0 %v3377
        %v4121 = vpop.f32.mrf.mxu0
        %v4122 = vadd.f32 %v4088, %v4121
        %v4123 = vpop.f32.mrf.mxu0
        %v4124 = vadd.f32 %v4090, %v4123
        %4125 = vmatmul.bf16.gmra.mxu0 %v3380
        %v4126 = vpop.f32.mrf.mxu0
        %v4127 = vadd.f32 %v4093, %v4126
        %v4128 = vpop.f32.mrf.mxu0
        %v4129 = vadd.f32 %v4095, %v4128
        %4130 = vmatmul.bf16.gmra.mxu0 %v3383
        %v4131 = vpop.f32.mrf.mxu0
        %v4132 = vadd.f32 %v4098, %v4131
        %v4133 = vpop.f32.mrf.mxu0
        %v4134 = vadd.f32 %v4100, %v4133
        %4135 = vmatmul.bf16.gmra.mxu0 %v3386
        %v4136 = vpop.f32.mrf.mxu0
        %v4137 = vadd.f32 %v4103, %v4136
        %v4138 = vpop.f32.mrf.mxu0
        %v4139 = vadd.f32 %v4105, %v4138
        %4140 = vdwg.mxu0
        %4141 = vmatpush.bf16.msra.mxu0 %v3796
        %4142 = vmatpush.bf16.msra.mxu0 %v3793
        %4143 = vmatpush.bf16.msra.mxu0 %v3790
        %4144 = vmatpush.bf16.msra.mxu0 %v3787
        %4145 = vmatpush.bf16.msra.mxu0 %v3784
        %4146 = vmatpush.bf16.msra.mxu0 %v3781
        %4147 = vmatpush.bf16.msra.mxu0 %v3778
        %4148 = vmatpush.bf16.msra.mxu0 %v3775
        %4149 = vmatmul.bf16.gmra.mxu0 %v3375
        %v4150 = vpop.f32.mrf.mxu0
        %v4151 = vadd.f32 %v4117, %v4150
        %v4152 = vpop.f32.mrf.mxu0
        %v4153 = vadd.f32 %v4119, %v4152
        %4154 = vmatmul.bf16.gmra.mxu0 %v3378
        %v4155 = vpop.f32.mrf.mxu0
        %v4156 = vadd.f32 %v4122, %v4155
        %v4157 = vpop.f32.mrf.mxu0
        %v4158 = vadd.f32 %v4124, %v4157
        %4159 = vmatmul.bf16.gmra.mxu0 %v3381
        %v4160 = vpop.f32.mrf.mxu0
        %v4161 = vadd.f32 %v4127, %v4160
        %v4162 = vpop.f32.mrf.mxu0
        %v4163 = vadd.f32 %v4129, %v4162
        %4164 = vmatmul.bf16.gmra.mxu0 %v3384
        %v4165 = vpop.f32.mrf.mxu0
        %v4166 = vadd.f32 %v4132, %v4165
        %v4167 = vpop.f32.mrf.mxu0
        %v4168 = vadd.f32 %v4134, %v4167
        %4169 = vmatmul.bf16.gmra.mxu0 %v3387
        %v4170 = vpop.f32.mrf.mxu0
        %v4171 = vadd.f32 %v4137, %v4170
        %v4172 = vpop.f32.mrf.mxu0
        %v4173 = vadd.f32 %v4139, %v4172
        %4174 = vdwg.mxu0
        %v4271 = vunpack.c.l.b16 %v3277
        %v4272 = vunpack.c.h.b16 %v3277
        %v4273 = vunpack.c.l.b16 %v3278
        %v4274 = vunpack.c.l.b16 %v3279
        %v4275 = vunpack.c.h.b16 %v3279
        %v4276 = vunpack.c.l.b16 %v3280
        %v4277 = vunpack.c.l.b16 %v3281
        %v4278 = vunpack.c.h.b16 %v3281
        %v4279 = vunpack.c.l.b16 %v3282
        %v4280 = vunpack.c.l.b16 %v3283
        %v4281 = vunpack.c.h.b16 %v3283
        %v4282 = vunpack.c.l.b16 %v3284
        %v4283 = vunpack.c.l.b16 %v3285
        %v4284 = vunpack.c.h.b16 %v3285
        %v4285 = vunpack.c.l.b16 %v3286
        %v4286 = vunpack.c.l.b16 %v3287
        %v4287 = vunpack.c.h.b16 %v3287
        %v4288 = vunpack.c.l.b16 %v3288
        %v4289 = vunpack.c.l.b16 %v3289
        %v4290 = vunpack.c.h.b16 %v3289
        %v4291 = vunpack.c.l.b16 %v3290
        %v4292 = vunpack.c.l.b16 %v3291
        %v4293 = vunpack.c.h.b16 %v3291
        %v4294 = vunpack.c.l.b16 %v3292
        %v4295 = vunpack.c.l.b16 %v3293
        %v4296 = vunpack.c.h.b16 %v3293
        %v4297 = vunpack.c.l.b16 %v3294
        %v4298 = vunpack.c.l.b16 %v3295
        %v4299 = vunpack.c.h.b16 %v3295
        %v4300 = vunpack.c.l.b16 %v3296
        %v4301 = vunpack.c.l.b16 %v3297
        %v4302 = vunpack.c.h.b16 %v3297
        %v4303 = vunpack.c.l.b16 %v3298
        %v4304 = vunpack.c.l.b16 %v3299
        %v4305 = vunpack.c.h.b16 %v3299
        %v4306 = vunpack.c.l.b16 %v3300
        %v4307 = vunpack.c.l.b16 %v3301
        %v4308 = vunpack.c.h.b16 %v3301
        %v4309 = vunpack.c.l.b16 %v3302
        %v4310 = vunpack.c.l.b16 %v3303
        %v4311 = vunpack.c.h.b16 %v3303
        %v4312 = vunpack.c.l.b16 %v3304
        %v4313 = vunpack.c.l.b16 %v3305
        %v4314 = vunpack.c.h.b16 %v3305
        %v4315 = vunpack.c.l.b16 %v3306
        %v4316 = vunpack.c.l.b16 %v3307
        %v4317 = vunpack.c.h.b16 %v3307
        %v4318 = vunpack.c.l.b16 %v3308
        %v4319 = vunpack.c.l.b16 %v3309
        %v4320 = vunpack.c.h.b16 %v3309
        %v4321 = vunpack.c.l.b16 %v3310
        %v4322 = vunpack.c.l.b16 %v3311
        %v4323 = vunpack.c.h.b16 %v3311
        %v4324 = vunpack.c.l.b16 %v3312
        %v4325 = vunpack.c.l.b16 %v3313
        %v4326 = vunpack.c.h.b16 %v3313
        %v4327 = vunpack.c.l.b16 %v3314
        %v4328 = vunpack.c.l.b16 %v3315
        %v4329 = vunpack.c.h.b16 %v3315
        %v4330 = vunpack.c.l.b16 %v3316
        %v4331 = vunpack.c.l.b16 %v3317
        %v4332 = vunpack.c.h.b16 %v3317
        %v4333 = vunpack.c.l.b16 %v3318
        %v4334 = vunpack.c.l.b16 %v3319
        %v4335 = vunpack.c.h.b16 %v3319
        %v4336 = vunpack.c.l.b16 %v3320
        %v4337 = vunpack.c.l.b16 %v3321
        %v4338 = vunpack.c.h.b16 %v3321
        %v4339 = vunpack.c.l.b16 %v3322
        %v4340 = vunpack.c.l.b16 %v3323
        %v4341 = vunpack.c.h.b16 %v3323
        %v4342 = vunpack.c.l.b16 %v3324
        %v4343 = vunpack.c.l.b16 %v3325
        %v4344 = vunpack.c.h.b16 %v3325
        %v4345 = vunpack.c.l.b16 %v3326
        %v4346 = vunpack.c.l.b16 %v3327
        %v4347 = vunpack.c.h.b16 %v3327
        %v4348 = vunpack.c.l.b16 %v3328
        %v4349 = vunpack.c.l.b16 %v3329
        %v4350 = vunpack.c.h.b16 %v3329
        %v4351 = vunpack.c.l.b16 %v3330
        %v4352 = vunpack.c.l.b16 %v3331
        %v4353 = vunpack.c.h.b16 %v3331
        %v4354 = vunpack.c.l.b16 %v3332
        %v4355 = vunpack.c.l.b16 %v3333
        %v4356 = vunpack.c.h.b16 %v3333
        %v4357 = vunpack.c.l.b16 %v3334
        %v4358 = vunpack.c.l.b16 %v3335
        %v4359 = vunpack.c.h.b16 %v3335
        %v4360 = vunpack.c.l.b16 %v3336
        %v4361 = vunpack.c.l.b16 %v3337
        %v4362 = vunpack.c.h.b16 %v3337
        %v4363 = vunpack.c.l.b16 %v3338
        %v4364 = vunpack.c.l.b16 %v3339
        %v4365 = vunpack.c.h.b16 %v3339
        %v4366 = vunpack.c.l.b16 %v3340
        %v4367 = vunpack.c.l.b16 %v3341
        %v4368 = vunpack.c.h.b16 %v3341
        %v4369 = vunpack.c.l.b16 %v3342
        %v4370 = vunpack.c.l.b16 %v3343
        %v4371 = vunpack.c.h.b16 %v3343
        %v4372 = vunpack.c.l.b16 %v3344
        %v4373 = vunpack.c.l.b16 %v3345
        %v4374 = vunpack.c.h.b16 %v3345
        %v4375 = vunpack.c.l.b16 %v3346
        %v4376 = vunpack.c.l.b16 %v3347
        %v4377 = vunpack.c.h.b16 %v3347
        %v4378 = vunpack.c.l.b16 %v3348
        %v4379 = vunpack.c.l.b16 %v3349
        %v4380 = vunpack.c.h.b16 %v3349
        %v4381 = vunpack.c.l.b16 %v3350
        %v4382 = vunpack.c.l.b16 %v3351
        %v4383 = vunpack.c.h.b16 %v3351
        %v4384 = vunpack.c.l.b16 %v3352
        %v4385 = vunpack.c.l.b16 %v3353
        %v4386 = vunpack.c.h.b16 %v3353
        %v4387 = vunpack.c.l.b16 %v3354
        %v4388 = vunpack.c.l.b16 %v3355
        %v4389 = vunpack.c.h.b16 %v3355
        %v4390 = vunpack.c.l.b16 %v3356
        %v4391 = vunpack.c.l.b16 %v3357
        %v4392 = vunpack.c.h.b16 %v3357
        %v4393 = vunpack.c.l.b16 %v3358
        %v4394 = vunpack.c.l.b16 %v3359
        %v4395 = vunpack.c.h.b16 %v3359
        %v4396 = vunpack.c.l.b16 %v3360
        %v4397 = vunpack.c.l.b16 %v3361
        %v4398 = vunpack.c.h.b16 %v3361
        %v4399 = vunpack.c.l.b16 %v3362
        %v4400 = vunpack.c.l.b16 %v3363
        %v4401 = vunpack.c.h.b16 %v3363
        %v4402 = vunpack.c.l.b16 %v3364
        %v4403 = vunpack.c.l.b16 %v3365
        %v4404 = vunpack.c.h.b16 %v3365
        %v4405 = vunpack.c.l.b16 %v3366
        %v4406 = vunpack.c.l.b16 %v3367
        %v4407 = vunpack.c.h.b16 %v3367
        %v4408 = vunpack.c.l.b16 %v3368
        %v4409 = vunpack.c.l.b16 %v3369
        %v4410 = vunpack.c.h.b16 %v3369
        %v4411 = vunpack.c.l.b16 %v3370
        %v4412 = vunpack.c.l.b16 %v3371
        %v4413 = vunpack.c.h.b16 %v3371
        %v4414 = vunpack.c.l.b16 %v3372
        %v4415 = vpack.c.b16 %v4274, %v4271
        %v4416 = vpack.c.b16 %v4275, %v4272
        %v4417 = vpack.c.b16 %v4276, %v4273
        %v4418 = vpack.c.b16 %v4280, %v4277
        %v4419 = vpack.c.b16 %v4281, %v4278
        %v4420 = vpack.c.b16 %v4282, %v4279
        %v4421 = vpack.c.b16 %v4286, %v4283
        %v4422 = vpack.c.b16 %v4287, %v4284
        %v4423 = vpack.c.b16 %v4288, %v4285
        %v4424 = vpack.c.b16 %v4292, %v4289
        %v4425 = vpack.c.b16 %v4293, %v4290
        %v4426 = vpack.c.b16 %v4294, %v4291
        %v4427 = vpack.c.b16 %v4298, %v4295
        %v4428 = vpack.c.b16 %v4299, %v4296
        %v4429 = vpack.c.b16 %v4300, %v4297
        %v4430 = vpack.c.b16 %v4304, %v4301
        %v4431 = vpack.c.b16 %v4305, %v4302
        %v4432 = vpack.c.b16 %v4306, %v4303
        %v4433 = vpack.c.b16 %v4310, %v4307
        %v4434 = vpack.c.b16 %v4311, %v4308
        %v4435 = vpack.c.b16 %v4312, %v4309
        %v4436 = vpack.c.b16 %v4316, %v4313
        %v4437 = vpack.c.b16 %v4317, %v4314
        %v4438 = vpack.c.b16 %v4318, %v4315
        %v4439 = vpack.c.b16 %v4322, %v4319
        %v4440 = vpack.c.b16 %v4323, %v4320
        %v4441 = vpack.c.b16 %v4324, %v4321
        %v4442 = vpack.c.b16 %v4328, %v4325
        %v4443 = vpack.c.b16 %v4329, %v4326
        %v4444 = vpack.c.b16 %v4330, %v4327
        %v4445 = vpack.c.b16 %v4334, %v4331
        %v4446 = vpack.c.b16 %v4335, %v4332
        %v4447 = vpack.c.b16 %v4336, %v4333
        %v4448 = vpack.c.b16 %v4340, %v4337
        %v4449 = vpack.c.b16 %v4341, %v4338
        %v4450 = vpack.c.b16 %v4342, %v4339
        %v4451 = vpack.c.b16 %v4346, %v4343
        %v4452 = vpack.c.b16 %v4347, %v4344
        %v4453 = vpack.c.b16 %v4348, %v4345
        %v4454 = vpack.c.b16 %v4352, %v4349
        %v4455 = vpack.c.b16 %v4353, %v4350
        %v4456 = vpack.c.b16 %v4354, %v4351
        %v4457 = vpack.c.b16 %v4358, %v4355
        %v4458 = vpack.c.b16 %v4359, %v4356
        %v4459 = vpack.c.b16 %v4360, %v4357
        %v4460 = vpack.c.b16 %v4364, %v4361
        %v4461 = vpack.c.b16 %v4365, %v4362
        %v4462 = vpack.c.b16 %v4366, %v4363
        %v4463 = vpack.c.b16 %v4370, %v4367
        %v4464 = vpack.c.b16 %v4371, %v4368
        %v4465 = vpack.c.b16 %v4372, %v4369
        %v4466 = vpack.c.b16 %v4376, %v4373
        %v4467 = vpack.c.b16 %v4377, %v4374
        %v4468 = vpack.c.b16 %v4378, %v4375
        %v4469 = vpack.c.b16 %v4382, %v4379
        %v4470 = vpack.c.b16 %v4383, %v4380
        %v4471 = vpack.c.b16 %v4384, %v4381
        %v4472 = vpack.c.b16 %v4388, %v4385
        %v4473 = vpack.c.b16 %v4389, %v4386
        %v4474 = vpack.c.b16 %v4390, %v4387
        %v4475 = vpack.c.b16 %v4394, %v4391
        %v4476 = vpack.c.b16 %v4395, %v4392
        %v4477 = vpack.c.b16 %v4396, %v4393
        %v4478 = vpack.c.b16 %v4400, %v4397
        %v4479 = vpack.c.b16 %v4401, %v4398
        %v4480 = vpack.c.b16 %v4402, %v4399
        %v4481 = vpack.c.b16 %v4406, %v4403
        %v4482 = vpack.c.b16 %v4407, %v4404
        %v4483 = vpack.c.b16 %v4408, %v4405
        %v4484 = vpack.c.b16 %v4412, %v4409
        %v4485 = vpack.c.b16 %v4413, %v4410
        %v4486 = vpack.c.b16 %v4414, %v4411
        %4559 = vmatpush.bf16.msra.mxu0 %v4436
        %4560 = vmatpush.bf16.msra.mxu0 %v4433
        %4561 = vmatpush.bf16.msra.mxu0 %v4430
        %4562 = vmatpush.bf16.msra.mxu0 %v4427
        %4563 = vmatpush.bf16.msra.mxu0 %v4424
        %4564 = vmatpush.bf16.msra.mxu0 %v4421
        %4565 = vmatpush.bf16.msra.mxu0 %v4418
        %4566 = vmatpush.bf16.msra.mxu0 %v4415
        %4567 = vmatmul.bf16.gmra.mxu0 %v3262
        %v4568 = vpop.f32.mrf.mxu0
        %v4569 = vadd.f32 %v3947, %v4568
        %v4570 = vpop.f32.mrf.mxu0
        %v4571 = vadd.f32 %v3949, %v4570
        %4572 = vmatmul.bf16.gmra.mxu0 %v3265
        %v4573 = vpop.f32.mrf.mxu0
        %v4574 = vadd.f32 %v3952, %v4573
        %v4575 = vpop.f32.mrf.mxu0
        %v4576 = vadd.f32 %v3954, %v4575
        %4577 = vmatmul.bf16.gmra.mxu0 %v3268
        %v4578 = vpop.f32.mrf.mxu0
        %v4579 = vadd.f32 %v3957, %v4578
        %v4580 = vpop.f32.mrf.mxu0
        %v4581 = vadd.f32 %v3959, %v4580
        %4582 = vmatmul.bf16.gmra.mxu0 %v3271
        %v4583 = vpop.f32.mrf.mxu0
        %v4584 = vadd.f32 %v3962, %v4583
        %v4585 = vpop.f32.mrf.mxu0
        %v4586 = vadd.f32 %v3964, %v4585
        %4587 = vmatmul.bf16.gmra.mxu0 %v3274
        %v4588 = vpop.f32.mrf.mxu0
        %v4589 = vadd.f32 %v3967, %v4588
        %v4590 = vpop.f32.mrf.mxu0
        %v4591 = vadd.f32 %v3969, %v4590
        %4592 = vdwg.mxu0
        %4593 = vmatpush.bf16.msra.mxu0 %v4460
        %4594 = vmatpush.bf16.msra.mxu0 %v4457
        %4595 = vmatpush.bf16.msra.mxu0 %v4454
        %4596 = vmatpush.bf16.msra.mxu0 %v4451
        %4597 = vmatpush.bf16.msra.mxu0 %v4448
        %4598 = vmatpush.bf16.msra.mxu0 %v4445
        %4599 = vmatpush.bf16.msra.mxu0 %v4442
        %4600 = vmatpush.bf16.msra.mxu0 %v4439
        %4601 = vmatmul.bf16.gmra.mxu0 %v3263
        %v4602 = vpop.f32.mrf.mxu0
        %v4603 = vadd.f32 %v4569, %v4602
        %v4604 = vpop.f32.mrf.mxu0
        %v4605 = vadd.f32 %v4571, %v4604
        %4606 = vmatmul.bf16.gmra.mxu0 %v3266
        %v4607 = vpop.f32.mrf.mxu0
        %v4608 = vadd.f32 %v4574, %v4607
        %v4609 = vpop.f32.mrf.mxu0
        %v4610 = vadd.f32 %v4576, %v4609
        %4611 = vmatmul.bf16.gmra.mxu0 %v3269
        %v4612 = vpop.f32.mrf.mxu0
        %v4613 = vadd.f32 %v4579, %v4612
        %v4614 = vpop.f32.mrf.mxu0
        %v4615 = vadd.f32 %v4581, %v4614
        %4616 = vmatmul.bf16.gmra.mxu0 %v3272
        %v4617 = vpop.f32.mrf.mxu0
        %v4618 = vadd.f32 %v4584, %v4617
        %v4619 = vpop.f32.mrf.mxu0
        %v4620 = vadd.f32 %v4586, %v4619
        %4621 = vmatmul.bf16.gmra.mxu0 %v3275
        %v4622 = vpop.f32.mrf.mxu0
        %v4623 = vadd.f32 %v4589, %v4622
        %v4624 = vpop.f32.mrf.mxu0
        %v4625 = vadd.f32 %v4591, %v4624
        %4626 = vdwg.mxu0
        %4627 = vmatpush.bf16.msra.mxu0 %v4484
        %4628 = vmatpush.bf16.msra.mxu0 %v4481
        %4629 = vmatpush.bf16.msra.mxu0 %v4478
        %4630 = vmatpush.bf16.msra.mxu0 %v4475
        %4631 = vmatpush.bf16.msra.mxu0 %v4472
        %4632 = vmatpush.bf16.msra.mxu0 %v4469
        %4633 = vmatpush.bf16.msra.mxu0 %v4466
        %4634 = vmatpush.bf16.msra.mxu0 %v4463
        %4635 = vmatmul.bf16.gmra.mxu0 %v3264
        %v4636 = vpop.f32.mrf.mxu0
        %v4637 = vadd.f32 %v4603, %v4636
        %v4638 = vpop.f32.mrf.mxu0
        %v4639 = vadd.f32 %v4605, %v4638
        %4640 = vmatmul.bf16.gmra.mxu0 %v3267
        %v4641 = vpop.f32.mrf.mxu0
        %v4642 = vadd.f32 %v4608, %v4641
        %v4643 = vpop.f32.mrf.mxu0
        %v4644 = vadd.f32 %v4610, %v4643
        %4645 = vmatmul.bf16.gmra.mxu0 %v3270
        %v4646 = vpop.f32.mrf.mxu0
        %v4647 = vadd.f32 %v4613, %v4646
        %v4648 = vpop.f32.mrf.mxu0
        %v4649 = vadd.f32 %v4615, %v4648
        %4650 = vmatmul.bf16.gmra.mxu0 %v3273
        %v4651 = vpop.f32.mrf.mxu0
        %v4652 = vadd.f32 %v4618, %v4651
        %v4653 = vpop.f32.mrf.mxu0
        %v4654 = vadd.f32 %v4620, %v4653
        %4655 = vmatmul.bf16.gmra.mxu0 %v3276
        %v4656 = vpop.f32.mrf.mxu0
        %v4657 = vadd.f32 %v4623, %v4656
        %v4658 = vpop.f32.mrf.mxu0
        %v4659 = vadd.f32 %v4625, %v4658
        %4660 = vdwg.mxu0
        %4661 = vmatpush.bf16.msra.mxu0 %v4437
        %4662 = vmatpush.bf16.msra.mxu0 %v4434
        %4663 = vmatpush.bf16.msra.mxu0 %v4431
        %4664 = vmatpush.bf16.msra.mxu0 %v4428
        %4665 = vmatpush.bf16.msra.mxu0 %v4425
        %4666 = vmatpush.bf16.msra.mxu0 %v4422
        %4667 = vmatpush.bf16.msra.mxu0 %v4419
        %4668 = vmatpush.bf16.msra.mxu0 %v4416
        %4669 = vmatmul.bf16.gmra.mxu0 %v3262
        %v4670 = vpop.f32.mrf.mxu0
        %v4671 = vadd.f32 %v4049, %v4670
        %v4672 = vpop.f32.mrf.mxu0
        %v4673 = vadd.f32 %v4051, %v4672
        %4674 = vmatmul.bf16.gmra.mxu0 %v3265
        %v4675 = vpop.f32.mrf.mxu0
        %v4676 = vadd.f32 %v4054, %v4675
        %v4677 = vpop.f32.mrf.mxu0
        %v4678 = vadd.f32 %v4056, %v4677
        %4679 = vmatmul.bf16.gmra.mxu0 %v3268
        %v4680 = vpop.f32.mrf.mxu0
        %v4681 = vadd.f32 %v4059, %v4680
        %v4682 = vpop.f32.mrf.mxu0
        %v4683 = vadd.f32 %v4061, %v4682
        %4684 = vmatmul.bf16.gmra.mxu0 %v3271
        %v4685 = vpop.f32.mrf.mxu0
        %v4686 = vadd.f32 %v4064, %v4685
        %v4687 = vpop.f32.mrf.mxu0
        %v4688 = vadd.f32 %v4066, %v4687
        %4689 = vmatmul.bf16.gmra.mxu0 %v3274
        %v4690 = vpop.f32.mrf.mxu0
        %v4691 = vadd.f32 %v4069, %v4690
        %v4692 = vpop.f32.mrf.mxu0
        %v4693 = vadd.f32 %v4071, %v4692
        %4694 = vdwg.mxu0
        %4695 = vmatpush.bf16.msra.mxu0 %v4461
        %4696 = vmatpush.bf16.msra.mxu0 %v4458
        %4697 = vmatpush.bf16.msra.mxu0 %v4455
        %4698 = vmatpush.bf16.msra.mxu0 %v4452
        %4699 = vmatpush.bf16.msra.mxu0 %v4449
        %4700 = vmatpush.bf16.msra.mxu0 %v4446
        %4701 = vmatpush.bf16.msra.mxu0 %v4443
        %4702 = vmatpush.bf16.msra.mxu0 %v4440
        %4703 = vmatmul.bf16.gmra.mxu0 %v3263
        %v4704 = vpop.f32.mrf.mxu0
        %v4705 = vadd.f32 %v4671, %v4704
        %v4706 = vpop.f32.mrf.mxu0
        %v4707 = vadd.f32 %v4673, %v4706
        %4708 = vmatmul.bf16.gmra.mxu0 %v3266
        %v4709 = vpop.f32.mrf.mxu0
        %v4710 = vadd.f32 %v4676, %v4709
        %v4711 = vpop.f32.mrf.mxu0
        %v4712 = vadd.f32 %v4678, %v4711
        %4713 = vmatmul.bf16.gmra.mxu0 %v3269
        %v4714 = vpop.f32.mrf.mxu0
        %v4715 = vadd.f32 %v4681, %v4714
        %v4716 = vpop.f32.mrf.mxu0
        %v4717 = vadd.f32 %v4683, %v4716
        %4718 = vmatmul.bf16.gmra.mxu0 %v3272
        %v4719 = vpop.f32.mrf.mxu0
        %v4720 = vadd.f32 %v4686, %v4719
        %v4721 = vpop.f32.mrf.mxu0
        %v4722 = vadd.f32 %v4688, %v4721
        %4723 = vmatmul.bf16.gmra.mxu0 %v3275
        %v4724 = vpop.f32.mrf.mxu0
        %v4725 = vadd.f32 %v4691, %v4724
        %v4726 = vpop.f32.mrf.mxu0
        %v4727 = vadd.f32 %v4693, %v4726
        %4728 = vdwg.mxu0
        %4729 = vmatpush.bf16.msra.mxu0 %v4485
        %4730 = vmatpush.bf16.msra.mxu0 %v4482
        %4731 = vmatpush.bf16.msra.mxu0 %v4479
        %4732 = vmatpush.bf16.msra.mxu0 %v4476
        %4733 = vmatpush.bf16.msra.mxu0 %v4473
        %4734 = vmatpush.bf16.msra.mxu0 %v4470
        %4735 = vmatpush.bf16.msra.mxu0 %v4467
        %4736 = vmatpush.bf16.msra.mxu0 %v4464
        %4737 = vmatmul.bf16.gmra.mxu0 %v3264
        %v4738 = vpop.f32.mrf.mxu0
        %v4739 = vadd.f32 %v4705, %v4738
        %v4740 = vpop.f32.mrf.mxu0
        %v4741 = vadd.f32 %v4707, %v4740
        %4742 = vmatmul.bf16.gmra.mxu0 %v3267
        %v4743 = vpop.f32.mrf.mxu0
        %v4744 = vadd.f32 %v4710, %v4743
        %v4745 = vpop.f32.mrf.mxu0
        %v4746 = vadd.f32 %v4712, %v4745
        %4747 = vmatmul.bf16.gmra.mxu0 %v3270
        %v4748 = vpop.f32.mrf.mxu0
        %v4749 = vadd.f32 %v4715, %v4748
        %v4750 = vpop.f32.mrf.mxu0
        %v4751 = vadd.f32 %v4717, %v4750
        %4752 = vmatmul.bf16.gmra.mxu0 %v3273
        %v4753 = vpop.f32.mrf.mxu0
        %v4754 = vadd.f32 %v4720, %v4753
        %v4755 = vpop.f32.mrf.mxu0
        %v4756 = vadd.f32 %v4722, %v4755
        %4757 = vmatmul.bf16.gmra.mxu0 %v3276
        %v4758 = vpop.f32.mrf.mxu0
        %v4759 = vadd.f32 %v4725, %v4758
        %v4760 = vpop.f32.mrf.mxu0
        %v4761 = vadd.f32 %v4727, %v4760
        %4762 = vdwg.mxu0
        %4763 = vmatpush.bf16.msra.mxu0 %v4438
        %4764 = vmatpush.bf16.msra.mxu0 %v4435
        %4765 = vmatpush.bf16.msra.mxu0 %v4432
        %4766 = vmatpush.bf16.msra.mxu0 %v4429
        %4767 = vmatpush.bf16.msra.mxu0 %v4426
        %4768 = vmatpush.bf16.msra.mxu0 %v4423
        %4769 = vmatpush.bf16.msra.mxu0 %v4420
        %4770 = vmatpush.bf16.msra.mxu0 %v4417
        %4771 = vmatmul.bf16.gmra.mxu0 %v3262
        %v4772 = vpop.f32.mrf.mxu0
        %v4773 = vadd.f32 %v4151, %v4772
        %v4774 = vpop.f32.mrf.mxu0
        %v4775 = vadd.f32 %v4153, %v4774
        %4776 = vmatmul.bf16.gmra.mxu0 %v3265
        %v4777 = vpop.f32.mrf.mxu0
        %v4778 = vadd.f32 %v4156, %v4777
        %v4779 = vpop.f32.mrf.mxu0
        %v4780 = vadd.f32 %v4158, %v4779
        %4781 = vmatmul.bf16.gmra.mxu0 %v3268
        %v4782 = vpop.f32.mrf.mxu0
        %v4783 = vadd.f32 %v4161, %v4782
        %v4784 = vpop.f32.mrf.mxu0
        %v4785 = vadd.f32 %v4163, %v4784
        %4786 = vmatmul.bf16.gmra.mxu0 %v3271
        %v4787 = vpop.f32.mrf.mxu0
        %v4788 = vadd.f32 %v4166, %v4787
        %v4789 = vpop.f32.mrf.mxu0
        %v4790 = vadd.f32 %v4168, %v4789
        %4791 = vmatmul.bf16.gmra.mxu0 %v3274
        %v4792 = vpop.f32.mrf.mxu0
        %v4793 = vadd.f32 %v4171, %v4792
        %v4794 = vpop.f32.mrf.mxu0
        %v4795 = vadd.f32 %v4173, %v4794
        %4796 = vdwg.mxu0
        %4797 = vmatpush.bf16.msra.mxu0 %v4462
        %4798 = vmatpush.bf16.msra.mxu0 %v4459
        %4799 = vmatpush.bf16.msra.mxu0 %v4456
        %4800 = vmatpush.bf16.msra.mxu0 %v4453
        %4801 = vmatpush.bf16.msra.mxu0 %v4450
        %4802 = vmatpush.bf16.msra.mxu0 %v4447
        %4803 = vmatpush.bf16.msra.mxu0 %v4444
        %4804 = vmatpush.bf16.msra.mxu0 %v4441
        %4805 = vmatmul.bf16.gmra.mxu0 %v3263
        %v4806 = vpop.f32.mrf.mxu0
        %v4807 = vadd.f32 %v4773, %v4806
        %v4808 = vpop.f32.mrf.mxu0
        %v4809 = vadd.f32 %v4775, %v4808
        %4810 = vmatmul.bf16.gmra.mxu0 %v3266
        %v4811 = vpop.f32.mrf.mxu0
        %v4812 = vadd.f32 %v4778, %v4811
        %v4813 = vpop.f32.mrf.mxu0
        %v4814 = vadd.f32 %v4780, %v4813
        %4815 = vmatmul.bf16.gmra.mxu0 %v3269
        %v4816 = vpop.f32.mrf.mxu0
        %v4817 = vadd.f32 %v4783, %v4816
        %v4818 = vpop.f32.mrf.mxu0
        %v4819 = vadd.f32 %v4785, %v4818
        %4820 = vmatmul.bf16.gmra.mxu0 %v3272
        %v4821 = vpop.f32.mrf.mxu0
        %v4822 = vadd.f32 %v4788, %v4821
        %v4823 = vpop.f32.mrf.mxu0
        %v4824 = vadd.f32 %v4790, %v4823
        %4825 = vmatmul.bf16.gmra.mxu0 %v3275
        %v4826 = vpop.f32.mrf.mxu0
        %v4827 = vadd.f32 %v4793, %v4826
        %v4828 = vpop.f32.mrf.mxu0
        %v4829 = vadd.f32 %v4795, %v4828
        %4830 = vdwg.mxu0
        %4831 = vmatpush.bf16.msra.mxu0 %v4486
        %4832 = vmatpush.bf16.msra.mxu0 %v4483
        %4833 = vmatpush.bf16.msra.mxu0 %v4480
        %4834 = vmatpush.bf16.msra.mxu0 %v4477
        %4835 = vmatpush.bf16.msra.mxu0 %v4474
        %4836 = vmatpush.bf16.msra.mxu0 %v4471
        %4837 = vmatpush.bf16.msra.mxu0 %v4468
        %4838 = vmatpush.bf16.msra.mxu0 %v4465
        %4839 = vmatmul.bf16.gmra.mxu0 %v3264
        %v4840 = vpop.f32.mrf.mxu0
        %v4841 = vadd.f32 %v4807, %v4840
        %v4842 = vpop.f32.mrf.mxu0
        %v4843 = vadd.f32 %v4809, %v4842
        %4844 = vmatmul.bf16.gmra.mxu0 %v3267
        %v4845 = vpop.f32.mrf.mxu0
        %v4846 = vadd.f32 %v4812, %v4845
        %v4847 = vpop.f32.mrf.mxu0
        %v4848 = vadd.f32 %v4814, %v4847
        %4849 = vmatmul.bf16.gmra.mxu0 %v3270
        %v4850 = vpop.f32.mrf.mxu0
        %v4851 = vadd.f32 %v4817, %v4850
        %v4852 = vpop.f32.mrf.mxu0
        %v4853 = vadd.f32 %v4819, %v4852
        %4854 = vmatmul.bf16.gmra.mxu0 %v3273
        %v4855 = vpop.f32.mrf.mxu0
        %v4856 = vadd.f32 %v4822, %v4855
        %v4857 = vpop.f32.mrf.mxu0
        %v4858 = vadd.f32 %v4824, %v4857
        %4859 = vmatmul.bf16.gmra.mxu0 %v3276
        %v4860 = vpop.f32.mrf.mxu0
        %v4861 = vadd.f32 %v4827, %v4860
        %v4862 = vpop.f32.mrf.mxu0
        %v4863 = vadd.f32 %v4829, %v4862
        %4864 = vdwg.mxu0
        %v4865 = vpack.c.bf16 %v3259, %v3256
        %v4866 = vpack.c.bf16 %v3260, %v3257
        %v4867 = vpack.c.bf16 %v3261, %v3258
        %s4868 = scalar_lea.vmem %s4, 1152
        %v4869 = vld [vmem:[%s4868] sm:$0xff]
        %v4870 = vld [vmem:[%s4868 + $0x8] sm:$0xf]
        %v4871 = vld [vmem:[%s4868 + $0xc] sm:$0xff]
        %v4872 = vld [vmem:[%s4868 + $0x14] sm:$0xf]
        %v4873 = vld [vmem:[%s4868 + $0x18] sm:$0xff]
        %v4874 = vld [vmem:[%s4868 + $0x20] sm:$0xf]
        %v4875 = vld [vmem:[%s4868 + $0x24] sm:$0xff]
        %v4876 = vld [vmem:[%s4868 + $0x2c] sm:$0xf]
        %v4877 = vld [vmem:[%s4868 + $0x30] sm:$0xff]
        %v4878 = vld [vmem:[%s4868 + $0x38] sm:$0xf]
        %v4879 = vld [vmem:[%s4868 + $0x3c] sm:$0xff]
        %v4880 = vld [vmem:[%s4868 + $0x44] sm:$0xf]
        %v4881 = vld [vmem:[%s4868 + $0x48] sm:$0xff]
        %v4882 = vld [vmem:[%s4868 + $0x50] sm:$0xf]
        %v4883 = vld [vmem:[%s4868 + $0x54] sm:$0xff]
        %v4884 = vld [vmem:[%s4868 + $0x5c] sm:$0xf]
        %v4885 = vld [vmem:[%s4868 + $0x60] sm:$0xff]
        %v4886 = vld [vmem:[%s4868 + $0x68] sm:$0xf]
        %v4887 = vld [vmem:[%s4868 + $0x6c] sm:$0xff]
        %v4888 = vld [vmem:[%s4868 + $0x74] sm:$0xf]
        %v4889 = vld [vmem:[%s4868 + $0x78] sm:$0xff]
        %v4890 = vld [vmem:[%s4868 + $0x80] sm:$0xf]
        %v4891 = vld [vmem:[%s4868 + $0x84] sm:$0xff]
        %v4892 = vld [vmem:[%s4868 + $0x8c] sm:$0xf]
        %v4893 = vld [vmem:[%s4868 + $0x90] sm:$0xff]
        %v4894 = vld [vmem:[%s4868 + $0x98] sm:$0xf]
        %v4895 = vld [vmem:[%s4868 + $0x9c] sm:$0xff]
        %v4896 = vld [vmem:[%s4868 + $0xa4] sm:$0xf]
        %v4897 = vld [vmem:[%s4868 + $0xa8] sm:$0xff]
        %v4898 = vld [vmem:[%s4868 + $0xb0] sm:$0xf]
        %v4899 = vld [vmem:[%s4868 + $0xb4] sm:$0xff]
        %v4900 = vld [vmem:[%s4868 + $0xbc] sm:$0xf]
        %v4901 = vld [vmem:[%s4868 + $0xc0] sm:$0xff]
        %v4902 = vld [vmem:[%s4868 + $0xc8] sm:$0xf]
        %v4903 = vld [vmem:[%s4868 + $0xcc] sm:$0xff]
        %v4904 = vld [vmem:[%s4868 + $0xd4] sm:$0xf]
        %v4905 = vld [vmem:[%s4868 + $0xd8] sm:$0xff]
        %v4906 = vld [vmem:[%s4868 + $0xe0] sm:$0xf]
        %v4907 = vld [vmem:[%s4868 + $0xe4] sm:$0xff]
        %v4908 = vld [vmem:[%s4868 + $0xec] sm:$0xf]
        %v4909 = vld [vmem:[%s4868 + $0xf0] sm:$0xff]
        %v4910 = vld [vmem:[%s4868 + $0xf8] sm:$0xf]
        %v4911 = vld [vmem:[%s4868 + $0xfc] sm:$0xff]
        %v4912 = vld [vmem:[%s4868 + $0x104] sm:$0xf]
        %v4913 = vld [vmem:[%s4868 + $0x108] sm:$0xff]
        %v4914 = vld [vmem:[%s4868 + $0x110] sm:$0xf]
        %v4915 = vld [vmem:[%s4868 + $0x114] sm:$0xff]
        %v4916 = vld [vmem:[%s4868 + $0x11c] sm:$0xf]
        %v4917 = vld [vmem:[%s4868 + $0x120] sm:$0xff]
        %v4918 = vld [vmem:[%s4868 + $0x128] sm:$0xf]
        %v4919 = vld [vmem:[%s4868 + $0x12c] sm:$0xff]
        %v4920 = vld [vmem:[%s4868 + $0x134] sm:$0xf]
        %v4921 = vld [vmem:[%s4868 + $0x138] sm:$0xff]
        %v4922 = vld [vmem:[%s4868 + $0x140] sm:$0xf]
        %v4923 = vld [vmem:[%s4868 + $0x144] sm:$0xff]
        %v4924 = vld [vmem:[%s4868 + $0x14c] sm:$0xf]
        %v4925 = vld [vmem:[%s4868 + $0x150] sm:$0xff]
        %v4926 = vld [vmem:[%s4868 + $0x158] sm:$0xf]
        %v4927 = vld [vmem:[%s4868 + $0x15c] sm:$0xff]
        %v4928 = vld [vmem:[%s4868 + $0x164] sm:$0xf]
        %v4929 = vld [vmem:[%s4868 + $0x168] sm:$0xff]
        %v4930 = vld [vmem:[%s4868 + $0x170] sm:$0xf]
        %v4931 = vld [vmem:[%s4868 + $0x174] sm:$0xff]
        %v4932 = vld [vmem:[%s4868 + $0x17c] sm:$0xf]
        %v4933 = vld [vmem:[%s4868 + $0x180] sm:$0xff]
        %v4934 = vld [vmem:[%s4868 + $0x188] sm:$0xf]
        %v4935 = vld [vmem:[%s4868 + $0x18c] sm:$0xff]
        %v4936 = vld [vmem:[%s4868 + $0x194] sm:$0xf]
        %v4937 = vld [vmem:[%s4868 + $0x198] sm:$0xff]
        %v4938 = vld [vmem:[%s4868 + $0x1a0] sm:$0xf]
        %v4939 = vld [vmem:[%s4868 + $0x1a4] sm:$0xff]
        %v4940 = vld [vmem:[%s4868 + $0x1ac] sm:$0xf]
        %v4941 = vld [vmem:[%s4868 + $0x1b0] sm:$0xff]
        %v4942 = vld [vmem:[%s4868 + $0x1b8] sm:$0xf]
        %v4943 = vld [vmem:[%s4868 + $0x1bc] sm:$0xff]
        %v4944 = vld [vmem:[%s4868 + $0x1c4] sm:$0xf]
        %v4945 = vld [vmem:[%s4868 + $0x1c8] sm:$0xff]
        %v4946 = vld [vmem:[%s4868 + $0x1d0] sm:$0xf]
        %v4947 = vld [vmem:[%s4868 + $0x1d4] sm:$0xff]
        %v4948 = vld [vmem:[%s4868 + $0x1dc] sm:$0xf]
        %v4949 = vld [vmem:[%s4868 + $0x1e0] sm:$0xff]
        %v4950 = vld [vmem:[%s4868 + $0x1e8] sm:$0xf]
        %v4951 = vld [vmem:[%s4868 + $0x1ec] sm:$0xff]
        %v4952 = vld [vmem:[%s4868 + $0x1f4] sm:$0xf]
        %v4953 = vld [vmem:[%s4868 + $0x1f8] sm:$0xff]
        %v4954 = vld [vmem:[%s4868 + $0x200] sm:$0xf]
        %v4955 = vld [vmem:[%s4868 + $0x204] sm:$0xff]
        %v4956 = vld [vmem:[%s4868 + $0x20c] sm:$0xf]
        %v4957 = vld [vmem:[%s4868 + $0x210] sm:$0xff]
        %v4958 = vld [vmem:[%s4868 + $0x218] sm:$0xf]
        %v4959 = vld [vmem:[%s4868 + $0x21c] sm:$0xff]
        %v4960 = vld [vmem:[%s4868 + $0x224] sm:$0xf]
        %v4961 = vld [vmem:[%s4868 + $0x228] sm:$0xff]
        %v4962 = vld [vmem:[%s4868 + $0x230] sm:$0xf]
        %v4963 = vld [vmem:[%s4868 + $0x234] sm:$0xff]
        %v4964 = vld [vmem:[%s4868 + $0x23c] sm:$0xf]
        %v5061 = vunpack.c.l.b16 %v4869
        %v5062 = vunpack.c.h.b16 %v4869
        %v5063 = vunpack.c.l.b16 %v4870
        %v5064 = vunpack.c.l.b16 %v4871
        %v5065 = vunpack.c.h.b16 %v4871
        %v5066 = vunpack.c.l.b16 %v4872
        %v5067 = vunpack.c.l.b16 %v4873
        %v5068 = vunpack.c.h.b16 %v4873
        %v5069 = vunpack.c.l.b16 %v4874
        %v5070 = vunpack.c.l.b16 %v4875
        %v5071 = vunpack.c.h.b16 %v4875
        %v5072 = vunpack.c.l.b16 %v4876
        %v5073 = vunpack.c.l.b16 %v4877
        %v5074 = vunpack.c.h.b16 %v4877
        %v5075 = vunpack.c.l.b16 %v4878
        %v5076 = vunpack.c.l.b16 %v4879
        %v5077 = vunpack.c.h.b16 %v4879
        %v5078 = vunpack.c.l.b16 %v4880
        %v5079 = vunpack.c.l.b16 %v4881
        %v5080 = vunpack.c.h.b16 %v4881
        %v5081 = vunpack.c.l.b16 %v4882
        %v5082 = vunpack.c.l.b16 %v4883
        %v5083 = vunpack.c.h.b16 %v4883
        %v5084 = vunpack.c.l.b16 %v4884
        %v5085 = vunpack.c.l.b16 %v4885
        %v5086 = vunpack.c.h.b16 %v4885
        %v5087 = vunpack.c.l.b16 %v4886
        %v5088 = vunpack.c.l.b16 %v4887
        %v5089 = vunpack.c.h.b16 %v4887
        %v5090 = vunpack.c.l.b16 %v4888
        %v5091 = vunpack.c.l.b16 %v4889
        %v5092 = vunpack.c.h.b16 %v4889
        %v5093 = vunpack.c.l.b16 %v4890
        %v5094 = vunpack.c.l.b16 %v4891
        %v5095 = vunpack.c.h.b16 %v4891
        %v5096 = vunpack.c.l.b16 %v4892
        %v5097 = vunpack.c.l.b16 %v4893
        %v5098 = vunpack.c.h.b16 %v4893
        %v5099 = vunpack.c.l.b16 %v4894
        %v5100 = vunpack.c.l.b16 %v4895
        %v5101 = vunpack.c.h.b16 %v4895
        %v5102 = vunpack.c.l.b16 %v4896
        %v5103 = vunpack.c.l.b16 %v4897
        %v5104 = vunpack.c.h.b16 %v4897
        %v5105 = vunpack.c.l.b16 %v4898
        %v5106 = vunpack.c.l.b16 %v4899
        %v5107 = vunpack.c.h.b16 %v4899
        %v5108 = vunpack.c.l.b16 %v4900
        %v5109 = vunpack.c.l.b16 %v4901
        %v5110 = vunpack.c.h.b16 %v4901
        %v5111 = vunpack.c.l.b16 %v4902
        %v5112 = vunpack.c.l.b16 %v4903
        %v5113 = vunpack.c.h.b16 %v4903
        %v5114 = vunpack.c.l.b16 %v4904
        %v5115 = vunpack.c.l.b16 %v4905
        %v5116 = vunpack.c.h.b16 %v4905
        %v5117 = vunpack.c.l.b16 %v4906
        %v5118 = vunpack.c.l.b16 %v4907
        %v5119 = vunpack.c.h.b16 %v4907
        %v5120 = vunpack.c.l.b16 %v4908
        %v5121 = vunpack.c.l.b16 %v4909
        %v5122 = vunpack.c.h.b16 %v4909
        %v5123 = vunpack.c.l.b16 %v4910
        %v5124 = vunpack.c.l.b16 %v4911
        %v5125 = vunpack.c.h.b16 %v4911
        %v5126 = vunpack.c.l.b16 %v4912
        %v5127 = vunpack.c.l.b16 %v4913
        %v5128 = vunpack.c.h.b16 %v4913
        %v5129 = vunpack.c.l.b16 %v4914
        %v5130 = vunpack.c.l.b16 %v4915
        %v5131 = vunpack.c.h.b16 %v4915
        %v5132 = vunpack.c.l.b16 %v4916
        %v5133 = vunpack.c.l.b16 %v4917
        %v5134 = vunpack.c.h.b16 %v4917
        %v5135 = vunpack.c.l.b16 %v4918
        %v5136 = vunpack.c.l.b16 %v4919
        %v5137 = vunpack.c.h.b16 %v4919
        %v5138 = vunpack.c.l.b16 %v4920
        %v5139 = vunpack.c.l.b16 %v4921
        %v5140 = vunpack.c.h.b16 %v4921
        %v5141 = vunpack.c.l.b16 %v4922
        %v5142 = vunpack.c.l.b16 %v4923
        %v5143 = vunpack.c.h.b16 %v4923
        %v5144 = vunpack.c.l.b16 %v4924
        %v5145 = vunpack.c.l.b16 %v4925
        %v5146 = vunpack.c.h.b16 %v4925
        %v5147 = vunpack.c.l.b16 %v4926
        %v5148 = vunpack.c.l.b16 %v4927
        %v5149 = vunpack.c.h.b16 %v4927
        %v5150 = vunpack.c.l.b16 %v4928
        %v5151 = vunpack.c.l.b16 %v4929
        %v5152 = vunpack.c.h.b16 %v4929
        %v5153 = vunpack.c.l.b16 %v4930
        %v5154 = vunpack.c.l.b16 %v4931
        %v5155 = vunpack.c.h.b16 %v4931
        %v5156 = vunpack.c.l.b16 %v4932
        %v5157 = vunpack.c.l.b16 %v4933
        %v5158 = vunpack.c.h.b16 %v4933
        %v5159 = vunpack.c.l.b16 %v4934
        %v5160 = vunpack.c.l.b16 %v4935
        %v5161 = vunpack.c.h.b16 %v4935
        %v5162 = vunpack.c.l.b16 %v4936
        %v5163 = vunpack.c.l.b16 %v4937
        %v5164 = vunpack.c.h.b16 %v4937
        %v5165 = vunpack.c.l.b16 %v4938
        %v5166 = vunpack.c.l.b16 %v4939
        %v5167 = vunpack.c.h.b16 %v4939
        %v5168 = vunpack.c.l.b16 %v4940
        %v5169 = vunpack.c.l.b16 %v4941
        %v5170 = vunpack.c.h.b16 %v4941
        %v5171 = vunpack.c.l.b16 %v4942
        %v5172 = vunpack.c.l.b16 %v4943
        %v5173 = vunpack.c.h.b16 %v4943
        %v5174 = vunpack.c.l.b16 %v4944
        %v5175 = vunpack.c.l.b16 %v4945
        %v5176 = vunpack.c.h.b16 %v4945
        %v5177 = vunpack.c.l.b16 %v4946
        %v5178 = vunpack.c.l.b16 %v4947
        %v5179 = vunpack.c.h.b16 %v4947
        %v5180 = vunpack.c.l.b16 %v4948
        %v5181 = vunpack.c.l.b16 %v4949
        %v5182 = vunpack.c.h.b16 %v4949
        %v5183 = vunpack.c.l.b16 %v4950
        %v5184 = vunpack.c.l.b16 %v4951
        %v5185 = vunpack.c.h.b16 %v4951
        %v5186 = vunpack.c.l.b16 %v4952
        %v5187 = vunpack.c.l.b16 %v4953
        %v5188 = vunpack.c.h.b16 %v4953
        %v5189 = vunpack.c.l.b16 %v4954
        %v5190 = vunpack.c.l.b16 %v4955
        %v5191 = vunpack.c.h.b16 %v4955
        %v5192 = vunpack.c.l.b16 %v4956
        %v5193 = vunpack.c.l.b16 %v4957
        %v5194 = vunpack.c.h.b16 %v4957
        %v5195 = vunpack.c.l.b16 %v4958
        %v5196 = vunpack.c.l.b16 %v4959
        %v5197 = vunpack.c.h.b16 %v4959
        %v5198 = vunpack.c.l.b16 %v4960
        %v5199 = vunpack.c.l.b16 %v4961
        %v5200 = vunpack.c.h.b16 %v4961
        %v5201 = vunpack.c.l.b16 %v4962
        %v5202 = vunpack.c.l.b16 %v4963
        %v5203 = vunpack.c.h.b16 %v4963
        %v5204 = vunpack.c.l.b16 %v4964
        %v5205 = vpack.c.b16 %v5064, %v5061
        %v5206 = vpack.c.b16 %v5065, %v5062
        %v5207 = vpack.c.b16 %v5066, %v5063
        %v5208 = vpack.c.b16 %v5070, %v5067
        %v5209 = vpack.c.b16 %v5071, %v5068
        %v5210 = vpack.c.b16 %v5072, %v5069
        %v5211 = vpack.c.b16 %v5076, %v5073
        %v5212 = vpack.c.b16 %v5077, %v5074
        %v5213 = vpack.c.b16 %v5078, %v5075
        %v5214 = vpack.c.b16 %v5082, %v5079
        %v5215 = vpack.c.b16 %v5083, %v5080
        %v5216 = vpack.c.b16 %v5084, %v5081
        %v5217 = vpack.c.b16 %v5088, %v5085
        %v5218 = vpack.c.b16 %v5089, %v5086
        %v5219 = vpack.c.b16 %v5090, %v5087
        %v5220 = vpack.c.b16 %v5094, %v5091
        %v5221 = vpack.c.b16 %v5095, %v5092
        %v5222 = vpack.c.b16 %v5096, %v5093
        %v5223 = vpack.c.b16 %v5100, %v5097
        %v5224 = vpack.c.b16 %v5101, %v5098
        %v5225 = vpack.c.b16 %v5102, %v5099
        %v5226 = vpack.c.b16 %v5106, %v5103
        %v5227 = vpack.c.b16 %v5107, %v5104
        %v5228 = vpack.c.b16 %v5108, %v5105
        %v5229 = vpack.c.b16 %v5112, %v5109
        %v5230 = vpack.c.b16 %v5113, %v5110
        %v5231 = vpack.c.b16 %v5114, %v5111
        %v5232 = vpack.c.b16 %v5118, %v5115
        %v5233 = vpack.c.b16 %v5119, %v5116
        %v5234 = vpack.c.b16 %v5120, %v5117
        %v5235 = vpack.c.b16 %v5124, %v5121
        %v5236 = vpack.c.b16 %v5125, %v5122
        %v5237 = vpack.c.b16 %v5126, %v5123
        %v5238 = vpack.c.b16 %v5130, %v5127
        %v5239 = vpack.c.b16 %v5131, %v5128
        %v5240 = vpack.c.b16 %v5132, %v5129
        %v5241 = vpack.c.b16 %v5136, %v5133
        %v5242 = vpack.c.b16 %v5137, %v5134
        %v5243 = vpack.c.b16 %v5138, %v5135
        %v5244 = vpack.c.b16 %v5142, %v5139
        %v5245 = vpack.c.b16 %v5143, %v5140
        %v5246 = vpack.c.b16 %v5144, %v5141
        %v5247 = vpack.c.b16 %v5148, %v5145
        %v5248 = vpack.c.b16 %v5149, %v5146
        %v5249 = vpack.c.b16 %v5150, %v5147
        %v5250 = vpack.c.b16 %v5154, %v5151
        %v5251 = vpack.c.b16 %v5155, %v5152
        %v5252 = vpack.c.b16 %v5156, %v5153
        %v5253 = vpack.c.b16 %v5160, %v5157
        %v5254 = vpack.c.b16 %v5161, %v5158
        %v5255 = vpack.c.b16 %v5162, %v5159
        %v5256 = vpack.c.b16 %v5166, %v5163
        %v5257 = vpack.c.b16 %v5167, %v5164
        %v5258 = vpack.c.b16 %v5168, %v5165
        %v5259 = vpack.c.b16 %v5172, %v5169
        %v5260 = vpack.c.b16 %v5173, %v5170
        %v5261 = vpack.c.b16 %v5174, %v5171
        %v5262 = vpack.c.b16 %v5178, %v5175
        %v5263 = vpack.c.b16 %v5179, %v5176
        %v5264 = vpack.c.b16 %v5180, %v5177
        %v5265 = vpack.c.b16 %v5184, %v5181
        %v5266 = vpack.c.b16 %v5185, %v5182
        %v5267 = vpack.c.b16 %v5186, %v5183
        %v5268 = vpack.c.b16 %v5190, %v5187
        %v5269 = vpack.c.b16 %v5191, %v5188
        %v5270 = vpack.c.b16 %v5192, %v5189
        %v5271 = vpack.c.b16 %v5196, %v5193
        %v5272 = vpack.c.b16 %v5197, %v5194
        %v5273 = vpack.c.b16 %v5198, %v5195
        %v5274 = vpack.c.b16 %v5202, %v5199
        %v5275 = vpack.c.b16 %v5203, %v5200
        %v5276 = vpack.c.b16 %v5204, %v5201
        %5349 = vmatpush.bf16.msra.mxu0 %v5226
        %5350 = vmatpush.bf16.msra.mxu0 %v5223
        %5351 = vmatpush.bf16.msra.mxu0 %v5220
        %5352 = vmatpush.bf16.msra.mxu0 %v5217
        %5353 = vmatpush.bf16.msra.mxu0 %v5214
        %5354 = vmatpush.bf16.msra.mxu0 %v5211
        %5355 = vmatpush.bf16.msra.mxu0 %v5208
        %5356 = vmatpush.bf16.msra.mxu0 %v5205
        %5357 = vmatmul.bf16.gmra.mxu0 %v3265
        %v5358 = vpop.f32.mrf.mxu0
        %v5359 = vadd.f32 0.0, %v5358
        %v5360 = vpop.f32.mrf.mxu0
        %v5361 = vadd.f32 0.0, %v5360
        %5362 = vmatmul.bf16.gmra.mxu0 %v3268
        %v5363 = vpop.f32.mrf.mxu0
        %v5364 = vadd.f32 0.0, %v5363
        %v5365 = vpop.f32.mrf.mxu0
        %v5366 = vadd.f32 0.0, %v5365
        %5367 = vmatmul.bf16.gmra.mxu0 %v3271
        %v5368 = vpop.f32.mrf.mxu0
        %v5369 = vadd.f32 0.0, %v5368
        %v5370 = vpop.f32.mrf.mxu0
        %v5371 = vadd.f32 0.0, %v5370
        %5372 = vmatmul.bf16.gmra.mxu0 %v3274
        %v5373 = vpop.f32.mrf.mxu0
        %v5374 = vadd.f32 0.0, %v5373
        %v5375 = vpop.f32.mrf.mxu0
        %v5376 = vadd.f32 0.0, %v5375
        %5377 = vmatmul.bf16.gmra.mxu0 %v4865
        %v5378 = vpop.f32.mrf.mxu0
        %v5379 = vadd.f32 0.0, %v5378
        %v5380 = vpop.f32.mrf.mxu0
        %v5381 = vadd.f32 0.0, %v5380
        %5382 = vdwg.mxu0
        %5383 = vmatpush.bf16.msra.mxu0 %v5250
        %5384 = vmatpush.bf16.msra.mxu0 %v5247
        %5385 = vmatpush.bf16.msra.mxu0 %v5244
        %5386 = vmatpush.bf16.msra.mxu0 %v5241
        %5387 = vmatpush.bf16.msra.mxu0 %v5238
        %5388 = vmatpush.bf16.msra.mxu0 %v5235
        %5389 = vmatpush.bf16.msra.mxu0 %v5232
        %5390 = vmatpush.bf16.msra.mxu0 %v5229
        %5391 = vmatmul.bf16.gmra.mxu0 %v3266
        %v5392 = vpop.f32.mrf.mxu0
        %v5393 = vadd.f32 %v5359, %v5392
        %v5394 = vpop.f32.mrf.mxu0
        %v5395 = vadd.f32 %v5361, %v5394
        %5396 = vmatmul.bf16.gmra.mxu0 %v3269
        %v5397 = vpop.f32.mrf.mxu0
        %v5398 = vadd.f32 %v5364, %v5397
        %v5399 = vpop.f32.mrf.mxu0
        %v5400 = vadd.f32 %v5366, %v5399
        %5401 = vmatmul.bf16.gmra.mxu0 %v3272
        %v5402 = vpop.f32.mrf.mxu0
        %v5403 = vadd.f32 %v5369, %v5402
        %v5404 = vpop.f32.mrf.mxu0
        %v5405 = vadd.f32 %v5371, %v5404
        %5406 = vmatmul.bf16.gmra.mxu0 %v3275
        %v5407 = vpop.f32.mrf.mxu0
        %v5408 = vadd.f32 %v5374, %v5407
        %v5409 = vpop.f32.mrf.mxu0
        %v5410 = vadd.f32 %v5376, %v5409
        %5411 = vmatmul.bf16.gmra.mxu0 %v4866
        %v5412 = vpop.f32.mrf.mxu0
        %v5413 = vadd.f32 %v5379, %v5412
        %v5414 = vpop.f32.mrf.mxu0
        %v5415 = vadd.f32 %v5381, %v5414
        %5416 = vdwg.mxu0
        %5417 = vmatpush.bf16.msra.mxu0 %v5274
        %5418 = vmatpush.bf16.msra.mxu0 %v5271
        %5419 = vmatpush.bf16.msra.mxu0 %v5268
        %5420 = vmatpush.bf16.msra.mxu0 %v5265
        %5421 = vmatpush.bf16.msra.mxu0 %v5262
        %5422 = vmatpush.bf16.msra.mxu0 %v5259
        %5423 = vmatpush.bf16.msra.mxu0 %v5256
        %5424 = vmatpush.bf16.msra.mxu0 %v5253
        %5425 = vmatmul.bf16.gmra.mxu0 %v3267
        %v5426 = vpop.f32.mrf.mxu0
        %v5427 = vadd.f32 %v5393, %v5426
        %v5428 = vpop.f32.mrf.mxu0
        %v5429 = vadd.f32 %v5395, %v5428
        %5430 = vmatmul.bf16.gmra.mxu0 %v3270
        %v5431 = vpop.f32.mrf.mxu0
        %v5432 = vadd.f32 %v5398, %v5431
        %v5433 = vpop.f32.mrf.mxu0
        %v5434 = vadd.f32 %v5400, %v5433
        %5435 = vmatmul.bf16.gmra.mxu0 %v3273
        %v5436 = vpop.f32.mrf.mxu0
        %v5437 = vadd.f32 %v5403, %v5436
        %v5438 = vpop.f32.mrf.mxu0
        %v5439 = vadd.f32 %v5405, %v5438
        %5440 = vmatmul.bf16.gmra.mxu0 %v3276
        %v5441 = vpop.f32.mrf.mxu0
        %v5442 = vadd.f32 %v5408, %v5441
        %v5443 = vpop.f32.mrf.mxu0
        %v5444 = vadd.f32 %v5410, %v5443
        %5445 = vmatmul.bf16.gmra.mxu0 %v4867
        %v5446 = vpop.f32.mrf.mxu0
        %v5447 = vadd.f32 %v5413, %v5446
        %v5448 = vpop.f32.mrf.mxu0
        %v5449 = vadd.f32 %v5415, %v5448
        %5450 = vdwg.mxu0
        %5451 = vmatpush.bf16.msra.mxu0 %v5227
        %5452 = vmatpush.bf16.msra.mxu0 %v5224
        %5453 = vmatpush.bf16.msra.mxu0 %v5221
        %5454 = vmatpush.bf16.msra.mxu0 %v5218
        %5455 = vmatpush.bf16.msra.mxu0 %v5215
        %5456 = vmatpush.bf16.msra.mxu0 %v5212
        %5457 = vmatpush.bf16.msra.mxu0 %v5209
        %5458 = vmatpush.bf16.msra.mxu0 %v5206
        %5459 = vmatmul.bf16.gmra.mxu0 %v3265
        %v5460 = vpop.f32.mrf.mxu0
        %v5461 = vadd.f32 0.0, %v5460
        %v5462 = vpop.f32.mrf.mxu0
        %v5463 = vadd.f32 0.0, %v5462
        %5464 = vmatmul.bf16.gmra.mxu0 %v3268
        %v5465 = vpop.f32.mrf.mxu0
        %v5466 = vadd.f32 0.0, %v5465
        %v5467 = vpop.f32.mrf.mxu0
        %v5468 = vadd.f32 0.0, %v5467
        %5469 = vmatmul.bf16.gmra.mxu0 %v3271
        %v5470 = vpop.f32.mrf.mxu0
        %v5471 = vadd.f32 0.0, %v5470
        %v5472 = vpop.f32.mrf.mxu0
        %v5473 = vadd.f32 0.0, %v5472
        %5474 = vmatmul.bf16.gmra.mxu0 %v3274
        %v5475 = vpop.f32.mrf.mxu0
        %v5476 = vadd.f32 0.0, %v5475
        %v5477 = vpop.f32.mrf.mxu0
        %v5478 = vadd.f32 0.0, %v5477
        %5479 = vmatmul.bf16.gmra.mxu0 %v4865
        %v5480 = vpop.f32.mrf.mxu0
        %v5481 = vadd.f32 0.0, %v5480
        %v5482 = vpop.f32.mrf.mxu0
        %v5483 = vadd.f32 0.0, %v5482
        %5484 = vdwg.mxu0
        %5485 = vmatpush.bf16.msra.mxu0 %v5251
        %5486 = vmatpush.bf16.msra.mxu0 %v5248
        %5487 = vmatpush.bf16.msra.mxu0 %v5245
        %5488 = vmatpush.bf16.msra.mxu0 %v5242
        %5489 = vmatpush.bf16.msra.mxu0 %v5239
        %5490 = vmatpush.bf16.msra.mxu0 %v5236
        %5491 = vmatpush.bf16.msra.mxu0 %v5233
        %5492 = vmatpush.bf16.msra.mxu0 %v5230
        %5493 = vmatmul.bf16.gmra.mxu0 %v3266
        %v5494 = vpop.f32.mrf.mxu0
        %v5495 = vadd.f32 %v5461, %v5494
        %v5496 = vpop.f32.mrf.mxu0
        %v5497 = vadd.f32 %v5463, %v5496
        %5498 = vmatmul.bf16.gmra.mxu0 %v3269
        %v5499 = vpop.f32.mrf.mxu0
        %v5500 = vadd.f32 %v5466, %v5499
        %v5501 = vpop.f32.mrf.mxu0
        %v5502 = vadd.f32 %v5468, %v5501
        %5503 = vmatmul.bf16.gmra.mxu0 %v3272
        %v5504 = vpop.f32.mrf.mxu0
        %v5505 = vadd.f32 %v5471, %v5504
        %v5506 = vpop.f32.mrf.mxu0
        %v5507 = vadd.f32 %v5473, %v5506
        %5508 = vmatmul.bf16.gmra.mxu0 %v3275
        %v5509 = vpop.f32.mrf.mxu0
        %v5510 = vadd.f32 %v5476, %v5509
        %v5511 = vpop.f32.mrf.mxu0
        %v5512 = vadd.f32 %v5478, %v5511
        %5513 = vmatmul.bf16.gmra.mxu0 %v4866
        %v5514 = vpop.f32.mrf.mxu0
        %v5515 = vadd.f32 %v5481, %v5514
        %v5516 = vpop.f32.mrf.mxu0
        %v5517 = vadd.f32 %v5483, %v5516
        %5518 = vdwg.mxu0
        %5519 = vmatpush.bf16.msra.mxu0 %v5275
        %5520 = vmatpush.bf16.msra.mxu0 %v5272
        %5521 = vmatpush.bf16.msra.mxu0 %v5269
        %5522 = vmatpush.bf16.msra.mxu0 %v5266
        %5523 = vmatpush.bf16.msra.mxu0 %v5263
        %5524 = vmatpush.bf16.msra.mxu0 %v5260
        %5525 = vmatpush.bf16.msra.mxu0 %v5257
        %5526 = vmatpush.bf16.msra.mxu0 %v5254
        %5527 = vmatmul.bf16.gmra.mxu0 %v3267
        %v5528 = vpop.f32.mrf.mxu0
        %v5529 = vadd.f32 %v5495, %v5528
        %v5530 = vpop.f32.mrf.mxu0
        %v5531 = vadd.f32 %v5497, %v5530
        %5532 = vmatmul.bf16.gmra.mxu0 %v3270
        %v5533 = vpop.f32.mrf.mxu0
        %v5534 = vadd.f32 %v5500, %v5533
        %v5535 = vpop.f32.mrf.mxu0
        %v5536 = vadd.f32 %v5502, %v5535
        %5537 = vmatmul.bf16.gmra.mxu0 %v3273
        %v5538 = vpop.f32.mrf.mxu0
        %v5539 = vadd.f32 %v5505, %v5538
        %v5540 = vpop.f32.mrf.mxu0
        %v5541 = vadd.f32 %v5507, %v5540
        %5542 = vmatmul.bf16.gmra.mxu0 %v3276
        %v5543 = vpop.f32.mrf.mxu0
        %v5544 = vadd.f32 %v5510, %v5543
        %v5545 = vpop.f32.mrf.mxu0
        %v5546 = vadd.f32 %v5512, %v5545
        %5547 = vmatmul.bf16.gmra.mxu0 %v4867
        %v5548 = vpop.f32.mrf.mxu0
        %v5549 = vadd.f32 %v5515, %v5548
        %v5550 = vpop.f32.mrf.mxu0
        %v5551 = vadd.f32 %v5517, %v5550
        %5552 = vdwg.mxu0
        %5553 = vmatpush.bf16.msra.mxu0 %v5228
        %5554 = vmatpush.bf16.msra.mxu0 %v5225
        %5555 = vmatpush.bf16.msra.mxu0 %v5222
        %5556 = vmatpush.bf16.msra.mxu0 %v5219
        %5557 = vmatpush.bf16.msra.mxu0 %v5216
        %5558 = vmatpush.bf16.msra.mxu0 %v5213
        %5559 = vmatpush.bf16.msra.mxu0 %v5210
        %5560 = vmatpush.bf16.msra.mxu0 %v5207
        %5561 = vmatmul.bf16.gmra.mxu0 %v3265
        %v5562 = vpop.f32.mrf.mxu0
        %v5563 = vadd.f32 0.0, %v5562
        %v5564 = vpop.f32.mrf.mxu0
        %v5565 = vadd.f32 0.0, %v5564
        %5566 = vmatmul.bf16.gmra.mxu0 %v3268
        %v5567 = vpop.f32.mrf.mxu0
        %v5568 = vadd.f32 0.0, %v5567
        %v5569 = vpop.f32.mrf.mxu0
        %v5570 = vadd.f32 0.0, %v5569
        %5571 = vmatmul.bf16.gmra.mxu0 %v3271
        %v5572 = vpop.f32.mrf.mxu0
        %v5573 = vadd.f32 0.0, %v5572
        %v5574 = vpop.f32.mrf.mxu0
        %v5575 = vadd.f32 0.0, %v5574
        %5576 = vmatmul.bf16.gmra.mxu0 %v3274
        %v5577 = vpop.f32.mrf.mxu0
        %v5578 = vadd.f32 0.0, %v5577
        %v5579 = vpop.f32.mrf.mxu0
        %v5580 = vadd.f32 0.0, %v5579
        %5581 = vmatmul.bf16.gmra.mxu0 %v4865
        %v5582 = vpop.f32.mrf.mxu0
        %v5583 = vadd.f32 0.0, %v5582
        %v5584 = vpop.f32.mrf.mxu0
        %v5585 = vadd.f32 0.0, %v5584
        %5586 = vdwg.mxu0
        %5587 = vmatpush.bf16.msra.mxu0 %v5252
        %5588 = vmatpush.bf16.msra.mxu0 %v5249
        %5589 = vmatpush.bf16.msra.mxu0 %v5246
        %5590 = vmatpush.bf16.msra.mxu0 %v5243
        %5591 = vmatpush.bf16.msra.mxu0 %v5240
        %5592 = vmatpush.bf16.msra.mxu0 %v5237
        %5593 = vmatpush.bf16.msra.mxu0 %v5234
        %5594 = vmatpush.bf16.msra.mxu0 %v5231
        %5595 = vmatmul.bf16.gmra.mxu0 %v3266
        %v5596 = vpop.f32.mrf.mxu0
        %v5597 = vadd.f32 %v5563, %v5596
        %v5598 = vpop.f32.mrf.mxu0
        %v5599 = vadd.f32 %v5565, %v5598
        %5600 = vmatmul.bf16.gmra.mxu0 %v3269
        %v5601 = vpop.f32.mrf.mxu0
        %v5602 = vadd.f32 %v5568, %v5601
        %v5603 = vpop.f32.mrf.mxu0
        %v5604 = vadd.f32 %v5570, %v5603
        %5605 = vmatmul.bf16.gmra.mxu0 %v3272
        %v5606 = vpop.f32.mrf.mxu0
        %v5607 = vadd.f32 %v5573, %v5606
        %v5608 = vpop.f32.mrf.mxu0
        %v5609 = vadd.f32 %v5575, %v5608
        %5610 = vmatmul.bf16.gmra.mxu0 %v3275
        %v5611 = vpop.f32.mrf.mxu0
        %v5612 = vadd.f32 %v5578, %v5611
        %v5613 = vpop.f32.mrf.mxu0
        %v5614 = vadd.f32 %v5580, %v5613
        %5615 = vmatmul.bf16.gmra.mxu0 %v4866
        %v5616 = vpop.f32.mrf.mxu0
        %v5617 = vadd.f32 %v5583, %v5616
        %v5618 = vpop.f32.mrf.mxu0
        %v5619 = vadd.f32 %v5585, %v5618
        %5620 = vdwg.mxu0
        %5621 = vmatpush.bf16.msra.mxu0 %v5276
        %5622 = vmatpush.bf16.msra.mxu0 %v5273
        %5623 = vmatpush.bf16.msra.mxu0 %v5270
        %5624 = vmatpush.bf16.msra.mxu0 %v5267
        %5625 = vmatpush.bf16.msra.mxu0 %v5264
        %5626 = vmatpush.bf16.msra.mxu0 %v5261
        %5627 = vmatpush.bf16.msra.mxu0 %v5258
        %5628 = vmatpush.bf16.msra.mxu0 %v5255
        %5629 = vmatmul.bf16.gmra.mxu0 %v3267
        %v5630 = vpop.f32.mrf.mxu0
        %v5631 = vadd.f32 %v5597, %v5630
        %v5632 = vpop.f32.mrf.mxu0
        %v5633 = vadd.f32 %v5599, %v5632
        %5634 = vmatmul.bf16.gmra.mxu0 %v3270
        %v5635 = vpop.f32.mrf.mxu0
        %v5636 = vadd.f32 %v5602, %v5635
        %v5637 = vpop.f32.mrf.mxu0
        %v5638 = vadd.f32 %v5604, %v5637
        %5639 = vmatmul.bf16.gmra.mxu0 %v3273
        %v5640 = vpop.f32.mrf.mxu0
        %v5641 = vadd.f32 %v5607, %v5640
        %v5642 = vpop.f32.mrf.mxu0
        %v5643 = vadd.f32 %v5609, %v5642
        %5644 = vmatmul.bf16.gmra.mxu0 %v3276
        %v5645 = vpop.f32.mrf.mxu0
        %v5646 = vadd.f32 %v5612, %v5645
        %v5647 = vpop.f32.mrf.mxu0
        %v5648 = vadd.f32 %v5614, %v5647
        %5649 = vmatmul.bf16.gmra.mxu0 %v4867
        %v5650 = vpop.f32.mrf.mxu0
        %v5651 = vadd.f32 %v5617, %v5650
        %v5652 = vpop.f32.mrf.mxu0
        %v5653 = vadd.f32 %v5619, %v5652
        %5654 = vdwg.mxu0
        %v5655 = vadd.f32 %v4637, %v5427
        %v5656 = vadd.f32 %v4739, %v5529
        %v5657 = vadd.f32 %v4841, %v5631
        %v5658 = vadd.f32 %v4639, %v5429
        %v5659 = vadd.f32 %v4741, %v5531
        %v5660 = vadd.f32 %v4843, %v5633
        %v5661 = vadd.f32 %v4642, %v5432
        %v5662 = vadd.f32 %v4744, %v5534
        %v5663 = vadd.f32 %v4846, %v5636
        %v5664 = vadd.f32 %v4644, %v5434
        %v5665 = vadd.f32 %v4746, %v5536
        %v5666 = vadd.f32 %v4848, %v5638
        %v5667 = vadd.f32 %v4647, %v5437
        %v5668 = vadd.f32 %v4749, %v5539
        %v5669 = vadd.f32 %v4851, %v5641
        %v5670 = vadd.f32 %v4649, %v5439
        %v5671 = vadd.f32 %v4751, %v5541
        %v5672 = vadd.f32 %v4853, %v5643
        %v5673 = vadd.f32 %v4652, %v5442
        %v5674 = vadd.f32 %v4754, %v5544
        %v5675 = vadd.f32 %v4856, %v5646
        %v5676 = vadd.f32 %v4654, %v5444
        %v5677 = vadd.f32 %v4756, %v5546
        %v5678 = vadd.f32 %v4858, %v5648
        %v5679 = vadd.f32 %v4657, %v5447
        %v5680 = vadd.f32 %v4759, %v5549
        %v5681 = vadd.f32 %v4861, %v5651
        %v5682 = vadd.f32 %v4659, %v5449
        %v5683 = vadd.f32 %v4761, %v5551
        %v5684 = vadd.f32 %v4863, %v5653
        %s5685 = scalar_lea.vmem %s4, 1728
        %v5686 = vld [vmem:[%s5685] sm:$0xff]
        %v5687 = vld [vmem:[%s5685 + $0x8] sm:$0xf]
        %v5688 = vld [vmem:[%s5685 + $0xc] sm:$0xff]
        %v5689 = vld [vmem:[%s5685 + $0x14] sm:$0xf]
        %v5690 = vld [vmem:[%s5685 + $0x18] sm:$0xff]
        %v5691 = vld [vmem:[%s5685 + $0x20] sm:$0xf]
        %v5692 = vld [vmem:[%s5685 + $0x24] sm:$0xff]
        %v5693 = vld [vmem:[%s5685 + $0x2c] sm:$0xf]
        %v5694 = vld [vmem:[%s5685 + $0x30] sm:$0xff]
        %v5695 = vld [vmem:[%s5685 + $0x38] sm:$0xf]
        %v5696 = vld [vmem:[%s5685 + $0x3c] sm:$0xff]
        %v5697 = vld [vmem:[%s5685 + $0x44] sm:$0xf]
        %v5698 = vld [vmem:[%s5685 + $0x48] sm:$0xff]
        %v5699 = vld [vmem:[%s5685 + $0x50] sm:$0xf]
        %v5700 = vld [vmem:[%s5685 + $0x54] sm:$0xff]
        %v5701 = vld [vmem:[%s5685 + $0x5c] sm:$0xf]
        %v5702 = vld [vmem:[%s5685 + $0x60] sm:$0xff]
        %v5703 = vld [vmem:[%s5685 + $0x68] sm:$0xf]
        %v5704 = vld [vmem:[%s5685 + $0x6c] sm:$0xff]
        %v5705 = vld [vmem:[%s5685 + $0x74] sm:$0xf]
        %v5706 = vld [vmem:[%s5685 + $0x78] sm:$0xff]
        %v5707 = vld [vmem:[%s5685 + $0x80] sm:$0xf]
        %v5708 = vld [vmem:[%s5685 + $0x84] sm:$0xff]
        %v5709 = vld [vmem:[%s5685 + $0x8c] sm:$0xf]
        %v5710 = vld [vmem:[%s5685 + $0x90] sm:$0xff]
        %v5711 = vld [vmem:[%s5685 + $0x98] sm:$0xf]
        %v5712 = vld [vmem:[%s5685 + $0x9c] sm:$0xff]
        %v5713 = vld [vmem:[%s5685 + $0xa4] sm:$0xf]
        %v5714 = vld [vmem:[%s5685 + $0xa8] sm:$0xff]
        %v5715 = vld [vmem:[%s5685 + $0xb0] sm:$0xf]
        %v5716 = vld [vmem:[%s5685 + $0xb4] sm:$0xff]
        %v5717 = vld [vmem:[%s5685 + $0xbc] sm:$0xf]
        %v5718 = vld [vmem:[%s5685 + $0xc0] sm:$0xff]
        %v5719 = vld [vmem:[%s5685 + $0xc8] sm:$0xf]
        %v5720 = vld [vmem:[%s5685 + $0xcc] sm:$0xff]
        %v5721 = vld [vmem:[%s5685 + $0xd4] sm:$0xf]
        %v5722 = vld [vmem:[%s5685 + $0xd8] sm:$0xff]
        %v5723 = vld [vmem:[%s5685 + $0xe0] sm:$0xf]
        %v5724 = vld [vmem:[%s5685 + $0xe4] sm:$0xff]
        %v5725 = vld [vmem:[%s5685 + $0xec] sm:$0xf]
        %v5726 = vld [vmem:[%s5685 + $0xf0] sm:$0xff]
        %v5727 = vld [vmem:[%s5685 + $0xf8] sm:$0xf]
        %v5728 = vld [vmem:[%s5685 + $0xfc] sm:$0xff]
        %v5729 = vld [vmem:[%s5685 + $0x104] sm:$0xf]
        %v5730 = vld [vmem:[%s5685 + $0x108] sm:$0xff]
        %v5731 = vld [vmem:[%s5685 + $0x110] sm:$0xf]
        %v5732 = vld [vmem:[%s5685 + $0x114] sm:$0xff]
        %v5733 = vld [vmem:[%s5685 + $0x11c] sm:$0xf]
        %v5734 = vld [vmem:[%s5685 + $0x120] sm:$0xff]
        %v5735 = vld [vmem:[%s5685 + $0x128] sm:$0xf]
        %v5736 = vld [vmem:[%s5685 + $0x12c] sm:$0xff]
        %v5737 = vld [vmem:[%s5685 + $0x134] sm:$0xf]
        %v5738 = vld [vmem:[%s5685 + $0x138] sm:$0xff]
        %v5739 = vld [vmem:[%s5685 + $0x140] sm:$0xf]
        %v5740 = vld [vmem:[%s5685 + $0x144] sm:$0xff]
        %v5741 = vld [vmem:[%s5685 + $0x14c] sm:$0xf]
        %v5742 = vld [vmem:[%s5685 + $0x150] sm:$0xff]
        %v5743 = vld [vmem:[%s5685 + $0x158] sm:$0xf]
        %v5744 = vld [vmem:[%s5685 + $0x15c] sm:$0xff]
        %v5745 = vld [vmem:[%s5685 + $0x164] sm:$0xf]
        %v5746 = vld [vmem:[%s5685 + $0x168] sm:$0xff]
        %v5747 = vld [vmem:[%s5685 + $0x170] sm:$0xf]
        %v5748 = vld [vmem:[%s5685 + $0x174] sm:$0xff]
        %v5749 = vld [vmem:[%s5685 + $0x17c] sm:$0xf]
        %v5750 = vld [vmem:[%s5685 + $0x180] sm:$0xff]
        %v5751 = vld [vmem:[%s5685 + $0x188] sm:$0xf]
        %v5752 = vld [vmem:[%s5685 + $0x18c] sm:$0xff]
        %v5753 = vld [vmem:[%s5685 + $0x194] sm:$0xf]
        %v5754 = vld [vmem:[%s5685 + $0x198] sm:$0xff]
        %v5755 = vld [vmem:[%s5685 + $0x1a0] sm:$0xf]
        %v5756 = vld [vmem:[%s5685 + $0x1a4] sm:$0xff]
        %v5757 = vld [vmem:[%s5685 + $0x1ac] sm:$0xf]
        %v5758 = vld [vmem:[%s5685 + $0x1b0] sm:$0xff]
        %v5759 = vld [vmem:[%s5685 + $0x1b8] sm:$0xf]
        %v5760 = vld [vmem:[%s5685 + $0x1bc] sm:$0xff]
        %v5761 = vld [vmem:[%s5685 + $0x1c4] sm:$0xf]
        %v5762 = vld [vmem:[%s5685 + $0x1c8] sm:$0xff]
        %v5763 = vld [vmem:[%s5685 + $0x1d0] sm:$0xf]
        %v5764 = vld [vmem:[%s5685 + $0x1d4] sm:$0xff]
        %v5765 = vld [vmem:[%s5685 + $0x1dc] sm:$0xf]
        %v5766 = vld [vmem:[%s5685 + $0x1e0] sm:$0xff]
        %v5767 = vld [vmem:[%s5685 + $0x1e8] sm:$0xf]
        %v5768 = vld [vmem:[%s5685 + $0x1ec] sm:$0xff]
        %v5769 = vld [vmem:[%s5685 + $0x1f4] sm:$0xf]
        %v5770 = vld [vmem:[%s5685 + $0x1f8] sm:$0xff]
        %v5771 = vld [vmem:[%s5685 + $0x200] sm:$0xf]
        %v5772 = vld [vmem:[%s5685 + $0x204] sm:$0xff]
        %v5773 = vld [vmem:[%s5685 + $0x20c] sm:$0xf]
        %v5774 = vld [vmem:[%s5685 + $0x210] sm:$0xff]
        %v5775 = vld [vmem:[%s5685 + $0x218] sm:$0xf]
        %v5776 = vld [vmem:[%s5685 + $0x21c] sm:$0xff]
        %v5777 = vld [vmem:[%s5685 + $0x224] sm:$0xf]
        %v5778 = vld [vmem:[%s5685 + $0x228] sm:$0xff]
        %v5779 = vld [vmem:[%s5685 + $0x230] sm:$0xf]
        %v5780 = vld [vmem:[%s5685 + $0x234] sm:$0xff]
        %v5781 = vld [vmem:[%s5685 + $0x23c] sm:$0xf]
        %s5782 = scalar_lea.vmem %s4, 2304
        %v5783 = vld [vmem:[%s5782] sm:$0xff]
        %v5784 = vld [vmem:[%s5782 + $0x8] sm:$0xf]
        %v5785 = vld [vmem:[%s5782 + $0xc] sm:$0xff]
        %v5786 = vld [vmem:[%s5782 + $0x14] sm:$0xf]
        %v5787 = vld [vmem:[%s5782 + $0x18] sm:$0xff]
        %v5788 = vld [vmem:[%s5782 + $0x20] sm:$0xf]
        %v5789 = vld [vmem:[%s5782 + $0x24] sm:$0xff]
        %v5790 = vld [vmem:[%s5782 + $0x2c] sm:$0xf]
        %v5791 = vld [vmem:[%s5782 + $0x30] sm:$0xff]
        %v5792 = vld [vmem:[%s5782 + $0x38] sm:$0xf]
        %v5793 = vld [vmem:[%s5782 + $0x3c] sm:$0xff]
        %v5794 = vld [vmem:[%s5782 + $0x44] sm:$0xf]
        %v5795 = vld [vmem:[%s5782 + $0x48] sm:$0xff]
        %v5796 = vld [vmem:[%s5782 + $0x50] sm:$0xf]
        %v5797 = vld [vmem:[%s5782 + $0x54] sm:$0xff]
        %v5798 = vld [vmem:[%s5782 + $0x5c] sm:$0xf]
        %v5799 = vld [vmem:[%s5782 + $0x60] sm:$0xff]
        %v5800 = vld [vmem:[%s5782 + $0x68] sm:$0xf]
        %v5801 = vld [vmem:[%s5782 + $0x6c] sm:$0xff]
        %v5802 = vld [vmem:[%s5782 + $0x74] sm:$0xf]
        %v5803 = vld [vmem:[%s5782 + $0x78] sm:$0xff]
        %v5804 = vld [vmem:[%s5782 + $0x80] sm:$0xf]
        %v5805 = vld [vmem:[%s5782 + $0x84] sm:$0xff]
        %v5806 = vld [vmem:[%s5782 + $0x8c] sm:$0xf]
        %v5807 = vld [vmem:[%s5782 + $0x90] sm:$0xff]
        %v5808 = vld [vmem:[%s5782 + $0x98] sm:$0xf]
        %v5809 = vld [vmem:[%s5782 + $0x9c] sm:$0xff]
        %v5810 = vld [vmem:[%s5782 + $0xa4] sm:$0xf]
        %v5811 = vld [vmem:[%s5782 + $0xa8] sm:$0xff]
        %v5812 = vld [vmem:[%s5782 + $0xb0] sm:$0xf]
        %v5813 = vld [vmem:[%s5782 + $0xb4] sm:$0xff]
        %v5814 = vld [vmem:[%s5782 + $0xbc] sm:$0xf]
        %v5815 = vld [vmem:[%s5782 + $0xc0] sm:$0xff]
        %v5816 = vld [vmem:[%s5782 + $0xc8] sm:$0xf]
        %v5817 = vld [vmem:[%s5782 + $0xcc] sm:$0xff]
        %v5818 = vld [vmem:[%s5782 + $0xd4] sm:$0xf]
        %v5819 = vld [vmem:[%s5782 + $0xd8] sm:$0xff]
        %v5820 = vld [vmem:[%s5782 + $0xe0] sm:$0xf]
        %v5821 = vld [vmem:[%s5782 + $0xe4] sm:$0xff]
        %v5822 = vld [vmem:[%s5782 + $0xec] sm:$0xf]
        %v5823 = vld [vmem:[%s5782 + $0xf0] sm:$0xff]
        %v5824 = vld [vmem:[%s5782 + $0xf8] sm:$0xf]
        %v5825 = vld [vmem:[%s5782 + $0xfc] sm:$0xff]
        %v5826 = vld [vmem:[%s5782 + $0x104] sm:$0xf]
        %v5827 = vld [vmem:[%s5782 + $0x108] sm:$0xff]
        %v5828 = vld [vmem:[%s5782 + $0x110] sm:$0xf]
        %v5829 = vld [vmem:[%s5782 + $0x114] sm:$0xff]
        %v5830 = vld [vmem:[%s5782 + $0x11c] sm:$0xf]
        %v5831 = vld [vmem:[%s5782 + $0x120] sm:$0xff]
        %v5832 = vld [vmem:[%s5782 + $0x128] sm:$0xf]
        %v5833 = vld [vmem:[%s5782 + $0x12c] sm:$0xff]
        %v5834 = vld [vmem:[%s5782 + $0x134] sm:$0xf]
        %v5835 = vld [vmem:[%s5782 + $0x138] sm:$0xff]
        %v5836 = vld [vmem:[%s5782 + $0x140] sm:$0xf]
        %v5837 = vld [vmem:[%s5782 + $0x144] sm:$0xff]
        %v5838 = vld [vmem:[%s5782 + $0x14c] sm:$0xf]
        %v5839 = vld [vmem:[%s5782 + $0x150] sm:$0xff]
        %v5840 = vld [vmem:[%s5782 + $0x158] sm:$0xf]
        %v5841 = vld [vmem:[%s5782 + $0x15c] sm:$0xff]
        %v5842 = vld [vmem:[%s5782 + $0x164] sm:$0xf]
        %v5843 = vld [vmem:[%s5782 + $0x168] sm:$0xff]
        %v5844 = vld [vmem:[%s5782 + $0x170] sm:$0xf]
        %v5845 = vld [vmem:[%s5782 + $0x174] sm:$0xff]
        %v5846 = vld [vmem:[%s5782 + $0x17c] sm:$0xf]
        %v5847 = vld [vmem:[%s5782 + $0x180] sm:$0xff]
        %v5848 = vld [vmem:[%s5782 + $0x188] sm:$0xf]
        %v5849 = vld [vmem:[%s5782 + $0x18c] sm:$0xff]
        %v5850 = vld [vmem:[%s5782 + $0x194] sm:$0xf]
        %v5851 = vld [vmem:[%s5782 + $0x198] sm:$0xff]
        %v5852 = vld [vmem:[%s5782 + $0x1a0] sm:$0xf]
        %v5853 = vld [vmem:[%s5782 + $0x1a4] sm:$0xff]
        %v5854 = vld [vmem:[%s5782 + $0x1ac] sm:$0xf]
        %v5855 = vld [vmem:[%s5782 + $0x1b0] sm:$0xff]
        %v5856 = vld [vmem:[%s5782 + $0x1b8] sm:$0xf]
        %v5857 = vld [vmem:[%s5782 + $0x1bc] sm:$0xff]
        %v5858 = vld [vmem:[%s5782 + $0x1c4] sm:$0xf]
        %v5859 = vld [vmem:[%s5782 + $0x1c8] sm:$0xff]
        %v5860 = vld [vmem:[%s5782 + $0x1d0] sm:$0xf]
        %v5861 = vld [vmem:[%s5782 + $0x1d4] sm:$0xff]
        %v5862 = vld [vmem:[%s5782 + $0x1dc] sm:$0xf]
        %v5863 = vld [vmem:[%s5782 + $0x1e0] sm:$0xff]
        %v5864 = vld [vmem:[%s5782 + $0x1e8] sm:$0xf]
        %v5865 = vld [vmem:[%s5782 + $0x1ec] sm:$0xff]
        %v5866 = vld [vmem:[%s5782 + $0x1f4] sm:$0xf]
        %v5867 = vld [vmem:[%s5782 + $0x1f8] sm:$0xff]
        %v5868 = vld [vmem:[%s5782 + $0x200] sm:$0xf]
        %v5869 = vld [vmem:[%s5782 + $0x204] sm:$0xff]
        %v5870 = vld [vmem:[%s5782 + $0x20c] sm:$0xf]
        %v5871 = vld [vmem:[%s5782 + $0x210] sm:$0xff]
        %v5872 = vld [vmem:[%s5782 + $0x218] sm:$0xf]
        %v5873 = vld [vmem:[%s5782 + $0x21c] sm:$0xff]
        %v5874 = vld [vmem:[%s5782 + $0x224] sm:$0xf]
        %v5875 = vld [vmem:[%s5782 + $0x228] sm:$0xff]
        %v5876 = vld [vmem:[%s5782 + $0x230] sm:$0xf]
        %v5877 = vld [vmem:[%s5782 + $0x234] sm:$0xff]
        %v5878 = vld [vmem:[%s5782 + $0x23c] sm:$0xf]
        %v5975 = vunpack.c.l.b16 %v5783
        %v5976 = vunpack.c.h.b16 %v5783
        %v5977 = vunpack.c.l.b16 %v5784
        %v5978 = vunpack.c.l.b16 %v5785
        %v5979 = vunpack.c.h.b16 %v5785
        %v5980 = vunpack.c.l.b16 %v5786
        %v5981 = vunpack.c.l.b16 %v5787
        %v5982 = vunpack.c.h.b16 %v5787
        %v5983 = vunpack.c.l.b16 %v5788
        %v5984 = vunpack.c.l.b16 %v5789
        %v5985 = vunpack.c.h.b16 %v5789
        %v5986 = vunpack.c.l.b16 %v5790
        %v5987 = vunpack.c.l.b16 %v5791
        %v5988 = vunpack.c.h.b16 %v5791
        %v5989 = vunpack.c.l.b16 %v5792
        %v5990 = vunpack.c.l.b16 %v5793
        %v5991 = vunpack.c.h.b16 %v5793
        %v5992 = vunpack.c.l.b16 %v5794
        %v5993 = vunpack.c.l.b16 %v5795
        %v5994 = vunpack.c.h.b16 %v5795
        %v5995 = vunpack.c.l.b16 %v5796
        %v5996 = vunpack.c.l.b16 %v5797
        %v5997 = vunpack.c.h.b16 %v5797
        %v5998 = vunpack.c.l.b16 %v5798
        %v5999 = vunpack.c.l.b16 %v5799
        %v6000 = vunpack.c.h.b16 %v5799
        %v6001 = vunpack.c.l.b16 %v5800
        %v6002 = vunpack.c.l.b16 %v5801
        %v6003 = vunpack.c.h.b16 %v5801
        %v6004 = vunpack.c.l.b16 %v5802
        %v6005 = vunpack.c.l.b16 %v5803
        %v6006 = vunpack.c.h.b16 %v5803
        %v6007 = vunpack.c.l.b16 %v5804
        %v6008 = vunpack.c.l.b16 %v5805
        %v6009 = vunpack.c.h.b16 %v5805
        %v6010 = vunpack.c.l.b16 %v5806
        %v6011 = vunpack.c.l.b16 %v5807
        %v6012 = vunpack.c.h.b16 %v5807
        %v6013 = vunpack.c.l.b16 %v5808
        %v6014 = vunpack.c.l.b16 %v5809
        %v6015 = vunpack.c.h.b16 %v5809
        %v6016 = vunpack.c.l.b16 %v5810
        %v6017 = vunpack.c.l.b16 %v5811
        %v6018 = vunpack.c.h.b16 %v5811
        %v6019 = vunpack.c.l.b16 %v5812
        %v6020 = vunpack.c.l.b16 %v5813
        %v6021 = vunpack.c.h.b16 %v5813
        %v6022 = vunpack.c.l.b16 %v5814
        %v6023 = vunpack.c.l.b16 %v5815
        %v6024 = vunpack.c.h.b16 %v5815
        %v6025 = vunpack.c.l.b16 %v5816
        %v6026 = vunpack.c.l.b16 %v5817
        %v6027 = vunpack.c.h.b16 %v5817
        %v6028 = vunpack.c.l.b16 %v5818
        %v6029 = vunpack.c.l.b16 %v5819
        %v6030 = vunpack.c.h.b16 %v5819
        %v6031 = vunpack.c.l.b16 %v5820
        %v6032 = vunpack.c.l.b16 %v5821
        %v6033 = vunpack.c.h.b16 %v5821
        %v6034 = vunpack.c.l.b16 %v5822
        %v6035 = vunpack.c.l.b16 %v5823
        %v6036 = vunpack.c.h.b16 %v5823
        %v6037 = vunpack.c.l.b16 %v5824
        %v6038 = vunpack.c.l.b16 %v5825
        %v6039 = vunpack.c.h.b16 %v5825
        %v6040 = vunpack.c.l.b16 %v5826
        %v6041 = vunpack.c.l.b16 %v5827
        %v6042 = vunpack.c.h.b16 %v5827
        %v6043 = vunpack.c.l.b16 %v5828
        %v6044 = vunpack.c.l.b16 %v5829
        %v6045 = vunpack.c.h.b16 %v5829
        %v6046 = vunpack.c.l.b16 %v5830
        %v6047 = vunpack.c.l.b16 %v5831
        %v6048 = vunpack.c.h.b16 %v5831
        %v6049 = vunpack.c.l.b16 %v5832
        %v6050 = vunpack.c.l.b16 %v5833
        %v6051 = vunpack.c.h.b16 %v5833
        %v6052 = vunpack.c.l.b16 %v5834
        %v6053 = vunpack.c.l.b16 %v5835
        %v6054 = vunpack.c.h.b16 %v5835
        %v6055 = vunpack.c.l.b16 %v5836
        %v6056 = vunpack.c.l.b16 %v5837
        %v6057 = vunpack.c.h.b16 %v5837
        %v6058 = vunpack.c.l.b16 %v5838
        %v6059 = vunpack.c.l.b16 %v5839
        %v6060 = vunpack.c.h.b16 %v5839
        %v6061 = vunpack.c.l.b16 %v5840
        %v6062 = vunpack.c.l.b16 %v5841
        %v6063 = vunpack.c.h.b16 %v5841
        %v6064 = vunpack.c.l.b16 %v5842
        %v6065 = vunpack.c.l.b16 %v5843
        %v6066 = vunpack.c.h.b16 %v5843
        %v6067 = vunpack.c.l.b16 %v5844
        %v6068 = vunpack.c.l.b16 %v5845
        %v6069 = vunpack.c.h.b16 %v5845
        %v6070 = vunpack.c.l.b16 %v5846
        %v6071 = vunpack.c.l.b16 %v5847
        %v6072 = vunpack.c.h.b16 %v5847
        %v6073 = vunpack.c.l.b16 %v5848
        %v6074 = vunpack.c.l.b16 %v5849
        %v6075 = vunpack.c.h.b16 %v5849
        %v6076 = vunpack.c.l.b16 %v5850
        %v6077 = vunpack.c.l.b16 %v5851
        %v6078 = vunpack.c.h.b16 %v5851
        %v6079 = vunpack.c.l.b16 %v5852
        %v6080 = vunpack.c.l.b16 %v5853
        %v6081 = vunpack.c.h.b16 %v5853
        %v6082 = vunpack.c.l.b16 %v5854
        %v6083 = vunpack.c.l.b16 %v5855
        %v6084 = vunpack.c.h.b16 %v5855
        %v6085 = vunpack.c.l.b16 %v5856
        %v6086 = vunpack.c.l.b16 %v5857
        %v6087 = vunpack.c.h.b16 %v5857
        %v6088 = vunpack.c.l.b16 %v5858
        %v6089 = vunpack.c.l.b16 %v5859
        %v6090 = vunpack.c.h.b16 %v5859
        %v6091 = vunpack.c.l.b16 %v5860
        %v6092 = vunpack.c.l.b16 %v5861
        %v6093 = vunpack.c.h.b16 %v5861
        %v6094 = vunpack.c.l.b16 %v5862
        %v6095 = vunpack.c.l.b16 %v5863
        %v6096 = vunpack.c.h.b16 %v5863
        %v6097 = vunpack.c.l.b16 %v5864
        %v6098 = vunpack.c.l.b16 %v5865
        %v6099 = vunpack.c.h.b16 %v5865
        %v6100 = vunpack.c.l.b16 %v5866
        %v6101 = vunpack.c.l.b16 %v5867
        %v6102 = vunpack.c.h.b16 %v5867
        %v6103 = vunpack.c.l.b16 %v5868
        %v6104 = vunpack.c.l.b16 %v5869
        %v6105 = vunpack.c.h.b16 %v5869
        %v6106 = vunpack.c.l.b16 %v5870
        %v6107 = vunpack.c.l.b16 %v5871
        %v6108 = vunpack.c.h.b16 %v5871
        %v6109 = vunpack.c.l.b16 %v5872
        %v6110 = vunpack.c.l.b16 %v5873
        %v6111 = vunpack.c.h.b16 %v5873
        %v6112 = vunpack.c.l.b16 %v5874
        %v6113 = vunpack.c.l.b16 %v5875
        %v6114 = vunpack.c.h.b16 %v5875
        %v6115 = vunpack.c.l.b16 %v5876
        %v6116 = vunpack.c.l.b16 %v5877
        %v6117 = vunpack.c.h.b16 %v5877
        %v6118 = vunpack.c.l.b16 %v5878
        %v6119 = vpack.c.b16 %v5978, %v5975
        %v6120 = vpack.c.b16 %v5979, %v5976
        %v6121 = vpack.c.b16 %v5980, %v5977
        %v6122 = vpack.c.b16 %v5984, %v5981
        %v6123 = vpack.c.b16 %v5985, %v5982
        %v6124 = vpack.c.b16 %v5986, %v5983
        %v6125 = vpack.c.b16 %v5990, %v5987
        %v6126 = vpack.c.b16 %v5991, %v5988
        %v6127 = vpack.c.b16 %v5992, %v5989
        %v6128 = vpack.c.b16 %v5996, %v5993
        %v6129 = vpack.c.b16 %v5997, %v5994
        %v6130 = vpack.c.b16 %v5998, %v5995
        %v6131 = vpack.c.b16 %v6002, %v5999
        %v6132 = vpack.c.b16 %v6003, %v6000
        %v6133 = vpack.c.b16 %v6004, %v6001
        %v6134 = vpack.c.b16 %v6008, %v6005
        %v6135 = vpack.c.b16 %v6009, %v6006
        %v6136 = vpack.c.b16 %v6010, %v6007
        %v6137 = vpack.c.b16 %v6014, %v6011
        %v6138 = vpack.c.b16 %v6015, %v6012
        %v6139 = vpack.c.b16 %v6016, %v6013
        %v6140 = vpack.c.b16 %v6020, %v6017
        %v6141 = vpack.c.b16 %v6021, %v6018
        %v6142 = vpack.c.b16 %v6022, %v6019
        %v6143 = vpack.c.b16 %v6026, %v6023
        %v6144 = vpack.c.b16 %v6027, %v6024
        %v6145 = vpack.c.b16 %v6028, %v6025
        %v6146 = vpack.c.b16 %v6032, %v6029
        %v6147 = vpack.c.b16 %v6033, %v6030
        %v6148 = vpack.c.b16 %v6034, %v6031
        %v6149 = vpack.c.b16 %v6038, %v6035
        %v6150 = vpack.c.b16 %v6039, %v6036
        %v6151 = vpack.c.b16 %v6040, %v6037
        %v6152 = vpack.c.b16 %v6044, %v6041
        %v6153 = vpack.c.b16 %v6045, %v6042
        %v6154 = vpack.c.b16 %v6046, %v6043
        %v6155 = vpack.c.b16 %v6050, %v6047
        %v6156 = vpack.c.b16 %v6051, %v6048
        %v6157 = vpack.c.b16 %v6052, %v6049
        %v6158 = vpack.c.b16 %v6056, %v6053
        %v6159 = vpack.c.b16 %v6057, %v6054
        %v6160 = vpack.c.b16 %v6058, %v6055
        %v6161 = vpack.c.b16 %v6062, %v6059
        %v6162 = vpack.c.b16 %v6063, %v6060
        %v6163 = vpack.c.b16 %v6064, %v6061
        %v6164 = vpack.c.b16 %v6068, %v6065
        %v6165 = vpack.c.b16 %v6069, %v6066
        %v6166 = vpack.c.b16 %v6070, %v6067
        %v6167 = vpack.c.b16 %v6074, %v6071
        %v6168 = vpack.c.b16 %v6075, %v6072
        %v6169 = vpack.c.b16 %v6076, %v6073
        %v6170 = vpack.c.b16 %v6080, %v6077
        %v6171 = vpack.c.b16 %v6081, %v6078
        %v6172 = vpack.c.b16 %v6082, %v6079
        %v6173 = vpack.c.b16 %v6086, %v6083
        %v6174 = vpack.c.b16 %v6087, %v6084
        %v6175 = vpack.c.b16 %v6088, %v6085
        %v6176 = vpack.c.b16 %v6092, %v6089
        %v6177 = vpack.c.b16 %v6093, %v6090
        %v6178 = vpack.c.b16 %v6094, %v6091
        %v6179 = vpack.c.b16 %v6098, %v6095
        %v6180 = vpack.c.b16 %v6099, %v6096
        %v6181 = vpack.c.b16 %v6100, %v6097
        %v6182 = vpack.c.b16 %v6104, %v6101
        %v6183 = vpack.c.b16 %v6105, %v6102
        %v6184 = vpack.c.b16 %v6106, %v6103
        %v6185 = vpack.c.b16 %v6110, %v6107
        %v6186 = vpack.c.b16 %v6111, %v6108
        %v6187 = vpack.c.b16 %v6112, %v6109
        %v6188 = vpack.c.b16 %v6116, %v6113
        %v6189 = vpack.c.b16 %v6117, %v6114
        %v6190 = vpack.c.b16 %v6118, %v6115
        %6263 = vmatpush.bf16.msra.mxu0 %v6140
        %6264 = vmatpush.bf16.msra.mxu0 %v6137
        %6265 = vmatpush.bf16.msra.mxu0 %v6134
        %6266 = vmatpush.bf16.msra.mxu0 %v6131
        %6267 = vmatpush.bf16.msra.mxu0 %v6128
        %6268 = vmatpush.bf16.msra.mxu0 %v6125
        %6269 = vmatpush.bf16.msra.mxu0 %v6122
        %6270 = vmatpush.bf16.msra.mxu0 %v6119
        %6271 = vmatmul.bf16.gmra.mxu0 %v3373
        %v6272 = vpop.f32.mrf.mxu0
        %v6273 = vadd.f32 0.0, %v6272
        %v6274 = vpop.f32.mrf.mxu0
        %v6275 = vadd.f32 0.0, %v6274
        %6276 = vmatmul.bf16.gmra.mxu0 %v3376
        %v6277 = vpop.f32.mrf.mxu0
        %v6278 = vadd.f32 0.0, %v6277
        %v6279 = vpop.f32.mrf.mxu0
        %v6280 = vadd.f32 0.0, %v6279
        %6281 = vmatmul.bf16.gmra.mxu0 %v3379
        %v6282 = vpop.f32.mrf.mxu0
        %v6283 = vadd.f32 0.0, %v6282
        %v6284 = vpop.f32.mrf.mxu0
        %v6285 = vadd.f32 0.0, %v6284
        %6286 = vmatmul.bf16.gmra.mxu0 %v3382
        %v6287 = vpop.f32.mrf.mxu0
        %v6288 = vadd.f32 0.0, %v6287
        %v6289 = vpop.f32.mrf.mxu0
        %v6290 = vadd.f32 0.0, %v6289
        %6291 = vmatmul.bf16.gmra.mxu0 %v3385
        %v6292 = vpop.f32.mrf.mxu0
        %v6293 = vadd.f32 0.0, %v6292
        %v6294 = vpop.f32.mrf.mxu0
        %v6295 = vadd.f32 0.0, %v6294
        %6296 = vdwg.mxu0
        %6297 = vmatpush.bf16.msra.mxu0 %v6164
        %6298 = vmatpush.bf16.msra.mxu0 %v6161
        %6299 = vmatpush.bf16.msra.mxu0 %v6158
        %6300 = vmatpush.bf16.msra.mxu0 %v6155
        %6301 = vmatpush.bf16.msra.mxu0 %v6152
        %6302 = vmatpush.bf16.msra.mxu0 %v6149
        %6303 = vmatpush.bf16.msra.mxu0 %v6146
        %6304 = vmatpush.bf16.msra.mxu0 %v6143
        %6305 = vmatmul.bf16.gmra.mxu0 %v3374
        %v6306 = vpop.f32.mrf.mxu0
        %v6307 = vadd.f32 %v6273, %v6306
        %v6308 = vpop.f32.mrf.mxu0
        %v6309 = vadd.f32 %v6275, %v6308
        %6310 = vmatmul.bf16.gmra.mxu0 %v3377
        %v6311 = vpop.f32.mrf.mxu0
        %v6312 = vadd.f32 %v6278, %v6311
        %v6313 = vpop.f32.mrf.mxu0
        %v6314 = vadd.f32 %v6280, %v6313
        %6315 = vmatmul.bf16.gmra.mxu0 %v3380
        %v6316 = vpop.f32.mrf.mxu0
        %v6317 = vadd.f32 %v6283, %v6316
        %v6318 = vpop.f32.mrf.mxu0
        %v6319 = vadd.f32 %v6285, %v6318
        %6320 = vmatmul.bf16.gmra.mxu0 %v3383
        %v6321 = vpop.f32.mrf.mxu0
        %v6322 = vadd.f32 %v6288, %v6321
        %v6323 = vpop.f32.mrf.mxu0
        %v6324 = vadd.f32 %v6290, %v6323
        %6325 = vmatmul.bf16.gmra.mxu0 %v3386
        %v6326 = vpop.f32.mrf.mxu0
        %v6327 = vadd.f32 %v6293, %v6326
        %v6328 = vpop.f32.mrf.mxu0
        %v6329 = vadd.f32 %v6295, %v6328
        %6330 = vdwg.mxu0
        %6331 = vmatpush.bf16.msra.mxu0 %v6188
        %6332 = vmatpush.bf16.msra.mxu0 %v6185
        %6333 = vmatpush.bf16.msra.mxu0 %v6182
        %6334 = vmatpush.bf16.msra.mxu0 %v6179
        %6335 = vmatpush.bf16.msra.mxu0 %v6176
        %6336 = vmatpush.bf16.msra.mxu0 %v6173
        %6337 = vmatpush.bf16.msra.mxu0 %v6170
        %6338 = vmatpush.bf16.msra.mxu0 %v6167
        %6339 = vmatmul.bf16.gmra.mxu0 %v3375
        %v6340 = vpop.f32.mrf.mxu0
        %v6341 = vadd.f32 %v6307, %v6340
        %v6342 = vpop.f32.mrf.mxu0
        %v6343 = vadd.f32 %v6309, %v6342
        %6344 = vmatmul.bf16.gmra.mxu0 %v3378
        %v6345 = vpop.f32.mrf.mxu0
        %v6346 = vadd.f32 %v6312, %v6345
        %v6347 = vpop.f32.mrf.mxu0
        %v6348 = vadd.f32 %v6314, %v6347
        %6349 = vmatmul.bf16.gmra.mxu0 %v3381
        %v6350 = vpop.f32.mrf.mxu0
        %v6351 = vadd.f32 %v6317, %v6350
        %v6352 = vpop.f32.mrf.mxu0
        %v6353 = vadd.f32 %v6319, %v6352
        %6354 = vmatmul.bf16.gmra.mxu0 %v3384
        %v6355 = vpop.f32.mrf.mxu0
        %v6356 = vadd.f32 %v6322, %v6355
        %v6357 = vpop.f32.mrf.mxu0
        %v6358 = vadd.f32 %v6324, %v6357
        %6359 = vmatmul.bf16.gmra.mxu0 %v3387
        %v6360 = vpop.f32.mrf.mxu0
        %v6361 = vadd.f32 %v6327, %v6360
        %v6362 = vpop.f32.mrf.mxu0
        %v6363 = vadd.f32 %v6329, %v6362
        %6364 = vdwg.mxu0
        %6365 = vmatpush.bf16.msra.mxu0 %v6141
        %6366 = vmatpush.bf16.msra.mxu0 %v6138
        %6367 = vmatpush.bf16.msra.mxu0 %v6135
        %6368 = vmatpush.bf16.msra.mxu0 %v6132
        %6369 = vmatpush.bf16.msra.mxu0 %v6129
        %6370 = vmatpush.bf16.msra.mxu0 %v6126
        %6371 = vmatpush.bf16.msra.mxu0 %v6123
        %6372 = vmatpush.bf16.msra.mxu0 %v6120
        %6373 = vmatmul.bf16.gmra.mxu0 %v3373
        %v6374 = vpop.f32.mrf.mxu0
        %v6375 = vadd.f32 0.0, %v6374
        %v6376 = vpop.f32.mrf.mxu0
        %v6377 = vadd.f32 0.0, %v6376
        %6378 = vmatmul.bf16.gmra.mxu0 %v3376
        %v6379 = vpop.f32.mrf.mxu0
        %v6380 = vadd.f32 0.0, %v6379
        %v6381 = vpop.f32.mrf.mxu0
        %v6382 = vadd.f32 0.0, %v6381
        %6383 = vmatmul.bf16.gmra.mxu0 %v3379
        %v6384 = vpop.f32.mrf.mxu0
        %v6385 = vadd.f32 0.0, %v6384
        %v6386 = vpop.f32.mrf.mxu0
        %v6387 = vadd.f32 0.0, %v6386
        %6388 = vmatmul.bf16.gmra.mxu0 %v3382
        %v6389 = vpop.f32.mrf.mxu0
        %v6390 = vadd.f32 0.0, %v6389
        %v6391 = vpop.f32.mrf.mxu0
        %v6392 = vadd.f32 0.0, %v6391
        %6393 = vmatmul.bf16.gmra.mxu0 %v3385
        %v6394 = vpop.f32.mrf.mxu0
        %v6395 = vadd.f32 0.0, %v6394
        %v6396 = vpop.f32.mrf.mxu0
        %v6397 = vadd.f32 0.0, %v6396
        %6398 = vdwg.mxu0
        %6399 = vmatpush.bf16.msra.mxu0 %v6165
        %6400 = vmatpush.bf16.msra.mxu0 %v6162
        %6401 = vmatpush.bf16.msra.mxu0 %v6159
        %6402 = vmatpush.bf16.msra.mxu0 %v6156
        %6403 = vmatpush.bf16.msra.mxu0 %v6153
        %6404 = vmatpush.bf16.msra.mxu0 %v6150
        %6405 = vmatpush.bf16.msra.mxu0 %v6147
        %6406 = vmatpush.bf16.msra.mxu0 %v6144
        %6407 = vmatmul.bf16.gmra.mxu0 %v3374
        %v6408 = vpop.f32.mrf.mxu0
        %v6409 = vadd.f32 %v6375, %v6408
        %v6410 = vpop.f32.mrf.mxu0
        %v6411 = vadd.f32 %v6377, %v6410
        %6412 = vmatmul.bf16.gmra.mxu0 %v3377
        %v6413 = vpop.f32.mrf.mxu0
        %v6414 = vadd.f32 %v6380, %v6413
        %v6415 = vpop.f32.mrf.mxu0
        %v6416 = vadd.f32 %v6382, %v6415
        %6417 = vmatmul.bf16.gmra.mxu0 %v3380
        %v6418 = vpop.f32.mrf.mxu0
        %v6419 = vadd.f32 %v6385, %v6418
        %v6420 = vpop.f32.mrf.mxu0
        %v6421 = vadd.f32 %v6387, %v6420
        %6422 = vmatmul.bf16.gmra.mxu0 %v3383
        %v6423 = vpop.f32.mrf.mxu0
        %v6424 = vadd.f32 %v6390, %v6423
        %v6425 = vpop.f32.mrf.mxu0
        %v6426 = vadd.f32 %v6392, %v6425
        %6427 = vmatmul.bf16.gmra.mxu0 %v3386
        %v6428 = vpop.f32.mrf.mxu0
        %v6429 = vadd.f32 %v6395, %v6428
        %v6430 = vpop.f32.mrf.mxu0
        %v6431 = vadd.f32 %v6397, %v6430
        %6432 = vdwg.mxu0
        %6433 = vmatpush.bf16.msra.mxu0 %v6189
        %6434 = vmatpush.bf16.msra.mxu0 %v6186
        %6435 = vmatpush.bf16.msra.mxu0 %v6183
        %6436 = vmatpush.bf16.msra.mxu0 %v6180
        %6437 = vmatpush.bf16.msra.mxu0 %v6177
        %6438 = vmatpush.bf16.msra.mxu0 %v6174
        %6439 = vmatpush.bf16.msra.mxu0 %v6171
        %6440 = vmatpush.bf16.msra.mxu0 %v6168
        %6441 = vmatmul.bf16.gmra.mxu0 %v3375
        %v6442 = vpop.f32.mrf.mxu0
        %v6443 = vadd.f32 %v6409, %v6442
        %v6444 = vpop.f32.mrf.mxu0
        %v6445 = vadd.f32 %v6411, %v6444
        %6446 = vmatmul.bf16.gmra.mxu0 %v3378
        %v6447 = vpop.f32.mrf.mxu0
        %v6448 = vadd.f32 %v6414, %v6447
        %v6449 = vpop.f32.mrf.mxu0
        %v6450 = vadd.f32 %v6416, %v6449
        %6451 = vmatmul.bf16.gmra.mxu0 %v3381
        %v6452 = vpop.f32.mrf.mxu0
        %v6453 = vadd.f32 %v6419, %v6452
        %v6454 = vpop.f32.mrf.mxu0
        %v6455 = vadd.f32 %v6421, %v6454
        %6456 = vmatmul.bf16.gmra.mxu0 %v3384
        %v6457 = vpop.f32.mrf.mxu0
        %v6458 = vadd.f32 %v6424, %v6457
        %v6459 = vpop.f32.mrf.mxu0
        %v6460 = vadd.f32 %v6426, %v6459
        %6461 = vmatmul.bf16.gmra.mxu0 %v3387
        %v6462 = vpop.f32.mrf.mxu0
        %v6463 = vadd.f32 %v6429, %v6462
        %v6464 = vpop.f32.mrf.mxu0
        %v6465 = vadd.f32 %v6431, %v6464
        %6466 = vdwg.mxu0
        %6467 = vmatpush.bf16.msra.mxu0 %v6142
        %6468 = vmatpush.bf16.msra.mxu0 %v6139
        %6469 = vmatpush.bf16.msra.mxu0 %v6136
        %6470 = vmatpush.bf16.msra.mxu0 %v6133
        %6471 = vmatpush.bf16.msra.mxu0 %v6130
        %6472 = vmatpush.bf16.msra.mxu0 %v6127
        %6473 = vmatpush.bf16.msra.mxu0 %v6124
        %6474 = vmatpush.bf16.msra.mxu0 %v6121
        %6475 = vmatmul.bf16.gmra.mxu0 %v3373
        %v6476 = vpop.f32.mrf.mxu0
        %v6477 = vadd.f32 0.0, %v6476
        %v6478 = vpop.f32.mrf.mxu0
        %v6479 = vadd.f32 0.0, %v6478
        %6480 = vmatmul.bf16.gmra.mxu0 %v3376
        %v6481 = vpop.f32.mrf.mxu0
        %v6482 = vadd.f32 0.0, %v6481
        %v6483 = vpop.f32.mrf.mxu0
        %v6484 = vadd.f32 0.0, %v6483
        %6485 = vmatmul.bf16.gmra.mxu0 %v3379
        %v6486 = vpop.f32.mrf.mxu0
        %v6487 = vadd.f32 0.0, %v6486
        %v6488 = vpop.f32.mrf.mxu0
        %v6489 = vadd.f32 0.0, %v6488
        %6490 = vmatmul.bf16.gmra.mxu0 %v3382
        %v6491 = vpop.f32.mrf.mxu0
        %v6492 = vadd.f32 0.0, %v6491
        %v6493 = vpop.f32.mrf.mxu0
        %v6494 = vadd.f32 0.0, %v6493
        %6495 = vmatmul.bf16.gmra.mxu0 %v3385
        %v6496 = vpop.f32.mrf.mxu0
        %v6497 = vadd.f32 0.0, %v6496
        %v6498 = vpop.f32.mrf.mxu0
        %v6499 = vadd.f32 0.0, %v6498
        %6500 = vdwg.mxu0
        %6501 = vmatpush.bf16.msra.mxu0 %v6166
        %6502 = vmatpush.bf16.msra.mxu0 %v6163
        %6503 = vmatpush.bf16.msra.mxu0 %v6160
        %6504 = vmatpush.bf16.msra.mxu0 %v6157
        %6505 = vmatpush.bf16.msra.mxu0 %v6154
        %6506 = vmatpush.bf16.msra.mxu0 %v6151
        %6507 = vmatpush.bf16.msra.mxu0 %v6148
        %6508 = vmatpush.bf16.msra.mxu0 %v6145
        %6509 = vmatmul.bf16.gmra.mxu0 %v3374
        %v6510 = vpop.f32.mrf.mxu0
        %v6511 = vadd.f32 %v6477, %v6510
        %v6512 = vpop.f32.mrf.mxu0
        %v6513 = vadd.f32 %v6479, %v6512
        %6514 = vmatmul.bf16.gmra.mxu0 %v3377
        %v6515 = vpop.f32.mrf.mxu0
        %v6516 = vadd.f32 %v6482, %v6515
        %v6517 = vpop.f32.mrf.mxu0
        %v6518 = vadd.f32 %v6484, %v6517
        %6519 = vmatmul.bf16.gmra.mxu0 %v3380
        %v6520 = vpop.f32.mrf.mxu0
        %v6521 = vadd.f32 %v6487, %v6520
        %v6522 = vpop.f32.mrf.mxu0
        %v6523 = vadd.f32 %v6489, %v6522
        %6524 = vmatmul.bf16.gmra.mxu0 %v3383
        %v6525 = vpop.f32.mrf.mxu0
        %v6526 = vadd.f32 %v6492, %v6525
        %v6527 = vpop.f32.mrf.mxu0
        %v6528 = vadd.f32 %v6494, %v6527
        %6529 = vmatmul.bf16.gmra.mxu0 %v3386
        %v6530 = vpop.f32.mrf.mxu0
        %v6531 = vadd.f32 %v6497, %v6530
        %v6532 = vpop.f32.mrf.mxu0
        %v6533 = vadd.f32 %v6499, %v6532
        %6534 = vdwg.mxu0
        %6535 = vmatpush.bf16.msra.mxu0 %v6190
        %6536 = vmatpush.bf16.msra.mxu0 %v6187
        %6537 = vmatpush.bf16.msra.mxu0 %v6184
        %6538 = vmatpush.bf16.msra.mxu0 %v6181
        %6539 = vmatpush.bf16.msra.mxu0 %v6178
        %6540 = vmatpush.bf16.msra.mxu0 %v6175
        %6541 = vmatpush.bf16.msra.mxu0 %v6172
        %6542 = vmatpush.bf16.msra.mxu0 %v6169
        %6543 = vmatmul.bf16.gmra.mxu0 %v3375
        %v6544 = vpop.f32.mrf.mxu0
        %v6545 = vadd.f32 %v6511, %v6544
        %v6546 = vpop.f32.mrf.mxu0
        %v6547 = vadd.f32 %v6513, %v6546
        %6548 = vmatmul.bf16.gmra.mxu0 %v3378
        %v6549 = vpop.f32.mrf.mxu0
        %v6550 = vadd.f32 %v6516, %v6549
        %v6551 = vpop.f32.mrf.mxu0
        %v6552 = vadd.f32 %v6518, %v6551
        %6553 = vmatmul.bf16.gmra.mxu0 %v3381
        %v6554 = vpop.f32.mrf.mxu0
        %v6555 = vadd.f32 %v6521, %v6554
        %v6556 = vpop.f32.mrf.mxu0
        %v6557 = vadd.f32 %v6523, %v6556
        %6558 = vmatmul.bf16.gmra.mxu0 %v3384
        %v6559 = vpop.f32.mrf.mxu0
        %v6560 = vadd.f32 %v6526, %v6559
        %v6561 = vpop.f32.mrf.mxu0
        %v6562 = vadd.f32 %v6528, %v6561
        %6563 = vmatmul.bf16.gmra.mxu0 %v3387
        %v6564 = vpop.f32.mrf.mxu0
        %v6565 = vadd.f32 %v6531, %v6564
        %v6566 = vpop.f32.mrf.mxu0
        %v6567 = vadd.f32 %v6533, %v6566
        %6568 = vdwg.mxu0
        %v6665 = vunpack.c.l.b16 %v5686
        %v6666 = vunpack.c.h.b16 %v5686
        %v6667 = vunpack.c.l.b16 %v5687
        %v6668 = vunpack.c.l.b16 %v5688
        %v6669 = vunpack.c.h.b16 %v5688
        %v6670 = vunpack.c.l.b16 %v5689
        %v6671 = vunpack.c.l.b16 %v5690
        %v6672 = vunpack.c.h.b16 %v5690
        %v6673 = vunpack.c.l.b16 %v5691
        %v6674 = vunpack.c.l.b16 %v5692
        %v6675 = vunpack.c.h.b16 %v5692
        %v6676 = vunpack.c.l.b16 %v5693
        %v6677 = vunpack.c.l.b16 %v5694
        %v6678 = vunpack.c.h.b16 %v5694
        %v6679 = vunpack.c.l.b16 %v5695
        %v6680 = vunpack.c.l.b16 %v5696
        %v6681 = vunpack.c.h.b16 %v5696
        %v6682 = vunpack.c.l.b16 %v5697
        %v6683 = vunpack.c.l.b16 %v5698
        %v6684 = vunpack.c.h.b16 %v5698
        %v6685 = vunpack.c.l.b16 %v5699
        %v6686 = vunpack.c.l.b16 %v5700
        %v6687 = vunpack.c.h.b16 %v5700
        %v6688 = vunpack.c.l.b16 %v5701
        %v6689 = vunpack.c.l.b16 %v5702
        %v6690 = vunpack.c.h.b16 %v5702
        %v6691 = vunpack.c.l.b16 %v5703
        %v6692 = vunpack.c.l.b16 %v5704
        %v6693 = vunpack.c.h.b16 %v5704
        %v6694 = vunpack.c.l.b16 %v5705
        %v6695 = vunpack.c.l.b16 %v5706
        %v6696 = vunpack.c.h.b16 %v5706
        %v6697 = vunpack.c.l.b16 %v5707
        %v6698 = vunpack.c.l.b16 %v5708
        %v6699 = vunpack.c.h.b16 %v5708
        %v6700 = vunpack.c.l.b16 %v5709
        %v6701 = vunpack.c.l.b16 %v5710
        %v6702 = vunpack.c.h.b16 %v5710
        %v6703 = vunpack.c.l.b16 %v5711
        %v6704 = vunpack.c.l.b16 %v5712
        %v6705 = vunpack.c.h.b16 %v5712
        %v6706 = vunpack.c.l.b16 %v5713
        %v6707 = vunpack.c.l.b16 %v5714
        %v6708 = vunpack.c.h.b16 %v5714
        %v6709 = vunpack.c.l.b16 %v5715
        %v6710 = vunpack.c.l.b16 %v5716
        %v6711 = vunpack.c.h.b16 %v5716
        %v6712 = vunpack.c.l.b16 %v5717
        %v6713 = vunpack.c.l.b16 %v5718
        %v6714 = vunpack.c.h.b16 %v5718
        %v6715 = vunpack.c.l.b16 %v5719
        %v6716 = vunpack.c.l.b16 %v5720
        %v6717 = vunpack.c.h.b16 %v5720
        %v6718 = vunpack.c.l.b16 %v5721
        %v6719 = vunpack.c.l.b16 %v5722
        %v6720 = vunpack.c.h.b16 %v5722
        %v6721 = vunpack.c.l.b16 %v5723
        %v6722 = vunpack.c.l.b16 %v5724
        %v6723 = vunpack.c.h.b16 %v5724
        %v6724 = vunpack.c.l.b16 %v5725
        %v6725 = vunpack.c.l.b16 %v5726
        %v6726 = vunpack.c.h.b16 %v5726
        %v6727 = vunpack.c.l.b16 %v5727
        %v6728 = vunpack.c.l.b16 %v5728
        %v6729 = vunpack.c.h.b16 %v5728
        %v6730 = vunpack.c.l.b16 %v5729
        %v6731 = vunpack.c.l.b16 %v5730
        %v6732 = vunpack.c.h.b16 %v5730
        %v6733 = vunpack.c.l.b16 %v5731
        %v6734 = vunpack.c.l.b16 %v5732
        %v6735 = vunpack.c.h.b16 %v5732
        %v6736 = vunpack.c.l.b16 %v5733
        %v6737 = vunpack.c.l.b16 %v5734
        %v6738 = vunpack.c.h.b16 %v5734
        %v6739 = vunpack.c.l.b16 %v5735
        %v6740 = vunpack.c.l.b16 %v5736
        %v6741 = vunpack.c.h.b16 %v5736
        %v6742 = vunpack.c.l.b16 %v5737
        %v6743 = vunpack.c.l.b16 %v5738
        %v6744 = vunpack.c.h.b16 %v5738
        %v6745 = vunpack.c.l.b16 %v5739
        %v6746 = vunpack.c.l.b16 %v5740
        %v6747 = vunpack.c.h.b16 %v5740
        %v6748 = vunpack.c.l.b16 %v5741
        %v6749 = vunpack.c.l.b16 %v5742
        %v6750 = vunpack.c.h.b16 %v5742
        %v6751 = vunpack.c.l.b16 %v5743
        %v6752 = vunpack.c.l.b16 %v5744
        %v6753 = vunpack.c.h.b16 %v5744
        %v6754 = vunpack.c.l.b16 %v5745
        %v6755 = vunpack.c.l.b16 %v5746
        %v6756 = vunpack.c.h.b16 %v5746
        %v6757 = vunpack.c.l.b16 %v5747
        %v6758 = vunpack.c.l.b16 %v5748
        %v6759 = vunpack.c.h.b16 %v5748
        %v6760 = vunpack.c.l.b16 %v5749
        %v6761 = vunpack.c.l.b16 %v5750
        %v6762 = vunpack.c.h.b16 %v5750
        %v6763 = vunpack.c.l.b16 %v5751
        %v6764 = vunpack.c.l.b16 %v5752
        %v6765 = vunpack.c.h.b16 %v5752
        %v6766 = vunpack.c.l.b16 %v5753
        %v6767 = vunpack.c.l.b16 %v5754
        %v6768 = vunpack.c.h.b16 %v5754
        %v6769 = vunpack.c.l.b16 %v5755
        %v6770 = vunpack.c.l.b16 %v5756
        %v6771 = vunpack.c.h.b16 %v5756
        %v6772 = vunpack.c.l.b16 %v5757
        %v6773 = vunpack.c.l.b16 %v5758
        %v6774 = vunpack.c.h.b16 %v5758
        %v6775 = vunpack.c.l.b16 %v5759
        %v6776 = vunpack.c.l.b16 %v5760
        %v6777 = vunpack.c.h.b16 %v5760
        %v6778 = vunpack.c.l.b16 %v5761
        %v6779 = vunpack.c.l.b16 %v5762
        %v6780 = vunpack.c.h.b16 %v5762
        %v6781 = vunpack.c.l.b16 %v5763
        %v6782 = vunpack.c.l.b16 %v5764
        %v6783 = vunpack.c.h.b16 %v5764
        %v6784 = vunpack.c.l.b16 %v5765
        %v6785 = vunpack.c.l.b16 %v5766
        %v6786 = vunpack.c.h.b16 %v5766
        %v6787 = vunpack.c.l.b16 %v5767
        %v6788 = vunpack.c.l.b16 %v5768
        %v6789 = vunpack.c.h.b16 %v5768
        %v6790 = vunpack.c.l.b16 %v5769
        %v6791 = vunpack.c.l.b16 %v5770
        %v6792 = vunpack.c.h.b16 %v5770
        %v6793 = vunpack.c.l.b16 %v5771
        %v6794 = vunpack.c.l.b16 %v5772
        %v6795 = vunpack.c.h.b16 %v5772
        %v6796 = vunpack.c.l.b16 %v5773
        %v6797 = vunpack.c.l.b16 %v5774
        %v6798 = vunpack.c.h.b16 %v5774
        %v6799 = vunpack.c.l.b16 %v5775
        %v6800 = vunpack.c.l.b16 %v5776
        %v6801 = vunpack.c.h.b16 %v5776
        %v6802 = vunpack.c.l.b16 %v5777
        %v6803 = vunpack.c.l.b16 %v5778
        %v6804 = vunpack.c.h.b16 %v5778
        %v6805 = vunpack.c.l.b16 %v5779
        %v6806 = vunpack.c.l.b16 %v5780
        %v6807 = vunpack.c.h.b16 %v5780
        %v6808 = vunpack.c.l.b16 %v5781
        %v6809 = vpack.c.b16 %v6668, %v6665
        %v6810 = vpack.c.b16 %v6669, %v6666
        %v6811 = vpack.c.b16 %v6670, %v6667
        %v6812 = vpack.c.b16 %v6674, %v6671
        %v6813 = vpack.c.b16 %v6675, %v6672
        %v6814 = vpack.c.b16 %v6676, %v6673
        %v6815 = vpack.c.b16 %v6680, %v6677
        %v6816 = vpack.c.b16 %v6681, %v6678
        %v6817 = vpack.c.b16 %v6682, %v6679
        %v6818 = vpack.c.b16 %v6686, %v6683
        %v6819 = vpack.c.b16 %v6687, %v6684
        %v6820 = vpack.c.b16 %v6688, %v6685
        %v6821 = vpack.c.b16 %v6692, %v6689
        %v6822 = vpack.c.b16 %v6693, %v6690
        %v6823 = vpack.c.b16 %v6694, %v6691
        %v6824 = vpack.c.b16 %v6698, %v6695
        %v6825 = vpack.c.b16 %v6699, %v6696
        %v6826 = vpack.c.b16 %v6700, %v6697
        %v6827 = vpack.c.b16 %v6704, %v6701
        %v6828 = vpack.c.b16 %v6705, %v6702
        %v6829 = vpack.c.b16 %v6706, %v6703
        %v6830 = vpack.c.b16 %v6710, %v6707
        %v6831 = vpack.c.b16 %v6711, %v6708
        %v6832 = vpack.c.b16 %v6712, %v6709
        %v6833 = vpack.c.b16 %v6716, %v6713
        %v6834 = vpack.c.b16 %v6717, %v6714
        %v6835 = vpack.c.b16 %v6718, %v6715
        %v6836 = vpack.c.b16 %v6722, %v6719
        %v6837 = vpack.c.b16 %v6723, %v6720
        %v6838 = vpack.c.b16 %v6724, %v6721
        %v6839 = vpack.c.b16 %v6728, %v6725
        %v6840 = vpack.c.b16 %v6729, %v6726
        %v6841 = vpack.c.b16 %v6730, %v6727
        %v6842 = vpack.c.b16 %v6734, %v6731
        %v6843 = vpack.c.b16 %v6735, %v6732
        %v6844 = vpack.c.b16 %v6736, %v6733
        %v6845 = vpack.c.b16 %v6740, %v6737
        %v6846 = vpack.c.b16 %v6741, %v6738
        %v6847 = vpack.c.b16 %v6742, %v6739
        %v6848 = vpack.c.b16 %v6746, %v6743
        %v6849 = vpack.c.b16 %v6747, %v6744
        %v6850 = vpack.c.b16 %v6748, %v6745
        %v6851 = vpack.c.b16 %v6752, %v6749
        %v6852 = vpack.c.b16 %v6753, %v6750
        %v6853 = vpack.c.b16 %v6754, %v6751
        %v6854 = vpack.c.b16 %v6758, %v6755
        %v6855 = vpack.c.b16 %v6759, %v6756
        %v6856 = vpack.c.b16 %v6760, %v6757
        %v6857 = vpack.c.b16 %v6764, %v6761
        %v6858 = vpack.c.b16 %v6765, %v6762
        %v6859 = vpack.c.b16 %v6766, %v6763
        %v6860 = vpack.c.b16 %v6770, %v6767
        %v6861 = vpack.c.b16 %v6771, %v6768
        %v6862 = vpack.c.b16 %v6772, %v6769
        %v6863 = vpack.c.b16 %v6776, %v6773
        %v6864 = vpack.c.b16 %v6777, %v6774
        %v6865 = vpack.c.b16 %v6778, %v6775
        %v6866 = vpack.c.b16 %v6782, %v6779
        %v6867 = vpack.c.b16 %v6783, %v6780
        %v6868 = vpack.c.b16 %v6784, %v6781
        %v6869 = vpack.c.b16 %v6788, %v6785
        %v6870 = vpack.c.b16 %v6789, %v6786
        %v6871 = vpack.c.b16 %v6790, %v6787
        %v6872 = vpack.c.b16 %v6794, %v6791
        %v6873 = vpack.c.b16 %v6795, %v6792
        %v6874 = vpack.c.b16 %v6796, %v6793
        %v6875 = vpack.c.b16 %v6800, %v6797
        %v6876 = vpack.c.b16 %v6801, %v6798
        %v6877 = vpack.c.b16 %v6802, %v6799
        %v6878 = vpack.c.b16 %v6806, %v6803
        %v6879 = vpack.c.b16 %v6807, %v6804
        %v6880 = vpack.c.b16 %v6808, %v6805
        %6953 = vmatpush.bf16.msra.mxu0 %v6830
        %6954 = vmatpush.bf16.msra.mxu0 %v6827
        %6955 = vmatpush.bf16.msra.mxu0 %v6824
        %6956 = vmatpush.bf16.msra.mxu0 %v6821
        %6957 = vmatpush.bf16.msra.mxu0 %v6818
        %6958 = vmatpush.bf16.msra.mxu0 %v6815
        %6959 = vmatpush.bf16.msra.mxu0 %v6812
        %6960 = vmatpush.bf16.msra.mxu0 %v6809
        %6961 = vmatmul.bf16.gmra.mxu0 %v3262
        %v6962 = vpop.f32.mrf.mxu0
        %v6963 = vadd.f32 %v6341, %v6962
        %v6964 = vpop.f32.mrf.mxu0
        %v6965 = vadd.f32 %v6343, %v6964
        %6966 = vmatmul.bf16.gmra.mxu0 %v3265
        %v6967 = vpop.f32.mrf.mxu0
        %v6968 = vadd.f32 %v6346, %v6967
        %v6969 = vpop.f32.mrf.mxu0
        %v6970 = vadd.f32 %v6348, %v6969
        %6971 = vmatmul.bf16.gmra.mxu0 %v3268
        %v6972 = vpop.f32.mrf.mxu0
        %v6973 = vadd.f32 %v6351, %v6972
        %v6974 = vpop.f32.mrf.mxu0
        %v6975 = vadd.f32 %v6353, %v6974
        %6976 = vmatmul.bf16.gmra.mxu0 %v3271
        %v6977 = vpop.f32.mrf.mxu0
        %v6978 = vadd.f32 %v6356, %v6977
        %v6979 = vpop.f32.mrf.mxu0
        %v6980 = vadd.f32 %v6358, %v6979
        %6981 = vmatmul.bf16.gmra.mxu0 %v3274
        %v6982 = vpop.f32.mrf.mxu0
        %v6983 = vadd.f32 %v6361, %v6982
        %v6984 = vpop.f32.mrf.mxu0
        %v6985 = vadd.f32 %v6363, %v6984
        %6986 = vdwg.mxu0
        %6987 = vmatpush.bf16.msra.mxu0 %v6854
        %6988 = vmatpush.bf16.msra.mxu0 %v6851
        %6989 = vmatpush.bf16.msra.mxu0 %v6848
        %6990 = vmatpush.bf16.msra.mxu0 %v6845
        %6991 = vmatpush.bf16.msra.mxu0 %v6842
        %6992 = vmatpush.bf16.msra.mxu0 %v6839
        %6993 = vmatpush.bf16.msra.mxu0 %v6836
        %6994 = vmatpush.bf16.msra.mxu0 %v6833
        %6995 = vmatmul.bf16.gmra.mxu0 %v3263
        %v6996 = vpop.f32.mrf.mxu0
        %v6997 = vadd.f32 %v6963, %v6996
        %v6998 = vpop.f32.mrf.mxu0
        %v6999 = vadd.f32 %v6965, %v6998
        %7000 = vmatmul.bf16.gmra.mxu0 %v3266
        %v7001 = vpop.f32.mrf.mxu0
        %v7002 = vadd.f32 %v6968, %v7001
        %v7003 = vpop.f32.mrf.mxu0
        %v7004 = vadd.f32 %v6970, %v7003
        %7005 = vmatmul.bf16.gmra.mxu0 %v3269
        %v7006 = vpop.f32.mrf.mxu0
        %v7007 = vadd.f32 %v6973, %v7006
        %v7008 = vpop.f32.mrf.mxu0
        %v7009 = vadd.f32 %v6975, %v7008
        %7010 = vmatmul.bf16.gmra.mxu0 %v3272
        %v7011 = vpop.f32.mrf.mxu0
        %v7012 = vadd.f32 %v6978, %v7011
        %v7013 = vpop.f32.mrf.mxu0
        %v7014 = vadd.f32 %v6980, %v7013
        %7015 = vmatmul.bf16.gmra.mxu0 %v3275
        %v7016 = vpop.f32.mrf.mxu0
        %v7017 = vadd.f32 %v6983, %v7016
        %v7018 = vpop.f32.mrf.mxu0
        %v7019 = vadd.f32 %v6985, %v7018
        %7020 = vdwg.mxu0
        %7021 = vmatpush.bf16.msra.mxu0 %v6878
        %7022 = vmatpush.bf16.msra.mxu0 %v6875
        %7023 = vmatpush.bf16.msra.mxu0 %v6872
        %7024 = vmatpush.bf16.msra.mxu0 %v6869
        %7025 = vmatpush.bf16.msra.mxu0 %v6866
        %7026 = vmatpush.bf16.msra.mxu0 %v6863
        %7027 = vmatpush.bf16.msra.mxu0 %v6860
        %7028 = vmatpush.bf16.msra.mxu0 %v6857
        %7029 = vmatmul.bf16.gmra.mxu0 %v3264
        %v7030 = vpop.f32.mrf.mxu0
        %v7031 = vadd.f32 %v6997, %v7030
        %v7032 = vpop.f32.mrf.mxu0
        %v7033 = vadd.f32 %v6999, %v7032
        %7034 = vmatmul.bf16.gmra.mxu0 %v3267
        %v7035 = vpop.f32.mrf.mxu0
        %v7036 = vadd.f32 %v7002, %v7035
        %v7037 = vpop.f32.mrf.mxu0
        %v7038 = vadd.f32 %v7004, %v7037
        %7039 = vmatmul.bf16.gmra.mxu0 %v3270
        %v7040 = vpop.f32.mrf.mxu0
        %v7041 = vadd.f32 %v7007, %v7040
        %v7042 = vpop.f32.mrf.mxu0
        %v7043 = vadd.f32 %v7009, %v7042
        %7044 = vmatmul.bf16.gmra.mxu0 %v3273
        %v7045 = vpop.f32.mrf.mxu0
        %v7046 = vadd.f32 %v7012, %v7045
        %v7047 = vpop.f32.mrf.mxu0
        %v7048 = vadd.f32 %v7014, %v7047
        %7049 = vmatmul.bf16.gmra.mxu0 %v3276
        %v7050 = vpop.f32.mrf.mxu0
        %v7051 = vadd.f32 %v7017, %v7050
        %v7052 = vpop.f32.mrf.mxu0
        %v7053 = vadd.f32 %v7019, %v7052
        %7054 = vdwg.mxu0
        %7055 = vmatpush.bf16.msra.mxu0 %v6831
        %7056 = vmatpush.bf16.msra.mxu0 %v6828
        %7057 = vmatpush.bf16.msra.mxu0 %v6825
        %7058 = vmatpush.bf16.msra.mxu0 %v6822
        %7059 = vmatpush.bf16.msra.mxu0 %v6819
        %7060 = vmatpush.bf16.msra.mxu0 %v6816
        %7061 = vmatpush.bf16.msra.mxu0 %v6813
        %7062 = vmatpush.bf16.msra.mxu0 %v6810
        %7063 = vmatmul.bf16.gmra.mxu0 %v3262
        %v7064 = vpop.f32.mrf.mxu0
        %v7065 = vadd.f32 %v6443, %v7064
        %v7066 = vpop.f32.mrf.mxu0
        %v7067 = vadd.f32 %v6445, %v7066
        %7068 = vmatmul.bf16.gmra.mxu0 %v3265
        %v7069 = vpop.f32.mrf.mxu0
        %v7070 = vadd.f32 %v6448, %v7069
        %v7071 = vpop.f32.mrf.mxu0
        %v7072 = vadd.f32 %v6450, %v7071
        %7073 = vmatmul.bf16.gmra.mxu0 %v3268
        %v7074 = vpop.f32.mrf.mxu0
        %v7075 = vadd.f32 %v6453, %v7074
        %v7076 = vpop.f32.mrf.mxu0
        %v7077 = vadd.f32 %v6455, %v7076
        %7078 = vmatmul.bf16.gmra.mxu0 %v3271
        %v7079 = vpop.f32.mrf.mxu0
        %v7080 = vadd.f32 %v6458, %v7079
        %v7081 = vpop.f32.mrf.mxu0
        %v7082 = vadd.f32 %v6460, %v7081
        %7083 = vmatmul.bf16.gmra.mxu0 %v3274
        %v7084 = vpop.f32.mrf.mxu0
        %v7085 = vadd.f32 %v6463, %v7084
        %v7086 = vpop.f32.mrf.mxu0
        %v7087 = vadd.f32 %v6465, %v7086
        %7088 = vdwg.mxu0
        %7089 = vmatpush.bf16.msra.mxu0 %v6855
        %7090 = vmatpush.bf16.msra.mxu0 %v6852
        %7091 = vmatpush.bf16.msra.mxu0 %v6849
        %7092 = vmatpush.bf16.msra.mxu0 %v6846
        %7093 = vmatpush.bf16.msra.mxu0 %v6843
        %7094 = vmatpush.bf16.msra.mxu0 %v6840
        %7095 = vmatpush.bf16.msra.mxu0 %v6837
        %7096 = vmatpush.bf16.msra.mxu0 %v6834
        %7097 = vmatmul.bf16.gmra.mxu0 %v3263
        %v7098 = vpop.f32.mrf.mxu0
        %v7099 = vadd.f32 %v7065, %v7098
        %v7100 = vpop.f32.mrf.mxu0
        %v7101 = vadd.f32 %v7067, %v7100
        %7102 = vmatmul.bf16.gmra.mxu0 %v3266
        %v7103 = vpop.f32.mrf.mxu0
        %v7104 = vadd.f32 %v7070, %v7103
        %v7105 = vpop.f32.mrf.mxu0
        %v7106 = vadd.f32 %v7072, %v7105
        %7107 = vmatmul.bf16.gmra.mxu0 %v3269
        %v7108 = vpop.f32.mrf.mxu0
        %v7109 = vadd.f32 %v7075, %v7108
        %v7110 = vpop.f32.mrf.mxu0
        %v7111 = vadd.f32 %v7077, %v7110
        %7112 = vmatmul.bf16.gmra.mxu0 %v3272
        %v7113 = vpop.f32.mrf.mxu0
        %v7114 = vadd.f32 %v7080, %v7113
        %v7115 = vpop.f32.mrf.mxu0
        %v7116 = vadd.f32 %v7082, %v7115
        %7117 = vmatmul.bf16.gmra.mxu0 %v3275
        %v7118 = vpop.f32.mrf.mxu0
        %v7119 = vadd.f32 %v7085, %v7118
        %v7120 = vpop.f32.mrf.mxu0
        %v7121 = vadd.f32 %v7087, %v7120
        %7122 = vdwg.mxu0
        %7123 = vmatpush.bf16.msra.mxu0 %v6879
        %7124 = vmatpush.bf16.msra.mxu0 %v6876
        %7125 = vmatpush.bf16.msra.mxu0 %v6873
        %7126 = vmatpush.bf16.msra.mxu0 %v6870
        %7127 = vmatpush.bf16.msra.mxu0 %v6867
        %7128 = vmatpush.bf16.msra.mxu0 %v6864
        %7129 = vmatpush.bf16.msra.mxu0 %v6861
        %7130 = vmatpush.bf16.msra.mxu0 %v6858
        %7131 = vmatmul.bf16.gmra.mxu0 %v3264
        %v7132 = vpop.f32.mrf.mxu0
        %v7133 = vadd.f32 %v7099, %v7132
        %v7134 = vpop.f32.mrf.mxu0
        %v7135 = vadd.f32 %v7101, %v7134
        %7136 = vmatmul.bf16.gmra.mxu0 %v3267
        %v7137 = vpop.f32.mrf.mxu0
        %v7138 = vadd.f32 %v7104, %v7137
        %v7139 = vpop.f32.mrf.mxu0
        %v7140 = vadd.f32 %v7106, %v7139
        %7141 = vmatmul.bf16.gmra.mxu0 %v3270
        %v7142 = vpop.f32.mrf.mxu0
        %v7143 = vadd.f32 %v7109, %v7142
        %v7144 = vpop.f32.mrf.mxu0
        %v7145 = vadd.f32 %v7111, %v7144
        %7146 = vmatmul.bf16.gmra.mxu0 %v3273
        %v7147 = vpop.f32.mrf.mxu0
        %v7148 = vadd.f32 %v7114, %v7147
        %v7149 = vpop.f32.mrf.mxu0
        %v7150 = vadd.f32 %v7116, %v7149
        %7151 = vmatmul.bf16.gmra.mxu0 %v3276
        %v7152 = vpop.f32.mrf.mxu0
        %v7153 = vadd.f32 %v7119, %v7152
        %v7154 = vpop.f32.mrf.mxu0
        %v7155 = vadd.f32 %v7121, %v7154
        %7156 = vdwg.mxu0
        %7157 = vmatpush.bf16.msra.mxu0 %v6832
        %7158 = vmatpush.bf16.msra.mxu0 %v6829
        %7159 = vmatpush.bf16.msra.mxu0 %v6826
        %7160 = vmatpush.bf16.msra.mxu0 %v6823
        %7161 = vmatpush.bf16.msra.mxu0 %v6820
        %7162 = vmatpush.bf16.msra.mxu0 %v6817
        %7163 = vmatpush.bf16.msra.mxu0 %v6814
        %7164 = vmatpush.bf16.msra.mxu0 %v6811
        %7165 = vmatmul.bf16.gmra.mxu0 %v3262
        %v7166 = vpop.f32.mrf.mxu0
        %v7167 = vadd.f32 %v6545, %v7166
        %v7168 = vpop.f32.mrf.mxu0
        %v7169 = vadd.f32 %v6547, %v7168
        %7170 = vmatmul.bf16.gmra.mxu0 %v3265
        %v7171 = vpop.f32.mrf.mxu0
        %v7172 = vadd.f32 %v6550, %v7171
        %v7173 = vpop.f32.mrf.mxu0
        %v7174 = vadd.f32 %v6552, %v7173
        %7175 = vmatmul.bf16.gmra.mxu0 %v3268
        %v7176 = vpop.f32.mrf.mxu0
        %v7177 = vadd.f32 %v6555, %v7176
        %v7178 = vpop.f32.mrf.mxu0
        %v7179 = vadd.f32 %v6557, %v7178
        %7180 = vmatmul.bf16.gmra.mxu0 %v3271
        %v7181 = vpop.f32.mrf.mxu0
        %v7182 = vadd.f32 %v6560, %v7181
        %v7183 = vpop.f32.mrf.mxu0
        %v7184 = vadd.f32 %v6562, %v7183
        %7185 = vmatmul.bf16.gmra.mxu0 %v3274
        %v7186 = vpop.f32.mrf.mxu0
        %v7187 = vadd.f32 %v6565, %v7186
        %v7188 = vpop.f32.mrf.mxu0
        %v7189 = vadd.f32 %v6567, %v7188
        %7190 = vdwg.mxu0
        %7191 = vmatpush.bf16.msra.mxu0 %v6856
        %7192 = vmatpush.bf16.msra.mxu0 %v6853
        %7193 = vmatpush.bf16.msra.mxu0 %v6850
        %7194 = vmatpush.bf16.msra.mxu0 %v6847
        %7195 = vmatpush.bf16.msra.mxu0 %v6844
        %7196 = vmatpush.bf16.msra.mxu0 %v6841
        %7197 = vmatpush.bf16.msra.mxu0 %v6838
        %7198 = vmatpush.bf16.msra.mxu0 %v6835
        %7199 = vmatmul.bf16.gmra.mxu0 %v3263
        %v7200 = vpop.f32.mrf.mxu0
        %v7201 = vadd.f32 %v7167, %v7200
        %v7202 = vpop.f32.mrf.mxu0
        %v7203 = vadd.f32 %v7169, %v7202
        %7204 = vmatmul.bf16.gmra.mxu0 %v3266
        %v7205 = vpop.f32.mrf.mxu0
        %v7206 = vadd.f32 %v7172, %v7205
        %v7207 = vpop.f32.mrf.mxu0
        %v7208 = vadd.f32 %v7174, %v7207
        %7209 = vmatmul.bf16.gmra.mxu0 %v3269
        %v7210 = vpop.f32.mrf.mxu0
        %v7211 = vadd.f32 %v7177, %v7210
        %v7212 = vpop.f32.mrf.mxu0
        %v7213 = vadd.f32 %v7179, %v7212
        %7214 = vmatmul.bf16.gmra.mxu0 %v3272
        %v7215 = vpop.f32.mrf.mxu0
        %v7216 = vadd.f32 %v7182, %v7215
        %v7217 = vpop.f32.mrf.mxu0
        %v7218 = vadd.f32 %v7184, %v7217
        %7219 = vmatmul.bf16.gmra.mxu0 %v3275
        %v7220 = vpop.f32.mrf.mxu0
        %v7221 = vadd.f32 %v7187, %v7220
        %v7222 = vpop.f32.mrf.mxu0
        %v7223 = vadd.f32 %v7189, %v7222
        %7224 = vdwg.mxu0
        %7225 = vmatpush.bf16.msra.mxu0 %v6880
        %7226 = vmatpush.bf16.msra.mxu0 %v6877
        %7227 = vmatpush.bf16.msra.mxu0 %v6874
        %7228 = vmatpush.bf16.msra.mxu0 %v6871
        %7229 = vmatpush.bf16.msra.mxu0 %v6868
        %7230 = vmatpush.bf16.msra.mxu0 %v6865
        %7231 = vmatpush.bf16.msra.mxu0 %v6862
        %7232 = vmatpush.bf16.msra.mxu0 %v6859
        %7233 = vmatmul.bf16.gmra.mxu0 %v3264
        %v7234 = vpop.f32.mrf.mxu0
        %v7235 = vadd.f32 %v7201, %v7234
        %v7236 = vpop.f32.mrf.mxu0
        %v7237 = vadd.f32 %v7203, %v7236
        %7238 = vmatmul.bf16.gmra.mxu0 %v3267
        %v7239 = vpop.f32.mrf.mxu0
        %v7240 = vadd.f32 %v7206, %v7239
        %v7241 = vpop.f32.mrf.mxu0
        %v7242 = vadd.f32 %v7208, %v7241
        %7243 = vmatmul.bf16.gmra.mxu0 %v3270
        %v7244 = vpop.f32.mrf.mxu0
        %v7245 = vadd.f32 %v7211, %v7244
        %v7246 = vpop.f32.mrf.mxu0
        %v7247 = vadd.f32 %v7213, %v7246
        %7248 = vmatmul.bf16.gmra.mxu0 %v3273
        %v7249 = vpop.f32.mrf.mxu0
        %v7250 = vadd.f32 %v7216, %v7249
        %v7251 = vpop.f32.mrf.mxu0
        %v7252 = vadd.f32 %v7218, %v7251
        %7253 = vmatmul.bf16.gmra.mxu0 %v3276
        %v7254 = vpop.f32.mrf.mxu0
        %v7255 = vadd.f32 %v7221, %v7254
        %v7256 = vpop.f32.mrf.mxu0
        %v7257 = vadd.f32 %v7223, %v7256
        %7258 = vdwg.mxu0
        %s7259 = scalar_lea.vmem %s4, 2880
        %v7260 = vld [vmem:[%s7259] sm:$0xff]
        %v7261 = vld [vmem:[%s7259 + $0x8] sm:$0xf]
        %v7262 = vld [vmem:[%s7259 + $0xc] sm:$0xff]
        %v7263 = vld [vmem:[%s7259 + $0x14] sm:$0xf]
        %v7264 = vld [vmem:[%s7259 + $0x18] sm:$0xff]
        %v7265 = vld [vmem:[%s7259 + $0x20] sm:$0xf]
        %v7266 = vld [vmem:[%s7259 + $0x24] sm:$0xff]
        %v7267 = vld [vmem:[%s7259 + $0x2c] sm:$0xf]
        %v7268 = vld [vmem:[%s7259 + $0x30] sm:$0xff]
        %v7269 = vld [vmem:[%s7259 + $0x38] sm:$0xf]
        %v7270 = vld [vmem:[%s7259 + $0x3c] sm:$0xff]
        %v7271 = vld [vmem:[%s7259 + $0x44] sm:$0xf]
        %v7272 = vld [vmem:[%s7259 + $0x48] sm:$0xff]
        %v7273 = vld [vmem:[%s7259 + $0x50] sm:$0xf]
        %v7274 = vld [vmem:[%s7259 + $0x54] sm:$0xff]
        %v7275 = vld [vmem:[%s7259 + $0x5c] sm:$0xf]
        %v7276 = vld [vmem:[%s7259 + $0x60] sm:$0xff]
        %v7277 = vld [vmem:[%s7259 + $0x68] sm:$0xf]
        %v7278 = vld [vmem:[%s7259 + $0x6c] sm:$0xff]
        %v7279 = vld [vmem:[%s7259 + $0x74] sm:$0xf]
        %v7280 = vld [vmem:[%s7259 + $0x78] sm:$0xff]
        %v7281 = vld [vmem:[%s7259 + $0x80] sm:$0xf]
        %v7282 = vld [vmem:[%s7259 + $0x84] sm:$0xff]
        %v7283 = vld [vmem:[%s7259 + $0x8c] sm:$0xf]
        %v7284 = vld [vmem:[%s7259 + $0x90] sm:$0xff]
        %v7285 = vld [vmem:[%s7259 + $0x98] sm:$0xf]
        %v7286 = vld [vmem:[%s7259 + $0x9c] sm:$0xff]
        %v7287 = vld [vmem:[%s7259 + $0xa4] sm:$0xf]
        %v7288 = vld [vmem:[%s7259 + $0xa8] sm:$0xff]
        %v7289 = vld [vmem:[%s7259 + $0xb0] sm:$0xf]
        %v7290 = vld [vmem:[%s7259 + $0xb4] sm:$0xff]
        %v7291 = vld [vmem:[%s7259 + $0xbc] sm:$0xf]
        %v7292 = vld [vmem:[%s7259 + $0xc0] sm:$0xff]
        %v7293 = vld [vmem:[%s7259 + $0xc8] sm:$0xf]
        %v7294 = vld [vmem:[%s7259 + $0xcc] sm:$0xff]
        %v7295 = vld [vmem:[%s7259 + $0xd4] sm:$0xf]
        %v7296 = vld [vmem:[%s7259 + $0xd8] sm:$0xff]
        %v7297 = vld [vmem:[%s7259 + $0xe0] sm:$0xf]
        %v7298 = vld [vmem:[%s7259 + $0xe4] sm:$0xff]
        %v7299 = vld [vmem:[%s7259 + $0xec] sm:$0xf]
        %v7300 = vld [vmem:[%s7259 + $0xf0] sm:$0xff]
        %v7301 = vld [vmem:[%s7259 + $0xf8] sm:$0xf]
        %v7302 = vld [vmem:[%s7259 + $0xfc] sm:$0xff]
        %v7303 = vld [vmem:[%s7259 + $0x104] sm:$0xf]
        %v7304 = vld [vmem:[%s7259 + $0x108] sm:$0xff]
        %v7305 = vld [vmem:[%s7259 + $0x110] sm:$0xf]
        %v7306 = vld [vmem:[%s7259 + $0x114] sm:$0xff]
        %v7307 = vld [vmem:[%s7259 + $0x11c] sm:$0xf]
        %v7308 = vld [vmem:[%s7259 + $0x120] sm:$0xff]
        %v7309 = vld [vmem:[%s7259 + $0x128] sm:$0xf]
        %v7310 = vld [vmem:[%s7259 + $0x12c] sm:$0xff]
        %v7311 = vld [vmem:[%s7259 + $0x134] sm:$0xf]
        %v7312 = vld [vmem:[%s7259 + $0x138] sm:$0xff]
        %v7313 = vld [vmem:[%s7259 + $0x140] sm:$0xf]
        %v7314 = vld [vmem:[%s7259 + $0x144] sm:$0xff]
        %v7315 = vld [vmem:[%s7259 + $0x14c] sm:$0xf]
        %v7316 = vld [vmem:[%s7259 + $0x150] sm:$0xff]
        %v7317 = vld [vmem:[%s7259 + $0x158] sm:$0xf]
        %v7318 = vld [vmem:[%s7259 + $0x15c] sm:$0xff]
        %v7319 = vld [vmem:[%s7259 + $0x164] sm:$0xf]
        %v7320 = vld [vmem:[%s7259 + $0x168] sm:$0xff]
        %v7321 = vld [vmem:[%s7259 + $0x170] sm:$0xf]
        %v7322 = vld [vmem:[%s7259 + $0x174] sm:$0xff]
        %v7323 = vld [vmem:[%s7259 + $0x17c] sm:$0xf]
        %v7324 = vld [vmem:[%s7259 + $0x180] sm:$0xff]
        %v7325 = vld [vmem:[%s7259 + $0x188] sm:$0xf]
        %v7326 = vld [vmem:[%s7259 + $0x18c] sm:$0xff]
        %v7327 = vld [vmem:[%s7259 + $0x194] sm:$0xf]
        %v7328 = vld [vmem:[%s7259 + $0x198] sm:$0xff]
        %v7329 = vld [vmem:[%s7259 + $0x1a0] sm:$0xf]
        %v7330 = vld [vmem:[%s7259 + $0x1a4] sm:$0xff]
        %v7331 = vld [vmem:[%s7259 + $0x1ac] sm:$0xf]
        %v7332 = vld [vmem:[%s7259 + $0x1b0] sm:$0xff]
        %v7333 = vld [vmem:[%s7259 + $0x1b8] sm:$0xf]
        %v7334 = vld [vmem:[%s7259 + $0x1bc] sm:$0xff]
        %v7335 = vld [vmem:[%s7259 + $0x1c4] sm:$0xf]
        %v7336 = vld [vmem:[%s7259 + $0x1c8] sm:$0xff]
        %v7337 = vld [vmem:[%s7259 + $0x1d0] sm:$0xf]
        %v7338 = vld [vmem:[%s7259 + $0x1d4] sm:$0xff]
        %v7339 = vld [vmem:[%s7259 + $0x1dc] sm:$0xf]
        %v7340 = vld [vmem:[%s7259 + $0x1e0] sm:$0xff]
        %v7341 = vld [vmem:[%s7259 + $0x1e8] sm:$0xf]
        %v7342 = vld [vmem:[%s7259 + $0x1ec] sm:$0xff]
        %v7343 = vld [vmem:[%s7259 + $0x1f4] sm:$0xf]
        %v7344 = vld [vmem:[%s7259 + $0x1f8] sm:$0xff]
        %v7345 = vld [vmem:[%s7259 + $0x200] sm:$0xf]
        %v7346 = vld [vmem:[%s7259 + $0x204] sm:$0xff]
        %v7347 = vld [vmem:[%s7259 + $0x20c] sm:$0xf]
        %v7348 = vld [vmem:[%s7259 + $0x210] sm:$0xff]
        %v7349 = vld [vmem:[%s7259 + $0x218] sm:$0xf]
        %v7350 = vld [vmem:[%s7259 + $0x21c] sm:$0xff]
        %v7351 = vld [vmem:[%s7259 + $0x224] sm:$0xf]
        %v7352 = vld [vmem:[%s7259 + $0x228] sm:$0xff]
        %v7353 = vld [vmem:[%s7259 + $0x230] sm:$0xf]
        %v7354 = vld [vmem:[%s7259 + $0x234] sm:$0xff]
        %v7355 = vld [vmem:[%s7259 + $0x23c] sm:$0xf]
        %v7452 = vunpack.c.l.b16 %v7260
        %v7453 = vunpack.c.h.b16 %v7260
        %v7454 = vunpack.c.l.b16 %v7261
        %v7455 = vunpack.c.l.b16 %v7262
        %v7456 = vunpack.c.h.b16 %v7262
        %v7457 = vunpack.c.l.b16 %v7263
        %v7458 = vunpack.c.l.b16 %v7264
        %v7459 = vunpack.c.h.b16 %v7264
        %v7460 = vunpack.c.l.b16 %v7265
        %v7461 = vunpack.c.l.b16 %v7266
        %v7462 = vunpack.c.h.b16 %v7266
        %v7463 = vunpack.c.l.b16 %v7267
        %v7464 = vunpack.c.l.b16 %v7268
        %v7465 = vunpack.c.h.b16 %v7268
        %v7466 = vunpack.c.l.b16 %v7269
        %v7467 = vunpack.c.l.b16 %v7270
        %v7468 = vunpack.c.h.b16 %v7270
        %v7469 = vunpack.c.l.b16 %v7271
        %v7470 = vunpack.c.l.b16 %v7272
        %v7471 = vunpack.c.h.b16 %v7272
        %v7472 = vunpack.c.l.b16 %v7273
        %v7473 = vunpack.c.l.b16 %v7274
        %v7474 = vunpack.c.h.b16 %v7274
        %v7475 = vunpack.c.l.b16 %v7275
        %v7476 = vunpack.c.l.b16 %v7276
        %v7477 = vunpack.c.h.b16 %v7276
        %v7478 = vunpack.c.l.b16 %v7277
        %v7479 = vunpack.c.l.b16 %v7278
        %v7480 = vunpack.c.h.b16 %v7278
        %v7481 = vunpack.c.l.b16 %v7279
        %v7482 = vunpack.c.l.b16 %v7280
        %v7483 = vunpack.c.h.b16 %v7280
        %v7484 = vunpack.c.l.b16 %v7281
        %v7485 = vunpack.c.l.b16 %v7282
        %v7486 = vunpack.c.h.b16 %v7282
        %v7487 = vunpack.c.l.b16 %v7283
        %v7488 = vunpack.c.l.b16 %v7284
        %v7489 = vunpack.c.h.b16 %v7284
        %v7490 = vunpack.c.l.b16 %v7285
        %v7491 = vunpack.c.l.b16 %v7286
        %v7492 = vunpack.c.h.b16 %v7286
        %v7493 = vunpack.c.l.b16 %v7287
        %v7494 = vunpack.c.l.b16 %v7288
        %v7495 = vunpack.c.h.b16 %v7288
        %v7496 = vunpack.c.l.b16 %v7289
        %v7497 = vunpack.c.l.b16 %v7290
        %v7498 = vunpack.c.h.b16 %v7290
        %v7499 = vunpack.c.l.b16 %v7291
        %v7500 = vunpack.c.l.b16 %v7292
        %v7501 = vunpack.c.h.b16 %v7292
        %v7502 = vunpack.c.l.b16 %v7293
        %v7503 = vunpack.c.l.b16 %v7294
        %v7504 = vunpack.c.h.b16 %v7294
        %v7505 = vunpack.c.l.b16 %v7295
        %v7506 = vunpack.c.l.b16 %v7296
        %v7507 = vunpack.c.h.b16 %v7296
        %v7508 = vunpack.c.l.b16 %v7297
        %v7509 = vunpack.c.l.b16 %v7298
        %v7510 = vunpack.c.h.b16 %v7298
        %v7511 = vunpack.c.l.b16 %v7299
        %v7512 = vunpack.c.l.b16 %v7300
        %v7513 = vunpack.c.h.b16 %v7300
        %v7514 = vunpack.c.l.b16 %v7301
        %v7515 = vunpack.c.l.b16 %v7302
        %v7516 = vunpack.c.h.b16 %v7302
        %v7517 = vunpack.c.l.b16 %v7303
        %v7518 = vunpack.c.l.b16 %v7304
        %v7519 = vunpack.c.h.b16 %v7304
        %v7520 = vunpack.c.l.b16 %v7305
        %v7521 = vunpack.c.l.b16 %v7306
        %v7522 = vunpack.c.h.b16 %v7306
        %v7523 = vunpack.c.l.b16 %v7307
        %v7524 = vunpack.c.l.b16 %v7308
        %v7525 = vunpack.c.h.b16 %v7308
        %v7526 = vunpack.c.l.b16 %v7309
        %v7527 = vunpack.c.l.b16 %v7310
        %v7528 = vunpack.c.h.b16 %v7310
        %v7529 = vunpack.c.l.b16 %v7311
        %v7530 = vunpack.c.l.b16 %v7312
        %v7531 = vunpack.c.h.b16 %v7312
        %v7532 = vunpack.c.l.b16 %v7313
        %v7533 = vunpack.c.l.b16 %v7314
        %v7534 = vunpack.c.h.b16 %v7314
        %v7535 = vunpack.c.l.b16 %v7315
        %v7536 = vunpack.c.l.b16 %v7316
        %v7537 = vunpack.c.h.b16 %v7316
        %v7538 = vunpack.c.l.b16 %v7317
        %v7539 = vunpack.c.l.b16 %v7318
        %v7540 = vunpack.c.h.b16 %v7318
        %v7541 = vunpack.c.l.b16 %v7319
        %v7542 = vunpack.c.l.b16 %v7320
        %v7543 = vunpack.c.h.b16 %v7320
        %v7544 = vunpack.c.l.b16 %v7321
        %v7545 = vunpack.c.l.b16 %v7322
        %v7546 = vunpack.c.h.b16 %v7322
        %v7547 = vunpack.c.l.b16 %v7323
        %v7548 = vunpack.c.l.b16 %v7324
        %v7549 = vunpack.c.h.b16 %v7324
        %v7550 = vunpack.c.l.b16 %v7325
        %v7551 = vunpack.c.l.b16 %v7326
        %v7552 = vunpack.c.h.b16 %v7326
        %v7553 = vunpack.c.l.b16 %v7327
        %v7554 = vunpack.c.l.b16 %v7328
        %v7555 = vunpack.c.h.b16 %v7328
        %v7556 = vunpack.c.l.b16 %v7329
        %v7557 = vunpack.c.l.b16 %v7330
        %v7558 = vunpack.c.h.b16 %v7330
        %v7559 = vunpack.c.l.b16 %v7331
        %v7560 = vunpack.c.l.b16 %v7332
        %v7561 = vunpack.c.h.b16 %v7332
        %v7562 = vunpack.c.l.b16 %v7333
        %v7563 = vunpack.c.l.b16 %v7334
        %v7564 = vunpack.c.h.b16 %v7334
        %v7565 = vunpack.c.l.b16 %v7335
        %v7566 = vunpack.c.l.b16 %v7336
        %v7567 = vunpack.c.h.b16 %v7336
        %v7568 = vunpack.c.l.b16 %v7337
        %v7569 = vunpack.c.l.b16 %v7338
        %v7570 = vunpack.c.h.b16 %v7338
        %v7571 = vunpack.c.l.b16 %v7339
        %v7572 = vunpack.c.l.b16 %v7340
        %v7573 = vunpack.c.h.b16 %v7340
        %v7574 = vunpack.c.l.b16 %v7341
        %v7575 = vunpack.c.l.b16 %v7342
        %v7576 = vunpack.c.h.b16 %v7342
        %v7577 = vunpack.c.l.b16 %v7343
        %v7578 = vunpack.c.l.b16 %v7344
        %v7579 = vunpack.c.h.b16 %v7344
        %v7580 = vunpack.c.l.b16 %v7345
        %v7581 = vunpack.c.l.b16 %v7346
        %v7582 = vunpack.c.h.b16 %v7346
        %v7583 = vunpack.c.l.b16 %v7347
        %v7584 = vunpack.c.l.b16 %v7348
        %v7585 = vunpack.c.h.b16 %v7348
        %v7586 = vunpack.c.l.b16 %v7349
        %v7587 = vunpack.c.l.b16 %v7350
        %v7588 = vunpack.c.h.b16 %v7350
        %v7589 = vunpack.c.l.b16 %v7351
        %v7590 = vunpack.c.l.b16 %v7352
        %v7591 = vunpack.c.h.b16 %v7352
        %v7592 = vunpack.c.l.b16 %v7353
        %v7593 = vunpack.c.l.b16 %v7354
        %v7594 = vunpack.c.h.b16 %v7354
        %v7595 = vunpack.c.l.b16 %v7355
        %v7596 = vpack.c.b16 %v7455, %v7452
        %v7597 = vpack.c.b16 %v7456, %v7453
        %v7598 = vpack.c.b16 %v7457, %v7454
        %v7599 = vpack.c.b16 %v7461, %v7458
        %v7600 = vpack.c.b16 %v7462, %v7459
        %v7601 = vpack.c.b16 %v7463, %v7460
        %v7602 = vpack.c.b16 %v7467, %v7464
        %v7603 = vpack.c.b16 %v7468, %v7465
        %v7604 = vpack.c.b16 %v7469, %v7466
        %v7605 = vpack.c.b16 %v7473, %v7470
        %v7606 = vpack.c.b16 %v7474, %v7471
        %v7607 = vpack.c.b16 %v7475, %v7472
        %v7608 = vpack.c.b16 %v7479, %v7476
        %v7609 = vpack.c.b16 %v7480, %v7477
        %v7610 = vpack.c.b16 %v7481, %v7478
        %v7611 = vpack.c.b16 %v7485, %v7482
        %v7612 = vpack.c.b16 %v7486, %v7483
        %v7613 = vpack.c.b16 %v7487, %v7484
        %v7614 = vpack.c.b16 %v7491, %v7488
        %v7615 = vpack.c.b16 %v7492, %v7489
        %v7616 = vpack.c.b16 %v7493, %v7490
        %v7617 = vpack.c.b16 %v7497, %v7494
        %v7618 = vpack.c.b16 %v7498, %v7495
        %v7619 = vpack.c.b16 %v7499, %v7496
        %v7620 = vpack.c.b16 %v7503, %v7500
        %v7621 = vpack.c.b16 %v7504, %v7501
        %v7622 = vpack.c.b16 %v7505, %v7502
        %v7623 = vpack.c.b16 %v7509, %v7506
        %v7624 = vpack.c.b16 %v7510, %v7507
        %v7625 = vpack.c.b16 %v7511, %v7508
        %v7626 = vpack.c.b16 %v7515, %v7512
        %v7627 = vpack.c.b16 %v7516, %v7513
        %v7628 = vpack.c.b16 %v7517, %v7514
        %v7629 = vpack.c.b16 %v7521, %v7518
        %v7630 = vpack.c.b16 %v7522, %v7519
        %v7631 = vpack.c.b16 %v7523, %v7520
        %v7632 = vpack.c.b16 %v7527, %v7524
        %v7633 = vpack.c.b16 %v7528, %v7525
        %v7634 = vpack.c.b16 %v7529, %v7526
        %v7635 = vpack.c.b16 %v7533, %v7530
        %v7636 = vpack.c.b16 %v7534, %v7531
        %v7637 = vpack.c.b16 %v7535, %v7532
        %v7638 = vpack.c.b16 %v7539, %v7536
        %v7639 = vpack.c.b16 %v7540, %v7537
        %v7640 = vpack.c.b16 %v7541, %v7538
        %v7641 = vpack.c.b16 %v7545, %v7542
        %v7642 = vpack.c.b16 %v7546, %v7543
        %v7643 = vpack.c.b16 %v7547, %v7544
        %v7644 = vpack.c.b16 %v7551, %v7548
        %v7645 = vpack.c.b16 %v7552, %v7549
        %v7646 = vpack.c.b16 %v7553, %v7550
        %v7647 = vpack.c.b16 %v7557, %v7554
        %v7648 = vpack.c.b16 %v7558, %v7555
        %v7649 = vpack.c.b16 %v7559, %v7556
        %v7650 = vpack.c.b16 %v7563, %v7560
        %v7651 = vpack.c.b16 %v7564, %v7561
        %v7652 = vpack.c.b16 %v7565, %v7562
        %v7653 = vpack.c.b16 %v7569, %v7566
        %v7654 = vpack.c.b16 %v7570, %v7567
        %v7655 = vpack.c.b16 %v7571, %v7568
        %v7656 = vpack.c.b16 %v7575, %v7572
        %v7657 = vpack.c.b16 %v7576, %v7573
        %v7658 = vpack.c.b16 %v7577, %v7574
        %v7659 = vpack.c.b16 %v7581, %v7578
        %v7660 = vpack.c.b16 %v7582, %v7579
        %v7661 = vpack.c.b16 %v7583, %v7580
        %v7662 = vpack.c.b16 %v7587, %v7584
        %v7663 = vpack.c.b16 %v7588, %v7585
        %v7664 = vpack.c.b16 %v7589, %v7586
        %v7665 = vpack.c.b16 %v7593, %v7590
        %v7666 = vpack.c.b16 %v7594, %v7591
        %v7667 = vpack.c.b16 %v7595, %v7592
        %7740 = vmatpush.bf16.msra.mxu0 %v7617
        %7741 = vmatpush.bf16.msra.mxu0 %v7614
        %7742 = vmatpush.bf16.msra.mxu0 %v7611
        %7743 = vmatpush.bf16.msra.mxu0 %v7608
        %7744 = vmatpush.bf16.msra.mxu0 %v7605
        %7745 = vmatpush.bf16.msra.mxu0 %v7602
        %7746 = vmatpush.bf16.msra.mxu0 %v7599
        %7747 = vmatpush.bf16.msra.mxu0 %v7596
        %7748 = vmatmul.bf16.gmra.mxu0 %v3265
        %v7749 = vpop.f32.mrf.mxu0
        %v7750 = vadd.f32 0.0, %v7749
        %v7751 = vpop.f32.mrf.mxu0
        %v7752 = vadd.f32 0.0, %v7751
        %7753 = vmatmul.bf16.gmra.mxu0 %v3268
        %v7754 = vpop.f32.mrf.mxu0
        %v7755 = vadd.f32 0.0, %v7754
        %v7756 = vpop.f32.mrf.mxu0
        %v7757 = vadd.f32 0.0, %v7756
        %7758 = vmatmul.bf16.gmra.mxu0 %v3271
        %v7759 = vpop.f32.mrf.mxu0
        %v7760 = vadd.f32 0.0, %v7759
        %v7761 = vpop.f32.mrf.mxu0
        %v7762 = vadd.f32 0.0, %v7761
        %7763 = vmatmul.bf16.gmra.mxu0 %v3274
        %v7764 = vpop.f32.mrf.mxu0
        %v7765 = vadd.f32 0.0, %v7764
        %v7766 = vpop.f32.mrf.mxu0
        %v7767 = vadd.f32 0.0, %v7766
        %7768 = vmatmul.bf16.gmra.mxu0 %v4865
        %v7769 = vpop.f32.mrf.mxu0
        %v7770 = vadd.f32 0.0, %v7769
        %v7771 = vpop.f32.mrf.mxu0
        %v7772 = vadd.f32 0.0, %v7771
        %7773 = vdwg.mxu0
        %7774 = vmatpush.bf16.msra.mxu0 %v7641
        %7775 = vmatpush.bf16.msra.mxu0 %v7638
        %7776 = vmatpush.bf16.msra.mxu0 %v7635
        %7777 = vmatpush.bf16.msra.mxu0 %v7632
        %7778 = vmatpush.bf16.msra.mxu0 %v7629
        %7779 = vmatpush.bf16.msra.mxu0 %v7626
        %7780 = vmatpush.bf16.msra.mxu0 %v7623
        %7781 = vmatpush.bf16.msra.mxu0 %v7620
        %7782 = vmatmul.bf16.gmra.mxu0 %v3266
        %v7783 = vpop.f32.mrf.mxu0
        %v7784 = vadd.f32 %v7750, %v7783
        %v7785 = vpop.f32.mrf.mxu0
        %v7786 = vadd.f32 %v7752, %v7785
        %7787 = vmatmul.bf16.gmra.mxu0 %v3269
        %v7788 = vpop.f32.mrf.mxu0
        %v7789 = vadd.f32 %v7755, %v7788
        %v7790 = vpop.f32.mrf.mxu0
        %v7791 = vadd.f32 %v7757, %v7790
        %7792 = vmatmul.bf16.gmra.mxu0 %v3272
        %v7793 = vpop.f32.mrf.mxu0
        %v7794 = vadd.f32 %v7760, %v7793
        %v7795 = vpop.f32.mrf.mxu0
        %v7796 = vadd.f32 %v7762, %v7795
        %7797 = vmatmul.bf16.gmra.mxu0 %v3275
        %v7798 = vpop.f32.mrf.mxu0
        %v7799 = vadd.f32 %v7765, %v7798
        %v7800 = vpop.f32.mrf.mxu0
        %v7801 = vadd.f32 %v7767, %v7800
        %7802 = vmatmul.bf16.gmra.mxu0 %v4866
        %v7803 = vpop.f32.mrf.mxu0
        %v7804 = vadd.f32 %v7770, %v7803
        %v7805 = vpop.f32.mrf.mxu0
        %v7806 = vadd.f32 %v7772, %v7805
        %7807 = vdwg.mxu0
        %7808 = vmatpush.bf16.msra.mxu0 %v7665
        %7809 = vmatpush.bf16.msra.mxu0 %v7662
        %7810 = vmatpush.bf16.msra.mxu0 %v7659
        %7811 = vmatpush.bf16.msra.mxu0 %v7656
        %7812 = vmatpush.bf16.msra.mxu0 %v7653
        %7813 = vmatpush.bf16.msra.mxu0 %v7650
        %7814 = vmatpush.bf16.msra.mxu0 %v7647
        %7815 = vmatpush.bf16.msra.mxu0 %v7644
        %7816 = vmatmul.bf16.gmra.mxu0 %v3267
        %v7817 = vpop.f32.mrf.mxu0
        %v7818 = vadd.f32 %v7784, %v7817
        %v7819 = vpop.f32.mrf.mxu0
        %v7820 = vadd.f32 %v7786, %v7819
        %7821 = vmatmul.bf16.gmra.mxu0 %v3270
        %v7822 = vpop.f32.mrf.mxu0
        %v7823 = vadd.f32 %v7789, %v7822
        %v7824 = vpop.f32.mrf.mxu0
        %v7825 = vadd.f32 %v7791, %v7824
        %7826 = vmatmul.bf16.gmra.mxu0 %v3273
        %v7827 = vpop.f32.mrf.mxu0
        %v7828 = vadd.f32 %v7794, %v7827
        %v7829 = vpop.f32.mrf.mxu0
        %v7830 = vadd.f32 %v7796, %v7829
        %7831 = vmatmul.bf16.gmra.mxu0 %v3276
        %v7832 = vpop.f32.mrf.mxu0
        %v7833 = vadd.f32 %v7799, %v7832
        %v7834 = vpop.f32.mrf.mxu0
        %v7835 = vadd.f32 %v7801, %v7834
        %7836 = vmatmul.bf16.gmra.mxu0 %v4867
        %v7837 = vpop.f32.mrf.mxu0
        %v7838 = vadd.f32 %v7804, %v7837
        %v7839 = vpop.f32.mrf.mxu0
        %v7840 = vadd.f32 %v7806, %v7839
        %7841 = vdwg.mxu0
        %7842 = vmatpush.bf16.msra.mxu0 %v7618
        %7843 = vmatpush.bf16.msra.mxu0 %v7615
        %7844 = vmatpush.bf16.msra.mxu0 %v7612
        %7845 = vmatpush.bf16.msra.mxu0 %v7609
        %7846 = vmatpush.bf16.msra.mxu0 %v7606
        %7847 = vmatpush.bf16.msra.mxu0 %v7603
        %7848 = vmatpush.bf16.msra.mxu0 %v7600
        %7849 = vmatpush.bf16.msra.mxu0 %v7597
        %7850 = vmatmul.bf16.gmra.mxu0 %v3265
        %v7851 = vpop.f32.mrf.mxu0
        %v7852 = vadd.f32 0.0, %v7851
        %v7853 = vpop.f32.mrf.mxu0
        %v7854 = vadd.f32 0.0, %v7853
        %7855 = vmatmul.bf16.gmra.mxu0 %v3268
        %v7856 = vpop.f32.mrf.mxu0
        %v7857 = vadd.f32 0.0, %v7856
        %v7858 = vpop.f32.mrf.mxu0
        %v7859 = vadd.f32 0.0, %v7858
        %7860 = vmatmul.bf16.gmra.mxu0 %v3271
        %v7861 = vpop.f32.mrf.mxu0
        %v7862 = vadd.f32 0.0, %v7861
        %v7863 = vpop.f32.mrf.mxu0
        %v7864 = vadd.f32 0.0, %v7863
        %7865 = vmatmul.bf16.gmra.mxu0 %v3274
        %v7866 = vpop.f32.mrf.mxu0
        %v7867 = vadd.f32 0.0, %v7866
        %v7868 = vpop.f32.mrf.mxu0
        %v7869 = vadd.f32 0.0, %v7868
        %7870 = vmatmul.bf16.gmra.mxu0 %v4865
        %v7871 = vpop.f32.mrf.mxu0
        %v7872 = vadd.f32 0.0, %v7871
        %v7873 = vpop.f32.mrf.mxu0
        %v7874 = vadd.f32 0.0, %v7873
        %7875 = vdwg.mxu0
        %7876 = vmatpush.bf16.msra.mxu0 %v7642
        %7877 = vmatpush.bf16.msra.mxu0 %v7639
        %7878 = vmatpush.bf16.msra.mxu0 %v7636
        %7879 = vmatpush.bf16.msra.mxu0 %v7633
        %7880 = vmatpush.bf16.msra.mxu0 %v7630
        %7881 = vmatpush.bf16.msra.mxu0 %v7627
        %7882 = vmatpush.bf16.msra.mxu0 %v7624
        %7883 = vmatpush.bf16.msra.mxu0 %v7621
        %7884 = vmatmul.bf16.gmra.mxu0 %v3266
        %v7885 = vpop.f32.mrf.mxu0
        %v7886 = vadd.f32 %v7852, %v7885
        %v7887 = vpop.f32.mrf.mxu0
        %v7888 = vadd.f32 %v7854, %v7887
        %7889 = vmatmul.bf16.gmra.mxu0 %v3269
        %v7890 = vpop.f32.mrf.mxu0
        %v7891 = vadd.f32 %v7857, %v7890
        %v7892 = vpop.f32.mrf.mxu0
        %v7893 = vadd.f32 %v7859, %v7892
        %7894 = vmatmul.bf16.gmra.mxu0 %v3272
        %v7895 = vpop.f32.mrf.mxu0
        %v7896 = vadd.f32 %v7862, %v7895
        %v7897 = vpop.f32.mrf.mxu0
        %v7898 = vadd.f32 %v7864, %v7897
        %7899 = vmatmul.bf16.gmra.mxu0 %v3275
        %v7900 = vpop.f32.mrf.mxu0
        %v7901 = vadd.f32 %v7867, %v7900
        %v7902 = vpop.f32.mrf.mxu0
        %v7903 = vadd.f32 %v7869, %v7902
        %7904 = vmatmul.bf16.gmra.mxu0 %v4866
        %v7905 = vpop.f32.mrf.mxu0
        %v7906 = vadd.f32 %v7872, %v7905
        %v7907 = vpop.f32.mrf.mxu0
        %v7908 = vadd.f32 %v7874, %v7907
        %7909 = vdwg.mxu0
        %7910 = vmatpush.bf16.msra.mxu0 %v7666
        %7911 = vmatpush.bf16.msra.mxu0 %v7663
        %7912 = vmatpush.bf16.msra.mxu0 %v7660
        %7913 = vmatpush.bf16.msra.mxu0 %v7657
        %7914 = vmatpush.bf16.msra.mxu0 %v7654
        %7915 = vmatpush.bf16.msra.mxu0 %v7651
        %7916 = vmatpush.bf16.msra.mxu0 %v7648
        %7917 = vmatpush.bf16.msra.mxu0 %v7645
        %7918 = vmatmul.bf16.gmra.mxu0 %v3267
        %v7919 = vpop.f32.mrf.mxu0
        %v7920 = vadd.f32 %v7886, %v7919
        %v7921 = vpop.f32.mrf.mxu0
        %v7922 = vadd.f32 %v7888, %v7921
        %7923 = vmatmul.bf16.gmra.mxu0 %v3270
        %v7924 = vpop.f32.mrf.mxu0
        %v7925 = vadd.f32 %v7891, %v7924
        %v7926 = vpop.f32.mrf.mxu0
        %v7927 = vadd.f32 %v7893, %v7926
        %7928 = vmatmul.bf16.gmra.mxu0 %v3273
        %v7929 = vpop.f32.mrf.mxu0
        %v7930 = vadd.f32 %v7896, %v7929
        %v7931 = vpop.f32.mrf.mxu0
        %v7932 = vadd.f32 %v7898, %v7931
        %7933 = vmatmul.bf16.gmra.mxu0 %v3276
        %v7934 = vpop.f32.mrf.mxu0
        %v7935 = vadd.f32 %v7901, %v7934
        %v7936 = vpop.f32.mrf.mxu0
        %v7937 = vadd.f32 %v7903, %v7936
        %7938 = vmatmul.bf16.gmra.mxu0 %v4867
        %v7939 = vpop.f32.mrf.mxu0
        %v7940 = vadd.f32 %v7906, %v7939
        %v7941 = vpop.f32.mrf.mxu0
        %v7942 = vadd.f32 %v7908, %v7941
        %7943 = vdwg.mxu0
        %7944 = vmatpush.bf16.msra.mxu0 %v7619
        %7945 = vmatpush.bf16.msra.mxu0 %v7616
        %7946 = vmatpush.bf16.msra.mxu0 %v7613
        %7947 = vmatpush.bf16.msra.mxu0 %v7610
        %7948 = vmatpush.bf16.msra.mxu0 %v7607
        %7949 = vmatpush.bf16.msra.mxu0 %v7604
        %7950 = vmatpush.bf16.msra.mxu0 %v7601
        %7951 = vmatpush.bf16.msra.mxu0 %v7598
        %7952 = vmatmul.bf16.gmra.mxu0 %v3265
        %v7953 = vpop.f32.mrf.mxu0
        %v7954 = vadd.f32 0.0, %v7953
        %v7955 = vpop.f32.mrf.mxu0
        %v7956 = vadd.f32 0.0, %v7955
        %7957 = vmatmul.bf16.gmra.mxu0 %v3268
        %v7958 = vpop.f32.mrf.mxu0
        %v7959 = vadd.f32 0.0, %v7958
        %v7960 = vpop.f32.mrf.mxu0
        %v7961 = vadd.f32 0.0, %v7960
        %7962 = vmatmul.bf16.gmra.mxu0 %v3271
        %v7963 = vpop.f32.mrf.mxu0
        %v7964 = vadd.f32 0.0, %v7963
        %v7965 = vpop.f32.mrf.mxu0
        %v7966 = vadd.f32 0.0, %v7965
        %7967 = vmatmul.bf16.gmra.mxu0 %v3274
        %v7968 = vpop.f32.mrf.mxu0
        %v7969 = vadd.f32 0.0, %v7968
        %v7970 = vpop.f32.mrf.mxu0
        %v7971 = vadd.f32 0.0, %v7970
        %7972 = vmatmul.bf16.gmra.mxu0 %v4865
        %v7973 = vpop.f32.mrf.mxu0
        %v7974 = vadd.f32 0.0, %v7973
        %v7975 = vpop.f32.mrf.mxu0
        %v7976 = vadd.f32 0.0, %v7975
        %7977 = vdwg.mxu0
        %7978 = vmatpush.bf16.msra.mxu0 %v7643
        %7979 = vmatpush.bf16.msra.mxu0 %v7640
        %7980 = vmatpush.bf16.msra.mxu0 %v7637
        %7981 = vmatpush.bf16.msra.mxu0 %v7634
        %7982 = vmatpush.bf16.msra.mxu0 %v7631
        %7983 = vmatpush.bf16.msra.mxu0 %v7628
        %7984 = vmatpush.bf16.msra.mxu0 %v7625
        %7985 = vmatpush.bf16.msra.mxu0 %v7622
        %7986 = vmatmul.bf16.gmra.mxu0 %v3266
        %v7987 = vpop.f32.mrf.mxu0
        %v7988 = vadd.f32 %v7954, %v7987
        %v7989 = vpop.f32.mrf.mxu0
        %v7990 = vadd.f32 %v7956, %v7989
        %7991 = vmatmul.bf16.gmra.mxu0 %v3269
        %v7992 = vpop.f32.mrf.mxu0
        %v7993 = vadd.f32 %v7959, %v7992
        %v7994 = vpop.f32.mrf.mxu0
        %v7995 = vadd.f32 %v7961, %v7994
        %7996 = vmatmul.bf16.gmra.mxu0 %v3272
        %v7997 = vpop.f32.mrf.mxu0
        %v7998 = vadd.f32 %v7964, %v7997
        %v7999 = vpop.f32.mrf.mxu0
        %v8000 = vadd.f32 %v7966, %v7999
        %8001 = vmatmul.bf16.gmra.mxu0 %v3275
        %v8002 = vpop.f32.mrf.mxu0
        %v8003 = vadd.f32 %v7969, %v8002
        %v8004 = vpop.f32.mrf.mxu0
        %v8005 = vadd.f32 %v7971, %v8004
        %8006 = vmatmul.bf16.gmra.mxu0 %v4866
        %v8007 = vpop.f32.mrf.mxu0
        %v8008 = vadd.f32 %v7974, %v8007
        %v8009 = vpop.f32.mrf.mxu0
        %v8010 = vadd.f32 %v7976, %v8009
        %8011 = vdwg.mxu0
        %8012 = vmatpush.bf16.msra.mxu0 %v7667
        %8013 = vmatpush.bf16.msra.mxu0 %v7664
        %8014 = vmatpush.bf16.msra.mxu0 %v7661
        %8015 = vmatpush.bf16.msra.mxu0 %v7658
        %8016 = vmatpush.bf16.msra.mxu0 %v7655
        %8017 = vmatpush.bf16.msra.mxu0 %v7652
        %8018 = vmatpush.bf16.msra.mxu0 %v7649
        %8019 = vmatpush.bf16.msra.mxu0 %v7646
        %8020 = vmatmul.bf16.gmra.mxu0 %v3267
        %v8021 = vpop.f32.mrf.mxu0
        %v8022 = vadd.f32 %v7988, %v8021
        %v8023 = vpop.f32.mrf.mxu0
        %v8024 = vadd.f32 %v7990, %v8023
        %8025 = vmatmul.bf16.gmra.mxu0 %v3270
        %v8026 = vpop.f32.mrf.mxu0
        %v8027 = vadd.f32 %v7993, %v8026
        %v8028 = vpop.f32.mrf.mxu0
        %v8029 = vadd.f32 %v7995, %v8028
        %8030 = vmatmul.bf16.gmra.mxu0 %v3273
        %v8031 = vpop.f32.mrf.mxu0
        %v8032 = vadd.f32 %v7998, %v8031
        %v8033 = vpop.f32.mrf.mxu0
        %v8034 = vadd.f32 %v8000, %v8033
        %8035 = vmatmul.bf16.gmra.mxu0 %v3276
        %v8036 = vpop.f32.mrf.mxu0
        %v8037 = vadd.f32 %v8003, %v8036
        %v8038 = vpop.f32.mrf.mxu0
        %v8039 = vadd.f32 %v8005, %v8038
        %8040 = vmatmul.bf16.gmra.mxu0 %v4867
        %v8041 = vpop.f32.mrf.mxu0
        %v8042 = vadd.f32 %v8008, %v8041
        %v8043 = vpop.f32.mrf.mxu0
        %v8044 = vadd.f32 %v8010, %v8043
        %8045 = vdwg.mxu0
        %v8046 = vadd.f32 %v7031, %v7818
        %v8047 = vadd.f32 %v7133, %v7920
        %v8048 = vadd.f32 %v7235, %v8022
        %v8049 = vadd.f32 %v7033, %v7820
        %v8050 = vadd.f32 %v7135, %v7922
        %v8051 = vadd.f32 %v7237, %v8024
        %v8052 = vadd.f32 %v7036, %v7823
        %v8053 = vadd.f32 %v7138, %v7925
        %v8054 = vadd.f32 %v7240, %v8027
        %v8055 = vadd.f32 %v7038, %v7825
        %v8056 = vadd.f32 %v7140, %v7927
        %v8057 = vadd.f32 %v7242, %v8029
        %v8058 = vadd.f32 %v7041, %v7828
        %v8059 = vadd.f32 %v7143, %v7930
        %v8060 = vadd.f32 %v7245, %v8032
        %v8061 = vadd.f32 %v7043, %v7830
        %v8062 = vadd.f32 %v7145, %v7932
        %v8063 = vadd.f32 %v7247, %v8034
        %v8064 = vadd.f32 %v7046, %v7833
        %v8065 = vadd.f32 %v7148, %v7935
        %v8066 = vadd.f32 %v7250, %v8037
        %v8067 = vadd.f32 %v7048, %v7835
        %v8068 = vadd.f32 %v7150, %v7937
        %v8069 = vadd.f32 %v7252, %v8039
        %v8070 = vadd.f32 %v7051, %v7838
        %v8071 = vadd.f32 %v7153, %v7940
        %v8072 = vadd.f32 %v7255, %v8042
        %v8073 = vadd.f32 %v7053, %v7840
        %v8074 = vadd.f32 %v7155, %v7942
        %v8075 = vadd.f32 %v7257, %v8044
        %v8076 = vmax.f32 %v5655, %v8046
        %v8077 = vmax.f32 %v5656, %v8047
        %v8078 = vmax.f32 %v5657, %v8048
        %v8079 = vmax.f32 %v5658, %v8049
        %v8080 = vmax.f32 %v5659, %v8050
        %v8081 = vmax.f32 %v5660, %v8051
        %v8082 = vmax.f32 %v5661, %v8052
        %v8083 = vmax.f32 %v5662, %v8053
        %v8084 = vmax.f32 %v5663, %v8054
        %v8085 = vmax.f32 %v5664, %v8055
        %v8086 = vmax.f32 %v5665, %v8056
        %v8087 = vmax.f32 %v5666, %v8057
        %v8088 = vmax.f32 %v5667, %v8058
        %v8089 = vmax.f32 %v5668, %v8059
        %v8090 = vmax.f32 %v5669, %v8060
        %v8091 = vmax.f32 %v5670, %v8061
        %v8092 = vmax.f32 %v5671, %v8062
        %v8093 = vmax.f32 %v5672, %v8063
        %v8094 = vmax.f32 %v5673, %v8064
        %v8095 = vmax.f32 %v5674, %v8065
        %v8096 = vmax.f32 %v5675, %v8066
        %v8097 = vmax.f32 %v5676, %v8067
        %v8098 = vmax.f32 %v5677, %v8068
        %v8099 = vmax.f32 %v5678, %v8069
        %v8100 = vmax.f32 %v5679, %v8070
        %v8101 = vmax.f32 %v5680, %v8071
        %v8102 = vmax.f32 %v5681, %v8072
        %v8103 = vmax.f32 %v5682, %v8073
        %v8104 = vmax.f32 %v5683, %v8074
        %v8105 = vmax.f32 %v5684, %v8075
        %v8106 = vld [vmem:[%s6] sm:$0xff]
        %v8107 = vld [vmem:[%s6 + $0x8] sm:$0xff]
        %v8108 = vld [vmem:[%s6 + $0x10] sm:$0xff]
        %v8109 = vld [vmem:[%s6 + $0x18] sm:$0xff]
        %v8110 = vld [vmem:[%s6 + $0x20] sm:$0xff]
        %vm8111 = vcmask 654336
        %v8113 = vsel %vm8111, %v8106, 0
        %v8116 = vsel %vm8111, %v8107, 0
        %v8119 = vsel %vm8111, %v8108, 0
        %v8122 = vsel %vm8111, %v8109, 0
        %v8125 = vsel %vm8111, %v8110, 0
        %8127 = vmatpush.msra.mxu0 0.0
        %8128 = vmatpush.msra.mxu0 0.0
        %8129 = vmatpush.msra.mxu0 0.0
        %8130 = vmatpush.msra.mxu0 0.0
        %8131 = vmatpush.msra.mxu0 0.0
        %8132 = vmatpush.msra.mxu0 0.0
        %8133 = vmatpush.msra.mxu0 %v8103
        %8134 = vmatpush.msra.mxu0 %v8100
        %8135 = vmatpush.msra.mxu0 %v8097
        %8136 = vmatpush.msra.mxu0 %v8094
        %8137 = vmatpush.msra.mxu0 %v8091
        %8138 = vmatpush.msra.mxu0 %v8088
        %8139 = vmatpush.msra.mxu0 %v8085
        %8140 = vmatpush.msra.mxu0 %v8082
        %8141 = vmatpush.msra.mxu0 %v8079
        %8142 = vmatpush.msra.mxu0 %v8076
        %8143 = vmatmul.f32.gmra.mxu0 %v8113
        %v8144 = vpop.f32.mrf.mxu0
        %v8145 = vadd.f32 0.0, %v8144
        %8146 = vmatmul.f32.gmra.mxu0 %v8116
        %v8147 = vpop.f32.mrf.mxu0
        %v8148 = vadd.f32 0.0, %v8147
        %8149 = vmatmul.f32.gmra.mxu0 %v8119
        %v8150 = vpop.f32.mrf.mxu0
        %v8151 = vadd.f32 0.0, %v8150
        %8152 = vmatmul.f32.gmra.mxu0 %v8122
        %v8153 = vpop.f32.mrf.mxu0
        %v8154 = vadd.f32 0.0, %v8153
        %8155 = vmatmul.f32.gmra.mxu0 %v8125
        %v8156 = vpop.f32.mrf.mxu0
        %v8157 = vadd.f32 0.0, %v8156
        %8158 = vdwg.mxu0
        %8159 = vmatpush.msra.mxu0 0.0
        %8160 = vmatpush.msra.mxu0 0.0
        %8161 = vmatpush.msra.mxu0 0.0
        %8162 = vmatpush.msra.mxu0 0.0
        %8163 = vmatpush.msra.mxu0 0.0
        %8164 = vmatpush.msra.mxu0 0.0
        %8165 = vmatpush.msra.mxu0 %v8104
        %8166 = vmatpush.msra.mxu0 %v8101
        %8167 = vmatpush.msra.mxu0 %v8098
        %8168 = vmatpush.msra.mxu0 %v8095
        %8169 = vmatpush.msra.mxu0 %v8092
        %8170 = vmatpush.msra.mxu0 %v8089
        %8171 = vmatpush.msra.mxu0 %v8086
        %8172 = vmatpush.msra.mxu0 %v8083
        %8173 = vmatpush.msra.mxu0 %v8080
        %8174 = vmatpush.msra.mxu0 %v8077
        %8175 = vmatmul.f32.gmra.mxu0 %v8113
        %v8176 = vpop.f32.mrf.mxu0
        %v8177 = vadd.f32 0.0, %v8176
        %8178 = vmatmul.f32.gmra.mxu0 %v8116
        %v8179 = vpop.f32.mrf.mxu0
        %v8180 = vadd.f32 0.0, %v8179
        %8181 = vmatmul.f32.gmra.mxu0 %v8119
        %v8182 = vpop.f32.mrf.mxu0
        %v8183 = vadd.f32 0.0, %v8182
        %8184 = vmatmul.f32.gmra.mxu0 %v8122
        %v8185 = vpop.f32.mrf.mxu0
        %v8186 = vadd.f32 0.0, %v8185
        %8187 = vmatmul.f32.gmra.mxu0 %v8125
        %v8188 = vpop.f32.mrf.mxu0
        %v8189 = vadd.f32 0.0, %v8188
        %8190 = vdwg.mxu0
        %8191 = vmatpush.msra.mxu0 0.0
        %8192 = vmatpush.msra.mxu0 0.0
        %8193 = vmatpush.msra.mxu0 0.0
        %8194 = vmatpush.msra.mxu0 0.0
        %8195 = vmatpush.msra.mxu0 0.0
        %8196 = vmatpush.msra.mxu0 0.0
        %8197 = vmatpush.msra.mxu0 %v8105
        %8198 = vmatpush.msra.mxu0 %v8102
        %8199 = vmatpush.msra.mxu0 %v8099
        %8200 = vmatpush.msra.mxu0 %v8096
        %8201 = vmatpush.msra.mxu0 %v8093
        %8202 = vmatpush.msra.mxu0 %v8090
        %8203 = vmatpush.msra.mxu0 %v8087
        %8204 = vmatpush.msra.mxu0 %v8084
        %8205 = vmatpush.msra.mxu0 %v8081
        %8206 = vmatpush.msra.mxu0 %v8078
        %8207 = vmatmul.f32.gmra.mxu0 %v8113
        %v8208 = vpop.f32.mrf.mxu0
        %v8209 = vadd.f32 0.0, %v8208
        %8210 = vmatmul.f32.gmra.mxu0 %v8116
        %v8211 = vpop.f32.mrf.mxu0
        %v8212 = vadd.f32 0.0, %v8211
        %8213 = vmatmul.f32.gmra.mxu0 %v8119
        %v8214 = vpop.f32.mrf.mxu0
        %v8215 = vadd.f32 0.0, %v8214
        %8216 = vmatmul.f32.gmra.mxu0 %v8122
        %v8217 = vpop.f32.mrf.mxu0
        %v8218 = vadd.f32 0.0, %v8217
        %8219 = vmatmul.f32.gmra.mxu0 %v8125
        %v8220 = vpop.f32.mrf.mxu0
        %v8221 = vadd.f32 0.0, %v8220
        %8222 = vdwg.mxu0
        %s8223 = scalar_lea.vmem %s6, 40
        %v8224 = vld [vmem:[%s8223] sm:$0xff]
        %v8225 = vld [vmem:[%s8223 + $0x8] sm:$0xff]
        %v8226 = vld [vmem:[%s8223 + $0x10] sm:$0xff]
        %v8227 = vld [vmem:[%s8223 + $0x18] sm:$0xff]
        %v8228 = vld [vmem:[%s8223 + $0x20] sm:$0xff]
        %v8230 = vsel %vm8111, %v8224, 0
        %v8233 = vsel %vm8111, %v8225, 0
        %v8236 = vsel %vm8111, %v8226, 0
        %v8239 = vsel %vm8111, %v8227, 0
        %v8242 = vsel %vm8111, %v8228, 0
        %8244 = vmatpush.msra.mxu0 0.0
        %8245 = vmatpush.msra.mxu0 0.0
        %8246 = vmatpush.msra.mxu0 0.0
        %8247 = vmatpush.msra.mxu0 0.0
        %8248 = vmatpush.msra.mxu0 0.0
        %8249 = vmatpush.msra.mxu0 0.0
        %8250 = vmatpush.msra.mxu0 %v8103
        %8251 = vmatpush.msra.mxu0 %v8100
        %8252 = vmatpush.msra.mxu0 %v8097
        %8253 = vmatpush.msra.mxu0 %v8094
        %8254 = vmatpush.msra.mxu0 %v8091
        %8255 = vmatpush.msra.mxu0 %v8088
        %8256 = vmatpush.msra.mxu0 %v8085
        %8257 = vmatpush.msra.mxu0 %v8082
        %8258 = vmatpush.msra.mxu0 %v8079
        %8259 = vmatpush.msra.mxu0 %v8076
        %8260 = vmatmul.f32.gmra.mxu0 %v8230
        %v8261 = vpop.f32.mrf.mxu0
        %v8262 = vadd.f32 0.0, %v8261
        %8263 = vmatmul.f32.gmra.mxu0 %v8233
        %v8264 = vpop.f32.mrf.mxu0
        %v8265 = vadd.f32 0.0, %v8264
        %8266 = vmatmul.f32.gmra.mxu0 %v8236
        %v8267 = vpop.f32.mrf.mxu0
        %v8268 = vadd.f32 0.0, %v8267
        %8269 = vmatmul.f32.gmra.mxu0 %v8239
        %v8270 = vpop.f32.mrf.mxu0
        %v8271 = vadd.f32 0.0, %v8270
        %8272 = vmatmul.f32.gmra.mxu0 %v8242
        %v8273 = vpop.f32.mrf.mxu0
        %v8274 = vadd.f32 0.0, %v8273
        %8275 = vdwg.mxu0
        %8276 = vmatpush.msra.mxu0 0.0
        %8277 = vmatpush.msra.mxu0 0.0
        %8278 = vmatpush.msra.mxu0 0.0
        %8279 = vmatpush.msra.mxu0 0.0
        %8280 = vmatpush.msra.mxu0 0.0
        %8281 = vmatpush.msra.mxu0 0.0
        %8282 = vmatpush.msra.mxu0 %v8104
        %8283 = vmatpush.msra.mxu0 %v8101
        %8284 = vmatpush.msra.mxu0 %v8098
        %8285 = vmatpush.msra.mxu0 %v8095
        %8286 = vmatpush.msra.mxu0 %v8092
        %8287 = vmatpush.msra.mxu0 %v8089
        %8288 = vmatpush.msra.mxu0 %v8086
        %8289 = vmatpush.msra.mxu0 %v8083
        %8290 = vmatpush.msra.mxu0 %v8080
        %8291 = vmatpush.msra.mxu0 %v8077
        %8292 = vmatmul.f32.gmra.mxu0 %v8230
        %v8293 = vpop.f32.mrf.mxu0
        %v8294 = vadd.f32 0.0, %v8293
        %8295 = vmatmul.f32.gmra.mxu0 %v8233
        %v8296 = vpop.f32.mrf.mxu0
        %v8297 = vadd.f32 0.0, %v8296
        %8298 = vmatmul.f32.gmra.mxu0 %v8236
        %v8299 = vpop.f32.mrf.mxu0
        %v8300 = vadd.f32 0.0, %v8299
        %8301 = vmatmul.f32.gmra.mxu0 %v8239
        %v8302 = vpop.f32.mrf.mxu0
        %v8303 = vadd.f32 0.0, %v8302
        %8304 = vmatmul.f32.gmra.mxu0 %v8242
        %v8305 = vpop.f32.mrf.mxu0
        %v8306 = vadd.f32 0.0, %v8305
        %8307 = vdwg.mxu0
        %8308 = vmatpush.msra.mxu0 0.0
        %8309 = vmatpush.msra.mxu0 0.0
        %8310 = vmatpush.msra.mxu0 0.0
        %8311 = vmatpush.msra.mxu0 0.0
        %8312 = vmatpush.msra.mxu0 0.0
        %8313 = vmatpush.msra.mxu0 0.0
        %8314 = vmatpush.msra.mxu0 %v8105
        %8315 = vmatpush.msra.mxu0 %v8102
        %8316 = vmatpush.msra.mxu0 %v8099
        %8317 = vmatpush.msra.mxu0 %v8096
        %8318 = vmatpush.msra.mxu0 %v8093
        %8319 = vmatpush.msra.mxu0 %v8090
        %8320 = vmatpush.msra.mxu0 %v8087
        %8321 = vmatpush.msra.mxu0 %v8084
        %8322 = vmatpush.msra.mxu0 %v8081
        %8323 = vmatpush.msra.mxu0 %v8078
        %8324 = vmatmul.f32.gmra.mxu0 %v8230
        %v8325 = vpop.f32.mrf.mxu0
        %v8326 = vadd.f32 0.0, %v8325
        %8327 = vmatmul.f32.gmra.mxu0 %v8233
        %v8328 = vpop.f32.mrf.mxu0
        %v8329 = vadd.f32 0.0, %v8328
        %8330 = vmatmul.f32.gmra.mxu0 %v8236
        %v8331 = vpop.f32.mrf.mxu0
        %v8332 = vadd.f32 0.0, %v8331
        %8333 = vmatmul.f32.gmra.mxu0 %v8239
        %v8334 = vpop.f32.mrf.mxu0
        %v8335 = vadd.f32 0.0, %v8334
        %8336 = vmatmul.f32.gmra.mxu0 %v8242
        %v8337 = vpop.f32.mrf.mxu0
        %v8338 = vadd.f32 0.0, %v8337
        %8339 = vdwg.mxu0
        %v8340 = vmax.f32 %v8145, %v8262
        %v8341 = vmax.f32 %v8177, %v8294
        %v8342 = vmax.f32 %v8209, %v8326
        %v8343 = vmax.f32 %v8148, %v8265
        %v8344 = vmax.f32 %v8180, %v8297
        %v8345 = vmax.f32 %v8212, %v8329
        %v8346 = vmax.f32 %v8151, %v8268
        %v8347 = vmax.f32 %v8183, %v8300
        %v8348 = vmax.f32 %v8215, %v8332
        %v8349 = vmax.f32 %v8154, %v8271
        %v8350 = vmax.f32 %v8186, %v8303
        %v8351 = vmax.f32 %v8218, %v8335
        %v8352 = vmax.f32 %v8157, %v8274
        %v8353 = vmax.f32 %v8189, %v8306
        %v8354 = vmax.f32 %v8221, %v8338
        %v8355 = vld [vmem:[%s5] sm:$0x7]
        %v8357 = vperm.slane %v8355, 0
        %v8358 = vperm.slane %v8355, 1
        %v8359 = vperm.slane %v8355, 2
        %v8363 = vadd.f32 %v8340, %v8357
        %v8364 = vadd.f32 %v8341, %v8358
        %v8365 = vadd.f32 %v8342, %v8359
        %v8366 = vadd.f32 %v8343, %v8357
        %v8367 = vadd.f32 %v8344, %v8358
        %v8368 = vadd.f32 %v8345, %v8359
        %v8369 = vadd.f32 %v8346, %v8357
        %v8370 = vadd.f32 %v8347, %v8358
        %v8371 = vadd.f32 %v8348, %v8359
        %v8372 = vadd.f32 %v8349, %v8357
        %v8373 = vadd.f32 %v8350, %v8358
        %v8374 = vadd.f32 %v8351, %v8359
        %v8375 = vadd.f32 %v8352, %v8357
        %v8376 = vadd.f32 %v8353, %v8358
        %v8377 = vadd.f32 %v8354, %v8359
        %v8378 = vmax.f32 %v8363, 0.0
        %v8379 = vmax.f32 %v8364, 0.0
        %v8380 = vmax.f32 %v8365, 0.0
        %v8381 = vmax.f32 %v8366, 0.0
        %v8382 = vmax.f32 %v8367, 0.0
        %v8383 = vmax.f32 %v8368, 0.0
        %v8384 = vmax.f32 %v8369, 0.0
        %v8385 = vmax.f32 %v8370, 0.0
        %v8386 = vmax.f32 %v8371, 0.0
        %v8387 = vmax.f32 %v8372, 0.0
        %v8388 = vmax.f32 %v8373, 0.0
        %v8389 = vmax.f32 %v8374, 0.0
        %v8390 = vmax.f32 %v8375, 0.0
        %v8391 = vmax.f32 %v8376, 0.0
        %v8392 = vmax.f32 %v8377, 0.0
        %v8393 = vpack.c.bf16 %v8378, %v8378
        %v8394 = vpack.c.bf16 %v8379, %v8379
        %v8395 = vpack.c.bf16 %v8380, %v8380
        %v8396 = vld [vmem:[%s7] sm:$0xf]
        %v8397 = vld [vmem:[%s7 + $0x4] sm:$0xf]
        %v8398 = vld [vmem:[%s7 + $0x8] sm:$0xf]
        %v8399 = vld [vmem:[%s7 + $0xc] sm:$0xf]
        %v8400 = vld [vmem:[%s7 + $0x10] sm:$0xf]
        %v8401 = vld [vmem:[%s7 + $0x14] sm:$0xf]
        %v8402 = vld [vmem:[%s7 + $0x18] sm:$0xf]
        %v8403 = vld [vmem:[%s7 + $0x1c] sm:$0xf]
        %v8404 = vld [vmem:[%s7 + $0x20] sm:$0xf]
        %v8405 = vld [vmem:[%s7 + $0x24] sm:$0xf]
        %v8406 = vld [vmem:[%s7 + $0x28] sm:$0xf]
        %v8407 = vld [vmem:[%s7 + $0x2c] sm:$0xf]
        %v8408 = vld [vmem:[%s7 + $0x30] sm:$0xf]
        %v8409 = vld [vmem:[%s7 + $0x34] sm:$0xf]
        %v8410 = vld [vmem:[%s7 + $0x38] sm:$0xf]
        %v8411 = vld [vmem:[%s7 + $0x3c] sm:$0xf]
        %v8412 = vld [vmem:[%s7 + $0x40] sm:$0xf]
        %v8413 = vld [vmem:[%s7 + $0x44] sm:$0xf]
        %v8414 = vld [vmem:[%s7 + $0x48] sm:$0xf]
        %v8415 = vld [vmem:[%s7 + $0x4c] sm:$0xf]
        %v8416 = vld [vmem:[%s7 + $0x50] sm:$0xf]
        %v8417 = vld [vmem:[%s7 + $0x54] sm:$0xf]
        %v8418 = vld [vmem:[%s7 + $0x58] sm:$0xf]
        %v8419 = vld [vmem:[%s7 + $0x5c] sm:$0xf]
        %v8420 = vld [vmem:[%s7 + $0x60] sm:$0xf]
        %v8421 = vld [vmem:[%s7 + $0x64] sm:$0xf]
        %v8422 = vld [vmem:[%s7 + $0x68] sm:$0xf]
        %v8423 = vld [vmem:[%s7 + $0x6c] sm:$0xf]
        %v8424 = vld [vmem:[%s7 + $0x70] sm:$0xf]
        %v8425 = vld [vmem:[%s7 + $0x74] sm:$0xf]
        %v8426 = vld [vmem:[%s7 + $0x78] sm:$0xf]
        %v8427 = vld [vmem:[%s7 + $0x7c] sm:$0xf]
        %v8428 = vld [vmem:[%s7 + $0x80] sm:$0xf]
        %v8429 = vld [vmem:[%s7 + $0x84] sm:$0xf]
        %v8430 = vld [vmem:[%s7 + $0x88] sm:$0xf]
        %v8431 = vld [vmem:[%s7 + $0x8c] sm:$0xf]
        %v8432 = vld [vmem:[%s7 + $0x90] sm:$0xf]
        %v8433 = vld [vmem:[%s7 + $0x94] sm:$0xf]
        %v8434 = vld [vmem:[%s7 + $0x98] sm:$0xf]
        %v8435 = vld [vmem:[%s7 + $0x9c] sm:$0xf]
        %v8436 = vpack.c.bf16 %v8381, %v8381
        %v8437 = vpack.c.bf16 %v8382, %v8382
        %v8438 = vpack.c.bf16 %v8383, %v8383
        %s8439 = scalar_lea.vmem %s7, 160
        %v8440 = vld [vmem:[%s8439] sm:$0xf]
        %v8441 = vld [vmem:[%s8439 + $0x4] sm:$0xf]
        %v8442 = vld [vmem:[%s8439 + $0x8] sm:$0xf]
        %v8443 = vld [vmem:[%s8439 + $0xc] sm:$0xf]
        %v8444 = vld [vmem:[%s8439 + $0x10] sm:$0xf]
        %v8445 = vld [vmem:[%s8439 + $0x14] sm:$0xf]
        %v8446 = vld [vmem:[%s8439 + $0x18] sm:$0xf]
        %v8447 = vld [vmem:[%s8439 + $0x1c] sm:$0xf]
        %v8448 = vld [vmem:[%s8439 + $0x20] sm:$0xf]
        %v8449 = vld [vmem:[%s8439 + $0x24] sm:$0xf]
        %v8450 = vld [vmem:[%s8439 + $0x28] sm:$0xf]
        %v8451 = vld [vmem:[%s8439 + $0x2c] sm:$0xf]
        %v8452 = vld [vmem:[%s8439 + $0x30] sm:$0xf]
        %v8453 = vld [vmem:[%s8439 + $0x34] sm:$0xf]
        %v8454 = vld [vmem:[%s8439 + $0x38] sm:$0xf]
        %v8455 = vld [vmem:[%s8439 + $0x3c] sm:$0xf]
        %v8456 = vld [vmem:[%s8439 + $0x40] sm:$0xf]
        %v8457 = vld [vmem:[%s8439 + $0x44] sm:$0xf]
        %v8458 = vld [vmem:[%s8439 + $0x48] sm:$0xf]
        %v8459 = vld [vmem:[%s8439 + $0x4c] sm:$0xf]
        %v8460 = vld [vmem:[%s8439 + $0x50] sm:$0xf]
        %v8461 = vld [vmem:[%s8439 + $0x54] sm:$0xf]
        %v8462 = vld [vmem:[%s8439 + $0x58] sm:$0xf]
        %v8463 = vld [vmem:[%s8439 + $0x5c] sm:$0xf]
        %v8464 = vld [vmem:[%s8439 + $0x60] sm:$0xf]
        %v8465 = vld [vmem:[%s8439 + $0x64] sm:$0xf]
        %v8466 = vld [vmem:[%s8439 + $0x68] sm:$0xf]
        %v8467 = vld [vmem:[%s8439 + $0x6c] sm:$0xf]
        %v8468 = vld [vmem:[%s8439 + $0x70] sm:$0xf]
        %v8469 = vld [vmem:[%s8439 + $0x74] sm:$0xf]
        %v8470 = vld [vmem:[%s8439 + $0x78] sm:$0xf]
        %v8471 = vld [vmem:[%s8439 + $0x7c] sm:$0xf]
        %v8472 = vld [vmem:[%s8439 + $0x80] sm:$0xf]
        %v8473 = vld [vmem:[%s8439 + $0x84] sm:$0xf]
        %v8474 = vld [vmem:[%s8439 + $0x88] sm:$0xf]
        %v8475 = vld [vmem:[%s8439 + $0x8c] sm:$0xf]
        %v8476 = vld [vmem:[%s8439 + $0x90] sm:$0xf]
        %v8477 = vld [vmem:[%s8439 + $0x94] sm:$0xf]
        %v8478 = vld [vmem:[%s8439 + $0x98] sm:$0xf]
        %v8479 = vld [vmem:[%s8439 + $0x9c] sm:$0xf]
        %v8520 = vunpack.c.l.b16 %v8440
        %v8521 = vunpack.c.l.b16 %v8441
        %v8522 = vunpack.c.l.b16 %v8442
        %v8523 = vunpack.c.l.b16 %v8443
        %v8524 = vunpack.c.l.b16 %v8444
        %v8525 = vunpack.c.l.b16 %v8445
        %v8526 = vunpack.c.l.b16 %v8446
        %v8527 = vunpack.c.l.b16 %v8447
        %v8528 = vunpack.c.l.b16 %v8448
        %v8529 = vunpack.c.l.b16 %v8449
        %v8530 = vunpack.c.l.b16 %v8450
        %v8531 = vunpack.c.l.b16 %v8451
        %v8532 = vunpack.c.l.b16 %v8452
        %v8533 = vunpack.c.l.b16 %v8453
        %v8534 = vunpack.c.l.b16 %v8454
        %v8535 = vunpack.c.l.b16 %v8455
        %v8536 = vunpack.c.l.b16 %v8456
        %v8537 = vunpack.c.l.b16 %v8457
        %v8538 = vunpack.c.l.b16 %v8458
        %v8539 = vunpack.c.l.b16 %v8459
        %v8540 = vunpack.c.l.b16 %v8460
        %v8541 = vunpack.c.l.b16 %v8461
        %v8542 = vunpack.c.l.b16 %v8462
        %v8543 = vunpack.c.l.b16 %v8463
        %v8544 = vunpack.c.l.b16 %v8464
        %v8545 = vunpack.c.l.b16 %v8465
        %v8546 = vunpack.c.l.b16 %v8466
        %v8547 = vunpack.c.l.b16 %v8467
        %v8548 = vunpack.c.l.b16 %v8468
        %v8549 = vunpack.c.l.b16 %v8469
        %v8550 = vunpack.c.l.b16 %v8470
        %v8551 = vunpack.c.l.b16 %v8471
        %v8552 = vunpack.c.l.b16 %v8472
        %v8553 = vunpack.c.l.b16 %v8473
        %v8554 = vunpack.c.l.b16 %v8474
        %v8555 = vunpack.c.l.b16 %v8475
        %v8556 = vunpack.c.l.b16 %v8476
        %v8557 = vunpack.c.l.b16 %v8477
        %v8558 = vunpack.c.l.b16 %v8478
        %v8559 = vunpack.c.l.b16 %v8479
        %v8560 = vpack.c.b16 %v8521, %v8520
        %v8561 = vpack.c.b16 %v8523, %v8522
        %v8562 = vpack.c.b16 %v8525, %v8524
        %v8563 = vpack.c.b16 %v8527, %v8526
        %v8564 = vpack.c.b16 %v8529, %v8528
        %v8565 = vpack.c.b16 %v8531, %v8530
        %v8566 = vpack.c.b16 %v8533, %v8532
        %v8567 = vpack.c.b16 %v8535, %v8534
        %v8568 = vpack.c.b16 %v8537, %v8536
        %v8569 = vpack.c.b16 %v8539, %v8538
        %v8570 = vpack.c.b16 %v8541, %v8540
        %v8571 = vpack.c.b16 %v8543, %v8542
        %v8572 = vpack.c.b16 %v8545, %v8544
        %v8573 = vpack.c.b16 %v8547, %v8546
        %v8574 = vpack.c.b16 %v8549, %v8548
        %v8575 = vpack.c.b16 %v8551, %v8550
        %v8576 = vpack.c.b16 %v8553, %v8552
        %v8577 = vpack.c.b16 %v8555, %v8554
        %v8578 = vpack.c.b16 %v8557, %v8556
        %v8579 = vpack.c.b16 %v8559, %v8558
        %v8601 = vsel %vm2412, %v8438, 0
        %8603 = vmatpush.bf16.msra.mxu0 %v8567
        %8604 = vmatpush.bf16.msra.mxu0 %v8566
        %8605 = vmatpush.bf16.msra.mxu0 %v8565
        %8606 = vmatpush.bf16.msra.mxu0 %v8564
        %8607 = vmatpush.bf16.msra.mxu0 %v8563
        %8608 = vmatpush.bf16.msra.mxu0 %v8562
        %8609 = vmatpush.bf16.msra.mxu0 %v8561
        %8610 = vmatpush.bf16.msra.mxu0 %v8560
        %8611 = vmatmul.bf16.gmra.mxu0 %v8436
        %v8612 = vpop.f32.mrf.mxu0
        %v8613 = vadd.f32 0.0, %v8612
        %v8614 = vpop.f32.mrf.mxu0
        %8615 = vdwg.mxu0
        %8616 = vmatpush.bf16.msra.mxu0 %v8575
        %8617 = vmatpush.bf16.msra.mxu0 %v8574
        %8618 = vmatpush.bf16.msra.mxu0 %v8573
        %8619 = vmatpush.bf16.msra.mxu0 %v8572
        %8620 = vmatpush.bf16.msra.mxu0 %v8571
        %8621 = vmatpush.bf16.msra.mxu0 %v8570
        %8622 = vmatpush.bf16.msra.mxu0 %v8569
        %8623 = vmatpush.bf16.msra.mxu0 %v8568
        %8624 = vmatmul.bf16.gmra.mxu0 %v8437
        %v8625 = vpop.f32.mrf.mxu0
        %v8626 = vadd.f32 %v8613, %v8625
        %v8627 = vpop.f32.mrf.mxu0
        %8628 = vdwg.mxu0
        %8629 = vmatpush.bf16.msra.mxu0 0
        %8630 = vmatpush.bf16.msra.mxu0 0
        %8631 = vmatpush.bf16.msra.mxu0 0
        %8632 = vmatpush.bf16.msra.mxu0 0
        %8633 = vmatpush.bf16.msra.mxu0 %v8579
        %8634 = vmatpush.bf16.msra.mxu0 %v8578
        %8635 = vmatpush.bf16.msra.mxu0 %v8577
        %8636 = vmatpush.bf16.msra.mxu0 %v8576
        %8637 = vmatmul.bf16.gmra.mxu0 %v8601
        %v8638 = vpop.f32.mrf.mxu0
        %v8639 = vadd.f32 %v8626, %v8638
        %v8640 = vpop.f32.mrf.mxu0
        %8641 = vdwg.mxu0
        %v8682 = vunpack.c.l.b16 %v8396
        %v8683 = vunpack.c.l.b16 %v8397
        %v8684 = vunpack.c.l.b16 %v8398
        %v8685 = vunpack.c.l.b16 %v8399
        %v8686 = vunpack.c.l.b16 %v8400
        %v8687 = vunpack.c.l.b16 %v8401
        %v8688 = vunpack.c.l.b16 %v8402
        %v8689 = vunpack.c.l.b16 %v8403
        %v8690 = vunpack.c.l.b16 %v8404
        %v8691 = vunpack.c.l.b16 %v8405
        %v8692 = vunpack.c.l.b16 %v8406
        %v8693 = vunpack.c.l.b16 %v8407
        %v8694 = vunpack.c.l.b16 %v8408
        %v8695 = vunpack.c.l.b16 %v8409
        %v8696 = vunpack.c.l.b16 %v8410
        %v8697 = vunpack.c.l.b16 %v8411
        %v8698 = vunpack.c.l.b16 %v8412
        %v8699 = vunpack.c.l.b16 %v8413
        %v8700 = vunpack.c.l.b16 %v8414
        %v8701 = vunpack.c.l.b16 %v8415
        %v8702 = vunpack.c.l.b16 %v8416
        %v8703 = vunpack.c.l.b16 %v8417
        %v8704 = vunpack.c.l.b16 %v8418
        %v8705 = vunpack.c.l.b16 %v8419
        %v8706 = vunpack.c.l.b16 %v8420
        %v8707 = vunpack.c.l.b16 %v8421
        %v8708 = vunpack.c.l.b16 %v8422
        %v8709 = vunpack.c.l.b16 %v8423
        %v8710 = vunpack.c.l.b16 %v8424
        %v8711 = vunpack.c.l.b16 %v8425
        %v8712 = vunpack.c.l.b16 %v8426
        %v8713 = vunpack.c.l.b16 %v8427
        %v8714 = vunpack.c.l.b16 %v8428
        %v8715 = vunpack.c.l.b16 %v8429
        %v8716 = vunpack.c.l.b16 %v8430
        %v8717 = vunpack.c.l.b16 %v8431
        %v8718 = vunpack.c.l.b16 %v8432
        %v8719 = vunpack.c.l.b16 %v8433
        %v8720 = vunpack.c.l.b16 %v8434
        %v8721 = vunpack.c.l.b16 %v8435
        %v8722 = vpack.c.b16 %v8683, %v8682
        %v8723 = vpack.c.b16 %v8685, %v8684
        %v8724 = vpack.c.b16 %v8687, %v8686
        %v8725 = vpack.c.b16 %v8689, %v8688
        %v8726 = vpack.c.b16 %v8691, %v8690
        %v8727 = vpack.c.b16 %v8693, %v8692
        %v8728 = vpack.c.b16 %v8695, %v8694
        %v8729 = vpack.c.b16 %v8697, %v8696
        %v8730 = vpack.c.b16 %v8699, %v8698
        %v8731 = vpack.c.b16 %v8701, %v8700
        %v8732 = vpack.c.b16 %v8703, %v8702
        %v8733 = vpack.c.b16 %v8705, %v8704
        %v8734 = vpack.c.b16 %v8707, %v8706
        %v8735 = vpack.c.b16 %v8709, %v8708
        %v8736 = vpack.c.b16 %v8711, %v8710
        %v8737 = vpack.c.b16 %v8713, %v8712
        %v8738 = vpack.c.b16 %v8715, %v8714
        %v8739 = vpack.c.b16 %v8717, %v8716
        %v8740 = vpack.c.b16 %v8719, %v8718
        %v8741 = vpack.c.b16 %v8721, %v8720
        %v8763 = vsel %vm2412, %v8395, 0
        %8765 = vmatpush.bf16.msra.mxu0 %v8729
        %8766 = vmatpush.bf16.msra.mxu0 %v8728
        %8767 = vmatpush.bf16.msra.mxu0 %v8727
        %8768 = vmatpush.bf16.msra.mxu0 %v8726
        %8769 = vmatpush.bf16.msra.mxu0 %v8725
        %8770 = vmatpush.bf16.msra.mxu0 %v8724
        %8771 = vmatpush.bf16.msra.mxu0 %v8723
        %8772 = vmatpush.bf16.msra.mxu0 %v8722
        %8773 = vmatmul.bf16.gmra.mxu0 %v8393
        %v8774 = vpop.f32.mrf.mxu0
        %v8775 = vadd.f32 %v8639, %v8774
        %v8776 = vpop.f32.mrf.mxu0
        %8777 = vdwg.mxu0
        %8778 = vmatpush.bf16.msra.mxu0 %v8737
        %8779 = vmatpush.bf16.msra.mxu0 %v8736
        %8780 = vmatpush.bf16.msra.mxu0 %v8735
        %8781 = vmatpush.bf16.msra.mxu0 %v8734
        %8782 = vmatpush.bf16.msra.mxu0 %v8733
        %8783 = vmatpush.bf16.msra.mxu0 %v8732
        %8784 = vmatpush.bf16.msra.mxu0 %v8731
        %8785 = vmatpush.bf16.msra.mxu0 %v8730
        %8786 = vmatmul.bf16.gmra.mxu0 %v8394
        %v8787 = vpop.f32.mrf.mxu0
        %v8788 = vadd.f32 %v8775, %v8787
        %v8789 = vpop.f32.mrf.mxu0
        %8790 = vdwg.mxu0
        %8791 = vmatpush.bf16.msra.mxu0 0
        %8792 = vmatpush.bf16.msra.mxu0 0
        %8793 = vmatpush.bf16.msra.mxu0 0
        %8794 = vmatpush.bf16.msra.mxu0 0
        %8795 = vmatpush.bf16.msra.mxu0 %v8741
        %8796 = vmatpush.bf16.msra.mxu0 %v8740
        %8797 = vmatpush.bf16.msra.mxu0 %v8739
        %8798 = vmatpush.bf16.msra.mxu0 %v8738
        %8799 = vmatmul.bf16.gmra.mxu0 %v8763
        %v8800 = vpop.f32.mrf.mxu0
        %v8801 = vadd.f32 %v8788, %v8800
        %v8802 = vpop.f32.mrf.mxu0
        %8803 = vdwg.mxu0
        %v8804 = vpack.c.bf16 %v8384, %v8384
        %v8805 = vpack.c.bf16 %v8385, %v8385
        %v8806 = vpack.c.bf16 %v8386, %v8386
        %s8807 = scalar_lea.vmem %s7, 320
        %v8808 = vld [vmem:[%s8807] sm:$0xf]
        %v8809 = vld [vmem:[%s8807 + $0x4] sm:$0xf]
        %v8810 = vld [vmem:[%s8807 + $0x8] sm:$0xf]
        %v8811 = vld [vmem:[%s8807 + $0xc] sm:$0xf]
        %v8812 = vld [vmem:[%s8807 + $0x10] sm:$0xf]
        %v8813 = vld [vmem:[%s8807 + $0x14] sm:$0xf]
        %v8814 = vld [vmem:[%s8807 + $0x18] sm:$0xf]
        %v8815 = vld [vmem:[%s8807 + $0x1c] sm:$0xf]
        %v8816 = vld [vmem:[%s8807 + $0x20] sm:$0xf]
        %v8817 = vld [vmem:[%s8807 + $0x24] sm:$0xf]
        %v8818 = vld [vmem:[%s8807 + $0x28] sm:$0xf]
        %v8819 = vld [vmem:[%s8807 + $0x2c] sm:$0xf]
        %v8820 = vld [vmem:[%s8807 + $0x30] sm:$0xf]
        %v8821 = vld [vmem:[%s8807 + $0x34] sm:$0xf]
        %v8822 = vld [vmem:[%s8807 + $0x38] sm:$0xf]
        %v8823 = vld [vmem:[%s8807 + $0x3c] sm:$0xf]
        %v8824 = vld [vmem:[%s8807 + $0x40] sm:$0xf]
        %v8825 = vld [vmem:[%s8807 + $0x44] sm:$0xf]
        %v8826 = vld [vmem:[%s8807 + $0x48] sm:$0xf]
        %v8827 = vld [vmem:[%s8807 + $0x4c] sm:$0xf]
        %v8828 = vld [vmem:[%s8807 + $0x50] sm:$0xf]
        %v8829 = vld [vmem:[%s8807 + $0x54] sm:$0xf]
        %v8830 = vld [vmem:[%s8807 + $0x58] sm:$0xf]
        %v8831 = vld [vmem:[%s8807 + $0x5c] sm:$0xf]
        %v8832 = vld [vmem:[%s8807 + $0x60] sm:$0xf]
        %v8833 = vld [vmem:[%s8807 + $0x64] sm:$0xf]
        %v8834 = vld [vmem:[%s8807 + $0x68] sm:$0xf]
        %v8835 = vld [vmem:[%s8807 + $0x6c] sm:$0xf]
        %v8836 = vld [vmem:[%s8807 + $0x70] sm:$0xf]
        %v8837 = vld [vmem:[%s8807 + $0x74] sm:$0xf]
        %v8838 = vld [vmem:[%s8807 + $0x78] sm:$0xf]
        %v8839 = vld [vmem:[%s8807 + $0x7c] sm:$0xf]
        %v8840 = vld [vmem:[%s8807 + $0x80] sm:$0xf]
        %v8841 = vld [vmem:[%s8807 + $0x84] sm:$0xf]
        %v8842 = vld [vmem:[%s8807 + $0x88] sm:$0xf]
        %v8843 = vld [vmem:[%s8807 + $0x8c] sm:$0xf]
        %v8844 = vld [vmem:[%s8807 + $0x90] sm:$0xf]
        %v8845 = vld [vmem:[%s8807 + $0x94] sm:$0xf]
        %v8846 = vld [vmem:[%s8807 + $0x98] sm:$0xf]
        %v8847 = vld [vmem:[%s8807 + $0x9c] sm:$0xf]
        %v8888 = vunpack.c.l.b16 %v8808
        %v8889 = vunpack.c.l.b16 %v8809
        %v8890 = vunpack.c.l.b16 %v8810
        %v8891 = vunpack.c.l.b16 %v8811
        %v8892 = vunpack.c.l.b16 %v8812
        %v8893 = vunpack.c.l.b16 %v8813
        %v8894 = vunpack.c.l.b16 %v8814
        %v8895 = vunpack.c.l.b16 %v8815
        %v8896 = vunpack.c.l.b16 %v8816
        %v8897 = vunpack.c.l.b16 %v8817
        %v8898 = vunpack.c.l.b16 %v8818
        %v8899 = vunpack.c.l.b16 %v8819
        %v8900 = vunpack.c.l.b16 %v8820
        %v8901 = vunpack.c.l.b16 %v8821
        %v8902 = vunpack.c.l.b16 %v8822
        %v8903 = vunpack.c.l.b16 %v8823
        %v8904 = vunpack.c.l.b16 %v8824
        %v8905 = vunpack.c.l.b16 %v8825
        %v8906 = vunpack.c.l.b16 %v8826
        %v8907 = vunpack.c.l.b16 %v8827
        %v8908 = vunpack.c.l.b16 %v8828
        %v8909 = vunpack.c.l.b16 %v8829
        %v8910 = vunpack.c.l.b16 %v8830
        %v8911 = vunpack.c.l.b16 %v8831
        %v8912 = vunpack.c.l.b16 %v8832
        %v8913 = vunpack.c.l.b16 %v8833
        %v8914 = vunpack.c.l.b16 %v8834
        %v8915 = vunpack.c.l.b16 %v8835
        %v8916 = vunpack.c.l.b16 %v8836
        %v8917 = vunpack.c.l.b16 %v8837
        %v8918 = vunpack.c.l.b16 %v8838
        %v8919 = vunpack.c.l.b16 %v8839
        %v8920 = vunpack.c.l.b16 %v8840
        %v8921 = vunpack.c.l.b16 %v8841
        %v8922 = vunpack.c.l.b16 %v8842
        %v8923 = vunpack.c.l.b16 %v8843
        %v8924 = vunpack.c.l.b16 %v8844
        %v8925 = vunpack.c.l.b16 %v8845
        %v8926 = vunpack.c.l.b16 %v8846
        %v8927 = vunpack.c.l.b16 %v8847
        %v8928 = vpack.c.b16 %v8889, %v8888
        %v8929 = vpack.c.b16 %v8891, %v8890
        %v8930 = vpack.c.b16 %v8893, %v8892
        %v8931 = vpack.c.b16 %v8895, %v8894
        %v8932 = vpack.c.b16 %v8897, %v8896
        %v8933 = vpack.c.b16 %v8899, %v8898
        %v8934 = vpack.c.b16 %v8901, %v8900
        %v8935 = vpack.c.b16 %v8903, %v8902
        %v8936 = vpack.c.b16 %v8905, %v8904
        %v8937 = vpack.c.b16 %v8907, %v8906
        %v8938 = vpack.c.b16 %v8909, %v8908
        %v8939 = vpack.c.b16 %v8911, %v8910
        %v8940 = vpack.c.b16 %v8913, %v8912
        %v8941 = vpack.c.b16 %v8915, %v8914
        %v8942 = vpack.c.b16 %v8917, %v8916
        %v8943 = vpack.c.b16 %v8919, %v8918
        %v8944 = vpack.c.b16 %v8921, %v8920
        %v8945 = vpack.c.b16 %v8923, %v8922
        %v8946 = vpack.c.b16 %v8925, %v8924
        %v8947 = vpack.c.b16 %v8927, %v8926
        %v8969 = vsel %vm2412, %v8806, 0
        %8971 = vmatpush.bf16.msra.mxu0 %v8935
        %8972 = vmatpush.bf16.msra.mxu0 %v8934
        %8973 = vmatpush.bf16.msra.mxu0 %v8933
        %8974 = vmatpush.bf16.msra.mxu0 %v8932
        %8975 = vmatpush.bf16.msra.mxu0 %v8931
        %8976 = vmatpush.bf16.msra.mxu0 %v8930
        %8977 = vmatpush.bf16.msra.mxu0 %v8929
        %8978 = vmatpush.bf16.msra.mxu0 %v8928
        %8979 = vmatmul.bf16.gmra.mxu0 %v8804
        %v8980 = vpop.f32.mrf.mxu0
        %v8981 = vadd.f32 0.0, %v8980
        %v8982 = vpop.f32.mrf.mxu0
        %8983 = vdwg.mxu0
        %8984 = vmatpush.bf16.msra.mxu0 %v8943
        %8985 = vmatpush.bf16.msra.mxu0 %v8942
        %8986 = vmatpush.bf16.msra.mxu0 %v8941
        %8987 = vmatpush.bf16.msra.mxu0 %v8940
        %8988 = vmatpush.bf16.msra.mxu0 %v8939
        %8989 = vmatpush.bf16.msra.mxu0 %v8938
        %8990 = vmatpush.bf16.msra.mxu0 %v8937
        %8991 = vmatpush.bf16.msra.mxu0 %v8936
        %8992 = vmatmul.bf16.gmra.mxu0 %v8805
        %v8993 = vpop.f32.mrf.mxu0
        %v8994 = vadd.f32 %v8981, %v8993
        %v8995 = vpop.f32.mrf.mxu0
        %8996 = vdwg.mxu0
        %8997 = vmatpush.bf16.msra.mxu0 0
        %8998 = vmatpush.bf16.msra.mxu0 0
        %8999 = vmatpush.bf16.msra.mxu0 0
        %9000 = vmatpush.bf16.msra.mxu0 0
        %9001 = vmatpush.bf16.msra.mxu0 %v8947
        %9002 = vmatpush.bf16.msra.mxu0 %v8946
        %9003 = vmatpush.bf16.msra.mxu0 %v8945
        %9004 = vmatpush.bf16.msra.mxu0 %v8944
        %9005 = vmatmul.bf16.gmra.mxu0 %v8969
        %v9006 = vpop.f32.mrf.mxu0
        %v9007 = vadd.f32 %v8994, %v9006
        %v9008 = vpop.f32.mrf.mxu0
        %9009 = vdwg.mxu0
        %v9010 = vadd.f32 %v8801, %v9007
        %v9011 = vpack.c.bf16 %v8387, %v8387
        %v9012 = vpack.c.bf16 %v8388, %v8388
        %v9013 = vpack.c.bf16 %v8389, %v8389
        %s9014 = scalar_lea.vmem %s7, 480
        %v9015 = vld [vmem:[%s9014] sm:$0xf]
        %v9016 = vld [vmem:[%s9014 + $0x4] sm:$0xf]
        %v9017 = vld [vmem:[%s9014 + $0x8] sm:$0xf]
        %v9018 = vld [vmem:[%s9014 + $0xc] sm:$0xf]
        %v9019 = vld [vmem:[%s9014 + $0x10] sm:$0xf]
        %v9020 = vld [vmem:[%s9014 + $0x14] sm:$0xf]
        %v9021 = vld [vmem:[%s9014 + $0x18] sm:$0xf]
        %v9022 = vld [vmem:[%s9014 + $0x1c] sm:$0xf]
        %v9023 = vld [vmem:[%s9014 + $0x20] sm:$0xf]
        %v9024 = vld [vmem:[%s9014 + $0x24] sm:$0xf]
        %v9025 = vld [vmem:[%s9014 + $0x28] sm:$0xf]
        %v9026 = vld [vmem:[%s9014 + $0x2c] sm:$0xf]
        %v9027 = vld [vmem:[%s9014 + $0x30] sm:$0xf]
        %v9028 = vld [vmem:[%s9014 + $0x34] sm:$0xf]
        %v9029 = vld [vmem:[%s9014 + $0x38] sm:$0xf]
        %v9030 = vld [vmem:[%s9014 + $0x3c] sm:$0xf]
        %v9031 = vld [vmem:[%s9014 + $0x40] sm:$0xf]
        %v9032 = vld [vmem:[%s9014 + $0x44] sm:$0xf]
        %v9033 = vld [vmem:[%s9014 + $0x48] sm:$0xf]
        %v9034 = vld [vmem:[%s9014 + $0x4c] sm:$0xf]
        %v9035 = vld [vmem:[%s9014 + $0x50] sm:$0xf]
        %v9036 = vld [vmem:[%s9014 + $0x54] sm:$0xf]
        %v9037 = vld [vmem:[%s9014 + $0x58] sm:$0xf]
        %v9038 = vld [vmem:[%s9014 + $0x5c] sm:$0xf]
        %v9039 = vld [vmem:[%s9014 + $0x60] sm:$0xf]
        %v9040 = vld [vmem:[%s9014 + $0x64] sm:$0xf]
        %v9041 = vld [vmem:[%s9014 + $0x68] sm:$0xf]
        %v9042 = vld [vmem:[%s9014 + $0x6c] sm:$0xf]
        %v9043 = vld [vmem:[%s9014 + $0x70] sm:$0xf]
        %v9044 = vld [vmem:[%s9014 + $0x74] sm:$0xf]
        %v9045 = vld [vmem:[%s9014 + $0x78] sm:$0xf]
        %v9046 = vld [vmem:[%s9014 + $0x7c] sm:$0xf]
        %v9047 = vld [vmem:[%s9014 + $0x80] sm:$0xf]
        %v9048 = vld [vmem:[%s9014 + $0x84] sm:$0xf]
        %v9049 = vld [vmem:[%s9014 + $0x88] sm:$0xf]
        %v9050 = vld [vmem:[%s9014 + $0x8c] sm:$0xf]
        %v9051 = vld [vmem:[%s9014 + $0x90] sm:$0xf]
        %v9052 = vld [vmem:[%s9014 + $0x94] sm:$0xf]
        %v9053 = vld [vmem:[%s9014 + $0x98] sm:$0xf]
        %v9054 = vld [vmem:[%s9014 + $0x9c] sm:$0xf]
        %v9095 = vunpack.c.l.b16 %v9015
        %v9096 = vunpack.c.l.b16 %v9016
        %v9097 = vunpack.c.l.b16 %v9017
        %v9098 = vunpack.c.l.b16 %v9018
        %v9099 = vunpack.c.l.b16 %v9019
        %v9100 = vunpack.c.l.b16 %v9020
        %v9101 = vunpack.c.l.b16 %v9021
        %v9102 = vunpack.c.l.b16 %v9022
        %v9103 = vunpack.c.l.b16 %v9023
        %v9104 = vunpack.c.l.b16 %v9024
        %v9105 = vunpack.c.l.b16 %v9025
        %v9106 = vunpack.c.l.b16 %v9026
        %v9107 = vunpack.c.l.b16 %v9027
        %v9108 = vunpack.c.l.b16 %v9028
        %v9109 = vunpack.c.l.b16 %v9029
        %v9110 = vunpack.c.l.b16 %v9030
        %v9111 = vunpack.c.l.b16 %v9031
        %v9112 = vunpack.c.l.b16 %v9032
        %v9113 = vunpack.c.l.b16 %v9033
        %v9114 = vunpack.c.l.b16 %v9034
        %v9115 = vunpack.c.l.b16 %v9035
        %v9116 = vunpack.c.l.b16 %v9036
        %v9117 = vunpack.c.l.b16 %v9037
        %v9118 = vunpack.c.l.b16 %v9038
        %v9119 = vunpack.c.l.b16 %v9039
        %v9120 = vunpack.c.l.b16 %v9040
        %v9121 = vunpack.c.l.b16 %v9041
        %v9122 = vunpack.c.l.b16 %v9042
        %v9123 = vunpack.c.l.b16 %v9043
        %v9124 = vunpack.c.l.b16 %v9044
        %v9125 = vunpack.c.l.b16 %v9045
        %v9126 = vunpack.c.l.b16 %v9046
        %v9127 = vunpack.c.l.b16 %v9047
        %v9128 = vunpack.c.l.b16 %v9048
        %v9129 = vunpack.c.l.b16 %v9049
        %v9130 = vunpack.c.l.b16 %v9050
        %v9131 = vunpack.c.l.b16 %v9051
        %v9132 = vunpack.c.l.b16 %v9052
        %v9133 = vunpack.c.l.b16 %v9053
        %v9134 = vunpack.c.l.b16 %v9054
        %v9135 = vpack.c.b16 %v9096, %v9095
        %v9136 = vpack.c.b16 %v9098, %v9097
        %v9137 = vpack.c.b16 %v9100, %v9099
        %v9138 = vpack.c.b16 %v9102, %v9101
        %v9139 = vpack.c.b16 %v9104, %v9103
        %v9140 = vpack.c.b16 %v9106, %v9105
        %v9141 = vpack.c.b16 %v9108, %v9107
        %v9142 = vpack.c.b16 %v9110, %v9109
        %v9143 = vpack.c.b16 %v9112, %v9111
        %v9144 = vpack.c.b16 %v9114, %v9113
        %v9145 = vpack.c.b16 %v9116, %v9115
        %v9146 = vpack.c.b16 %v9118, %v9117
        %v9147 = vpack.c.b16 %v9120, %v9119
        %v9148 = vpack.c.b16 %v9122, %v9121
        %v9149 = vpack.c.b16 %v9124, %v9123
        %v9150 = vpack.c.b16 %v9126, %v9125
        %v9151 = vpack.c.b16 %v9128, %v9127
        %v9152 = vpack.c.b16 %v9130, %v9129
        %v9153 = vpack.c.b16 %v9132, %v9131
        %v9154 = vpack.c.b16 %v9134, %v9133
        %v9176 = vsel %vm2412, %v9013, 0
        %9178 = vmatpush.bf16.msra.mxu0 %v9142
        %9179 = vmatpush.bf16.msra.mxu0 %v9141
        %9180 = vmatpush.bf16.msra.mxu0 %v9140
        %9181 = vmatpush.bf16.msra.mxu0 %v9139
        %9182 = vmatpush.bf16.msra.mxu0 %v9138
        %9183 = vmatpush.bf16.msra.mxu0 %v9137
        %9184 = vmatpush.bf16.msra.mxu0 %v9136
        %9185 = vmatpush.bf16.msra.mxu0 %v9135
        %9186 = vmatmul.bf16.gmra.mxu0 %v9011
        %v9187 = vpop.f32.mrf.mxu0
        %v9188 = vadd.f32 0.0, %v9187
        %v9189 = vpop.f32.mrf.mxu0
        %9190 = vdwg.mxu0
        %9191 = vmatpush.bf16.msra.mxu0 %v9150
        %9192 = vmatpush.bf16.msra.mxu0 %v9149
        %9193 = vmatpush.bf16.msra.mxu0 %v9148
        %9194 = vmatpush.bf16.msra.mxu0 %v9147
        %9195 = vmatpush.bf16.msra.mxu0 %v9146
        %9196 = vmatpush.bf16.msra.mxu0 %v9145
        %9197 = vmatpush.bf16.msra.mxu0 %v9144
        %9198 = vmatpush.bf16.msra.mxu0 %v9143
        %9199 = vmatmul.bf16.gmra.mxu0 %v9012
        %v9200 = vpop.f32.mrf.mxu0
        %v9201 = vadd.f32 %v9188, %v9200
        %v9202 = vpop.f32.mrf.mxu0
        %9203 = vdwg.mxu0
        %9204 = vmatpush.bf16.msra.mxu0 0
        %9205 = vmatpush.bf16.msra.mxu0 0
        %9206 = vmatpush.bf16.msra.mxu0 0
        %9207 = vmatpush.bf16.msra.mxu0 0
        %9208 = vmatpush.bf16.msra.mxu0 %v9154
        %9209 = vmatpush.bf16.msra.mxu0 %v9153
        %9210 = vmatpush.bf16.msra.mxu0 %v9152
        %9211 = vmatpush.bf16.msra.mxu0 %v9151
        %9212 = vmatmul.bf16.gmra.mxu0 %v9176
        %v9213 = vpop.f32.mrf.mxu0
        %v9214 = vadd.f32 %v9201, %v9213
        %v9215 = vpop.f32.mrf.mxu0
        %9216 = vdwg.mxu0
        %v9217 = vadd.f32 %v9010, %v9214
        %v9218 = vpack.c.bf16 %v8390, %v8390
        %v9219 = vpack.c.bf16 %v8391, %v8391
        %v9220 = vpack.c.bf16 %v8392, %v8392
        %s9221 = scalar_lea.vmem %s7, 640
        %v9222 = vld [vmem:[%s9221] sm:$0xf]
        %v9223 = vld [vmem:[%s9221 + $0x4] sm:$0xf]
        %v9224 = vld [vmem:[%s9221 + $0x8] sm:$0xf]
        %v9225 = vld [vmem:[%s9221 + $0xc] sm:$0xf]
        %v9226 = vld [vmem:[%s9221 + $0x10] sm:$0xf]
        %v9227 = vld [vmem:[%s9221 + $0x14] sm:$0xf]
        %v9228 = vld [vmem:[%s9221 + $0x18] sm:$0xf]
        %v9229 = vld [vmem:[%s9221 + $0x1c] sm:$0xf]
        %v9230 = vld [vmem:[%s9221 + $0x20] sm:$0xf]
        %v9231 = vld [vmem:[%s9221 + $0x24] sm:$0xf]
        %v9232 = vld [vmem:[%s9221 + $0x28] sm:$0xf]
        %v9233 = vld [vmem:[%s9221 + $0x2c] sm:$0xf]
        %v9234 = vld [vmem:[%s9221 + $0x30] sm:$0xf]
        %v9235 = vld [vmem:[%s9221 + $0x34] sm:$0xf]
        %v9236 = vld [vmem:[%s9221 + $0x38] sm:$0xf]
        %v9237 = vld [vmem:[%s9221 + $0x3c] sm:$0xf]
        %v9238 = vld [vmem:[%s9221 + $0x40] sm:$0xf]
        %v9239 = vld [vmem:[%s9221 + $0x44] sm:$0xf]
        %v9240 = vld [vmem:[%s9221 + $0x48] sm:$0xf]
        %v9241 = vld [vmem:[%s9221 + $0x4c] sm:$0xf]
        %v9242 = vld [vmem:[%s9221 + $0x50] sm:$0xf]
        %v9243 = vld [vmem:[%s9221 + $0x54] sm:$0xf]
        %v9244 = vld [vmem:[%s9221 + $0x58] sm:$0xf]
        %v9245 = vld [vmem:[%s9221 + $0x5c] sm:$0xf]
        %v9246 = vld [vmem:[%s9221 + $0x60] sm:$0xf]
        %v9247 = vld [vmem:[%s9221 + $0x64] sm:$0xf]
        %v9248 = vld [vmem:[%s9221 + $0x68] sm:$0xf]
        %v9249 = vld [vmem:[%s9221 + $0x6c] sm:$0xf]
        %v9250 = vld [vmem:[%s9221 + $0x70] sm:$0xf]
        %v9251 = vld [vmem:[%s9221 + $0x74] sm:$0xf]
        %v9252 = vld [vmem:[%s9221 + $0x78] sm:$0xf]
        %v9253 = vld [vmem:[%s9221 + $0x7c] sm:$0xf]
        %v9254 = vld [vmem:[%s9221 + $0x80] sm:$0xf]
        %v9255 = vld [vmem:[%s9221 + $0x84] sm:$0xf]
        %v9256 = vld [vmem:[%s9221 + $0x88] sm:$0xf]
        %v9257 = vld [vmem:[%s9221 + $0x8c] sm:$0xf]
        %v9258 = vld [vmem:[%s9221 + $0x90] sm:$0xf]
        %v9259 = vld [vmem:[%s9221 + $0x94] sm:$0xf]
        %v9260 = vld [vmem:[%s9221 + $0x98] sm:$0xf]
        %v9261 = vld [vmem:[%s9221 + $0x9c] sm:$0xf]
        %v9302 = vunpack.c.l.b16 %v9222
        %v9303 = vunpack.c.l.b16 %v9223
        %v9304 = vunpack.c.l.b16 %v9224
        %v9305 = vunpack.c.l.b16 %v9225
        %v9306 = vunpack.c.l.b16 %v9226
        %v9307 = vunpack.c.l.b16 %v9227
        %v9308 = vunpack.c.l.b16 %v9228
        %v9309 = vunpack.c.l.b16 %v9229
        %v9310 = vunpack.c.l.b16 %v9230
        %v9311 = vunpack.c.l.b16 %v9231
        %v9312 = vunpack.c.l.b16 %v9232
        %v9313 = vunpack.c.l.b16 %v9233
        %v9314 = vunpack.c.l.b16 %v9234
        %v9315 = vunpack.c.l.b16 %v9235
        %v9316 = vunpack.c.l.b16 %v9236
        %v9317 = vunpack.c.l.b16 %v9237
        %v9318 = vunpack.c.l.b16 %v9238
        %v9319 = vunpack.c.l.b16 %v9239
        %v9320 = vunpack.c.l.b16 %v9240
        %v9321 = vunpack.c.l.b16 %v9241
        %v9322 = vunpack.c.l.b16 %v9242
        %v9323 = vunpack.c.l.b16 %v9243
        %v9324 = vunpack.c.l.b16 %v9244
        %v9325 = vunpack.c.l.b16 %v9245
        %v9326 = vunpack.c.l.b16 %v9246
        %v9327 = vunpack.c.l.b16 %v9247
        %v9328 = vunpack.c.l.b16 %v9248
        %v9329 = vunpack.c.l.b16 %v9249
        %v9330 = vunpack.c.l.b16 %v9250
        %v9331 = vunpack.c.l.b16 %v9251
        %v9332 = vunpack.c.l.b16 %v9252
        %v9333 = vunpack.c.l.b16 %v9253
        %v9334 = vunpack.c.l.b16 %v9254
        %v9335 = vunpack.c.l.b16 %v9255
        %v9336 = vunpack.c.l.b16 %v9256
        %v9337 = vunpack.c.l.b16 %v9257
        %v9338 = vunpack.c.l.b16 %v9258
        %v9339 = vunpack.c.l.b16 %v9259
        %v9340 = vunpack.c.l.b16 %v9260
        %v9341 = vunpack.c.l.b16 %v9261
        %v9342 = vpack.c.b16 %v9303, %v9302
        %v9343 = vpack.c.b16 %v9305, %v9304
        %v9344 = vpack.c.b16 %v9307, %v9306
        %v9345 = vpack.c.b16 %v9309, %v9308
        %v9346 = vpack.c.b16 %v9311, %v9310
        %v9347 = vpack.c.b16 %v9313, %v9312
        %v9348 = vpack.c.b16 %v9315, %v9314
        %v9349 = vpack.c.b16 %v9317, %v9316
        %v9350 = vpack.c.b16 %v9319, %v9318
        %v9351 = vpack.c.b16 %v9321, %v9320
        %v9352 = vpack.c.b16 %v9323, %v9322
        %v9353 = vpack.c.b16 %v9325, %v9324
        %v9354 = vpack.c.b16 %v9327, %v9326
        %v9355 = vpack.c.b16 %v9329, %v9328
        %v9356 = vpack.c.b16 %v9331, %v9330
        %v9357 = vpack.c.b16 %v9333, %v9332
        %v9358 = vpack.c.b16 %v9335, %v9334
        %v9359 = vpack.c.b16 %v9337, %v9336
        %v9360 = vpack.c.b16 %v9339, %v9338
        %v9361 = vpack.c.b16 %v9341, %v9340
        %v9383 = vsel %vm2412, %v9220, 0
        %9385 = vmatpush.bf16.msra.mxu0 %v9349
        %9386 = vmatpush.bf16.msra.mxu0 %v9348
        %9387 = vmatpush.bf16.msra.mxu0 %v9347
        %9388 = vmatpush.bf16.msra.mxu0 %v9346
        %9389 = vmatpush.bf16.msra.mxu0 %v9345
        %9390 = vmatpush.bf16.msra.mxu0 %v9344
        %9391 = vmatpush.bf16.msra.mxu0 %v9343
        %9392 = vmatpush.bf16.msra.mxu0 %v9342
        %9393 = vmatmul.bf16.gmra.mxu0 %v9218
        %v9394 = vpop.f32.mrf.mxu0
        %v9395 = vadd.f32 0.0, %v9394
        %v9396 = vpop.f32.mrf.mxu0
        %9397 = vdwg.mxu0
        %9398 = vmatpush.bf16.msra.mxu0 %v9357
        %9399 = vmatpush.bf16.msra.mxu0 %v9356
        %9400 = vmatpush.bf16.msra.mxu0 %v9355
        %9401 = vmatpush.bf16.msra.mxu0 %v9354
        %9402 = vmatpush.bf16.msra.mxu0 %v9353
        %9403 = vmatpush.bf16.msra.mxu0 %v9352
        %9404 = vmatpush.bf16.msra.mxu0 %v9351
        %9405 = vmatpush.bf16.msra.mxu0 %v9350
        %9406 = vmatmul.bf16.gmra.mxu0 %v9219
        %v9407 = vpop.f32.mrf.mxu0
        %v9408 = vadd.f32 %v9395, %v9407
        %v9409 = vpop.f32.mrf.mxu0
        %9410 = vdwg.mxu0
        %9411 = vmatpush.bf16.msra.mxu0 0
        %9412 = vmatpush.bf16.msra.mxu0 0
        %9413 = vmatpush.bf16.msra.mxu0 0
        %9414 = vmatpush.bf16.msra.mxu0 0
        %9415 = vmatpush.bf16.msra.mxu0 %v9361
        %9416 = vmatpush.bf16.msra.mxu0 %v9360
        %9417 = vmatpush.bf16.msra.mxu0 %v9359
        %9418 = vmatpush.bf16.msra.mxu0 %v9358
        %9419 = vmatmul.bf16.gmra.mxu0 %v9383
        %v9420 = vpop.f32.mrf.mxu0
        %v9421 = vadd.f32 %v9408, %v9420
        %v9422 = vpop.f32.mrf.mxu0
        %9423 = vdwg.mxu0
        %v9424 = vadd.f32 %v9217, %v9421
        %v9425 = vld [vmem:[%s8] sm:$0x1]
        %v9427 = vperm.slane %v9425, 0
        %v9429 = vadd.f32 %v9424, %v9427
        %v9430 = vmax.f32 %v9429, 0.0
        %v9431 = vld [vmem:[%s9] sm:$0xff]
        %v9432 = vld [vmem:[%s9 + $0x8] sm:$0xff]
        %v9433 = vld [vmem:[%s9 + $0x10] sm:$0xff]
        %v9434 = vld [vmem:[%s9 + $0x18] sm:$0xff]
        %v9435 = vld [vmem:[%s9 + $0x20] sm:$0xff]
        %v9436 = vld [vmem:[%s9 + $0x28] sm:$0xff]
        %v9437 = vld [vmem:[%s9 + $0x30] sm:$0xff]
        %v9438 = vld [vmem:[%s9 + $0x38] sm:$0xff]
        %v9439 = vld [vmem:[%s10] sm:$0x1]
        %v9441 = vperm.slane %v9439, 0
        %v9444 = vsel %vm2412, %v9430, 0
        %9446 = vmatpush.msra.mxu0 0.0
        %9447 = vmatpush.msra.mxu0 0.0
        %9448 = vmatpush.msra.mxu0 0.0
        %9449 = vmatpush.msra.mxu0 0.0
        %9450 = vmatpush.msra.mxu0 0.0
        %9451 = vmatpush.msra.mxu0 0.0
        %9452 = vmatpush.msra.mxu0 0.0
        %9453 = vmatpush.msra.mxu0 0.0
        %9454 = vmatpush.msra.mxu0 %v9438
        %9455 = vmatpush.msra.mxu0 %v9437
        %9456 = vmatpush.msra.mxu0 %v9436
        %9457 = vmatpush.msra.mxu0 %v9435
        %9458 = vmatpush.msra.mxu0 %v9434
        %9459 = vmatpush.msra.mxu0 %v9433
        %9460 = vmatpush.msra.mxu0 %v9432
        %9461 = vmatpush.msra.mxu0 %v9431
        %9462 = vmatmul.f32.gmra.mxu0 %v9444
        %v9463 = vpop.f32.mrf.mxu0
        %v9464 = vadd.f32 %v9441, %v9463
        %9465 = vdwg.mxu0
        %vm9466 = vcmask 15360
        %9467 = vst.msk [vmem:[%s519] sm:$0xff] %vm9466, %v9464
        %p9468 = scmp.lt.s32.totalorder %s22, 1
        %s9469 = scalar_select %p9468, %s22, 1
        %s9470 = smul.addr %s9469, 8
        %s9471 = scalar_lea.vmem %s11, %s9470
        // Predicated region
        $region103: #{binary_cnn1_forward.1} parent=97 // pred_check
          %p9472 = pneg %p276
        $region104: #{binary_cnn1_forward.1} parent=97 // pred_check_branch
          %9474 = sbr.rel (%p9472) target = $region106
        $region105: #{binary_cnn1_forward.1} parent=97 // pred_region
          _
        $region106: #{binary_cnn1_forward.1} parent=97 // pred_fallthru
          _
      $region98: #{binary_cnn1_forward.1} parent=5 // pred_fallthru
        _
      %p9475 = scmp.le.s32.totalorder 2, %s17
      // Predicated region
      $region107: #{binary_cnn1_forward.1} parent=5 // pred_check
        %p9476 = pneg %p9475
      $region108: #{binary_cnn1_forward.1} parent=5 // pred_check_branch
        %9478 = sbr.rel (%p9476) target = $region110
      $region109: #{binary_cnn1_forward.1} parent=5 // pred_region
        %s9479 = ssub.s32 %s17, 2
        // Predicated region
        $region111: #{binary_cnn1_forward.1} parent=109 // pred_check
          %p9480 = pneg %p282
        $region112: #{binary_cnn1_forward.1} parent=109 // pred_check_branch
          %9482 = sbr.rel (%p9480) target = $region114
        $region113: #{binary_cnn1_forward.1} parent=109 // pred_region
          %p9483 = scmp.lt.s32.totalorder %s23, 1
          %s9484 = scalar_select %p9483, %s23, 1
          %s9485 = smul.addr %s9484, 8
          %s9486 = scalar_lea.vmem %s11, %s9485
        $region114: #{binary_cnn1_forward.1} parent=109 // pred_fallthru
          _
      $region110: #{binary_cnn1_forward.1} parent=5 // pred_fallthru
        _
    $region6: #{binary_cnn1_forward.1} parent=1 // loop_footer
      %s21 = sadd.s32 1, %s17
    $region7: #{binary_cnn1_forward.1} parent=1 // loop_footer_branch
      %16 = sbr.rel target = $region3
    $region8: #{binary_cnn1_forward.1} parent=1 // loop_exit
      _

</llo_original>
